<compile_context>
chip_gen: v5e
topology: v5e:2x2
jax: 0.10.0
libtpu: 0.0.40
codegen_flags: <defaults>
</compile_context>

<pallas_src>
import jax
import jax.numpy as jnp
from jax.experimental import pallas as pl
from jax.experimental.pallas import tpu as pltpu

# Problem sizes (feature dims fixed by the module; batch kept small).
N_ROIS = 8                      # total RoIs (rows of x)
N_IMAGES = 2                    # images in the batch (len(need_backprop))
MINIBATCH = N_ROIS // N_IMAGES  # RoIs per image for the label-resize layer
D_IN = 4096
D_H = 1024
TK = 1024                       # K-tile for the first (4096 -> 1024) matmul
N_KSTEPS = D_IN // TK           # grid size (4)
W2_ROWS = D_H // N_KSTEPS       # W2 rows staged into VMEM per grid step (256)


def _instance_da_kernel(x_ref, w1_ref, w2_ref, w3_ref,
                        b1_ref, b2_ref, b3_ref, label_ref,
                        loss_ref, acc_ref, w2_vmem):
    """Grid axis 0 walks the K dimension of the first matmul (4096 / TK steps).

    acc_ref (f32) accumulates x @ W1 across K tiles.  W2 arrives sliced across
    the same grid steps and is staged into w2_vmem so its DMA overlaps the W1
    stream.  On the last step the remaining (small) layers + sigmoid + L1 loss
    run entirely in VMEM.
    """
    k = pl.program_id(0)

    @pl.when(k == 0)
    def _():
        acc_ref[...] = jnp.zeros_like(acc_ref)

    # Stage this step's slice of W2 into the persistent VMEM scratch.
    row0 = pl.multiple_of(k * W2_ROWS, W2_ROWS)
    w2_vmem[pl.ds(row0, W2_ROWS), :] = w2_ref[...]

    # Layer 1 partial product: (N, TK)bf16 @ (TK, 1024)bf16 -> f32 acc.
    acc_ref[...] += jnp.dot(x_ref[...], w1_ref[...],
                            preferred_element_type=jnp.float32)

    @pl.when(k == pl.num_programs(0) - 1)
    def _():
        # Layer 1 finalize: bias + ReLU (dropout = identity in eval mode).
        h1 = jnp.maximum(acc_ref[...] + b1_ref[...], 0.0)
        # Layer 2: (N, 1024)bf16 @ (1024, 1024)bf16 + bias, ReLU (f32 acc).
        h2 = jnp.dot(h1.astype(jnp.bfloat16), w2_vmem[...],
                     preferred_element_type=jnp.float32)
        h2 = jnp.maximum(h2 + b2_ref[...], 0.0)
        # Classifier: lane-dense VPU multiply + lane reduce, w3 is (1, 1024) f32.
        logits = jnp.sum(h2 * w3_ref[...], axis=-1, keepdims=True) + b3_ref[...]
        p = jax.nn.sigmoid(logits)                       # (N, 1)
        # loss = mean(|p - label|)
        diff = jnp.abs(p - label_ref[...])               # (N, 1)
        loss_ref[...] = jnp.sum(diff, axis=(0, 1), keepdims=True) / float(N_ROIS)


def prepare_params(w1, b1, w2, b2, w3, b3):
    """One-time, outside-jit parameter prep (dtype / layout).

    Casting W1/W2 to bf16 here (instead of per call inside the jit) removes the
    per-call f32->bf16 round trip through HBM, which dominated the runtime.
    """
    return {
        "w1": w1.astype(jnp.bfloat16),              # (4096, 1024) bf16
        "w2": w2.astype(jnp.bfloat16),              # (1024, 1024) bf16
        "w3_t": w3.astype(jnp.float32).T,           # (1, 1024) f32, lane-dense
        "b1": b1.astype(jnp.float32).reshape(1, D_H),
        "b2": b2.astype(jnp.float32).reshape(1, D_H),
        "b3": b3.astype(jnp.float32).reshape(1, 1),
    }


@jax.jit
def instance_da_forward(x, need_backprop, params, alpha=0.1):
    """Pallas implementation of _InstanceDA.forward (returns scalar loss)."""
    # grad_reverse: identity in the forward pass (alpha only affects backward).
    del alpha

    # InstanceLabelResizeLayer: broadcast each image's label over its
    # MINIBATCH RoIs -> (N_ROIS, 1).  (Plain-JAX glue, no compute.)
    label = jnp.repeat(need_backprop.astype(jnp.float32), MINIBATCH)
    label = label.reshape(N_ROIS, 1)

    # Activations are tiny (8 x 4096); casting them per call is negligible.
    x_bf16 = x.astype(jnp.bfloat16)

    loss = pl.pallas_call(
        _instance_da_kernel,
        out_shape=jax.ShapeDtypeStruct((1, 1), jnp.float32),
        grid_spec=pltpu.PrefetchScalarGridSpec(
            num_scalar_prefetch=0,
            grid=(N_KSTEPS,),
            in_specs=[
                pl.BlockSpec((N_ROIS, TK), lambda k: (0, k)),      # x K-tiles (bf16)
                pl.BlockSpec((TK, D_H), lambda k: (k, 0)),         # W1 K-tiles (bf16)
                pl.BlockSpec((W2_ROWS, D_H), lambda k: (k, 0)),    # W2 slices (bf16)
                pl.BlockSpec((1, D_H), lambda k: (0, 0)),          # W3^T (f32)
                pl.BlockSpec((1, D_H), lambda k: (0, 0)),          # b1
                pl.BlockSpec((1, D_H), lambda k: (0, 0)),          # b2
                pl.BlockSpec((1, 1), lambda k: (0, 0)),            # b3
                pl.BlockSpec((N_ROIS, 1), lambda k: (0, 0)),       # label
            ],
            out_specs=pl.BlockSpec((1, 1), lambda k: (0, 0)),
            scratch_shapes=[
                pltpu.VMEM((N_ROIS, D_H), jnp.float32),            # layer-1 acc
                pltpu.VMEM((D_H, D_H), jnp.bfloat16),              # staged W2
            ],
        ),
        compiler_params=pltpu.CompilerParams(
            dimension_semantics=("arbitrary",),
            vmem_limit_bytes=32 * 1024 * 1024,
        ),
    )(x_bf16, params["w1"], params["w2"], params["w3_t"],
      params["b1"], params["b2"], params["b3"], label)
    return loss[0, 0]


def _init_linear(key, fan_in, fan_out):
    """Deterministic PyTorch-style init: U(-1/sqrt(fan_in), 1/sqrt(fan_in))."""
    k_w, k_b = jax.random.split(key)
    bound = 1.0 / (fan_in ** 0.5)
    # Stored as (in_features, out_features), i.e. torch weight transposed.
    w = jax.random.uniform(k_w, (fan_in, fan_out), jnp.float32, -bound, bound)
    b = jax.random.uniform(k_b, (fan_out,), jnp.float32, -bound, bound)
    return w, b


if __name__ == "__main__":
    root = jax.random.PRNGKey(0)
    k_x, k_l1, k_l2, k_l3 = jax.random.split(root, 4)

    # Inputs: pooled RoI features (N_ROIS, 4096) and per-image domain labels.
    x = jax.random.normal(k_x, (N_ROIS, D_IN), jnp.float32)
    need_backprop = jnp.array([1.0, 0.0], dtype=jnp.float32)   # (N_IMAGES,)

    # Parameters (deterministic, module __init__ shapes).
    w1, b1 = _init_linear(k_l1, D_IN, D_H)    # dc_ip1: 4096 -> 1024
    w2, b2 = _init_linear(k_l2, D_H, D_H)     # dc_ip2: 1024 -> 1024
    w3, b3 = _init_linear(k_l3, D_H, 1)       # clssifer: 1024 -> 1

    # One-time prep (outside jit): bf16 weights, 2-D biases, transposed W3.
    params = prepare_params(w1, b1, w2, b2, w3, b3)

    loss = instance_da_forward(x, need_backprop, params)
    jax.block_until_ready(loss)

    label = jnp.repeat(need_backprop, MINIBATCH).reshape(N_ROIS, 1)

    # Reference 1: mirrors the kernel's bf16 streaming (tight tolerance).
    xb = x.astype(jnp.bfloat16)
    w1b = w1.astype(jnp.bfloat16)
    w2b = w2.astype(jnp.bfloat16)
    h1b = jnp.maximum(jnp.dot(xb, w1b, preferred_element_type=jnp.float32) + b1, 0.0)
    h2b = jnp.maximum(jnp.dot(h1b.astype(jnp.bfloat16), w2b,
                              preferred_element_type=jnp.float32) + b2, 0.0)
    pb = jax.nn.sigmoid(h2b @ w3 + b3)
    ref_bf16 = jnp.mean(jnp.abs(pb - label))
    assert jnp.allclose(loss, ref_bf16, atol=1e-3, rtol=1e-3), (loss, ref_bf16)

    # Reference 2: full-f32 PyTorch-parity check (bf16-loosened tolerance).
    h1 = jnp.maximum(x @ w1 + b1, 0.0)
    h2 = jnp.maximum(h1 @ w2 + b2, 0.0)
    p = jax.nn.sigmoid(h2 @ w3 + b3)
    ref_f32 = jnp.mean(jnp.abs(p - label))
    assert jnp.allclose(loss, ref_f32, atol=2e-2, rtol=2e-2), (loss, ref_f32)

    print("KERNEL_OK")
</pallas_src>

<mosaic_0001>
module attributes {stable_mosaic.version = 11 : i64} {
  func.func @_instance_da_kernel(%arg0: i32, %arg1: memref<8x1024xbf16, #tpu.memory_space<vmem>>, %arg2: memref<1024x1024xbf16, #tpu.memory_space<vmem>>, %arg3: memref<256x1024xbf16, #tpu.memory_space<vmem>>, %arg4: memref<1x1024xf32, #tpu.memory_space<vmem>>, %arg5: memref<1x1024xf32, #tpu.memory_space<vmem>>, %arg6: memref<1x1024xf32, #tpu.memory_space<vmem>>, %arg7: memref<1x1xf32, #tpu.memory_space<vmem>>, %arg8: memref<8x1xf32, #tpu.memory_space<vmem>>, %arg9: memref<1x1xf32, #tpu.memory_space<vmem>>, %arg10: memref<8x1024xf32, #tpu.memory_space<vmem>>, %arg11: memref<1024x1024xbf16, #tpu.memory_space<vmem>>) attributes {dimension_semantics = [#tpu.dimension_semantics<arbitrary>], iteration_bounds = array<i64: 4>, scalar_prefetch = 0 : i64, scratch_operands = 2 : i64, tpu.core_type = #tpu.core_type<tc>, window_params = [{transform_indices = @transform_0, window_bounds = array<i64: 8, 1024>}, {transform_indices = @transform_1, window_bounds = array<i64: 1024, 1024>}, {transform_indices = @transform_2, window_bounds = array<i64: 256, 1024>}, {pipeline_mode = #tpu.pipeline_mode<synchronous>, transform_indices = @transform_3, window_bounds = array<i64: 1, 1024>}, {pipeline_mode = #tpu.pipeline_mode<synchronous>, transform_indices = @transform_4, window_bounds = array<i64: 1, 1024>}, {pipeline_mode = #tpu.pipeline_mode<synchronous>, transform_indices = @transform_5, window_bounds = array<i64: 1, 1024>}, {pipeline_mode = #tpu.pipeline_mode<synchronous>, transform_indices = @transform_6, window_bounds = array<i64: 1, 1>}, {pipeline_mode = #tpu.pipeline_mode<synchronous>, transform_indices = @transform_7, window_bounds = array<i64: 8, 1>}, {pipeline_mode = #tpu.pipeline_mode<synchronous>, transform_indices = @transform_8, window_bounds = array<i64: 1, 1>}]} {
    %c0_i32 = arith.constant 0 : i32
    %0 = arith.cmpi eq, %arg0, %c0_i32 : i32
    %1 = arith.extui %0 : i1 to i32
    %c0_i32_0 = arith.constant 0 : i32
    %2 = arith.cmpi ne, %1, %c0_i32_0 : i32
    scf.if %2 {
      %cst_12 = arith.constant 0.000000e+00 : f32
      %17 = vector.broadcast %cst_12 : f32 to vector<8x1024xf32>
      %c0_13 = arith.constant 0 : index
      %c0_14 = arith.constant 0 : index
      %18 = vector.load %arg10[%c0_13, %c0_14] : memref<8x1024xf32, #tpu.memory_space<vmem>>, vector<8x1024xf32>
      tpu.vector_store %arg10[%c0_13, %c0_14], %17 {strides = array<i32>} : memref<8x1024xf32, #tpu.memory_space<vmem>>, vector<8x1024xf32>,
    } else {
    }
    %c256_i32 = arith.constant 256 : i32
    %3 = arith.muli %arg0, %c256_i32 : i32
    %4 = tpu.assume_multiple %3, 256 : i32
    %c0 = arith.constant 0 : index
    %c0_1 = arith.constant 0 : index
    %5 = vector.load %arg3[%c0, %c0_1] : memref<256x1024xbf16, #tpu.memory_space<vmem>>, vector<256x1024xbf16>
    %6 = arith.index_cast %4 : i32 to index
    %c0_2 = arith.constant 0 : index
    %7 = vector.load %arg11[%6, %c0_2] : memref<1024x1024xbf16, #tpu.memory_space<vmem>>, vector<256x1024xbf16>
    tpu.vector_store %arg11[%6, %c0_2], %5 {strides = array<i32>} : memref<1024x1024xbf16, #tpu.memory_space<vmem>>, vector<256x1024xbf16>,
    %c0_3 = arith.constant 0 : index
    %c0_4 = arith.constant 0 : index
    %8 = vector.load %arg10[%c0_3, %c0_4] : memref<8x1024xf32, #tpu.memory_space<vmem>>, vector<8x1024xf32>
    %c0_5 = arith.constant 0 : index
    %c0_6 = arith.constant 0 : index
    %9 = vector.load %arg1[%c0_5, %c0_6] : memref<8x1024xbf16, #tpu.memory_space<vmem>>, vector<8x1024xbf16>
    %c0_7 = arith.constant 0 : index
    %c0_8 = arith.constant 0 : index
    %10 = vector.load %arg2[%c0_7, %c0_8] : memref<1024x1024xbf16, #tpu.memory_space<vmem>>, vector<1024x1024xbf16>
    %cst = arith.constant dense<0.000000e+00> : vector<8x1024xf32>
    %11 = tpu.matmul %9, %10, %cst {dimension_numbers = #tpu.dot_dimension_numbers<[1], [0], [0], [1], [0, 0, 1, 1], [], []>} : vector<8x1024xbf16>, vector<1024x1024xbf16>, vector<8x1024xf32> -> vector<8x1024xf32>
    %12 = arith.addf %8, %11 : vector<8x1024xf32>
    %c0_9 = arith.constant 0 : index
    %c0_10 = arith.constant 0 : index
    %13 = vector.load %arg10[%c0_9, %c0_10] : memref<8x1024xf32, #tpu.memory_space<vmem>>, vector<8x1024xf32>
    tpu.vector_store %arg10[%c0_9, %c0_10], %12 {strides = array<i32>} : memref<8x1024xf32, #tpu.memory_space<vmem>>, vector<8x1024xf32>,
    %c3_i32 = arith.constant 3 : i32
    %14 = arith.cmpi eq, %arg0, %c3_i32 : i32
    %15 = arith.extui %14 : i1 to i32
    %c0_i32_11 = arith.constant 0 : i32
    %16 = arith.cmpi ne, %15, %c0_i32_11 : i32
    scf.if %16 {
      %c0_12 = arith.constant 0 : index
      %c0_13 = arith.constant 0 : index
      %17 = vector.load %arg10[%c0_12, %c0_13] : memref<8x1024xf32, #tpu.memory_space<vmem>>, vector<8x1024xf32>
      %c0_14 = arith.constant 0 : index
      %c0_15 = arith.constant 0 : index
      %18 = vector.load %arg5[%c0_14, %c0_15] : memref<1x1024xf32, #tpu.memory_space<vmem>>, vector<1x1024xf32>
      %19 = vector.broadcast %18 : vector<1x1024xf32> to vector<8x1024xf32>
      %20 = arith.addf %17, %19 : vector<8x1024xf32>
      %cst_16 = arith.constant 0.000000e+00 : f32
      %21 = vector.broadcast %cst_16 : f32 to vector<8x1024xf32>
      %22 = arith.maximumf %20, %21 : vector<8x1024xf32>
      %23 = arith.truncf %22 : vector<8x1024xf32> to vector<8x1024xbf16>
      %c0_17 = arith.constant 0 : index
      %c0_18 = arith.constant 0 : index
      %24 = vector.load %arg11[%c0_17, %c0_18] : memref<1024x1024xbf16, #tpu.memory_space<vmem>>, vector<1024x1024xbf16>
      %cst_19 = arith.constant dense<0.000000e+00> : vector<8x1024xf32>
      %25 = tpu.matmul %23, %24, %cst_19 {dimension_numbers = #tpu.dot_dimension_numbers<[1], [0], [0], [1], [0, 0, 1, 1], [], []>} : vector<8x1024xbf16>, vector<1024x1024xbf16>, vector<8x1024xf32> -> vector<8x1024xf32>
      %c0_20 = arith.constant 0 : index
      %c0_21 = arith.constant 0 : index
      %26 = vector.load %arg6[%c0_20, %c0_21] : memref<1x1024xf32, #tpu.memory_space<vmem>>, vector<1x1024xf32>
      %27 = vector.broadcast %26 : vector<1x1024xf32> to vector<8x1024xf32>
      %28 = arith.addf %25, %27 : vector<8x1024xf32>
      %cst_22 = arith.constant 0.000000e+00 : f32
      %29 = vector.broadcast %cst_22 : f32 to vector<8x1024xf32>
      %30 = arith.maximumf %28, %29 : vector<8x1024xf32>
      %c0_23 = arith.constant 0 : index
      %c0_24 = arith.constant 0 : index
      %31 = vector.load %arg4[%c0_23, %c0_24] : memref<1x1024xf32, #tpu.memory_space<vmem>>, vector<1x1024xf32>
      %32 = vector.broadcast %31 : vector<1x1024xf32> to vector<8x1024xf32>
      %33 = arith.mulf %30, %32 : vector<8x1024xf32>
      %cst_25 = arith.constant dense<0.000000e+00> : vector<8xf32>
      %34 = vector.multi_reduction <add>, %33, %cst_25 [1] : vector<8x1024xf32> to vector<8xf32>
      %35 = vector.shape_cast %34 : vector<8xf32> to vector<8x1xf32>
      %c0_26 = arith.constant 0 : index
      %c0_27 = arith.constant 0 : index
      %36 = vector.load %arg7[%c0_26, %c0_27] : memref<1x1xf32, #tpu.memory_space<vmem>>, vector<1x1xf32>
      %37 = vector.broadcast %36 : vector<1x1xf32> to vector<8x1xf32>
      %38 = arith.addf %35, %37 : vector<8x1xf32>
      %39 = arith.negf %38 : vector<8x1xf32>
      %40 = math.exp %39 : vector<8x1xf32>
      %cst_28 = arith.constant 1.000000e+00 : f32
      %41 = vector.broadcast %cst_28 : f32 to vector<8x1xf32>
      %42 = arith.addf %41, %40 : vector<8x1xf32>
      %43 = arith.divf %41, %42 : vector<8x1xf32>
      %c0_29 = arith.constant 0 : index
      %c0_30 = arith.constant 0 : index
      %44 = vector.load %arg8[%c0_29, %c0_30] : memref<8x1xf32, #tpu.memory_space<vmem>>, vector<8x1xf32>
      %45 = arith.subf %43, %44 : vector<8x1xf32>
      %46 = math.absf %45 : vector<8x1xf32>
      %47 = vector.shape_cast %46 : vector<8x1xf32> to vector<1x8x1xf32>
      %cst_31 = arith.constant dense<0.000000e+00> : vector<1xf32>
      %48 = vector.multi_reduction <add>, %47, %cst_31 [1, 2] : vector<1x8x1xf32> to vector<1xf32>
      %49 = vector.shape_cast %48 : vector<1xf32> to vector<1x1x1xf32>
      %50 = vector.extract %49[0, 0, 0] : f32 from vector<1x1x1xf32>
      %51 = vector.broadcast %50 : f32 to vector<1x1xf32>
      %cst_32 = arith.constant 8.000000e+00 : f32
      %52 = vector.broadcast %cst_32 : f32 to vector<1x1xf32>
      %53 = arith.divf %51, %52 : vector<1x1xf32>
      %c0_33 = arith.constant 0 : index
      %c0_34 = arith.constant 0 : index
      %54 = vector.load %arg9[%c0_33, %c0_34] : memref<1x1xf32, #tpu.memory_space<vmem>>, vector<1x1xf32>
      tpu.vector_store %arg9[%c0_33, %c0_34], %53 {strides = array<i32>} : memref<1x1xf32, #tpu.memory_space<vmem>>, vector<1x1xf32>,
    } else {
    }
    return
  }
  func.func @transform_0(%arg0: i32) -> (i32, i32) {
    %c0_i32 = arith.constant 0 : i32
    %c0_i32_0 = arith.constant 0 : i32
    return %c0_i32, %arg0 : i32, i32
  }
  func.func @transform_1(%arg0: i32) -> (i32, i32) {
    %c0_i32 = arith.constant 0 : i32
    %c0_i32_0 = arith.constant 0 : i32
    return %arg0, %c0_i32 : i32, i32
  }
  func.func @transform_2(%arg0: i32) -> (i32, i32) {
    %c0_i32 = arith.constant 0 : i32
    %c0_i32_0 = arith.constant 0 : i32
    return %arg0, %c0_i32 : i32, i32
  }
  func.func @transform_3(%arg0: i32) -> (i32, i32) {
    %c0_i32 = arith.constant 0 : i32
    %c0_i32_0 = arith.constant 0 : i32
    %c0_i32_1 = arith.constant 0 : i32
    return %c0_i32, %c0_i32_0 : i32, i32
  }
  func.func @transform_4(%arg0: i32) -> (i32, i32) {
    %c0_i32 = arith.constant 0 : i32
    %c0_i32_0 = arith.constant 0 : i32
    %c0_i32_1 = arith.constant 0 : i32
    return %c0_i32, %c0_i32_0 : i32, i32
  }
  func.func @transform_5(%arg0: i32) -> (i32, i32) {
    %c0_i32 = arith.constant 0 : i32
    %c0_i32_0 = arith.constant 0 : i32
    %c0_i32_1 = arith.constant 0 : i32
    return %c0_i32, %c0_i32_0 : i32, i32
  }
  func.func @transform_6(%arg0: i32) -> (i32, i32) {
    %c0_i32 = arith.constant 0 : i32
    %c0_i32_0 = arith.constant 0 : i32
    %c0_i32_1 = arith.constant 0 : i32
    return %c0_i32, %c0_i32_0 : i32, i32
  }
  func.func @transform_7(%arg0: i32) -> (i32, i32) {
    %c0_i32 = arith.constant 0 : i32
    %c0_i32_0 = arith.constant 0 : i32
    %c0_i32_1 = arith.constant 0 : i32
    return %c0_i32, %c0_i32_0 : i32, i32
  }
  func.func @transform_8(%arg0: i32) -> (i32, i32) {
    %c0_i32 = arith.constant 0 : i32
    %c0_i32_0 = arith.constant 0 : i32
    %c0_i32_1 = arith.constant 0 : i32
    return %c0_i32, %c0_i32_0 : i32, i32
  }
}

</mosaic_0001>

<llo_original>
// kernel: instance_da_forward.1
$region0: #{instance_da_forward.1}
  #allocation0 [shape = 'u32[]', space=smem, size = 0x4, offset = 0x4, fixed_abs, tag = 'smem constant byte address 0x4 - core index']
  #allocation1 [shape = 'u32[72,128]{1,0:T(1,128)}', space=vmem, size = 0x9000, scoped, tag = 'internal scratch']
  #allocation2 [shape = 'f32[8,1024]{1,0:T(8,128)}', space=vmem, size = 0x8000, scoped, tag = 'scratch operand']
  #allocation3 [shape = 'bf16[1024,1024]{1,0:T(8,128)(2,1)}', space=vmem, size = 0x200000, scoped, tag = 'scratch operand']
  #allocation4 [shape = 'f32[1,1]{1,0:T(1,128)S(1)}', space=vmem, size = 0x200, scoped, tag = 'scoped memory for instance_da_forward.1']
  %s0 = inlined_call_operand.vmem [shape: bf16[8,4096], index: 0, kind: input, shape index: {}]
  %s1 = inlined_call_operand.hbm [shape: bf16[4096,1024], index: 1, kind: input, shape index: {}]
  %s2 = inlined_call_operand.hbm [shape: bf16[1024,1024], index: 2, kind: input, shape index: {}]
  %s3 = inlined_call_operand.hbm [shape: f32[1,1024], index: 3, kind: input, shape index: {}]
  %s4 = inlined_call_operand.hbm [shape: f32[1,1024], index: 4, kind: input, shape index: {}]
  %s5 = inlined_call_operand.hbm [shape: f32[1,1024], index: 5, kind: input, shape index: {}]
  %s6 = inlined_call_operand.<no memory space> [shape: f32[1,1], index: 6, kind: input, shape index: {}]
  %s7 = inlined_call_operand.vmem [shape: f32[8,1], index: 7, kind: input, shape index: {}]
  %s8 = inlined_call_operand.hbm [shape: f32[1,1], index: 8, kind: output, shape index: {}]
  %s9 = sld [smem:[#allocation0]]
  $region93: #{instance_da_forward.1} parent=0
    _
  %s11 = ssub.s32 1, %s9
  %s12 = scalar_select 0, %s11, %s9
  %v13 = vstv %s6
  %14 = vst [vmem:[#allocation4] sm:$0x1] %v13
  $region1: #{instance_da_forward.1} parent=0
    #allocation5 [shape = 'u8[4194304]{0}', space=vmem, size = 0x400000, scoped, tag = 'input window, operand 1']
    #allocation6 [shape = 's32[2]{0}', space=sflag, size = 0x8, scoped, tag = 'scoped memory for instance_da_forward.1']
    #allocation7 [shape = 's32[2]{0}', space=sflag, size = 0x8, scoped, tag = 'scoped memory for instance_da_forward.1']
    #allocation8 [shape = 'u8[1048576]{0}', space=vmem, size = 0x100000, scoped, tag = 'input window, operand 2']
    #allocation9 [shape = 's32[2]{0}', space=sflag, size = 0x8, scoped, tag = 'scoped memory for instance_da_forward.1']
    #allocation10 [shape = 'u8[4096]{0}', space=vmem, size = 0x1000, scoped, tag = 'input window, operand 3, single buffered']
    #allocation11 [shape = 'u8[4096]{0}', space=vmem, size = 0x1000, scoped, tag = 'input window, operand 4, single buffered']
    #allocation12 [shape = 's32[1]{0}', space=sflag, size = 0x4, scoped, tag = 'scoped memory for instance_da_forward.1']
    #allocation13 [shape = 'u8[4096]{0}', space=vmem, size = 0x1000, scoped, tag = 'input window, operand 5, single buffered']
    #allocation14 [shape = 'u8[512]{0}', space=vmem, size = 0x400, scoped, tag = 'output window, operand 0, single buffered']
    %15 = vsyncpa [#allocation6], 0
    %s16 = scalar_lea.sflag [#allocation6], 1
    %17 = vsyncpa %s16, 0
    %18 = vsyncpa [#allocation9], 0
    %s19 = scalar_lea.sflag [#allocation9], 1
    %20 = vsyncpa %s19, 0
    %21 = vsyncpa [#allocation12], 0
    %22 = vsyncpa [#allocation7], 0
    loop: start=0, step=1, limit=6
    $region2: #{instance_da_forward.1} parent=1 // loop_pre_header
      _
    $region3: #{instance_da_forward.1} parent=1 // loop_header
      %s24 = sphi 0, %s28
      %p25 = scmp.ge.s32.totalorder %s24, 6
      %s34 = sphi 0, %s36
      %s37 = sphi 0, %s34
      %s38 = sphi 0, %s37
      %s54 = sphi 0, %s38
      %s60 = sphi 0, %s62
      %s63 = sphi 0, %s60
      %s64 = sphi 0, %s63
      %s80 = sphi 0, %s64
      %s86 = sphi 0, %s88
      %s89 = sphi 0, %s86
      %s90 = sphi 0, %s89
      %s106 = sphi 0, %s90
      %s110 = sphi 0, %s110
      %s112 = sphi 0, %s110
      %s113 = sphi 0, %s112
      %s127 = sphi 0, %s113
      %s131 = sphi 0, %s131
      %s133 = sphi 0, %s131
      %s134 = sphi 0, %s133
      %s148 = sphi 0, %s134
      %s152 = sphi 0, %s152
      %s154 = sphi 0, %s152
      %s155 = sphi 0, %s154
      %s169 = sphi 0, %s155
      %s173 = sphi 0, %s173
      %s175 = sphi 0, %s173
      %s176 = sphi 0, %s175
      %s190 = sphi 0, %s176
      %s194 = sphi 0, %s194
      %s196 = sphi 0, %s194
      %s197 = sphi 0, %s196
      %s211 = sphi 0, %s197
      %s215 = sphi 0, %s215
      %s217 = sphi 0, %s215
      %s218 = sphi 0, %s217
      %s232 = sphi 0, %s218
    $region4: #{instance_da_forward.1} parent=1 // loop_header_branch
      %27 = sbr.rel (%p25) target = $region8
    $region5: #{instance_da_forward.1} parent=1 // loop_body
      %s29 = ssub.s32 %s24, 1
      %s30 = ssub.s32 %s24, 2
      %s31 = sadd.s32 %s24, 1
      %s32 = ssub.s32 %s24, %s31
      %p33 = scmp.eq.s32.totalorder %s32, 0
      %s35 = sadd.s32 %s34, 1
      %s36 = scalar_select %p33, %s34, %s35
      %p39 = pneg %p33
      %p40 = scmp.eq.s32.totalorder %s24, 3
      %p41 = por %p39, %p40
      %p42 = scmp.ne.s32.totalorder %s34, %s37
      %p43 = scmp.eq.s32.totalorder %s24, 0
      %p44 = por %p42, %p43
      %p45 = scmp.ne.s32.totalorder %s34, %s37
      %p46 = scmp.eq.s32.totalorder %s29, 3
      %p47 = por %p45, %p46
      %p48 = scmp.ne.s32.totalorder %s37, %s38
      %p49 = scmp.eq.s32.totalorder %s29, 0
      %p50 = por %p48, %p49
      %p51 = scmp.ne.s32.totalorder %s37, %s38
      %p52 = scmp.eq.s32.totalorder %s30, 3
      %p53 = por %p51, %p52
      %p55 = scmp.ne.s32.totalorder %s38, %s54
      %p56 = scmp.eq.s32.totalorder %s30, 0
      %p57 = por %p55, %p56
      %s58 = ssub.s32 %s24, %s31
      %p59 = scmp.eq.s32.totalorder %s58, 0
      %s61 = sadd.s32 %s60, 1
      %s62 = scalar_select %p59, %s60, %s61
      %p65 = pneg %p59
      %p66 = scmp.eq.s32.totalorder %s24, 3
      %p67 = por %p65, %p66
      %p68 = scmp.ne.s32.totalorder %s60, %s63
      %p69 = scmp.eq.s32.totalorder %s24, 0
      %p70 = por %p68, %p69
      %p71 = scmp.ne.s32.totalorder %s60, %s63
      %p72 = scmp.eq.s32.totalorder %s29, 3
      %p73 = por %p71, %p72
      %p74 = scmp.ne.s32.totalorder %s63, %s64
      %p75 = scmp.eq.s32.totalorder %s29, 0
      %p76 = por %p74, %p75
      %p77 = scmp.ne.s32.totalorder %s63, %s64
      %p78 = scmp.eq.s32.totalorder %s30, 3
      %p79 = por %p77, %p78
      %p81 = scmp.ne.s32.totalorder %s64, %s80
      %p82 = scmp.eq.s32.totalorder %s30, 0
      %p83 = por %p81, %p82
      %s84 = ssub.s32 %s24, %s31
      %p85 = scmp.eq.s32.totalorder %s84, 0
      %s87 = sadd.s32 %s86, 1
      %s88 = scalar_select %p85, %s86, %s87
      %p91 = pneg %p85
      %p92 = scmp.eq.s32.totalorder %s24, 3
      %p93 = por %p91, %p92
      %p94 = scmp.ne.s32.totalorder %s86, %s89
      %p95 = scmp.eq.s32.totalorder %s24, 0
      %p96 = por %p94, %p95
      %p97 = scmp.ne.s32.totalorder %s86, %s89
      %p98 = scmp.eq.s32.totalorder %s29, 3
      %p99 = por %p97, %p98
      %p100 = scmp.ne.s32.totalorder %s89, %s90
      %p101 = scmp.eq.s32.totalorder %s29, 0
      %p102 = por %p100, %p101
      %p103 = scmp.ne.s32.totalorder %s89, %s90
      %p104 = scmp.eq.s32.totalorder %s30, 3
      %p105 = por %p103, %p104
      %p107 = scmp.ne.s32.totalorder %s90, %s106
      %p108 = scmp.eq.s32.totalorder %s30, 0
      %p109 = por %p107, %p108
      %s111 = sadd.s32 %s110, 1
      %p114 = scmp.eq.s32.totalorder %s24, 3
      %p115 = scmp.ne.s32.totalorder %s110, %s112
      %p116 = scmp.eq.s32.totalorder %s24, 0
      %p117 = por %p115, %p116
      %p118 = scmp.ne.s32.totalorder %s110, %s112
      %p119 = scmp.eq.s32.totalorder %s29, 3
      %p120 = por %p118, %p119
      %p121 = scmp.ne.s32.totalorder %s112, %s113
      %p122 = scmp.eq.s32.totalorder %s29, 0
      %p123 = por %p121, %p122
      %p124 = scmp.ne.s32.totalorder %s112, %s113
      %p125 = scmp.eq.s32.totalorder %s30, 3
      %p126 = por %p124, %p125
      %p128 = scmp.ne.s32.totalorder %s113, %s127
      %p129 = scmp.eq.s32.totalorder %s30, 0
      %p130 = por %p128, %p129
      %s132 = sadd.s32 %s131, 1
      %p135 = scmp.eq.s32.totalorder %s24, 3
      %p136 = scmp.ne.s32.totalorder %s131, %s133
      %p137 = scmp.eq.s32.totalorder %s24, 0
      %p138 = por %p136, %p137
      %p139 = scmp.ne.s32.totalorder %s131, %s133
      %p140 = scmp.eq.s32.totalorder %s29, 3
      %p141 = por %p139, %p140
      %p142 = scmp.ne.s32.totalorder %s133, %s134
      %p143 = scmp.eq.s32.totalorder %s29, 0
      %p144 = por %p142, %p143
      %p145 = scmp.ne.s32.totalorder %s133, %s134
      %p146 = scmp.eq.s32.totalorder %s30, 3
      %p147 = por %p145, %p146
      %p149 = scmp.ne.s32.totalorder %s134, %s148
      %p150 = scmp.eq.s32.totalorder %s30, 0
      %p151 = por %p149, %p150
      %s153 = sadd.s32 %s152, 1
      %p156 = scmp.eq.s32.totalorder %s24, 3
      %p157 = scmp.ne.s32.totalorder %s152, %s154
      %p158 = scmp.eq.s32.totalorder %s24, 0
      %p159 = por %p157, %p158
      %p160 = scmp.ne.s32.totalorder %s152, %s154
      %p161 = scmp.eq.s32.totalorder %s29, 3
      %p162 = por %p160, %p161
      %p163 = scmp.ne.s32.totalorder %s154, %s155
      %p164 = scmp.eq.s32.totalorder %s29, 0
      %p165 = por %p163, %p164
      %p166 = scmp.ne.s32.totalorder %s154, %s155
      %p167 = scmp.eq.s32.totalorder %s30, 3
      %p168 = por %p166, %p167
      %p170 = scmp.ne.s32.totalorder %s155, %s169
      %p171 = scmp.eq.s32.totalorder %s30, 0
      %p172 = por %p170, %p171
      %s174 = sadd.s32 %s173, 1
      %p177 = scmp.eq.s32.totalorder %s24, 3
      %p178 = scmp.ne.s32.totalorder %s173, %s175
      %p179 = scmp.eq.s32.totalorder %s24, 0
      %p180 = por %p178, %p179
      %p181 = scmp.ne.s32.totalorder %s173, %s175
      %p182 = scmp.eq.s32.totalorder %s29, 3
      %p183 = por %p181, %p182
      %p184 = scmp.ne.s32.totalorder %s175, %s176
      %p185 = scmp.eq.s32.totalorder %s29, 0
      %p186 = por %p184, %p185
      %p187 = scmp.ne.s32.totalorder %s175, %s176
      %p188 = scmp.eq.s32.totalorder %s30, 3
      %p189 = por %p187, %p188
      %p191 = scmp.ne.s32.totalorder %s176, %s190
      %p192 = scmp.eq.s32.totalorder %s30, 0
      %p193 = por %p191, %p192
      %s195 = sadd.s32 %s194, 1
      %p198 = scmp.eq.s32.totalorder %s24, 3
      %p199 = scmp.ne.s32.totalorder %s194, %s196
      %p200 = scmp.eq.s32.totalorder %s24, 0
      %p201 = por %p199, %p200
      %p202 = scmp.ne.s32.totalorder %s194, %s196
      %p203 = scmp.eq.s32.totalorder %s29, 3
      %p204 = por %p202, %p203
      %p205 = scmp.ne.s32.totalorder %s196, %s197
      %p206 = scmp.eq.s32.totalorder %s29, 0
      %p207 = por %p205, %p206
      %p208 = scmp.ne.s32.totalorder %s196, %s197
      %p209 = scmp.eq.s32.totalorder %s30, 3
      %p210 = por %p208, %p209
      %p212 = scmp.ne.s32.totalorder %s197, %s211
      %p213 = scmp.eq.s32.totalorder %s30, 0
      %p214 = por %p212, %p213
      %s216 = sadd.s32 %s215, 1
      %p219 = scmp.eq.s32.totalorder %s24, 3
      %p220 = scmp.ne.s32.totalorder %s215, %s217
      %p221 = scmp.eq.s32.totalorder %s24, 0
      %p222 = por %p220, %p221
      %p223 = scmp.ne.s32.totalorder %s215, %s217
      %p224 = scmp.eq.s32.totalorder %s29, 3
      %p225 = por %p223, %p224
      %p226 = scmp.ne.s32.totalorder %s217, %s218
      %p227 = scmp.eq.s32.totalorder %s29, 0
      %p228 = por %p226, %p227
      %p229 = scmp.ne.s32.totalorder %s217, %s218
      %p230 = scmp.eq.s32.totalorder %s30, 3
      %p231 = por %p229, %p230
      %p233 = scmp.ne.s32.totalorder %s218, %s232
      %p234 = scmp.eq.s32.totalorder %s30, 0
      %p235 = por %p233, %p234
      %p236 = scmp.le.s32.totalorder 1, %s24
      %p237 = scmp.lt.s32.totalorder %s24, 5
      %p238 = pnand %p236, %p237
      %p239 = pneg %p238
      // Predicated region
      $region9: #{instance_da_forward.1} parent=5 // pred_check
        _
      $region10: #{instance_da_forward.1} parent=5 // pred_check_branch
        %241 = sbr.rel (%p238) target = $region12
      $region11: #{instance_da_forward.1} parent=5 // pred_region
        %s242 = ssub.s32 %s24, 1
        // Predicated region
        $region13: #{instance_da_forward.1} parent=11 // pred_check
          %p243 = pneg %p123
        $region14: #{instance_da_forward.1} parent=11 // pred_check_branch
          %245 = sbr.rel (%p243) target = $region16
        $region15: #{instance_da_forward.1} parent=11 // pred_region
          %247 = vsyncadd [#allocation9], 0
          %s249 = sshll.u32 %s3, 4
          %s250 = int_to_ptr.hbm [resolvable:$true] %s249
          %s251 = sshll.u32 [#allocation10], 4
          %s252 = int_to_ptr.vmem [resolvable:$true] %s251
          %254 = dma.hbm_to_vmem [thread:$0]  %s250, 128, %s252, [#allocation9]
        $region16: #{instance_da_forward.1} parent=11 // pred_fallthru
          _
        // Predicated region
        $region17: #{instance_da_forward.1} parent=11 // pred_check
          %p255 = pneg %p144
        $region18: #{instance_da_forward.1} parent=11 // pred_check_branch
          %257 = sbr.rel (%p255) target = $region20
        $region19: #{instance_da_forward.1} parent=11 // pred_region
          %259 = vsyncadd [#allocation12], 0
          %s261 = sshll.u32 %s4, 4
          %s262 = int_to_ptr.hbm [resolvable:$true] %s261
          %s263 = sshll.u32 [#allocation11], 4
          %s264 = int_to_ptr.vmem [resolvable:$true] %s263
          %266 = dma.hbm_to_vmem [thread:$0]  %s262, 128, %s264, [#allocation12]
        $region20: #{instance_da_forward.1} parent=11 // pred_fallthru
          _
        // Predicated region
        $region21: #{instance_da_forward.1} parent=11 // pred_check
          %p267 = pneg %p165
        $region22: #{instance_da_forward.1} parent=11 // pred_check_branch
          %269 = sbr.rel (%p267) target = $region24
        $region23: #{instance_da_forward.1} parent=11 // pred_region
          %271 = vsyncadd [#allocation12], 0
          %s273 = sshll.u32 %s5, 4
          %s274 = int_to_ptr.hbm [resolvable:$true] %s273
          %s275 = sshll.u32 [#allocation13], 4
          %s276 = int_to_ptr.vmem [resolvable:$true] %s275
          %278 = dma.hbm_to_vmem [thread:$0]  %s274, 128, %s276, [#allocation12]
        $region24: #{instance_da_forward.1} parent=11 // pred_fallthru
          _
        // Predicated region
        $region25: #{instance_da_forward.1} parent=11 // pred_check
          %p279 = pneg %p186
        $region26: #{instance_da_forward.1} parent=11 // pred_check_branch
          %281 = sbr.rel (%p279) target = $region28
        $region27: #{instance_da_forward.1} parent=11 // pred_region
          _
        $region28: #{instance_da_forward.1} parent=11 // pred_fallthru
          _
        // Predicated region
        $region29: #{instance_da_forward.1} parent=11 // pred_check
          %p282 = pneg %p207
        $region30: #{instance_da_forward.1} parent=11 // pred_check_branch
          %284 = sbr.rel (%p282) target = $region32
        $region31: #{instance_da_forward.1} parent=11 // pred_region
          _
        $region32: #{instance_da_forward.1} parent=11 // pred_fallthru
          _
      $region12: #{instance_da_forward.1} parent=5 // pred_fallthru
        _
      %p285 = scmp.lt.s32.totalorder %s24, 4
      // Predicated region
      $region33: #{instance_da_forward.1} parent=5 // pred_check
        %p286 = pneg %p285
      $region34: #{instance_da_forward.1} parent=5 // pred_check_branch
        %288 = sbr.rel (%p286) target = $region36
      $region35: #{instance_da_forward.1} parent=5 // pred_region
        // Predicated region
        $region37: #{instance_da_forward.1} parent=35 // pred_check
          %p289 = pneg %p44
        $region38: #{instance_da_forward.1} parent=35 // pred_check_branch
          %291 = sbr.rel (%p289) target = $region40
        $region39: #{instance_da_forward.1} parent=35 // pred_region
          %s292 = smul.u32 8, %s24
          %p293 = scmp.lt.s32.totalorder %s292, 31
          %s294 = scalar_select %p293, %s292, 31
          %s295 = smul.addr %s294, 4
          %s296 = scalar_lea.vmem %s0, %s295
          %s297 = smul.u32 8, %s24
        $region40: #{instance_da_forward.1} parent=35 // pred_fallthru
          _
        // Predicated region
        $region41: #{instance_da_forward.1} parent=35 // pred_check
          %p298 = pneg %p70
        $region42: #{instance_da_forward.1} parent=35 // pred_check_branch
          %300 = sbr.rel (%p298) target = $region44
        $region43: #{instance_da_forward.1} parent=35 // pred_region
          %s301 = sand.u32 %s60, 1
          %s302 = scalar_lea.sflag [#allocation6], %s301
          %s303 = sand.u32 %s60, 1
          %s304 = smul.addr %s303, 4096
          %s305 = scalar_lea.vmem [#allocation5], %s304
          %s306 = smul.u32 128, %s24
          %308 = vsyncadd %s302, 0
          %s309 = smul.addr %s306, 8
          %s310 = smul.addr %s309, 4
          %s311 = scalar_lea.hbm %s1, %s310
          %s312 = sshll.u32 %s311, 4
          %s313 = int_to_ptr.hbm [resolvable:$true] %s312
          %s314 = sshll.u32 %s305, 4
          %s315 = int_to_ptr.vmem [resolvable:$true] %s314
          %320 = dma.hbm_to_vmem [thread:$0]  %s313, 65536, %s315, %s302, 512, 512, 32
        $region44: #{instance_da_forward.1} parent=35 // pred_fallthru
          _
        // Predicated region
        $region45: #{instance_da_forward.1} parent=35 // pred_check
          %p321 = pneg %p96
        $region46: #{instance_da_forward.1} parent=35 // pred_check_branch
          %323 = sbr.rel (%p321) target = $region48
        $region47: #{instance_da_forward.1} parent=35 // pred_region
          %s324 = sand.u32 %s24, 1
          %s325 = scalar_lea.sflag [#allocation9], %s324
          %s326 = sand.u32 %s86, 1
          %s327 = smul.addr %s326, 1024
          %s328 = scalar_lea.vmem [#allocation8], %s327
          %s329 = smul.u32 32, %s24
          %331 = vsyncadd %s325, 0
          %s332 = smul.addr %s329, 8
          %s333 = smul.addr %s332, 4
          %s334 = scalar_lea.hbm %s2, %s333
          %s335 = sshll.u32 %s334, 4
          %s336 = int_to_ptr.hbm [resolvable:$true] %s335
          %s337 = sshll.u32 %s328, 4
          %s338 = int_to_ptr.vmem [resolvable:$true] %s337
          %343 = dma.hbm_to_vmem [thread:$0]  %s336, 16384, %s338, %s325, 512, 512, 32
        $region48: #{instance_da_forward.1} parent=35 // pred_fallthru
          _
      $region36: #{instance_da_forward.1} parent=5 // pred_fallthru
        _
      %p344 = scmp.le.s32.totalorder 1, %s24
      %p345 = scmp.lt.s32.totalorder %s24, 5
      %p346 = pnand %p344, %p345
      %p347 = pneg %p346
      // Predicated region
      $region49: #{instance_da_forward.1} parent=5 // pred_check
        _
      $region50: #{instance_da_forward.1} parent=5 // pred_check_branch
        %349 = sbr.rel (%p346) target = $region52
      $region51: #{instance_da_forward.1} parent=5 // pred_region
        %s350 = ssub.s32 %s24, 1
        %s351 = sand.u32 %s63, 1
        %s352 = scalar_lea.sflag [#allocation6], %s351
        %s353 = sand.u32 %s63, 1
        %s354 = smul.addr %s353, 4096
        %s355 = scalar_lea.vmem [#allocation5], %s354
        // Predicated region
        $region53: #{instance_da_forward.1} parent=51 // pred_check
          %p356 = pneg %p76
        $region54: #{instance_da_forward.1} parent=51 // pred_check_branch
          %358 = sbr.rel (%p356) target = $region56
        $region55: #{instance_da_forward.1} parent=51 // pred_region
          %360 = dma.done %s352, 65536
        $region56: #{instance_da_forward.1} parent=51 // pred_fallthru
          _
        %s361 = sand.u32 %s29, 1
        %s362 = scalar_lea.sflag [#allocation9], %s361
        %s363 = sand.u32 %s89, 1
        %s364 = smul.addr %s363, 1024
        %s365 = scalar_lea.vmem [#allocation8], %s364
        // Predicated region
        $region57: #{instance_da_forward.1} parent=51 // pred_check
          %p366 = pneg %p102
        $region58: #{instance_da_forward.1} parent=51 // pred_check_branch
          %368 = sbr.rel (%p366) target = $region60
        $region59: #{instance_da_forward.1} parent=51 // pred_region
          %370 = dma.done %s362, 16384
        $region60: #{instance_da_forward.1} parent=51 // pred_fallthru
          _
        // Predicated region
        $region61: #{instance_da_forward.1} parent=51 // pred_check
          %p371 = pneg %p123
        $region62: #{instance_da_forward.1} parent=51 // pred_check_branch
          %373 = sbr.rel (%p371) target = $region64
        $region63: #{instance_da_forward.1} parent=51 // pred_region
          %375 = dma.done [#allocation9], 128
        $region64: #{instance_da_forward.1} parent=51 // pred_fallthru
          _
        // Predicated region
        $region65: #{instance_da_forward.1} parent=51 // pred_check
          %p376 = pneg %p144
        $region66: #{instance_da_forward.1} parent=51 // pred_check_branch
          %378 = sbr.rel (%p376) target = $region68
        $region67: #{instance_da_forward.1} parent=51 // pred_region
          %380 = dma.done [#allocation12], 128
        $region68: #{instance_da_forward.1} parent=51 // pred_fallthru
          _
        // Predicated region
        $region69: #{instance_da_forward.1} parent=51 // pred_check
          %p381 = pneg %p165
        $region70: #{instance_da_forward.1} parent=51 // pred_check_branch
          %383 = sbr.rel (%p381) target = $region72
        $region71: #{instance_da_forward.1} parent=51 // pred_region
          %385 = dma.done [#allocation12], 128
        $region72: #{instance_da_forward.1} parent=51 // pred_fallthru
          _
        %s386 = smul.u32 8, %s29
        %p387 = scmp.lt.s32.totalorder %s386, 31
        %s388 = scalar_select %p387, %s386, 31
        %s389 = smul.addr %s388, 4
        %s390 = scalar_lea.vmem %s0, %s389
        %p391 = pneg %p50
        %p392 = pneg %p47
        %s393 = sand.u32 %s63, 1
        %s394 = scalar_lea.sflag [#allocation6], %s393
        %s395 = sand.u32 %s63, 1
        %s396 = smul.addr %s395, 4096
        %s397 = scalar_lea.vmem [#allocation5], %s396
        %p398 = pneg %p76
        %p399 = pneg %p73
        %s400 = sand.u32 %s29, 1
        %s401 = scalar_lea.sflag [#allocation9], %s400
        %s402 = sand.u32 %s89, 1
        %s403 = smul.addr %s402, 1024
        %s404 = scalar_lea.vmem [#allocation8], %s403
        %p405 = pneg %p102
        %p406 = pneg %p99
        %p407 = pneg %p123
        %p408 = pneg %p120
        %p409 = pneg %p144
        %p410 = pneg %p141
        %p411 = pneg %p165
        %p412 = pneg %p162
        %p413 = pneg %p186
        %p414 = pneg %p183
        %p415 = pneg %p207
        %p416 = pneg %p204
        %p417 = pneg %p228
        %p418 = pneg %p225
        %s419 = smul.u32 8, %s29
        %p420 = scmp.lt.s32.totalorder %s419, 31
        %s421 = scalar_select %p420, %s419, 31
        %s422 = smul.addr %s421, 4
        %s423 = scalar_lea.vmem %s0, %s422
        %s424 = smul.u32 8, %s29
        %s425 = smul.u32 128, %s29
        %s426 = smul.u32 32, %s29
        %p427 = scmp.eq.s32.totalorder %s29, 0
        // Predicated region
        $region73: #{instance_da_forward.1} parent=51 // pred_check
          %p428 = pneg %p427
        $region74: #{instance_da_forward.1} parent=51 // pred_check_branch
          %430 = sbr.rel (%p428) target = $region76
        $region75: #{instance_da_forward.1} parent=51 // pred_region
          %431 = vst [vmem:[#allocation2] sm:$0xff] 0.0
          %432 = vst [vmem:[#allocation2 + $0x8] sm:$0xff] 0.0
          %433 = vst [vmem:[#allocation2 + $0x10] sm:$0xff] 0.0
          %434 = vst [vmem:[#allocation2 + $0x18] sm:$0xff] 0.0
          %435 = vst [vmem:[#allocation2 + $0x20] sm:$0xff] 0.0
          %436 = vst [vmem:[#allocation2 + $0x28] sm:$0xff] 0.0
          %437 = vst [vmem:[#allocation2 + $0x30] sm:$0xff] 0.0
          %438 = vst [vmem:[#allocation2 + $0x38] sm:$0xff] 0.0
        $region76: #{instance_da_forward.1} parent=51 // pred_fallthru
          _
        %s439 = smul.u32 %s29, 256
        %v440 = vld [vmem:[%s365] sm:$0xff]
        %v441 = vld [vmem:[%s365 + $0x8] sm:$0xff]
        %v442 = vld [vmem:[%s365 + $0x10] sm:$0xff]
        %v443 = vld [vmem:[%s365 + $0x18] sm:$0xff]
        %v444 = vld [vmem:[%s365 + $0x20] sm:$0xff]
        %v445 = vld [vmem:[%s365 + $0x28] sm:$0xff]
        %v446 = vld [vmem:[%s365 + $0x30] sm:$0xff]
        %v447 = vld [vmem:[%s365 + $0x38] sm:$0xff]
        %v448 = vld [vmem:[%s365 + $0x40] sm:$0xff]
        %v449 = vld [vmem:[%s365 + $0x48] sm:$0xff]
        %v450 = vld [vmem:[%s365 + $0x50] sm:$0xff]
        %v451 = vld [vmem:[%s365 + $0x58] sm:$0xff]
        %v452 = vld [vmem:[%s365 + $0x60] sm:$0xff]
        %v453 = vld [vmem:[%s365 + $0x68] sm:$0xff]
        %v454 = vld [vmem:[%s365 + $0x70] sm:$0xff]
        %v455 = vld [vmem:[%s365 + $0x78] sm:$0xff]
        %v456 = vld [vmem:[%s365 + $0x80] sm:$0xff]
        %v457 = vld [vmem:[%s365 + $0x88] sm:$0xff]
        %v458 = vld [vmem:[%s365 + $0x90] sm:$0xff]
        %v459 = vld [vmem:[%s365 + $0x98] sm:$0xff]
        %v460 = vld [vmem:[%s365 + $0xa0] sm:$0xff]
        %v461 = vld [vmem:[%s365 + $0xa8] sm:$0xff]
        %v462 = vld [vmem:[%s365 + $0xb0] sm:$0xff]
        %v463 = vld [vmem:[%s365 + $0xb8] sm:$0xff]
        %v464 = vld [vmem:[%s365 + $0xc0] sm:$0xff]
        %v465 = vld [vmem:[%s365 + $0xc8] sm:$0xff]
        %v466 = vld [vmem:[%s365 + $0xd0] sm:$0xff]
        %v467 = vld [vmem:[%s365 + $0xd8] sm:$0xff]
        %v468 = vld [vmem:[%s365 + $0xe0] sm:$0xff]
        %v469 = vld [vmem:[%s365 + $0xe8] sm:$0xff]
        %v470 = vld [vmem:[%s365 + $0xf0] sm:$0xff]
        %v471 = vld [vmem:[%s365 + $0xf8] sm:$0xff]
        %v472 = vld [vmem:[%s365 + $0x100] sm:$0xff]
        %v473 = vld [vmem:[%s365 + $0x108] sm:$0xff]
        %v474 = vld [vmem:[%s365 + $0x110] sm:$0xff]
        %v475 = vld [vmem:[%s365 + $0x118] sm:$0xff]
        %v476 = vld [vmem:[%s365 + $0x120] sm:$0xff]
        %v477 = vld [vmem:[%s365 + $0x128] sm:$0xff]
        %v478 = vld [vmem:[%s365 + $0x130] sm:$0xff]
        %v479 = vld [vmem:[%s365 + $0x138] sm:$0xff]
        %v480 = vld [vmem:[%s365 + $0x140] sm:$0xff]
        %v481 = vld [vmem:[%s365 + $0x148] sm:$0xff]
        %v482 = vld [vmem:[%s365 + $0x150] sm:$0xff]
        %v483 = vld [vmem:[%s365 + $0x158] sm:$0xff]
        %v484 = vld [vmem:[%s365 + $0x160] sm:$0xff]
        %v485 = vld [vmem:[%s365 + $0x168] sm:$0xff]
        %v486 = vld [vmem:[%s365 + $0x170] sm:$0xff]
        %v487 = vld [vmem:[%s365 + $0x178] sm:$0xff]
        %v488 = vld [vmem:[%s365 + $0x180] sm:$0xff]
        %v489 = vld [vmem:[%s365 + $0x188] sm:$0xff]
        %v490 = vld [vmem:[%s365 + $0x190] sm:$0xff]
        %v491 = vld [vmem:[%s365 + $0x198] sm:$0xff]
        %v492 = vld [vmem:[%s365 + $0x1a0] sm:$0xff]
        %v493 = vld [vmem:[%s365 + $0x1a8] sm:$0xff]
        %v494 = vld [vmem:[%s365 + $0x1b0] sm:$0xff]
        %v495 = vld [vmem:[%s365 + $0x1b8] sm:$0xff]
        %v496 = vld [vmem:[%s365 + $0x1c0] sm:$0xff]
        %v497 = vld [vmem:[%s365 + $0x1c8] sm:$0xff]
        %v498 = vld [vmem:[%s365 + $0x1d0] sm:$0xff]
        %v499 = vld [vmem:[%s365 + $0x1d8] sm:$0xff]
        %v500 = vld [vmem:[%s365 + $0x1e0] sm:$0xff]
        %v501 = vld [vmem:[%s365 + $0x1e8] sm:$0xff]
        %v502 = vld [vmem:[%s365 + $0x1f0] sm:$0xff]
        %v503 = vld [vmem:[%s365 + $0x1f8] sm:$0xff]
        %v504 = vld [vmem:[%s365 + $0x200] sm:$0xff]
        %v505 = vld [vmem:[%s365 + $0x208] sm:$0xff]
        %v506 = vld [vmem:[%s365 + $0x210] sm:$0xff]
        %v507 = vld [vmem:[%s365 + $0x218] sm:$0xff]
        %v508 = vld [vmem:[%s365 + $0x220] sm:$0xff]
        %v509 = vld [vmem:[%s365 + $0x228] sm:$0xff]
        %v510 = vld [vmem:[%s365 + $0x230] sm:$0xff]
        %v511 = vld [vmem:[%s365 + $0x238] sm:$0xff]
        %v512 = vld [vmem:[%s365 + $0x240] sm:$0xff]
        %v513 = vld [vmem:[%s365 + $0x248] sm:$0xff]
        %v514 = vld [vmem:[%s365 + $0x250] sm:$0xff]
        %v515 = vld [vmem:[%s365 + $0x258] sm:$0xff]
        %v516 = vld [vmem:[%s365 + $0x260] sm:$0xff]
        %v517 = vld [vmem:[%s365 + $0x268] sm:$0xff]
        %v518 = vld [vmem:[%s365 + $0x270] sm:$0xff]
        %v519 = vld [vmem:[%s365 + $0x278] sm:$0xff]
        %v520 = vld [vmem:[%s365 + $0x280] sm:$0xff]
        %v521 = vld [vmem:[%s365 + $0x288] sm:$0xff]
        %v522 = vld [vmem:[%s365 + $0x290] sm:$0xff]
        %v523 = vld [vmem:[%s365 + $0x298] sm:$0xff]
        %v524 = vld [vmem:[%s365 + $0x2a0] sm:$0xff]
        %v525 = vld [vmem:[%s365 + $0x2a8] sm:$0xff]
        %v526 = vld [vmem:[%s365 + $0x2b0] sm:$0xff]
        %v527 = vld [vmem:[%s365 + $0x2b8] sm:$0xff]
        %v528 = vld [vmem:[%s365 + $0x2c0] sm:$0xff]
        %v529 = vld [vmem:[%s365 + $0x2c8] sm:$0xff]
        %v530 = vld [vmem:[%s365 + $0x2d0] sm:$0xff]
        %v531 = vld [vmem:[%s365 + $0x2d8] sm:$0xff]
        %v532 = vld [vmem:[%s365 + $0x2e0] sm:$0xff]
        %v533 = vld [vmem:[%s365 + $0x2e8] sm:$0xff]
        %v534 = vld [vmem:[%s365 + $0x2f0] sm:$0xff]
        %v535 = vld [vmem:[%s365 + $0x2f8] sm:$0xff]
        %v536 = vld [vmem:[%s365 + $0x300] sm:$0xff]
        %v537 = vld [vmem:[%s365 + $0x308] sm:$0xff]
        %v538 = vld [vmem:[%s365 + $0x310] sm:$0xff]
        %v539 = vld [vmem:[%s365 + $0x318] sm:$0xff]
        %v540 = vld [vmem:[%s365 + $0x320] sm:$0xff]
        %v541 = vld [vmem:[%s365 + $0x328] sm:$0xff]
        %v542 = vld [vmem:[%s365 + $0x330] sm:$0xff]
        %v543 = vld [vmem:[%s365 + $0x338] sm:$0xff]
        %v544 = vld [vmem:[%s365 + $0x340] sm:$0xff]
        %v545 = vld [vmem:[%s365 + $0x348] sm:$0xff]
        %v546 = vld [vmem:[%s365 + $0x350] sm:$0xff]
        %v547 = vld [vmem:[%s365 + $0x358] sm:$0xff]
        %v548 = vld [vmem:[%s365 + $0x360] sm:$0xff]
        %v549 = vld [vmem:[%s365 + $0x368] sm:$0xff]
        %v550 = vld [vmem:[%s365 + $0x370] sm:$0xff]
        %v551 = vld [vmem:[%s365 + $0x378] sm:$0xff]
        %v552 = vld [vmem:[%s365 + $0x380] sm:$0xff]
        %v553 = vld [vmem:[%s365 + $0x388] sm:$0xff]
        %v554 = vld [vmem:[%s365 + $0x390] sm:$0xff]
        %v555 = vld [vmem:[%s365 + $0x398] sm:$0xff]
        %v556 = vld [vmem:[%s365 + $0x3a0] sm:$0xff]
        %v557 = vld [vmem:[%s365 + $0x3a8] sm:$0xff]
        %v558 = vld [vmem:[%s365 + $0x3b0] sm:$0xff]
        %v559 = vld [vmem:[%s365 + $0x3b8] sm:$0xff]
        %v560 = vld [vmem:[%s365 + $0x3c0] sm:$0xff]
        %v561 = vld [vmem:[%s365 + $0x3c8] sm:$0xff]
        %v562 = vld [vmem:[%s365 + $0x3d0] sm:$0xff]
        %v563 = vld [vmem:[%s365 + $0x3d8] sm:$0xff]
        %v564 = vld [vmem:[%s365 + $0x3e0] sm:$0xff]
        %v565 = vld [vmem:[%s365 + $0x3e8] sm:$0xff]
        %v566 = vld [vmem:[%s365 + $0x3f0] sm:$0xff]
        %v567 = vld [vmem:[%s365 + $0x3f8] sm:$0xff]
        %s568 = sshra.s32 %s439, 3
        %s569 = sand.u32 %s439, 7
        %s570 = smul.u32 %s568, 8
        %s571 = smul.addr %s570, 4
        %s572 = scalar_lea.vmem [#allocation3], %s571
        %573 = vst [vmem:[%s572] sm:$0xff] %v440
        %574 = vst [vmem:[%s572 + $0x8] sm:$0xff] %v441
        %575 = vst [vmem:[%s572 + $0x10] sm:$0xff] %v442
        %576 = vst [vmem:[%s572 + $0x18] sm:$0xff] %v443
        %577 = vst [vmem:[%s572 + $0x20] sm:$0xff] %v444
        %578 = vst [vmem:[%s572 + $0x28] sm:$0xff] %v445
        %579 = vst [vmem:[%s572 + $0x30] sm:$0xff] %v446
        %580 = vst [vmem:[%s572 + $0x38] sm:$0xff] %v447
        %581 = vst [vmem:[%s572 + $0x40] sm:$0xff] %v448
        %582 = vst [vmem:[%s572 + $0x48] sm:$0xff] %v449
        %583 = vst [vmem:[%s572 + $0x50] sm:$0xff] %v450
        %584 = vst [vmem:[%s572 + $0x58] sm:$0xff] %v451
        %585 = vst [vmem:[%s572 + $0x60] sm:$0xff] %v452
        %586 = vst [vmem:[%s572 + $0x68] sm:$0xff] %v453
        %587 = vst [vmem:[%s572 + $0x70] sm:$0xff] %v454
        %588 = vst [vmem:[%s572 + $0x78] sm:$0xff] %v455
        %589 = vst [vmem:[%s572 + $0x80] sm:$0xff] %v456
        %590 = vst [vmem:[%s572 + $0x88] sm:$0xff] %v457
        %591 = vst [vmem:[%s572 + $0x90] sm:$0xff] %v458
        %592 = vst [vmem:[%s572 + $0x98] sm:$0xff] %v459
        %593 = vst [vmem:[%s572 + $0xa0] sm:$0xff] %v460
        %594 = vst [vmem:[%s572 + $0xa8] sm:$0xff] %v461
        %595 = vst [vmem:[%s572 + $0xb0] sm:$0xff] %v462
        %596 = vst [vmem:[%s572 + $0xb8] sm:$0xff] %v463
        %597 = vst [vmem:[%s572 + $0xc0] sm:$0xff] %v464
        %598 = vst [vmem:[%s572 + $0xc8] sm:$0xff] %v465
        %599 = vst [vmem:[%s572 + $0xd0] sm:$0xff] %v466
        %600 = vst [vmem:[%s572 + $0xd8] sm:$0xff] %v467
        %601 = vst [vmem:[%s572 + $0xe0] sm:$0xff] %v468
        %602 = vst [vmem:[%s572 + $0xe8] sm:$0xff] %v469
        %603 = vst [vmem:[%s572 + $0xf0] sm:$0xff] %v470
        %604 = vst [vmem:[%s572 + $0xf8] sm:$0xff] %v471
        %605 = vst [vmem:[%s572 + $0x100] sm:$0xff] %v472
        %606 = vst [vmem:[%s572 + $0x108] sm:$0xff] %v473
        %607 = vst [vmem:[%s572 + $0x110] sm:$0xff] %v474
        %608 = vst [vmem:[%s572 + $0x118] sm:$0xff] %v475
        %609 = vst [vmem:[%s572 + $0x120] sm:$0xff] %v476
        %610 = vst [vmem:[%s572 + $0x128] sm:$0xff] %v477
        %611 = vst [vmem:[%s572 + $0x130] sm:$0xff] %v478
        %612 = vst [vmem:[%s572 + $0x138] sm:$0xff] %v479
        %613 = vst [vmem:[%s572 + $0x140] sm:$0xff] %v480
        %614 = vst [vmem:[%s572 + $0x148] sm:$0xff] %v481
        %615 = vst [vmem:[%s572 + $0x150] sm:$0xff] %v482
        %616 = vst [vmem:[%s572 + $0x158] sm:$0xff] %v483
        %617 = vst [vmem:[%s572 + $0x160] sm:$0xff] %v484
        %618 = vst [vmem:[%s572 + $0x168] sm:$0xff] %v485
        %619 = vst [vmem:[%s572 + $0x170] sm:$0xff] %v486
        %620 = vst [vmem:[%s572 + $0x178] sm:$0xff] %v487
        %621 = vst [vmem:[%s572 + $0x180] sm:$0xff] %v488
        %622 = vst [vmem:[%s572 + $0x188] sm:$0xff] %v489
        %623 = vst [vmem:[%s572 + $0x190] sm:$0xff] %v490
        %624 = vst [vmem:[%s572 + $0x198] sm:$0xff] %v491
        %625 = vst [vmem:[%s572 + $0x1a0] sm:$0xff] %v492
        %626 = vst [vmem:[%s572 + $0x1a8] sm:$0xff] %v493
        %627 = vst [vmem:[%s572 + $0x1b0] sm:$0xff] %v494
        %628 = vst [vmem:[%s572 + $0x1b8] sm:$0xff] %v495
        %629 = vst [vmem:[%s572 + $0x1c0] sm:$0xff] %v496
        %630 = vst [vmem:[%s572 + $0x1c8] sm:$0xff] %v497
        %631 = vst [vmem:[%s572 + $0x1d0] sm:$0xff] %v498
        %632 = vst [vmem:[%s572 + $0x1d8] sm:$0xff] %v499
        %633 = vst [vmem:[%s572 + $0x1e0] sm:$0xff] %v500
        %634 = vst [vmem:[%s572 + $0x1e8] sm:$0xff] %v501
        %635 = vst [vmem:[%s572 + $0x1f0] sm:$0xff] %v502
        %636 = vst [vmem:[%s572 + $0x1f8] sm:$0xff] %v503
        %637 = vst [vmem:[%s572 + $0x200] sm:$0xff] %v504
        %638 = vst [vmem:[%s572 + $0x208] sm:$0xff] %v505
        %639 = vst [vmem:[%s572 + $0x210] sm:$0xff] %v506
        %640 = vst [vmem:[%s572 + $0x218] sm:$0xff] %v507
        %641 = vst [vmem:[%s572 + $0x220] sm:$0xff] %v508
        %642 = vst [vmem:[%s572 + $0x228] sm:$0xff] %v509
        %643 = vst [vmem:[%s572 + $0x230] sm:$0xff] %v510
        %644 = vst [vmem:[%s572 + $0x238] sm:$0xff] %v511
        %645 = vst [vmem:[%s572 + $0x240] sm:$0xff] %v512
        %646 = vst [vmem:[%s572 + $0x248] sm:$0xff] %v513
        %647 = vst [vmem:[%s572 + $0x250] sm:$0xff] %v514
        %648 = vst [vmem:[%s572 + $0x258] sm:$0xff] %v515
        %649 = vst [vmem:[%s572 + $0x260] sm:$0xff] %v516
        %650 = vst [vmem:[%s572 + $0x268] sm:$0xff] %v517
        %651 = vst [vmem:[%s572 + $0x270] sm:$0xff] %v518
        %652 = vst [vmem:[%s572 + $0x278] sm:$0xff] %v519
        %653 = vst [vmem:[%s572 + $0x280] sm:$0xff] %v520
        %654 = vst [vmem:[%s572 + $0x288] sm:$0xff] %v521
        %655 = vst [vmem:[%s572 + $0x290] sm:$0xff] %v522
        %656 = vst [vmem:[%s572 + $0x298] sm:$0xff] %v523
        %657 = vst [vmem:[%s572 + $0x2a0] sm:$0xff] %v524
        %658 = vst [vmem:[%s572 + $0x2a8] sm:$0xff] %v525
        %659 = vst [vmem:[%s572 + $0x2b0] sm:$0xff] %v526
        %660 = vst [vmem:[%s572 + $0x2b8] sm:$0xff] %v527
        %661 = vst [vmem:[%s572 + $0x2c0] sm:$0xff] %v528
        %662 = vst [vmem:[%s572 + $0x2c8] sm:$0xff] %v529
        %663 = vst [vmem:[%s572 + $0x2d0] sm:$0xff] %v530
        %664 = vst [vmem:[%s572 + $0x2d8] sm:$0xff] %v531
        %665 = vst [vmem:[%s572 + $0x2e0] sm:$0xff] %v532
        %666 = vst [vmem:[%s572 + $0x2e8] sm:$0xff] %v533
        %667 = vst [vmem:[%s572 + $0x2f0] sm:$0xff] %v534
        %668 = vst [vmem:[%s572 + $0x2f8] sm:$0xff] %v535
        %669 = vst [vmem:[%s572 + $0x300] sm:$0xff] %v536
        %670 = vst [vmem:[%s572 + $0x308] sm:$0xff] %v537
        %671 = vst [vmem:[%s572 + $0x310] sm:$0xff] %v538
        %672 = vst [vmem:[%s572 + $0x318] sm:$0xff] %v539
        %673 = vst [vmem:[%s572 + $0x320] sm:$0xff] %v540
        %674 = vst [vmem:[%s572 + $0x328] sm:$0xff] %v541
        %675 = vst [vmem:[%s572 + $0x330] sm:$0xff] %v542
        %676 = vst [vmem:[%s572 + $0x338] sm:$0xff] %v543
        %677 = vst [vmem:[%s572 + $0x340] sm:$0xff] %v544
        %678 = vst [vmem:[%s572 + $0x348] sm:$0xff] %v545
        %679 = vst [vmem:[%s572 + $0x350] sm:$0xff] %v546
        %680 = vst [vmem:[%s572 + $0x358] sm:$0xff] %v547
        %681 = vst [vmem:[%s572 + $0x360] sm:$0xff] %v548
        %682 = vst [vmem:[%s572 + $0x368] sm:$0xff] %v549
        %683 = vst [vmem:[%s572 + $0x370] sm:$0xff] %v550
        %684 = vst [vmem:[%s572 + $0x378] sm:$0xff] %v551
        %685 = vst [vmem:[%s572 + $0x380] sm:$0xff] %v552
        %686 = vst [vmem:[%s572 + $0x388] sm:$0xff] %v553
        %687 = vst [vmem:[%s572 + $0x390] sm:$0xff] %v554
        %688 = vst [vmem:[%s572 + $0x398] sm:$0xff] %v555
        %689 = vst [vmem:[%s572 + $0x3a0] sm:$0xff] %v556
        %690 = vst [vmem:[%s572 + $0x3a8] sm:$0xff] %v557
        %691 = vst [vmem:[%s572 + $0x3b0] sm:$0xff] %v558
        %692 = vst [vmem:[%s572 + $0x3b8] sm:$0xff] %v559
        %693 = vst [vmem:[%s572 + $0x3c0] sm:$0xff] %v560
        %694 = vst [vmem:[%s572 + $0x3c8] sm:$0xff] %v561
        %695 = vst [vmem:[%s572 + $0x3d0] sm:$0xff] %v562
        %696 = vst [vmem:[%s572 + $0x3d8] sm:$0xff] %v563
        %697 = vst [vmem:[%s572 + $0x3e0] sm:$0xff] %v564
        %698 = vst [vmem:[%s572 + $0x3e8] sm:$0xff] %v565
        %699 = vst [vmem:[%s572 + $0x3f0] sm:$0xff] %v566
        %700 = vst [vmem:[%s572 + $0x3f8] sm:$0xff] %v567
        %v701 = vld [vmem:[#allocation2] sm:$0xff]
        %v702 = vld [vmem:[#allocation2 + $0x8] sm:$0xff]
        %v703 = vld [vmem:[#allocation2 + $0x10] sm:$0xff]
        %v704 = vld [vmem:[#allocation2 + $0x18] sm:$0xff]
        %v705 = vld [vmem:[#allocation2 + $0x20] sm:$0xff]
        %v706 = vld [vmem:[#allocation2 + $0x28] sm:$0xff]
        %v707 = vld [vmem:[#allocation2 + $0x30] sm:$0xff]
        %v708 = vld [vmem:[#allocation2 + $0x38] sm:$0xff]
        %v709 = vld [vmem:[%s423] sm:$0xff]
        %v710 = vld [vmem:[%s423 + $0x8] sm:$0xff]
        %v711 = vld [vmem:[%s423 + $0x10] sm:$0xff]
        %v712 = vld [vmem:[%s423 + $0x18] sm:$0xff]
        %v713 = vld [vmem:[%s355] sm:$0xff]
        %v714 = vld [vmem:[%s355 + $0x8] sm:$0xff]
        %v715 = vld [vmem:[%s355 + $0x10] sm:$0xff]
        %v716 = vld [vmem:[%s355 + $0x18] sm:$0xff]
        %v717 = vld [vmem:[%s355 + $0x20] sm:$0xff]
        %v718 = vld [vmem:[%s355 + $0x28] sm:$0xff]
        %v719 = vld [vmem:[%s355 + $0x30] sm:$0xff]
        %v720 = vld [vmem:[%s355 + $0x38] sm:$0xff]
        %v721 = vld [vmem:[%s355 + $0x40] sm:$0xff]
        %v722 = vld [vmem:[%s355 + $0x48] sm:$0xff]
        %v723 = vld [vmem:[%s355 + $0x50] sm:$0xff]
        %v724 = vld [vmem:[%s355 + $0x58] sm:$0xff]
        %v725 = vld [vmem:[%s355 + $0x60] sm:$0xff]
        %v726 = vld [vmem:[%s355 + $0x68] sm:$0xff]
        %v727 = vld [vmem:[%s355 + $0x70] sm:$0xff]
        %v728 = vld [vmem:[%s355 + $0x78] sm:$0xff]
        %v729 = vld [vmem:[%s355 + $0x80] sm:$0xff]
        %v730 = vld [vmem:[%s355 + $0x88] sm:$0xff]
        %v731 = vld [vmem:[%s355 + $0x90] sm:$0xff]
        %v732 = vld [vmem:[%s355 + $0x98] sm:$0xff]
        %v733 = vld [vmem:[%s355 + $0xa0] sm:$0xff]
        %v734 = vld [vmem:[%s355 + $0xa8] sm:$0xff]
        %v735 = vld [vmem:[%s355 + $0xb0] sm:$0xff]
        %v736 = vld [vmem:[%s355 + $0xb8] sm:$0xff]
        %v737 = vld [vmem:[%s355 + $0xc0] sm:$0xff]
        %v738 = vld [vmem:[%s355 + $0xc8] sm:$0xff]
        %v739 = vld [vmem:[%s355 + $0xd0] sm:$0xff]
        %v740 = vld [vmem:[%s355 + $0xd8] sm:$0xff]
        %v741 = vld [vmem:[%s355 + $0xe0] sm:$0xff]
        %v742 = vld [vmem:[%s355 + $0xe8] sm:$0xff]
        %v743 = vld [vmem:[%s355 + $0xf0] sm:$0xff]
        %v744 = vld [vmem:[%s355 + $0xf8] sm:$0xff]
        %v745 = vld [vmem:[%s355 + $0x100] sm:$0xff]
        %v746 = vld [vmem:[%s355 + $0x108] sm:$0xff]
        %v747 = vld [vmem:[%s355 + $0x110] sm:$0xff]
        %v748 = vld [vmem:[%s355 + $0x118] sm:$0xff]
        %v749 = vld [vmem:[%s355 + $0x120] sm:$0xff]
        %v750 = vld [vmem:[%s355 + $0x128] sm:$0xff]
        %v751 = vld [vmem:[%s355 + $0x130] sm:$0xff]
        %v752 = vld [vmem:[%s355 + $0x138] sm:$0xff]
        %v753 = vld [vmem:[%s355 + $0x140] sm:$0xff]
        %v754 = vld [vmem:[%s355 + $0x148] sm:$0xff]
        %v755 = vld [vmem:[%s355 + $0x150] sm:$0xff]
        %v756 = vld [vmem:[%s355 + $0x158] sm:$0xff]
        %v757 = vld [vmem:[%s355 + $0x160] sm:$0xff]
        %v758 = vld [vmem:[%s355 + $0x168] sm:$0xff]
        %v759 = vld [vmem:[%s355 + $0x170] sm:$0xff]
        %v760 = vld [vmem:[%s355 + $0x178] sm:$0xff]
        %v761 = vld [vmem:[%s355 + $0x180] sm:$0xff]
        %v762 = vld [vmem:[%s355 + $0x188] sm:$0xff]
        %v763 = vld [vmem:[%s355 + $0x190] sm:$0xff]
        %v764 = vld [vmem:[%s355 + $0x198] sm:$0xff]
        %v765 = vld [vmem:[%s355 + $0x1a0] sm:$0xff]
        %v766 = vld [vmem:[%s355 + $0x1a8] sm:$0xff]
        %v767 = vld [vmem:[%s355 + $0x1b0] sm:$0xff]
        %v768 = vld [vmem:[%s355 + $0x1b8] sm:$0xff]
        %v769 = vld [vmem:[%s355 + $0x1c0] sm:$0xff]
        %v770 = vld [vmem:[%s355 + $0x1c8] sm:$0xff]
        %v771 = vld [vmem:[%s355 + $0x1d0] sm:$0xff]
        %v772 = vld [vmem:[%s355 + $0x1d8] sm:$0xff]
        %v773 = vld [vmem:[%s355 + $0x1e0] sm:$0xff]
        %v774 = vld [vmem:[%s355 + $0x1e8] sm:$0xff]
        %v775 = vld [vmem:[%s355 + $0x1f0] sm:$0xff]
        %v776 = vld [vmem:[%s355 + $0x1f8] sm:$0xff]
        %v777 = vld [vmem:[%s355 + $0x200] sm:$0xff]
        %v778 = vld [vmem:[%s355 + $0x208] sm:$0xff]
        %v779 = vld [vmem:[%s355 + $0x210] sm:$0xff]
        %v780 = vld [vmem:[%s355 + $0x218] sm:$0xff]
        %v781 = vld [vmem:[%s355 + $0x220] sm:$0xff]
        %v782 = vld [vmem:[%s355 + $0x228] sm:$0xff]
        %v783 = vld [vmem:[%s355 + $0x230] sm:$0xff]
        %v784 = vld [vmem:[%s355 + $0x238] sm:$0xff]
        %v785 = vld [vmem:[%s355 + $0x240] sm:$0xff]
        %v786 = vld [vmem:[%s355 + $0x248] sm:$0xff]
        %v787 = vld [vmem:[%s355 + $0x250] sm:$0xff]
        %v788 = vld [vmem:[%s355 + $0x258] sm:$0xff]
        %v789 = vld [vmem:[%s355 + $0x260] sm:$0xff]
        %v790 = vld [vmem:[%s355 + $0x268] sm:$0xff]
        %v791 = vld [vmem:[%s355 + $0x270] sm:$0xff]
        %v792 = vld [vmem:[%s355 + $0x278] sm:$0xff]
        %v793 = vld [vmem:[%s355 + $0x280] sm:$0xff]
        %v794 = vld [vmem:[%s355 + $0x288] sm:$0xff]
        %v795 = vld [vmem:[%s355 + $0x290] sm:$0xff]
        %v796 = vld [vmem:[%s355 + $0x298] sm:$0xff]
        %v797 = vld [vmem:[%s355 + $0x2a0] sm:$0xff]
        %v798 = vld [vmem:[%s355 + $0x2a8] sm:$0xff]
        %v799 = vld [vmem:[%s355 + $0x2b0] sm:$0xff]
        %v800 = vld [vmem:[%s355 + $0x2b8] sm:$0xff]
        %v801 = vld [vmem:[%s355 + $0x2c0] sm:$0xff]
        %v802 = vld [vmem:[%s355 + $0x2c8] sm:$0xff]
        %v803 = vld [vmem:[%s355 + $0x2d0] sm:$0xff]
        %v804 = vld [vmem:[%s355 + $0x2d8] sm:$0xff]
        %v805 = vld [vmem:[%s355 + $0x2e0] sm:$0xff]
        %v806 = vld [vmem:[%s355 + $0x2e8] sm:$0xff]
        %v807 = vld [vmem:[%s355 + $0x2f0] sm:$0xff]
        %v808 = vld [vmem:[%s355 + $0x2f8] sm:$0xff]
        %v809 = vld [vmem:[%s355 + $0x300] sm:$0xff]
        %v810 = vld [vmem:[%s355 + $0x308] sm:$0xff]
        %v811 = vld [vmem:[%s355 + $0x310] sm:$0xff]
        %v812 = vld [vmem:[%s355 + $0x318] sm:$0xff]
        %v813 = vld [vmem:[%s355 + $0x320] sm:$0xff]
        %v814 = vld [vmem:[%s355 + $0x328] sm:$0xff]
        %v815 = vld [vmem:[%s355 + $0x330] sm:$0xff]
        %v816 = vld [vmem:[%s355 + $0x338] sm:$0xff]
        %v817 = vld [vmem:[%s355 + $0x340] sm:$0xff]
        %v818 = vld [vmem:[%s355 + $0x348] sm:$0xff]
        %v819 = vld [vmem:[%s355 + $0x350] sm:$0xff]
        %v820 = vld [vmem:[%s355 + $0x358] sm:$0xff]
        %v821 = vld [vmem:[%s355 + $0x360] sm:$0xff]
        %v822 = vld [vmem:[%s355 + $0x368] sm:$0xff]
        %v823 = vld [vmem:[%s355 + $0x370] sm:$0xff]
        %v824 = vld [vmem:[%s355 + $0x378] sm:$0xff]
        %v825 = vld [vmem:[%s355 + $0x380] sm:$0xff]
        %v826 = vld [vmem:[%s355 + $0x388] sm:$0xff]
        %v827 = vld [vmem:[%s355 + $0x390] sm:$0xff]
        %v828 = vld [vmem:[%s355 + $0x398] sm:$0xff]
        %v829 = vld [vmem:[%s355 + $0x3a0] sm:$0xff]
        %v830 = vld [vmem:[%s355 + $0x3a8] sm:$0xff]
        %v831 = vld [vmem:[%s355 + $0x3b0] sm:$0xff]
        %v832 = vld [vmem:[%s355 + $0x3b8] sm:$0xff]
        %v833 = vld [vmem:[%s355 + $0x3c0] sm:$0xff]
        %v834 = vld [vmem:[%s355 + $0x3c8] sm:$0xff]
        %v835 = vld [vmem:[%s355 + $0x3d0] sm:$0xff]
        %v836 = vld [vmem:[%s355 + $0x3d8] sm:$0xff]
        %v837 = vld [vmem:[%s355 + $0x3e0] sm:$0xff]
        %v838 = vld [vmem:[%s355 + $0x3e8] sm:$0xff]
        %v839 = vld [vmem:[%s355 + $0x3f0] sm:$0xff]
        %v840 = vld [vmem:[%s355 + $0x3f8] sm:$0xff]
        %v841 = vld [vmem:[%s355 + $0x400] sm:$0xff]
        %v842 = vld [vmem:[%s355 + $0x408] sm:$0xff]
        %v843 = vld [vmem:[%s355 + $0x410] sm:$0xff]
        %v844 = vld [vmem:[%s355 + $0x418] sm:$0xff]
        %v845 = vld [vmem:[%s355 + $0x420] sm:$0xff]
        %v846 = vld [vmem:[%s355 + $0x428] sm:$0xff]
        %v847 = vld [vmem:[%s355 + $0x430] sm:$0xff]
        %v848 = vld [vmem:[%s355 + $0x438] sm:$0xff]
        %v849 = vld [vmem:[%s355 + $0x440] sm:$0xff]
        %v850 = vld [vmem:[%s355 + $0x448] sm:$0xff]
        %v851 = vld [vmem:[%s355 + $0x450] sm:$0xff]
        %v852 = vld [vmem:[%s355 + $0x458] sm:$0xff]
        %v853 = vld [vmem:[%s355 + $0x460] sm:$0xff]
        %v854 = vld [vmem:[%s355 + $0x468] sm:$0xff]
        %v855 = vld [vmem:[%s355 + $0x470] sm:$0xff]
        %v856 = vld [vmem:[%s355 + $0x478] sm:$0xff]
        %v857 = vld [vmem:[%s355 + $0x480] sm:$0xff]
        %v858 = vld [vmem:[%s355 + $0x488] sm:$0xff]
        %v859 = vld [vmem:[%s355 + $0x490] sm:$0xff]
        %v860 = vld [vmem:[%s355 + $0x498] sm:$0xff]
        %v861 = vld [vmem:[%s355 + $0x4a0] sm:$0xff]
        %v862 = vld [vmem:[%s355 + $0x4a8] sm:$0xff]
        %v863 = vld [vmem:[%s355 + $0x4b0] sm:$0xff]
        %v864 = vld [vmem:[%s355 + $0x4b8] sm:$0xff]
        %v865 = vld [vmem:[%s355 + $0x4c0] sm:$0xff]
        %v866 = vld [vmem:[%s355 + $0x4c8] sm:$0xff]
        %v867 = vld [vmem:[%s355 + $0x4d0] sm:$0xff]
        %v868 = vld [vmem:[%s355 + $0x4d8] sm:$0xff]
        %v869 = vld [vmem:[%s355 + $0x4e0] sm:$0xff]
        %v870 = vld [vmem:[%s355 + $0x4e8] sm:$0xff]
        %v871 = vld [vmem:[%s355 + $0x4f0] sm:$0xff]
        %v872 = vld [vmem:[%s355 + $0x4f8] sm:$0xff]
        %v873 = vld [vmem:[%s355 + $0x500] sm:$0xff]
        %v874 = vld [vmem:[%s355 + $0x508] sm:$0xff]
        %v875 = vld [vmem:[%s355 + $0x510] sm:$0xff]
        %v876 = vld [vmem:[%s355 + $0x518] sm:$0xff]
        %v877 = vld [vmem:[%s355 + $0x520] sm:$0xff]
        %v878 = vld [vmem:[%s355 + $0x528] sm:$0xff]
        %v879 = vld [vmem:[%s355 + $0x530] sm:$0xff]
        %v880 = vld [vmem:[%s355 + $0x538] sm:$0xff]
        %v881 = vld [vmem:[%s355 + $0x540] sm:$0xff]
        %v882 = vld [vmem:[%s355 + $0x548] sm:$0xff]
        %v883 = vld [vmem:[%s355 + $0x550] sm:$0xff]
        %v884 = vld [vmem:[%s355 + $0x558] sm:$0xff]
        %v885 = vld [vmem:[%s355 + $0x560] sm:$0xff]
        %v886 = vld [vmem:[%s355 + $0x568] sm:$0xff]
        %v887 = vld [vmem:[%s355 + $0x570] sm:$0xff]
        %v888 = vld [vmem:[%s355 + $0x578] sm:$0xff]
        %v889 = vld [vmem:[%s355 + $0x580] sm:$0xff]
        %v890 = vld [vmem:[%s355 + $0x588] sm:$0xff]
        %v891 = vld [vmem:[%s355 + $0x590] sm:$0xff]
        %v892 = vld [vmem:[%s355 + $0x598] sm:$0xff]
        %v893 = vld [vmem:[%s355 + $0x5a0] sm:$0xff]
        %v894 = vld [vmem:[%s355 + $0x5a8] sm:$0xff]
        %v895 = vld [vmem:[%s355 + $0x5b0] sm:$0xff]
        %v896 = vld [vmem:[%s355 + $0x5b8] sm:$0xff]
        %v897 = vld [vmem:[%s355 + $0x5c0] sm:$0xff]
        %v898 = vld [vmem:[%s355 + $0x5c8] sm:$0xff]
        %v899 = vld [vmem:[%s355 + $0x5d0] sm:$0xff]
        %v900 = vld [vmem:[%s355 + $0x5d8] sm:$0xff]
        %v901 = vld [vmem:[%s355 + $0x5e0] sm:$0xff]
        %v902 = vld [vmem:[%s355 + $0x5e8] sm:$0xff]
        %v903 = vld [vmem:[%s355 + $0x5f0] sm:$0xff]
        %v904 = vld [vmem:[%s355 + $0x5f8] sm:$0xff]
        %v905 = vld [vmem:[%s355 + $0x600] sm:$0xff]
        %v906 = vld [vmem:[%s355 + $0x608] sm:$0xff]
        %v907 = vld [vmem:[%s355 + $0x610] sm:$0xff]
        %v908 = vld [vmem:[%s355 + $0x618] sm:$0xff]
        %v909 = vld [vmem:[%s355 + $0x620] sm:$0xff]
        %v910 = vld [vmem:[%s355 + $0x628] sm:$0xff]
        %v911 = vld [vmem:[%s355 + $0x630] sm:$0xff]
        %v912 = vld [vmem:[%s355 + $0x638] sm:$0xff]
        %v913 = vld [vmem:[%s355 + $0x640] sm:$0xff]
        %v914 = vld [vmem:[%s355 + $0x648] sm:$0xff]
        %v915 = vld [vmem:[%s355 + $0x650] sm:$0xff]
        %v916 = vld [vmem:[%s355 + $0x658] sm:$0xff]
        %v917 = vld [vmem:[%s355 + $0x660] sm:$0xff]
        %v918 = vld [vmem:[%s355 + $0x668] sm:$0xff]
        %v919 = vld [vmem:[%s355 + $0x670] sm:$0xff]
        %v920 = vld [vmem:[%s355 + $0x678] sm:$0xff]
        %v921 = vld [vmem:[%s355 + $0x680] sm:$0xff]
        %v922 = vld [vmem:[%s355 + $0x688] sm:$0xff]
        %v923 = vld [vmem:[%s355 + $0x690] sm:$0xff]
        %v924 = vld [vmem:[%s355 + $0x698] sm:$0xff]
        %v925 = vld [vmem:[%s355 + $0x6a0] sm:$0xff]
        %v926 = vld [vmem:[%s355 + $0x6a8] sm:$0xff]
        %v927 = vld [vmem:[%s355 + $0x6b0] sm:$0xff]
        %v928 = vld [vmem:[%s355 + $0x6b8] sm:$0xff]
        %v929 = vld [vmem:[%s355 + $0x6c0] sm:$0xff]
        %v930 = vld [vmem:[%s355 + $0x6c8] sm:$0xff]
        %v931 = vld [vmem:[%s355 + $0x6d0] sm:$0xff]
        %v932 = vld [vmem:[%s355 + $0x6d8] sm:$0xff]
        %v933 = vld [vmem:[%s355 + $0x6e0] sm:$0xff]
        %v934 = vld [vmem:[%s355 + $0x6e8] sm:$0xff]
        %v935 = vld [vmem:[%s355 + $0x6f0] sm:$0xff]
        %v936 = vld [vmem:[%s355 + $0x6f8] sm:$0xff]
        %v937 = vld [vmem:[%s355 + $0x700] sm:$0xff]
        %v938 = vld [vmem:[%s355 + $0x708] sm:$0xff]
        %v939 = vld [vmem:[%s355 + $0x710] sm:$0xff]
        %v940 = vld [vmem:[%s355 + $0x718] sm:$0xff]
        %v941 = vld [vmem:[%s355 + $0x720] sm:$0xff]
        %v942 = vld [vmem:[%s355 + $0x728] sm:$0xff]
        %v943 = vld [vmem:[%s355 + $0x730] sm:$0xff]
        %v944 = vld [vmem:[%s355 + $0x738] sm:$0xff]
        %v945 = vld [vmem:[%s355 + $0x740] sm:$0xff]
        %v946 = vld [vmem:[%s355 + $0x748] sm:$0xff]
        %v947 = vld [vmem:[%s355 + $0x750] sm:$0xff]
        %v948 = vld [vmem:[%s355 + $0x758] sm:$0xff]
        %v949 = vld [vmem:[%s355 + $0x760] sm:$0xff]
        %v950 = vld [vmem:[%s355 + $0x768] sm:$0xff]
        %v951 = vld [vmem:[%s355 + $0x770] sm:$0xff]
        %v952 = vld [vmem:[%s355 + $0x778] sm:$0xff]
        %v953 = vld [vmem:[%s355 + $0x780] sm:$0xff]
        %v954 = vld [vmem:[%s355 + $0x788] sm:$0xff]
        %v955 = vld [vmem:[%s355 + $0x790] sm:$0xff]
        %v956 = vld [vmem:[%s355 + $0x798] sm:$0xff]
        %v957 = vld [vmem:[%s355 + $0x7a0] sm:$0xff]
        %v958 = vld [vmem:[%s355 + $0x7a8] sm:$0xff]
        %v959 = vld [vmem:[%s355 + $0x7b0] sm:$0xff]
        %v960 = vld [vmem:[%s355 + $0x7b8] sm:$0xff]
        %v961 = vld [vmem:[%s355 + $0x7c0] sm:$0xff]
        %v962 = vld [vmem:[%s355 + $0x7c8] sm:$0xff]
        %v963 = vld [vmem:[%s355 + $0x7d0] sm:$0xff]
        %v964 = vld [vmem:[%s355 + $0x7d8] sm:$0xff]
        %v965 = vld [vmem:[%s355 + $0x7e0] sm:$0xff]
        %v966 = vld [vmem:[%s355 + $0x7e8] sm:$0xff]
        %v967 = vld [vmem:[%s355 + $0x7f0] sm:$0xff]
        %v968 = vld [vmem:[%s355 + $0x7f8] sm:$0xff]
        %v969 = vld [vmem:[%s355 + $0x800] sm:$0xff]
        %v970 = vld [vmem:[%s355 + $0x808] sm:$0xff]
        %v971 = vld [vmem:[%s355 + $0x810] sm:$0xff]
        %v972 = vld [vmem:[%s355 + $0x818] sm:$0xff]
        %v973 = vld [vmem:[%s355 + $0x820] sm:$0xff]
        %v974 = vld [vmem:[%s355 + $0x828] sm:$0xff]
        %v975 = vld [vmem:[%s355 + $0x830] sm:$0xff]
        %v976 = vld [vmem:[%s355 + $0x838] sm:$0xff]
        %v977 = vld [vmem:[%s355 + $0x840] sm:$0xff]
        %v978 = vld [vmem:[%s355 + $0x848] sm:$0xff]
        %v979 = vld [vmem:[%s355 + $0x850] sm:$0xff]
        %v980 = vld [vmem:[%s355 + $0x858] sm:$0xff]
        %v981 = vld [vmem:[%s355 + $0x860] sm:$0xff]
        %v982 = vld [vmem:[%s355 + $0x868] sm:$0xff]
        %v983 = vld [vmem:[%s355 + $0x870] sm:$0xff]
        %v984 = vld [vmem:[%s355 + $0x878] sm:$0xff]
        %v985 = vld [vmem:[%s355 + $0x880] sm:$0xff]
        %v986 = vld [vmem:[%s355 + $0x888] sm:$0xff]
        %v987 = vld [vmem:[%s355 + $0x890] sm:$0xff]
        %v988 = vld [vmem:[%s355 + $0x898] sm:$0xff]
        %v989 = vld [vmem:[%s355 + $0x8a0] sm:$0xff]
        %v990 = vld [vmem:[%s355 + $0x8a8] sm:$0xff]
        %v991 = vld [vmem:[%s355 + $0x8b0] sm:$0xff]
        %v992 = vld [vmem:[%s355 + $0x8b8] sm:$0xff]
        %v993 = vld [vmem:[%s355 + $0x8c0] sm:$0xff]
        %v994 = vld [vmem:[%s355 + $0x8c8] sm:$0xff]
        %v995 = vld [vmem:[%s355 + $0x8d0] sm:$0xff]
        %v996 = vld [vmem:[%s355 + $0x8d8] sm:$0xff]
        %v997 = vld [vmem:[%s355 + $0x8e0] sm:$0xff]
        %v998 = vld [vmem:[%s355 + $0x8e8] sm:$0xff]
        %v999 = vld [vmem:[%s355 + $0x8f0] sm:$0xff]
        %v1000 = vld [vmem:[%s355 + $0x8f8] sm:$0xff]
        %v1001 = vld [vmem:[%s355 + $0x900] sm:$0xff]
        %v1002 = vld [vmem:[%s355 + $0x908] sm:$0xff]
        %v1003 = vld [vmem:[%s355 + $0x910] sm:$0xff]
        %v1004 = vld [vmem:[%s355 + $0x918] sm:$0xff]
        %v1005 = vld [vmem:[%s355 + $0x920] sm:$0xff]
        %v1006 = vld [vmem:[%s355 + $0x928] sm:$0xff]
        %v1007 = vld [vmem:[%s355 + $0x930] sm:$0xff]
        %v1008 = vld [vmem:[%s355 + $0x938] sm:$0xff]
        %v1009 = vld [vmem:[%s355 + $0x940] sm:$0xff]
        %v1010 = vld [vmem:[%s355 + $0x948] sm:$0xff]
        %v1011 = vld [vmem:[%s355 + $0x950] sm:$0xff]
        %v1012 = vld [vmem:[%s355 + $0x958] sm:$0xff]
        %v1013 = vld [vmem:[%s355 + $0x960] sm:$0xff]
        %v1014 = vld [vmem:[%s355 + $0x968] sm:$0xff]
        %v1015 = vld [vmem:[%s355 + $0x970] sm:$0xff]
        %v1016 = vld [vmem:[%s355 + $0x978] sm:$0xff]
        %v1017 = vld [vmem:[%s355 + $0x980] sm:$0xff]
        %v1018 = vld [vmem:[%s355 + $0x988] sm:$0xff]
        %v1019 = vld [vmem:[%s355 + $0x990] sm:$0xff]
        %v1020 = vld [vmem:[%s355 + $0x998] sm:$0xff]
        %v1021 = vld [vmem:[%s355 + $0x9a0] sm:$0xff]
        %v1022 = vld [vmem:[%s355 + $0x9a8] sm:$0xff]
        %v1023 = vld [vmem:[%s355 + $0x9b0] sm:$0xff]
        %v1024 = vld [vmem:[%s355 + $0x9b8] sm:$0xff]
        %v1025 = vld [vmem:[%s355 + $0x9c0] sm:$0xff]
        %v1026 = vld [vmem:[%s355 + $0x9c8] sm:$0xff]
        %v1027 = vld [vmem:[%s355 + $0x9d0] sm:$0xff]
        %v1028 = vld [vmem:[%s355 + $0x9d8] sm:$0xff]
        %v1029 = vld [vmem:[%s355 + $0x9e0] sm:$0xff]
        %v1030 = vld [vmem:[%s355 + $0x9e8] sm:$0xff]
        %v1031 = vld [vmem:[%s355 + $0x9f0] sm:$0xff]
        %v1032 = vld [vmem:[%s355 + $0x9f8] sm:$0xff]
        %v1033 = vld [vmem:[%s355 + $0xa00] sm:$0xff]
        %v1034 = vld [vmem:[%s355 + $0xa08] sm:$0xff]
        %v1035 = vld [vmem:[%s355 + $0xa10] sm:$0xff]
        %v1036 = vld [vmem:[%s355 + $0xa18] sm:$0xff]
        %v1037 = vld [vmem:[%s355 + $0xa20] sm:$0xff]
        %v1038 = vld [vmem:[%s355 + $0xa28] sm:$0xff]
        %v1039 = vld [vmem:[%s355 + $0xa30] sm:$0xff]
        %v1040 = vld [vmem:[%s355 + $0xa38] sm:$0xff]
        %v1041 = vld [vmem:[%s355 + $0xa40] sm:$0xff]
        %v1042 = vld [vmem:[%s355 + $0xa48] sm:$0xff]
        %v1043 = vld [vmem:[%s355 + $0xa50] sm:$0xff]
        %v1044 = vld [vmem:[%s355 + $0xa58] sm:$0xff]
        %v1045 = vld [vmem:[%s355 + $0xa60] sm:$0xff]
        %v1046 = vld [vmem:[%s355 + $0xa68] sm:$0xff]
        %v1047 = vld [vmem:[%s355 + $0xa70] sm:$0xff]
        %v1048 = vld [vmem:[%s355 + $0xa78] sm:$0xff]
        %v1049 = vld [vmem:[%s355 + $0xa80] sm:$0xff]
        %v1050 = vld [vmem:[%s355 + $0xa88] sm:$0xff]
        %v1051 = vld [vmem:[%s355 + $0xa90] sm:$0xff]
        %v1052 = vld [vmem:[%s355 + $0xa98] sm:$0xff]
        %v1053 = vld [vmem:[%s355 + $0xaa0] sm:$0xff]
        %v1054 = vld [vmem:[%s355 + $0xaa8] sm:$0xff]
        %v1055 = vld [vmem:[%s355 + $0xab0] sm:$0xff]
        %v1056 = vld [vmem:[%s355 + $0xab8] sm:$0xff]
        %v1057 = vld [vmem:[%s355 + $0xac0] sm:$0xff]
        %v1058 = vld [vmem:[%s355 + $0xac8] sm:$0xff]
        %v1059 = vld [vmem:[%s355 + $0xad0] sm:$0xff]
        %v1060 = vld [vmem:[%s355 + $0xad8] sm:$0xff]
        %v1061 = vld [vmem:[%s355 + $0xae0] sm:$0xff]
        %v1062 = vld [vmem:[%s355 + $0xae8] sm:$0xff]
        %v1063 = vld [vmem:[%s355 + $0xaf0] sm:$0xff]
        %v1064 = vld [vmem:[%s355 + $0xaf8] sm:$0xff]
        %v1065 = vld [vmem:[%s355 + $0xb00] sm:$0xff]
        %v1066 = vld [vmem:[%s355 + $0xb08] sm:$0xff]
        %v1067 = vld [vmem:[%s355 + $0xb10] sm:$0xff]
        %v1068 = vld [vmem:[%s355 + $0xb18] sm:$0xff]
        %v1069 = vld [vmem:[%s355 + $0xb20] sm:$0xff]
        %v1070 = vld [vmem:[%s355 + $0xb28] sm:$0xff]
        %v1071 = vld [vmem:[%s355 + $0xb30] sm:$0xff]
        %v1072 = vld [vmem:[%s355 + $0xb38] sm:$0xff]
        %v1073 = vld [vmem:[%s355 + $0xb40] sm:$0xff]
        %v1074 = vld [vmem:[%s355 + $0xb48] sm:$0xff]
        %v1075 = vld [vmem:[%s355 + $0xb50] sm:$0xff]
        %v1076 = vld [vmem:[%s355 + $0xb58] sm:$0xff]
        %v1077 = vld [vmem:[%s355 + $0xb60] sm:$0xff]
        %v1078 = vld [vmem:[%s355 + $0xb68] sm:$0xff]
        %v1079 = vld [vmem:[%s355 + $0xb70] sm:$0xff]
        %v1080 = vld [vmem:[%s355 + $0xb78] sm:$0xff]
        %v1081 = vld [vmem:[%s355 + $0xb80] sm:$0xff]
        %v1082 = vld [vmem:[%s355 + $0xb88] sm:$0xff]
        %v1083 = vld [vmem:[%s355 + $0xb90] sm:$0xff]
        %v1084 = vld [vmem:[%s355 + $0xb98] sm:$0xff]
        %v1085 = vld [vmem:[%s355 + $0xba0] sm:$0xff]
        %v1086 = vld [vmem:[%s355 + $0xba8] sm:$0xff]
        %v1087 = vld [vmem:[%s355 + $0xbb0] sm:$0xff]
        %v1088 = vld [vmem:[%s355 + $0xbb8] sm:$0xff]
        %v1089 = vld [vmem:[%s355 + $0xbc0] sm:$0xff]
        %v1090 = vld [vmem:[%s355 + $0xbc8] sm:$0xff]
        %v1091 = vld [vmem:[%s355 + $0xbd0] sm:$0xff]
        %v1092 = vld [vmem:[%s355 + $0xbd8] sm:$0xff]
        %v1093 = vld [vmem:[%s355 + $0xbe0] sm:$0xff]
        %v1094 = vld [vmem:[%s355 + $0xbe8] sm:$0xff]
        %v1095 = vld [vmem:[%s355 + $0xbf0] sm:$0xff]
        %v1096 = vld [vmem:[%s355 + $0xbf8] sm:$0xff]
        %v1097 = vld [vmem:[%s355 + $0xc00] sm:$0xff]
        %v1098 = vld [vmem:[%s355 + $0xc08] sm:$0xff]
        %v1099 = vld [vmem:[%s355 + $0xc10] sm:$0xff]
        %v1100 = vld [vmem:[%s355 + $0xc18] sm:$0xff]
        %v1101 = vld [vmem:[%s355 + $0xc20] sm:$0xff]
        %v1102 = vld [vmem:[%s355 + $0xc28] sm:$0xff]
        %v1103 = vld [vmem:[%s355 + $0xc30] sm:$0xff]
        %v1104 = vld [vmem:[%s355 + $0xc38] sm:$0xff]
        %v1105 = vld [vmem:[%s355 + $0xc40] sm:$0xff]
        %v1106 = vld [vmem:[%s355 + $0xc48] sm:$0xff]
        %v1107 = vld [vmem:[%s355 + $0xc50] sm:$0xff]
        %v1108 = vld [vmem:[%s355 + $0xc58] sm:$0xff]
        %v1109 = vld [vmem:[%s355 + $0xc60] sm:$0xff]
        %v1110 = vld [vmem:[%s355 + $0xc68] sm:$0xff]
        %v1111 = vld [vmem:[%s355 + $0xc70] sm:$0xff]
        %v1112 = vld [vmem:[%s355 + $0xc78] sm:$0xff]
        %v1113 = vld [vmem:[%s355 + $0xc80] sm:$0xff]
        %v1114 = vld [vmem:[%s355 + $0xc88] sm:$0xff]
        %v1115 = vld [vmem:[%s355 + $0xc90] sm:$0xff]
        %v1116 = vld [vmem:[%s355 + $0xc98] sm:$0xff]
        %v1117 = vld [vmem:[%s355 + $0xca0] sm:$0xff]
        %v1118 = vld [vmem:[%s355 + $0xca8] sm:$0xff]
        %v1119 = vld [vmem:[%s355 + $0xcb0] sm:$0xff]
        %v1120 = vld [vmem:[%s355 + $0xcb8] sm:$0xff]
        %v1121 = vld [vmem:[%s355 + $0xcc0] sm:$0xff]
        %v1122 = vld [vmem:[%s355 + $0xcc8] sm:$0xff]
        %v1123 = vld [vmem:[%s355 + $0xcd0] sm:$0xff]
        %v1124 = vld [vmem:[%s355 + $0xcd8] sm:$0xff]
        %v1125 = vld [vmem:[%s355 + $0xce0] sm:$0xff]
        %v1126 = vld [vmem:[%s355 + $0xce8] sm:$0xff]
        %v1127 = vld [vmem:[%s355 + $0xcf0] sm:$0xff]
        %v1128 = vld [vmem:[%s355 + $0xcf8] sm:$0xff]
        %v1129 = vld [vmem:[%s355 + $0xd00] sm:$0xff]
        %v1130 = vld [vmem:[%s355 + $0xd08] sm:$0xff]
        %v1131 = vld [vmem:[%s355 + $0xd10] sm:$0xff]
        %v1132 = vld [vmem:[%s355 + $0xd18] sm:$0xff]
        %v1133 = vld [vmem:[%s355 + $0xd20] sm:$0xff]
        %v1134 = vld [vmem:[%s355 + $0xd28] sm:$0xff]
        %v1135 = vld [vmem:[%s355 + $0xd30] sm:$0xff]
        %v1136 = vld [vmem:[%s355 + $0xd38] sm:$0xff]
        %v1137 = vld [vmem:[%s355 + $0xd40] sm:$0xff]
        %v1138 = vld [vmem:[%s355 + $0xd48] sm:$0xff]
        %v1139 = vld [vmem:[%s355 + $0xd50] sm:$0xff]
        %v1140 = vld [vmem:[%s355 + $0xd58] sm:$0xff]
        %v1141 = vld [vmem:[%s355 + $0xd60] sm:$0xff]
        %v1142 = vld [vmem:[%s355 + $0xd68] sm:$0xff]
        %v1143 = vld [vmem:[%s355 + $0xd70] sm:$0xff]
        %v1144 = vld [vmem:[%s355 + $0xd78] sm:$0xff]
        %v1145 = vld [vmem:[%s355 + $0xd80] sm:$0xff]
        %v1146 = vld [vmem:[%s355 + $0xd88] sm:$0xff]
        %v1147 = vld [vmem:[%s355 + $0xd90] sm:$0xff]
        %v1148 = vld [vmem:[%s355 + $0xd98] sm:$0xff]
        %v1149 = vld [vmem:[%s355 + $0xda0] sm:$0xff]
        %v1150 = vld [vmem:[%s355 + $0xda8] sm:$0xff]
        %v1151 = vld [vmem:[%s355 + $0xdb0] sm:$0xff]
        %v1152 = vld [vmem:[%s355 + $0xdb8] sm:$0xff]
        %v1153 = vld [vmem:[%s355 + $0xdc0] sm:$0xff]
        %v1154 = vld [vmem:[%s355 + $0xdc8] sm:$0xff]
        %v1155 = vld [vmem:[%s355 + $0xdd0] sm:$0xff]
        %v1156 = vld [vmem:[%s355 + $0xdd8] sm:$0xff]
        %v1157 = vld [vmem:[%s355 + $0xde0] sm:$0xff]
        %v1158 = vld [vmem:[%s355 + $0xde8] sm:$0xff]
        %v1159 = vld [vmem:[%s355 + $0xdf0] sm:$0xff]
        %v1160 = vld [vmem:[%s355 + $0xdf8] sm:$0xff]
        %v1161 = vld [vmem:[%s355 + $0xe00] sm:$0xff]
        %v1162 = vld [vmem:[%s355 + $0xe08] sm:$0xff]
        %v1163 = vld [vmem:[%s355 + $0xe10] sm:$0xff]
        %v1164 = vld [vmem:[%s355 + $0xe18] sm:$0xff]
        %v1165 = vld [vmem:[%s355 + $0xe20] sm:$0xff]
        %v1166 = vld [vmem:[%s355 + $0xe28] sm:$0xff]
        %v1167 = vld [vmem:[%s355 + $0xe30] sm:$0xff]
        %v1168 = vld [vmem:[%s355 + $0xe38] sm:$0xff]
        %v1169 = vld [vmem:[%s355 + $0xe40] sm:$0xff]
        %v1170 = vld [vmem:[%s355 + $0xe48] sm:$0xff]
        %v1171 = vld [vmem:[%s355 + $0xe50] sm:$0xff]
        %v1172 = vld [vmem:[%s355 + $0xe58] sm:$0xff]
        %v1173 = vld [vmem:[%s355 + $0xe60] sm:$0xff]
        %v1174 = vld [vmem:[%s355 + $0xe68] sm:$0xff]
        %v1175 = vld [vmem:[%s355 + $0xe70] sm:$0xff]
        %v1176 = vld [vmem:[%s355 + $0xe78] sm:$0xff]
        %v1177 = vld [vmem:[%s355 + $0xe80] sm:$0xff]
        %v1178 = vld [vmem:[%s355 + $0xe88] sm:$0xff]
        %v1179 = vld [vmem:[%s355 + $0xe90] sm:$0xff]
        %v1180 = vld [vmem:[%s355 + $0xe98] sm:$0xff]
        %v1181 = vld [vmem:[%s355 + $0xea0] sm:$0xff]
        %v1182 = vld [vmem:[%s355 + $0xea8] sm:$0xff]
        %v1183 = vld [vmem:[%s355 + $0xeb0] sm:$0xff]
        %v1184 = vld [vmem:[%s355 + $0xeb8] sm:$0xff]
        %v1185 = vld [vmem:[%s355 + $0xec0] sm:$0xff]
        %v1186 = vld [vmem:[%s355 + $0xec8] sm:$0xff]
        %v1187 = vld [vmem:[%s355 + $0xed0] sm:$0xff]
        %v1188 = vld [vmem:[%s355 + $0xed8] sm:$0xff]
        %v1189 = vld [vmem:[%s355 + $0xee0] sm:$0xff]
        %v1190 = vld [vmem:[%s355 + $0xee8] sm:$0xff]
        %v1191 = vld [vmem:[%s355 + $0xef0] sm:$0xff]
        %v1192 = vld [vmem:[%s355 + $0xef8] sm:$0xff]
        %v1193 = vld [vmem:[%s355 + $0xf00] sm:$0xff]
        %v1194 = vld [vmem:[%s355 + $0xf08] sm:$0xff]
        %v1195 = vld [vmem:[%s355 + $0xf10] sm:$0xff]
        %v1196 = vld [vmem:[%s355 + $0xf18] sm:$0xff]
        %v1197 = vld [vmem:[%s355 + $0xf20] sm:$0xff]
        %v1198 = vld [vmem:[%s355 + $0xf28] sm:$0xff]
        %v1199 = vld [vmem:[%s355 + $0xf30] sm:$0xff]
        %v1200 = vld [vmem:[%s355 + $0xf38] sm:$0xff]
        %v1201 = vld [vmem:[%s355 + $0xf40] sm:$0xff]
        %v1202 = vld [vmem:[%s355 + $0xf48] sm:$0xff]
        %v1203 = vld [vmem:[%s355 + $0xf50] sm:$0xff]
        %v1204 = vld [vmem:[%s355 + $0xf58] sm:$0xff]
        %v1205 = vld [vmem:[%s355 + $0xf60] sm:$0xff]
        %v1206 = vld [vmem:[%s355 + $0xf68] sm:$0xff]
        %v1207 = vld [vmem:[%s355 + $0xf70] sm:$0xff]
        %v1208 = vld [vmem:[%s355 + $0xf78] sm:$0xff]
        %v1209 = vld [vmem:[%s355 + $0xf80] sm:$0xff]
        %v1210 = vld [vmem:[%s355 + $0xf88] sm:$0xff]
        %v1211 = vld [vmem:[%s355 + $0xf90] sm:$0xff]
        %v1212 = vld [vmem:[%s355 + $0xf98] sm:$0xff]
        %v1213 = vld [vmem:[%s355 + $0xfa0] sm:$0xff]
        %v1214 = vld [vmem:[%s355 + $0xfa8] sm:$0xff]
        %v1215 = vld [vmem:[%s355 + $0xfb0] sm:$0xff]
        %v1216 = vld [vmem:[%s355 + $0xfb8] sm:$0xff]
        %v1217 = vld [vmem:[%s355 + $0xfc0] sm:$0xff]
        %v1218 = vld [vmem:[%s355 + $0xfc8] sm:$0xff]
        %v1219 = vld [vmem:[%s355 + $0xfd0] sm:$0xff]
        %v1220 = vld [vmem:[%s355 + $0xfd8] sm:$0xff]
        %v1221 = vld [vmem:[%s355 + $0xfe0] sm:$0xff]
        %v1222 = vld [vmem:[%s355 + $0xfe8] sm:$0xff]
        %v1223 = vld [vmem:[%s355 + $0xff0] sm:$0xff]
        %v1224 = vld [vmem:[%s355 + $0xff8] sm:$0xff]
        %v1229 = vunpack.c.l.b16 %v709
        %v1230 = vunpack.c.h.b16 %v709
        %v1231 = vunpack.c.l.b16 %v710
        %v1232 = vunpack.c.h.b16 %v710
        %v1233 = vunpack.c.l.b16 %v711
        %v1234 = vunpack.c.h.b16 %v711
        %v1235 = vunpack.c.l.b16 %v712
        %v1236 = vunpack.c.h.b16 %v712
        %v1237 = vpack.c.b16 %v1229, %v1229
        %v1238 = vpack.c.b16 %v1230, %v1230
        %v1239 = vpack.c.b16 %v1231, %v1231
        %v1240 = vpack.c.b16 %v1232, %v1232
        %v1241 = vpack.c.b16 %v1233, %v1233
        %v1242 = vpack.c.b16 %v1234, %v1234
        %v1243 = vpack.c.b16 %v1235, %v1235
        %v1244 = vpack.c.b16 %v1236, %v1236
        %v1765 = vunpack.c.l.b16 %v713
        %v1766 = vunpack.c.h.b16 %v713
        %v1767 = vunpack.c.l.b16 %v714
        %v1768 = vunpack.c.h.b16 %v714
        %v1769 = vunpack.c.l.b16 %v715
        %v1770 = vunpack.c.h.b16 %v715
        %v1771 = vunpack.c.l.b16 %v716
        %v1772 = vunpack.c.h.b16 %v716
        %v1773 = vunpack.c.l.b16 %v717
        %v1774 = vunpack.c.h.b16 %v717
        %v1775 = vunpack.c.l.b16 %v718
        %v1776 = vunpack.c.h.b16 %v718
        %v1777 = vunpack.c.l.b16 %v719
        %v1778 = vunpack.c.h.b16 %v719
        %v1779 = vunpack.c.l.b16 %v720
        %v1780 = vunpack.c.h.b16 %v720
        %v1781 = vunpack.c.l.b16 %v721
        %v1782 = vunpack.c.h.b16 %v721
        %v1783 = vunpack.c.l.b16 %v722
        %v1784 = vunpack.c.h.b16 %v722
        %v1785 = vunpack.c.l.b16 %v723
        %v1786 = vunpack.c.h.b16 %v723
        %v1787 = vunpack.c.l.b16 %v724
        %v1788 = vunpack.c.h.b16 %v724
        %v1789 = vunpack.c.l.b16 %v725
        %v1790 = vunpack.c.h.b16 %v725
        %v1791 = vunpack.c.l.b16 %v726
        %v1792 = vunpack.c.h.b16 %v726
        %v1793 = vunpack.c.l.b16 %v727
        %v1794 = vunpack.c.h.b16 %v727
        %v1795 = vunpack.c.l.b16 %v728
        %v1796 = vunpack.c.h.b16 %v728
        %v1797 = vunpack.c.l.b16 %v729
        %v1798 = vunpack.c.h.b16 %v729
        %v1799 = vunpack.c.l.b16 %v730
        %v1800 = vunpack.c.h.b16 %v730
        %v1801 = vunpack.c.l.b16 %v731
        %v1802 = vunpack.c.h.b16 %v731
        %v1803 = vunpack.c.l.b16 %v732
        %v1804 = vunpack.c.h.b16 %v732
        %v1805 = vunpack.c.l.b16 %v733
        %v1806 = vunpack.c.h.b16 %v733
        %v1807 = vunpack.c.l.b16 %v734
        %v1808 = vunpack.c.h.b16 %v734
        %v1809 = vunpack.c.l.b16 %v735
        %v1810 = vunpack.c.h.b16 %v735
        %v1811 = vunpack.c.l.b16 %v736
        %v1812 = vunpack.c.h.b16 %v736
        %v1813 = vunpack.c.l.b16 %v737
        %v1814 = vunpack.c.h.b16 %v737
        %v1815 = vunpack.c.l.b16 %v738
        %v1816 = vunpack.c.h.b16 %v738
        %v1817 = vunpack.c.l.b16 %v739
        %v1818 = vunpack.c.h.b16 %v739
        %v1819 = vunpack.c.l.b16 %v740
        %v1820 = vunpack.c.h.b16 %v740
        %v1821 = vunpack.c.l.b16 %v741
        %v1822 = vunpack.c.h.b16 %v741
        %v1823 = vunpack.c.l.b16 %v742
        %v1824 = vunpack.c.h.b16 %v742
        %v1825 = vunpack.c.l.b16 %v743
        %v1826 = vunpack.c.h.b16 %v743
        %v1827 = vunpack.c.l.b16 %v744
        %v1828 = vunpack.c.h.b16 %v744
        %v1829 = vunpack.c.l.b16 %v745
        %v1830 = vunpack.c.h.b16 %v745
        %v1831 = vunpack.c.l.b16 %v746
        %v1832 = vunpack.c.h.b16 %v746
        %v1833 = vunpack.c.l.b16 %v747
        %v1834 = vunpack.c.h.b16 %v747
        %v1835 = vunpack.c.l.b16 %v748
        %v1836 = vunpack.c.h.b16 %v748
        %v1837 = vunpack.c.l.b16 %v749
        %v1838 = vunpack.c.h.b16 %v749
        %v1839 = vunpack.c.l.b16 %v750
        %v1840 = vunpack.c.h.b16 %v750
        %v1841 = vunpack.c.l.b16 %v751
        %v1842 = vunpack.c.h.b16 %v751
        %v1843 = vunpack.c.l.b16 %v752
        %v1844 = vunpack.c.h.b16 %v752
        %v1845 = vunpack.c.l.b16 %v753
        %v1846 = vunpack.c.h.b16 %v753
        %v1847 = vunpack.c.l.b16 %v754
        %v1848 = vunpack.c.h.b16 %v754
        %v1849 = vunpack.c.l.b16 %v755
        %v1850 = vunpack.c.h.b16 %v755
        %v1851 = vunpack.c.l.b16 %v756
        %v1852 = vunpack.c.h.b16 %v756
        %v1853 = vunpack.c.l.b16 %v757
        %v1854 = vunpack.c.h.b16 %v757
        %v1855 = vunpack.c.l.b16 %v758
        %v1856 = vunpack.c.h.b16 %v758
        %v1857 = vunpack.c.l.b16 %v759
        %v1858 = vunpack.c.h.b16 %v759
        %v1859 = vunpack.c.l.b16 %v760
        %v1860 = vunpack.c.h.b16 %v760
        %v1861 = vunpack.c.l.b16 %v761
        %v1862 = vunpack.c.h.b16 %v761
        %v1863 = vunpack.c.l.b16 %v762
        %v1864 = vunpack.c.h.b16 %v762
        %v1865 = vunpack.c.l.b16 %v763
        %v1866 = vunpack.c.h.b16 %v763
        %v1867 = vunpack.c.l.b16 %v764
        %v1868 = vunpack.c.h.b16 %v764
        %v1869 = vunpack.c.l.b16 %v765
        %v1870 = vunpack.c.h.b16 %v765
        %v1871 = vunpack.c.l.b16 %v766
        %v1872 = vunpack.c.h.b16 %v766
        %v1873 = vunpack.c.l.b16 %v767
        %v1874 = vunpack.c.h.b16 %v767
        %v1875 = vunpack.c.l.b16 %v768
        %v1876 = vunpack.c.h.b16 %v768
        %v1877 = vunpack.c.l.b16 %v769
        %v1878 = vunpack.c.h.b16 %v769
        %v1879 = vunpack.c.l.b16 %v770
        %v1880 = vunpack.c.h.b16 %v770
        %v1881 = vunpack.c.l.b16 %v771
        %v1882 = vunpack.c.h.b16 %v771
        %v1883 = vunpack.c.l.b16 %v772
        %v1884 = vunpack.c.h.b16 %v772
        %v1885 = vunpack.c.l.b16 %v773
        %v1886 = vunpack.c.h.b16 %v773
        %v1887 = vunpack.c.l.b16 %v774
        %v1888 = vunpack.c.h.b16 %v774
        %v1889 = vunpack.c.l.b16 %v775
        %v1890 = vunpack.c.h.b16 %v775
        %v1891 = vunpack.c.l.b16 %v776
        %v1892 = vunpack.c.h.b16 %v776
        %v1893 = vunpack.c.l.b16 %v777
        %v1894 = vunpack.c.h.b16 %v777
        %v1895 = vunpack.c.l.b16 %v778
        %v1896 = vunpack.c.h.b16 %v778
        %v1897 = vunpack.c.l.b16 %v779
        %v1898 = vunpack.c.h.b16 %v779
        %v1899 = vunpack.c.l.b16 %v780
        %v1900 = vunpack.c.h.b16 %v780
        %v1901 = vunpack.c.l.b16 %v781
        %v1902 = vunpack.c.h.b16 %v781
        %v1903 = vunpack.c.l.b16 %v782
        %v1904 = vunpack.c.h.b16 %v782
        %v1905 = vunpack.c.l.b16 %v783
        %v1906 = vunpack.c.h.b16 %v783
        %v1907 = vunpack.c.l.b16 %v784
        %v1908 = vunpack.c.h.b16 %v784
        %v1909 = vunpack.c.l.b16 %v785
        %v1910 = vunpack.c.h.b16 %v785
        %v1911 = vunpack.c.l.b16 %v786
        %v1912 = vunpack.c.h.b16 %v786
        %v1913 = vunpack.c.l.b16 %v787
        %v1914 = vunpack.c.h.b16 %v787
        %v1915 = vunpack.c.l.b16 %v788
        %v1916 = vunpack.c.h.b16 %v788
        %v1917 = vunpack.c.l.b16 %v789
        %v1918 = vunpack.c.h.b16 %v789
        %v1919 = vunpack.c.l.b16 %v790
        %v1920 = vunpack.c.h.b16 %v790
        %v1921 = vunpack.c.l.b16 %v791
        %v1922 = vunpack.c.h.b16 %v791
        %v1923 = vunpack.c.l.b16 %v792
        %v1924 = vunpack.c.h.b16 %v792
        %v1925 = vunpack.c.l.b16 %v793
        %v1926 = vunpack.c.h.b16 %v793
        %v1927 = vunpack.c.l.b16 %v794
        %v1928 = vunpack.c.h.b16 %v794
        %v1929 = vunpack.c.l.b16 %v795
        %v1930 = vunpack.c.h.b16 %v795
        %v1931 = vunpack.c.l.b16 %v796
        %v1932 = vunpack.c.h.b16 %v796
        %v1933 = vunpack.c.l.b16 %v797
        %v1934 = vunpack.c.h.b16 %v797
        %v1935 = vunpack.c.l.b16 %v798
        %v1936 = vunpack.c.h.b16 %v798
        %v1937 = vunpack.c.l.b16 %v799
        %v1938 = vunpack.c.h.b16 %v799
        %v1939 = vunpack.c.l.b16 %v800
        %v1940 = vunpack.c.h.b16 %v800
        %v1941 = vunpack.c.l.b16 %v801
        %v1942 = vunpack.c.h.b16 %v801
        %v1943 = vunpack.c.l.b16 %v802
        %v1944 = vunpack.c.h.b16 %v802
        %v1945 = vunpack.c.l.b16 %v803
        %v1946 = vunpack.c.h.b16 %v803
        %v1947 = vunpack.c.l.b16 %v804
        %v1948 = vunpack.c.h.b16 %v804
        %v1949 = vunpack.c.l.b16 %v805
        %v1950 = vunpack.c.h.b16 %v805
        %v1951 = vunpack.c.l.b16 %v806
        %v1952 = vunpack.c.h.b16 %v806
        %v1953 = vunpack.c.l.b16 %v807
        %v1954 = vunpack.c.h.b16 %v807
        %v1955 = vunpack.c.l.b16 %v808
        %v1956 = vunpack.c.h.b16 %v808
        %v1957 = vunpack.c.l.b16 %v809
        %v1958 = vunpack.c.h.b16 %v809
        %v1959 = vunpack.c.l.b16 %v810
        %v1960 = vunpack.c.h.b16 %v810
        %v1961 = vunpack.c.l.b16 %v811
        %v1962 = vunpack.c.h.b16 %v811
        %v1963 = vunpack.c.l.b16 %v812
        %v1964 = vunpack.c.h.b16 %v812
        %v1965 = vunpack.c.l.b16 %v813
        %v1966 = vunpack.c.h.b16 %v813
        %v1967 = vunpack.c.l.b16 %v814
        %v1968 = vunpack.c.h.b16 %v814
        %v1969 = vunpack.c.l.b16 %v815
        %v1970 = vunpack.c.h.b16 %v815
        %v1971 = vunpack.c.l.b16 %v816
        %v1972 = vunpack.c.h.b16 %v816
        %v1973 = vunpack.c.l.b16 %v817
        %v1974 = vunpack.c.h.b16 %v817
        %v1975 = vunpack.c.l.b16 %v818
        %v1976 = vunpack.c.h.b16 %v818
        %v1977 = vunpack.c.l.b16 %v819
        %v1978 = vunpack.c.h.b16 %v819
        %v1979 = vunpack.c.l.b16 %v820
        %v1980 = vunpack.c.h.b16 %v820
        %v1981 = vunpack.c.l.b16 %v821
        %v1982 = vunpack.c.h.b16 %v821
        %v1983 = vunpack.c.l.b16 %v822
        %v1984 = vunpack.c.h.b16 %v822
        %v1985 = vunpack.c.l.b16 %v823
        %v1986 = vunpack.c.h.b16 %v823
        %v1987 = vunpack.c.l.b16 %v824
        %v1988 = vunpack.c.h.b16 %v824
        %v1989 = vunpack.c.l.b16 %v825
        %v1990 = vunpack.c.h.b16 %v825
        %v1991 = vunpack.c.l.b16 %v826
        %v1992 = vunpack.c.h.b16 %v826
        %v1993 = vunpack.c.l.b16 %v827
        %v1994 = vunpack.c.h.b16 %v827
        %v1995 = vunpack.c.l.b16 %v828
        %v1996 = vunpack.c.h.b16 %v828
        %v1997 = vunpack.c.l.b16 %v829
        %v1998 = vunpack.c.h.b16 %v829
        %v1999 = vunpack.c.l.b16 %v830
        %v2000 = vunpack.c.h.b16 %v830
        %v2001 = vunpack.c.l.b16 %v831
        %v2002 = vunpack.c.h.b16 %v831
        %v2003 = vunpack.c.l.b16 %v832
        %v2004 = vunpack.c.h.b16 %v832
        %v2005 = vunpack.c.l.b16 %v833
        %v2006 = vunpack.c.h.b16 %v833
        %v2007 = vunpack.c.l.b16 %v834
        %v2008 = vunpack.c.h.b16 %v834
        %v2009 = vunpack.c.l.b16 %v835
        %v2010 = vunpack.c.h.b16 %v835
        %v2011 = vunpack.c.l.b16 %v836
        %v2012 = vunpack.c.h.b16 %v836
        %v2013 = vunpack.c.l.b16 %v837
        %v2014 = vunpack.c.h.b16 %v837
        %v2015 = vunpack.c.l.b16 %v838
        %v2016 = vunpack.c.h.b16 %v838
        %v2017 = vunpack.c.l.b16 %v839
        %v2018 = vunpack.c.h.b16 %v839
        %v2019 = vunpack.c.l.b16 %v840
        %v2020 = vunpack.c.h.b16 %v840
        %v2021 = vunpack.c.l.b16 %v841
        %v2022 = vunpack.c.h.b16 %v841
        %v2023 = vunpack.c.l.b16 %v842
        %v2024 = vunpack.c.h.b16 %v842
        %v2025 = vunpack.c.l.b16 %v843
        %v2026 = vunpack.c.h.b16 %v843
        %v2027 = vunpack.c.l.b16 %v844
        %v2028 = vunpack.c.h.b16 %v844
        %v2029 = vunpack.c.l.b16 %v845
        %v2030 = vunpack.c.h.b16 %v845
        %v2031 = vunpack.c.l.b16 %v846
        %v2032 = vunpack.c.h.b16 %v846
        %v2033 = vunpack.c.l.b16 %v847
        %v2034 = vunpack.c.h.b16 %v847
        %v2035 = vunpack.c.l.b16 %v848
        %v2036 = vunpack.c.h.b16 %v848
        %v2037 = vunpack.c.l.b16 %v849
        %v2038 = vunpack.c.h.b16 %v849
        %v2039 = vunpack.c.l.b16 %v850
        %v2040 = vunpack.c.h.b16 %v850
        %v2041 = vunpack.c.l.b16 %v851
        %v2042 = vunpack.c.h.b16 %v851
        %v2043 = vunpack.c.l.b16 %v852
        %v2044 = vunpack.c.h.b16 %v852
        %v2045 = vunpack.c.l.b16 %v853
        %v2046 = vunpack.c.h.b16 %v853
        %v2047 = vunpack.c.l.b16 %v854
        %v2048 = vunpack.c.h.b16 %v854
        %v2049 = vunpack.c.l.b16 %v855
        %v2050 = vunpack.c.h.b16 %v855
        %v2051 = vunpack.c.l.b16 %v856
        %v2052 = vunpack.c.h.b16 %v856
        %v2053 = vunpack.c.l.b16 %v857
        %v2054 = vunpack.c.h.b16 %v857
        %v2055 = vunpack.c.l.b16 %v858
        %v2056 = vunpack.c.h.b16 %v858
        %v2057 = vunpack.c.l.b16 %v859
        %v2058 = vunpack.c.h.b16 %v859
        %v2059 = vunpack.c.l.b16 %v860
        %v2060 = vunpack.c.h.b16 %v860
        %v2061 = vunpack.c.l.b16 %v861
        %v2062 = vunpack.c.h.b16 %v861
        %v2063 = vunpack.c.l.b16 %v862
        %v2064 = vunpack.c.h.b16 %v862
        %v2065 = vunpack.c.l.b16 %v863
        %v2066 = vunpack.c.h.b16 %v863
        %v2067 = vunpack.c.l.b16 %v864
        %v2068 = vunpack.c.h.b16 %v864
        %v2069 = vunpack.c.l.b16 %v865
        %v2070 = vunpack.c.h.b16 %v865
        %v2071 = vunpack.c.l.b16 %v866
        %v2072 = vunpack.c.h.b16 %v866
        %v2073 = vunpack.c.l.b16 %v867
        %v2074 = vunpack.c.h.b16 %v867
        %v2075 = vunpack.c.l.b16 %v868
        %v2076 = vunpack.c.h.b16 %v868
        %v2077 = vunpack.c.l.b16 %v869
        %v2078 = vunpack.c.h.b16 %v869
        %v2079 = vunpack.c.l.b16 %v870
        %v2080 = vunpack.c.h.b16 %v870
        %v2081 = vunpack.c.l.b16 %v871
        %v2082 = vunpack.c.h.b16 %v871
        %v2083 = vunpack.c.l.b16 %v872
        %v2084 = vunpack.c.h.b16 %v872
        %v2085 = vunpack.c.l.b16 %v873
        %v2086 = vunpack.c.h.b16 %v873
        %v2087 = vunpack.c.l.b16 %v874
        %v2088 = vunpack.c.h.b16 %v874
        %v2089 = vunpack.c.l.b16 %v875
        %v2090 = vunpack.c.h.b16 %v875
        %v2091 = vunpack.c.l.b16 %v876
        %v2092 = vunpack.c.h.b16 %v876
        %v2093 = vunpack.c.l.b16 %v877
        %v2094 = vunpack.c.h.b16 %v877
        %v2095 = vunpack.c.l.b16 %v878
        %v2096 = vunpack.c.h.b16 %v878
        %v2097 = vunpack.c.l.b16 %v879
        %v2098 = vunpack.c.h.b16 %v879
        %v2099 = vunpack.c.l.b16 %v880
        %v2100 = vunpack.c.h.b16 %v880
        %v2101 = vunpack.c.l.b16 %v881
        %v2102 = vunpack.c.h.b16 %v881
        %v2103 = vunpack.c.l.b16 %v882
        %v2104 = vunpack.c.h.b16 %v882
        %v2105 = vunpack.c.l.b16 %v883
        %v2106 = vunpack.c.h.b16 %v883
        %v2107 = vunpack.c.l.b16 %v884
        %v2108 = vunpack.c.h.b16 %v884
        %v2109 = vunpack.c.l.b16 %v885
        %v2110 = vunpack.c.h.b16 %v885
        %v2111 = vunpack.c.l.b16 %v886
        %v2112 = vunpack.c.h.b16 %v886
        %v2113 = vunpack.c.l.b16 %v887
        %v2114 = vunpack.c.h.b16 %v887
        %v2115 = vunpack.c.l.b16 %v888
        %v2116 = vunpack.c.h.b16 %v888
        %v2117 = vunpack.c.l.b16 %v889
        %v2118 = vunpack.c.h.b16 %v889
        %v2119 = vunpack.c.l.b16 %v890
        %v2120 = vunpack.c.h.b16 %v890
        %v2121 = vunpack.c.l.b16 %v891
        %v2122 = vunpack.c.h.b16 %v891
        %v2123 = vunpack.c.l.b16 %v892
        %v2124 = vunpack.c.h.b16 %v892
        %v2125 = vunpack.c.l.b16 %v893
        %v2126 = vunpack.c.h.b16 %v893
        %v2127 = vunpack.c.l.b16 %v894
        %v2128 = vunpack.c.h.b16 %v894
        %v2129 = vunpack.c.l.b16 %v895
        %v2130 = vunpack.c.h.b16 %v895
        %v2131 = vunpack.c.l.b16 %v896
        %v2132 = vunpack.c.h.b16 %v896
        %v2133 = vunpack.c.l.b16 %v897
        %v2134 = vunpack.c.h.b16 %v897
        %v2135 = vunpack.c.l.b16 %v898
        %v2136 = vunpack.c.h.b16 %v898
        %v2137 = vunpack.c.l.b16 %v899
        %v2138 = vunpack.c.h.b16 %v899
        %v2139 = vunpack.c.l.b16 %v900
        %v2140 = vunpack.c.h.b16 %v900
        %v2141 = vunpack.c.l.b16 %v901
        %v2142 = vunpack.c.h.b16 %v901
        %v2143 = vunpack.c.l.b16 %v902
        %v2144 = vunpack.c.h.b16 %v902
        %v2145 = vunpack.c.l.b16 %v903
        %v2146 = vunpack.c.h.b16 %v903
        %v2147 = vunpack.c.l.b16 %v904
        %v2148 = vunpack.c.h.b16 %v904
        %v2149 = vunpack.c.l.b16 %v905
        %v2150 = vunpack.c.h.b16 %v905
        %v2151 = vunpack.c.l.b16 %v906
        %v2152 = vunpack.c.h.b16 %v906
        %v2153 = vunpack.c.l.b16 %v907
        %v2154 = vunpack.c.h.b16 %v907
        %v2155 = vunpack.c.l.b16 %v908
        %v2156 = vunpack.c.h.b16 %v908
        %v2157 = vunpack.c.l.b16 %v909
        %v2158 = vunpack.c.h.b16 %v909
        %v2159 = vunpack.c.l.b16 %v910
        %v2160 = vunpack.c.h.b16 %v910
        %v2161 = vunpack.c.l.b16 %v911
        %v2162 = vunpack.c.h.b16 %v911
        %v2163 = vunpack.c.l.b16 %v912
        %v2164 = vunpack.c.h.b16 %v912
        %v2165 = vunpack.c.l.b16 %v913
        %v2166 = vunpack.c.h.b16 %v913
        %v2167 = vunpack.c.l.b16 %v914
        %v2168 = vunpack.c.h.b16 %v914
        %v2169 = vunpack.c.l.b16 %v915
        %v2170 = vunpack.c.h.b16 %v915
        %v2171 = vunpack.c.l.b16 %v916
        %v2172 = vunpack.c.h.b16 %v916
        %v2173 = vunpack.c.l.b16 %v917
        %v2174 = vunpack.c.h.b16 %v917
        %v2175 = vunpack.c.l.b16 %v918
        %v2176 = vunpack.c.h.b16 %v918
        %v2177 = vunpack.c.l.b16 %v919
        %v2178 = vunpack.c.h.b16 %v919
        %v2179 = vunpack.c.l.b16 %v920
        %v2180 = vunpack.c.h.b16 %v920
        %v2181 = vunpack.c.l.b16 %v921
        %v2182 = vunpack.c.h.b16 %v921
        %v2183 = vunpack.c.l.b16 %v922
        %v2184 = vunpack.c.h.b16 %v922
        %v2185 = vunpack.c.l.b16 %v923
        %v2186 = vunpack.c.h.b16 %v923
        %v2187 = vunpack.c.l.b16 %v924
        %v2188 = vunpack.c.h.b16 %v924
        %v2189 = vunpack.c.l.b16 %v925
        %v2190 = vunpack.c.h.b16 %v925
        %v2191 = vunpack.c.l.b16 %v926
        %v2192 = vunpack.c.h.b16 %v926
        %v2193 = vunpack.c.l.b16 %v927
        %v2194 = vunpack.c.h.b16 %v927
        %v2195 = vunpack.c.l.b16 %v928
        %v2196 = vunpack.c.h.b16 %v928
        %v2197 = vunpack.c.l.b16 %v929
        %v2198 = vunpack.c.h.b16 %v929
        %v2199 = vunpack.c.l.b16 %v930
        %v2200 = vunpack.c.h.b16 %v930
        %v2201 = vunpack.c.l.b16 %v931
        %v2202 = vunpack.c.h.b16 %v931
        %v2203 = vunpack.c.l.b16 %v932
        %v2204 = vunpack.c.h.b16 %v932
        %v2205 = vunpack.c.l.b16 %v933
        %v2206 = vunpack.c.h.b16 %v933
        %v2207 = vunpack.c.l.b16 %v934
        %v2208 = vunpack.c.h.b16 %v934
        %v2209 = vunpack.c.l.b16 %v935
        %v2210 = vunpack.c.h.b16 %v935
        %v2211 = vunpack.c.l.b16 %v936
        %v2212 = vunpack.c.h.b16 %v936
        %v2213 = vunpack.c.l.b16 %v937
        %v2214 = vunpack.c.h.b16 %v937
        %v2215 = vunpack.c.l.b16 %v938
        %v2216 = vunpack.c.h.b16 %v938
        %v2217 = vunpack.c.l.b16 %v939
        %v2218 = vunpack.c.h.b16 %v939
        %v2219 = vunpack.c.l.b16 %v940
        %v2220 = vunpack.c.h.b16 %v940
        %v2221 = vunpack.c.l.b16 %v941
        %v2222 = vunpack.c.h.b16 %v941
        %v2223 = vunpack.c.l.b16 %v942
        %v2224 = vunpack.c.h.b16 %v942
        %v2225 = vunpack.c.l.b16 %v943
        %v2226 = vunpack.c.h.b16 %v943
        %v2227 = vunpack.c.l.b16 %v944
        %v2228 = vunpack.c.h.b16 %v944
        %v2229 = vunpack.c.l.b16 %v945
        %v2230 = vunpack.c.h.b16 %v945
        %v2231 = vunpack.c.l.b16 %v946
        %v2232 = vunpack.c.h.b16 %v946
        %v2233 = vunpack.c.l.b16 %v947
        %v2234 = vunpack.c.h.b16 %v947
        %v2235 = vunpack.c.l.b16 %v948
        %v2236 = vunpack.c.h.b16 %v948
        %v2237 = vunpack.c.l.b16 %v949
        %v2238 = vunpack.c.h.b16 %v949
        %v2239 = vunpack.c.l.b16 %v950
        %v2240 = vunpack.c.h.b16 %v950
        %v2241 = vunpack.c.l.b16 %v951
        %v2242 = vunpack.c.h.b16 %v951
        %v2243 = vunpack.c.l.b16 %v952
        %v2244 = vunpack.c.h.b16 %v952
        %v2245 = vunpack.c.l.b16 %v953
        %v2246 = vunpack.c.h.b16 %v953
        %v2247 = vunpack.c.l.b16 %v954
        %v2248 = vunpack.c.h.b16 %v954
        %v2249 = vunpack.c.l.b16 %v955
        %v2250 = vunpack.c.h.b16 %v955
        %v2251 = vunpack.c.l.b16 %v956
        %v2252 = vunpack.c.h.b16 %v956
        %v2253 = vunpack.c.l.b16 %v957
        %v2254 = vunpack.c.h.b16 %v957
        %v2255 = vunpack.c.l.b16 %v958
        %v2256 = vunpack.c.h.b16 %v958
        %v2257 = vunpack.c.l.b16 %v959
        %v2258 = vunpack.c.h.b16 %v959
        %v2259 = vunpack.c.l.b16 %v960
        %v2260 = vunpack.c.h.b16 %v960
        %v2261 = vunpack.c.l.b16 %v961
        %v2262 = vunpack.c.h.b16 %v961
        %v2263 = vunpack.c.l.b16 %v962
        %v2264 = vunpack.c.h.b16 %v962
        %v2265 = vunpack.c.l.b16 %v963
        %v2266 = vunpack.c.h.b16 %v963
        %v2267 = vunpack.c.l.b16 %v964
        %v2268 = vunpack.c.h.b16 %v964
        %v2269 = vunpack.c.l.b16 %v965
        %v2270 = vunpack.c.h.b16 %v965
        %v2271 = vunpack.c.l.b16 %v966
        %v2272 = vunpack.c.h.b16 %v966
        %v2273 = vunpack.c.l.b16 %v967
        %v2274 = vunpack.c.h.b16 %v967
        %v2275 = vunpack.c.l.b16 %v968
        %v2276 = vunpack.c.h.b16 %v968
        %v2277 = vunpack.c.l.b16 %v969
        %v2278 = vunpack.c.h.b16 %v969
        %v2279 = vunpack.c.l.b16 %v970
        %v2280 = vunpack.c.h.b16 %v970
        %v2281 = vunpack.c.l.b16 %v971
        %v2282 = vunpack.c.h.b16 %v971
        %v2283 = vunpack.c.l.b16 %v972
        %v2284 = vunpack.c.h.b16 %v972
        %v2285 = vunpack.c.l.b16 %v973
        %v2286 = vunpack.c.h.b16 %v973
        %v2287 = vunpack.c.l.b16 %v974
        %v2288 = vunpack.c.h.b16 %v974
        %v2289 = vunpack.c.l.b16 %v975
        %v2290 = vunpack.c.h.b16 %v975
        %v2291 = vunpack.c.l.b16 %v976
        %v2292 = vunpack.c.h.b16 %v976
        %v2293 = vunpack.c.l.b16 %v977
        %v2294 = vunpack.c.h.b16 %v977
        %v2295 = vunpack.c.l.b16 %v978
        %v2296 = vunpack.c.h.b16 %v978
        %v2297 = vunpack.c.l.b16 %v979
        %v2298 = vunpack.c.h.b16 %v979
        %v2299 = vunpack.c.l.b16 %v980
        %v2300 = vunpack.c.h.b16 %v980
        %v2301 = vunpack.c.l.b16 %v981
        %v2302 = vunpack.c.h.b16 %v981
        %v2303 = vunpack.c.l.b16 %v982
        %v2304 = vunpack.c.h.b16 %v982
        %v2305 = vunpack.c.l.b16 %v983
        %v2306 = vunpack.c.h.b16 %v983
        %v2307 = vunpack.c.l.b16 %v984
        %v2308 = vunpack.c.h.b16 %v984
        %v2309 = vunpack.c.l.b16 %v985
        %v2310 = vunpack.c.h.b16 %v985
        %v2311 = vunpack.c.l.b16 %v986
        %v2312 = vunpack.c.h.b16 %v986
        %v2313 = vunpack.c.l.b16 %v987
        %v2314 = vunpack.c.h.b16 %v987
        %v2315 = vunpack.c.l.b16 %v988
        %v2316 = vunpack.c.h.b16 %v988
        %v2317 = vunpack.c.l.b16 %v989
        %v2318 = vunpack.c.h.b16 %v989
        %v2319 = vunpack.c.l.b16 %v990
        %v2320 = vunpack.c.h.b16 %v990
        %v2321 = vunpack.c.l.b16 %v991
        %v2322 = vunpack.c.h.b16 %v991
        %v2323 = vunpack.c.l.b16 %v992
        %v2324 = vunpack.c.h.b16 %v992
        %v2325 = vunpack.c.l.b16 %v993
        %v2326 = vunpack.c.h.b16 %v993
        %v2327 = vunpack.c.l.b16 %v994
        %v2328 = vunpack.c.h.b16 %v994
        %v2329 = vunpack.c.l.b16 %v995
        %v2330 = vunpack.c.h.b16 %v995
        %v2331 = vunpack.c.l.b16 %v996
        %v2332 = vunpack.c.h.b16 %v996
        %v2333 = vunpack.c.l.b16 %v997
        %v2334 = vunpack.c.h.b16 %v997
        %v2335 = vunpack.c.l.b16 %v998
        %v2336 = vunpack.c.h.b16 %v998
        %v2337 = vunpack.c.l.b16 %v999
        %v2338 = vunpack.c.h.b16 %v999
        %v2339 = vunpack.c.l.b16 %v1000
        %v2340 = vunpack.c.h.b16 %v1000
        %v2341 = vunpack.c.l.b16 %v1001
        %v2342 = vunpack.c.h.b16 %v1001
        %v2343 = vunpack.c.l.b16 %v1002
        %v2344 = vunpack.c.h.b16 %v1002
        %v2345 = vunpack.c.l.b16 %v1003
        %v2346 = vunpack.c.h.b16 %v1003
        %v2347 = vunpack.c.l.b16 %v1004
        %v2348 = vunpack.c.h.b16 %v1004
        %v2349 = vunpack.c.l.b16 %v1005
        %v2350 = vunpack.c.h.b16 %v1005
        %v2351 = vunpack.c.l.b16 %v1006
        %v2352 = vunpack.c.h.b16 %v1006
        %v2353 = vunpack.c.l.b16 %v1007
        %v2354 = vunpack.c.h.b16 %v1007
        %v2355 = vunpack.c.l.b16 %v1008
        %v2356 = vunpack.c.h.b16 %v1008
        %v2357 = vunpack.c.l.b16 %v1009
        %v2358 = vunpack.c.h.b16 %v1009
        %v2359 = vunpack.c.l.b16 %v1010
        %v2360 = vunpack.c.h.b16 %v1010
        %v2361 = vunpack.c.l.b16 %v1011
        %v2362 = vunpack.c.h.b16 %v1011
        %v2363 = vunpack.c.l.b16 %v1012
        %v2364 = vunpack.c.h.b16 %v1012
        %v2365 = vunpack.c.l.b16 %v1013
        %v2366 = vunpack.c.h.b16 %v1013
        %v2367 = vunpack.c.l.b16 %v1014
        %v2368 = vunpack.c.h.b16 %v1014
        %v2369 = vunpack.c.l.b16 %v1015
        %v2370 = vunpack.c.h.b16 %v1015
        %v2371 = vunpack.c.l.b16 %v1016
        %v2372 = vunpack.c.h.b16 %v1016
        %v2373 = vunpack.c.l.b16 %v1017
        %v2374 = vunpack.c.h.b16 %v1017
        %v2375 = vunpack.c.l.b16 %v1018
        %v2376 = vunpack.c.h.b16 %v1018
        %v2377 = vunpack.c.l.b16 %v1019
        %v2378 = vunpack.c.h.b16 %v1019
        %v2379 = vunpack.c.l.b16 %v1020
        %v2380 = vunpack.c.h.b16 %v1020
        %v2381 = vunpack.c.l.b16 %v1021
        %v2382 = vunpack.c.h.b16 %v1021
        %v2383 = vunpack.c.l.b16 %v1022
        %v2384 = vunpack.c.h.b16 %v1022
        %v2385 = vunpack.c.l.b16 %v1023
        %v2386 = vunpack.c.h.b16 %v1023
        %v2387 = vunpack.c.l.b16 %v1024
        %v2388 = vunpack.c.h.b16 %v1024
        %v2389 = vunpack.c.l.b16 %v1025
        %v2390 = vunpack.c.h.b16 %v1025
        %v2391 = vunpack.c.l.b16 %v1026
        %v2392 = vunpack.c.h.b16 %v1026
        %v2393 = vunpack.c.l.b16 %v1027
        %v2394 = vunpack.c.h.b16 %v1027
        %v2395 = vunpack.c.l.b16 %v1028
        %v2396 = vunpack.c.h.b16 %v1028
        %v2397 = vunpack.c.l.b16 %v1029
        %v2398 = vunpack.c.h.b16 %v1029
        %v2399 = vunpack.c.l.b16 %v1030
        %v2400 = vunpack.c.h.b16 %v1030
        %v2401 = vunpack.c.l.b16 %v1031
        %v2402 = vunpack.c.h.b16 %v1031
        %v2403 = vunpack.c.l.b16 %v1032
        %v2404 = vunpack.c.h.b16 %v1032
        %v2405 = vunpack.c.l.b16 %v1033
        %v2406 = vunpack.c.h.b16 %v1033
        %v2407 = vunpack.c.l.b16 %v1034
        %v2408 = vunpack.c.h.b16 %v1034
        %v2409 = vunpack.c.l.b16 %v1035
        %v2410 = vunpack.c.h.b16 %v1035
        %v2411 = vunpack.c.l.b16 %v1036
        %v2412 = vunpack.c.h.b16 %v1036
        %v2413 = vunpack.c.l.b16 %v1037
        %v2414 = vunpack.c.h.b16 %v1037
        %v2415 = vunpack.c.l.b16 %v1038
        %v2416 = vunpack.c.h.b16 %v1038
        %v2417 = vunpack.c.l.b16 %v1039
        %v2418 = vunpack.c.h.b16 %v1039
        %v2419 = vunpack.c.l.b16 %v1040
        %v2420 = vunpack.c.h.b16 %v1040
        %v2421 = vunpack.c.l.b16 %v1041
        %v2422 = vunpack.c.h.b16 %v1041
        %v2423 = vunpack.c.l.b16 %v1042
        %v2424 = vunpack.c.h.b16 %v1042
        %v2425 = vunpack.c.l.b16 %v1043
        %v2426 = vunpack.c.h.b16 %v1043
        %v2427 = vunpack.c.l.b16 %v1044
        %v2428 = vunpack.c.h.b16 %v1044
        %v2429 = vunpack.c.l.b16 %v1045
        %v2430 = vunpack.c.h.b16 %v1045
        %v2431 = vunpack.c.l.b16 %v1046
        %v2432 = vunpack.c.h.b16 %v1046
        %v2433 = vunpack.c.l.b16 %v1047
        %v2434 = vunpack.c.h.b16 %v1047
        %v2435 = vunpack.c.l.b16 %v1048
        %v2436 = vunpack.c.h.b16 %v1048
        %v2437 = vunpack.c.l.b16 %v1049
        %v2438 = vunpack.c.h.b16 %v1049
        %v2439 = vunpack.c.l.b16 %v1050
        %v2440 = vunpack.c.h.b16 %v1050
        %v2441 = vunpack.c.l.b16 %v1051
        %v2442 = vunpack.c.h.b16 %v1051
        %v2443 = vunpack.c.l.b16 %v1052
        %v2444 = vunpack.c.h.b16 %v1052
        %v2445 = vunpack.c.l.b16 %v1053
        %v2446 = vunpack.c.h.b16 %v1053
        %v2447 = vunpack.c.l.b16 %v1054
        %v2448 = vunpack.c.h.b16 %v1054
        %v2449 = vunpack.c.l.b16 %v1055
        %v2450 = vunpack.c.h.b16 %v1055
        %v2451 = vunpack.c.l.b16 %v1056
        %v2452 = vunpack.c.h.b16 %v1056
        %v2453 = vunpack.c.l.b16 %v1057
        %v2454 = vunpack.c.h.b16 %v1057
        %v2455 = vunpack.c.l.b16 %v1058
        %v2456 = vunpack.c.h.b16 %v1058
        %v2457 = vunpack.c.l.b16 %v1059
        %v2458 = vunpack.c.h.b16 %v1059
        %v2459 = vunpack.c.l.b16 %v1060
        %v2460 = vunpack.c.h.b16 %v1060
        %v2461 = vunpack.c.l.b16 %v1061
        %v2462 = vunpack.c.h.b16 %v1061
        %v2463 = vunpack.c.l.b16 %v1062
        %v2464 = vunpack.c.h.b16 %v1062
        %v2465 = vunpack.c.l.b16 %v1063
        %v2466 = vunpack.c.h.b16 %v1063
        %v2467 = vunpack.c.l.b16 %v1064
        %v2468 = vunpack.c.h.b16 %v1064
        %v2469 = vunpack.c.l.b16 %v1065
        %v2470 = vunpack.c.h.b16 %v1065
        %v2471 = vunpack.c.l.b16 %v1066
        %v2472 = vunpack.c.h.b16 %v1066
        %v2473 = vunpack.c.l.b16 %v1067
        %v2474 = vunpack.c.h.b16 %v1067
        %v2475 = vunpack.c.l.b16 %v1068
        %v2476 = vunpack.c.h.b16 %v1068
        %v2477 = vunpack.c.l.b16 %v1069
        %v2478 = vunpack.c.h.b16 %v1069
        %v2479 = vunpack.c.l.b16 %v1070
        %v2480 = vunpack.c.h.b16 %v1070
        %v2481 = vunpack.c.l.b16 %v1071
        %v2482 = vunpack.c.h.b16 %v1071
        %v2483 = vunpack.c.l.b16 %v1072
        %v2484 = vunpack.c.h.b16 %v1072
        %v2485 = vunpack.c.l.b16 %v1073
        %v2486 = vunpack.c.h.b16 %v1073
        %v2487 = vunpack.c.l.b16 %v1074
        %v2488 = vunpack.c.h.b16 %v1074
        %v2489 = vunpack.c.l.b16 %v1075
        %v2490 = vunpack.c.h.b16 %v1075
        %v2491 = vunpack.c.l.b16 %v1076
        %v2492 = vunpack.c.h.b16 %v1076
        %v2493 = vunpack.c.l.b16 %v1077
        %v2494 = vunpack.c.h.b16 %v1077
        %v2495 = vunpack.c.l.b16 %v1078
        %v2496 = vunpack.c.h.b16 %v1078
        %v2497 = vunpack.c.l.b16 %v1079
        %v2498 = vunpack.c.h.b16 %v1079
        %v2499 = vunpack.c.l.b16 %v1080
        %v2500 = vunpack.c.h.b16 %v1080
        %v2501 = vunpack.c.l.b16 %v1081
        %v2502 = vunpack.c.h.b16 %v1081
        %v2503 = vunpack.c.l.b16 %v1082
        %v2504 = vunpack.c.h.b16 %v1082
        %v2505 = vunpack.c.l.b16 %v1083
        %v2506 = vunpack.c.h.b16 %v1083
        %v2507 = vunpack.c.l.b16 %v1084
        %v2508 = vunpack.c.h.b16 %v1084
        %v2509 = vunpack.c.l.b16 %v1085
        %v2510 = vunpack.c.h.b16 %v1085
        %v2511 = vunpack.c.l.b16 %v1086
        %v2512 = vunpack.c.h.b16 %v1086
        %v2513 = vunpack.c.l.b16 %v1087
        %v2514 = vunpack.c.h.b16 %v1087
        %v2515 = vunpack.c.l.b16 %v1088
        %v2516 = vunpack.c.h.b16 %v1088
        %v2517 = vunpack.c.l.b16 %v1089
        %v2518 = vunpack.c.h.b16 %v1089
        %v2519 = vunpack.c.l.b16 %v1090
        %v2520 = vunpack.c.h.b16 %v1090
        %v2521 = vunpack.c.l.b16 %v1091
        %v2522 = vunpack.c.h.b16 %v1091
        %v2523 = vunpack.c.l.b16 %v1092
        %v2524 = vunpack.c.h.b16 %v1092
        %v2525 = vunpack.c.l.b16 %v1093
        %v2526 = vunpack.c.h.b16 %v1093
        %v2527 = vunpack.c.l.b16 %v1094
        %v2528 = vunpack.c.h.b16 %v1094
        %v2529 = vunpack.c.l.b16 %v1095
        %v2530 = vunpack.c.h.b16 %v1095
        %v2531 = vunpack.c.l.b16 %v1096
        %v2532 = vunpack.c.h.b16 %v1096
        %v2533 = vunpack.c.l.b16 %v1097
        %v2534 = vunpack.c.h.b16 %v1097
        %v2535 = vunpack.c.l.b16 %v1098
        %v2536 = vunpack.c.h.b16 %v1098
        %v2537 = vunpack.c.l.b16 %v1099
        %v2538 = vunpack.c.h.b16 %v1099
        %v2539 = vunpack.c.l.b16 %v1100
        %v2540 = vunpack.c.h.b16 %v1100
        %v2541 = vunpack.c.l.b16 %v1101
        %v2542 = vunpack.c.h.b16 %v1101
        %v2543 = vunpack.c.l.b16 %v1102
        %v2544 = vunpack.c.h.b16 %v1102
        %v2545 = vunpack.c.l.b16 %v1103
        %v2546 = vunpack.c.h.b16 %v1103
        %v2547 = vunpack.c.l.b16 %v1104
        %v2548 = vunpack.c.h.b16 %v1104
        %v2549 = vunpack.c.l.b16 %v1105
        %v2550 = vunpack.c.h.b16 %v1105
        %v2551 = vunpack.c.l.b16 %v1106
        %v2552 = vunpack.c.h.b16 %v1106
        %v2553 = vunpack.c.l.b16 %v1107
        %v2554 = vunpack.c.h.b16 %v1107
        %v2555 = vunpack.c.l.b16 %v1108
        %v2556 = vunpack.c.h.b16 %v1108
        %v2557 = vunpack.c.l.b16 %v1109
        %v2558 = vunpack.c.h.b16 %v1109
        %v2559 = vunpack.c.l.b16 %v1110
        %v2560 = vunpack.c.h.b16 %v1110
        %v2561 = vunpack.c.l.b16 %v1111
        %v2562 = vunpack.c.h.b16 %v1111
        %v2563 = vunpack.c.l.b16 %v1112
        %v2564 = vunpack.c.h.b16 %v1112
        %v2565 = vunpack.c.l.b16 %v1113
        %v2566 = vunpack.c.h.b16 %v1113
        %v2567 = vunpack.c.l.b16 %v1114
        %v2568 = vunpack.c.h.b16 %v1114
        %v2569 = vunpack.c.l.b16 %v1115
        %v2570 = vunpack.c.h.b16 %v1115
        %v2571 = vunpack.c.l.b16 %v1116
        %v2572 = vunpack.c.h.b16 %v1116
        %v2573 = vunpack.c.l.b16 %v1117
        %v2574 = vunpack.c.h.b16 %v1117
        %v2575 = vunpack.c.l.b16 %v1118
        %v2576 = vunpack.c.h.b16 %v1118
        %v2577 = vunpack.c.l.b16 %v1119
        %v2578 = vunpack.c.h.b16 %v1119
        %v2579 = vunpack.c.l.b16 %v1120
        %v2580 = vunpack.c.h.b16 %v1120
        %v2581 = vunpack.c.l.b16 %v1121
        %v2582 = vunpack.c.h.b16 %v1121
        %v2583 = vunpack.c.l.b16 %v1122
        %v2584 = vunpack.c.h.b16 %v1122
        %v2585 = vunpack.c.l.b16 %v1123
        %v2586 = vunpack.c.h.b16 %v1123
        %v2587 = vunpack.c.l.b16 %v1124
        %v2588 = vunpack.c.h.b16 %v1124
        %v2589 = vunpack.c.l.b16 %v1125
        %v2590 = vunpack.c.h.b16 %v1125
        %v2591 = vunpack.c.l.b16 %v1126
        %v2592 = vunpack.c.h.b16 %v1126
        %v2593 = vunpack.c.l.b16 %v1127
        %v2594 = vunpack.c.h.b16 %v1127
        %v2595 = vunpack.c.l.b16 %v1128
        %v2596 = vunpack.c.h.b16 %v1128
        %v2597 = vunpack.c.l.b16 %v1129
        %v2598 = vunpack.c.h.b16 %v1129
        %v2599 = vunpack.c.l.b16 %v1130
        %v2600 = vunpack.c.h.b16 %v1130
        %v2601 = vunpack.c.l.b16 %v1131
        %v2602 = vunpack.c.h.b16 %v1131
        %v2603 = vunpack.c.l.b16 %v1132
        %v2604 = vunpack.c.h.b16 %v1132
        %v2605 = vunpack.c.l.b16 %v1133
        %v2606 = vunpack.c.h.b16 %v1133
        %v2607 = vunpack.c.l.b16 %v1134
        %v2608 = vunpack.c.h.b16 %v1134
        %v2609 = vunpack.c.l.b16 %v1135
        %v2610 = vunpack.c.h.b16 %v1135
        %v2611 = vunpack.c.l.b16 %v1136
        %v2612 = vunpack.c.h.b16 %v1136
        %v2613 = vunpack.c.l.b16 %v1137
        %v2614 = vunpack.c.h.b16 %v1137
        %v2615 = vunpack.c.l.b16 %v1138
        %v2616 = vunpack.c.h.b16 %v1138
        %v2617 = vunpack.c.l.b16 %v1139
        %v2618 = vunpack.c.h.b16 %v1139
        %v2619 = vunpack.c.l.b16 %v1140
        %v2620 = vunpack.c.h.b16 %v1140
        %v2621 = vunpack.c.l.b16 %v1141
        %v2622 = vunpack.c.h.b16 %v1141
        %v2623 = vunpack.c.l.b16 %v1142
        %v2624 = vunpack.c.h.b16 %v1142
        %v2625 = vunpack.c.l.b16 %v1143
        %v2626 = vunpack.c.h.b16 %v1143
        %v2627 = vunpack.c.l.b16 %v1144
        %v2628 = vunpack.c.h.b16 %v1144
        %v2629 = vunpack.c.l.b16 %v1145
        %v2630 = vunpack.c.h.b16 %v1145
        %v2631 = vunpack.c.l.b16 %v1146
        %v2632 = vunpack.c.h.b16 %v1146
        %v2633 = vunpack.c.l.b16 %v1147
        %v2634 = vunpack.c.h.b16 %v1147
        %v2635 = vunpack.c.l.b16 %v1148
        %v2636 = vunpack.c.h.b16 %v1148
        %v2637 = vunpack.c.l.b16 %v1149
        %v2638 = vunpack.c.h.b16 %v1149
        %v2639 = vunpack.c.l.b16 %v1150
        %v2640 = vunpack.c.h.b16 %v1150
        %v2641 = vunpack.c.l.b16 %v1151
        %v2642 = vunpack.c.h.b16 %v1151
        %v2643 = vunpack.c.l.b16 %v1152
        %v2644 = vunpack.c.h.b16 %v1152
        %v2645 = vunpack.c.l.b16 %v1153
        %v2646 = vunpack.c.h.b16 %v1153
        %v2647 = vunpack.c.l.b16 %v1154
        %v2648 = vunpack.c.h.b16 %v1154
        %v2649 = vunpack.c.l.b16 %v1155
        %v2650 = vunpack.c.h.b16 %v1155
        %v2651 = vunpack.c.l.b16 %v1156
        %v2652 = vunpack.c.h.b16 %v1156
        %v2653 = vunpack.c.l.b16 %v1157
        %v2654 = vunpack.c.h.b16 %v1157
        %v2655 = vunpack.c.l.b16 %v1158
        %v2656 = vunpack.c.h.b16 %v1158
        %v2657 = vunpack.c.l.b16 %v1159
        %v2658 = vunpack.c.h.b16 %v1159
        %v2659 = vunpack.c.l.b16 %v1160
        %v2660 = vunpack.c.h.b16 %v1160
        %v2661 = vunpack.c.l.b16 %v1161
        %v2662 = vunpack.c.h.b16 %v1161
        %v2663 = vunpack.c.l.b16 %v1162
        %v2664 = vunpack.c.h.b16 %v1162
        %v2665 = vunpack.c.l.b16 %v1163
        %v2666 = vunpack.c.h.b16 %v1163
        %v2667 = vunpack.c.l.b16 %v1164
        %v2668 = vunpack.c.h.b16 %v1164
        %v2669 = vunpack.c.l.b16 %v1165
        %v2670 = vunpack.c.h.b16 %v1165
        %v2671 = vunpack.c.l.b16 %v1166
        %v2672 = vunpack.c.h.b16 %v1166
        %v2673 = vunpack.c.l.b16 %v1167
        %v2674 = vunpack.c.h.b16 %v1167
        %v2675 = vunpack.c.l.b16 %v1168
        %v2676 = vunpack.c.h.b16 %v1168
        %v2677 = vunpack.c.l.b16 %v1169
        %v2678 = vunpack.c.h.b16 %v1169
        %v2679 = vunpack.c.l.b16 %v1170
        %v2680 = vunpack.c.h.b16 %v1170
        %v2681 = vunpack.c.l.b16 %v1171
        %v2682 = vunpack.c.h.b16 %v1171
        %v2683 = vunpack.c.l.b16 %v1172
        %v2684 = vunpack.c.h.b16 %v1172
        %v2685 = vunpack.c.l.b16 %v1173
        %v2686 = vunpack.c.h.b16 %v1173
        %v2687 = vunpack.c.l.b16 %v1174
        %v2688 = vunpack.c.h.b16 %v1174
        %v2689 = vunpack.c.l.b16 %v1175
        %v2690 = vunpack.c.h.b16 %v1175
        %v2691 = vunpack.c.l.b16 %v1176
        %v2692 = vunpack.c.h.b16 %v1176
        %v2693 = vunpack.c.l.b16 %v1177
        %v2694 = vunpack.c.h.b16 %v1177
        %v2695 = vunpack.c.l.b16 %v1178
        %v2696 = vunpack.c.h.b16 %v1178
        %v2697 = vunpack.c.l.b16 %v1179
        %v2698 = vunpack.c.h.b16 %v1179
        %v2699 = vunpack.c.l.b16 %v1180
        %v2700 = vunpack.c.h.b16 %v1180
        %v2701 = vunpack.c.l.b16 %v1181
        %v2702 = vunpack.c.h.b16 %v1181
        %v2703 = vunpack.c.l.b16 %v1182
        %v2704 = vunpack.c.h.b16 %v1182
        %v2705 = vunpack.c.l.b16 %v1183
        %v2706 = vunpack.c.h.b16 %v1183
        %v2707 = vunpack.c.l.b16 %v1184
        %v2708 = vunpack.c.h.b16 %v1184
        %v2709 = vunpack.c.l.b16 %v1185
        %v2710 = vunpack.c.h.b16 %v1185
        %v2711 = vunpack.c.l.b16 %v1186
        %v2712 = vunpack.c.h.b16 %v1186
        %v2713 = vunpack.c.l.b16 %v1187
        %v2714 = vunpack.c.h.b16 %v1187
        %v2715 = vunpack.c.l.b16 %v1188
        %v2716 = vunpack.c.h.b16 %v1188
        %v2717 = vunpack.c.l.b16 %v1189
        %v2718 = vunpack.c.h.b16 %v1189
        %v2719 = vunpack.c.l.b16 %v1190
        %v2720 = vunpack.c.h.b16 %v1190
        %v2721 = vunpack.c.l.b16 %v1191
        %v2722 = vunpack.c.h.b16 %v1191
        %v2723 = vunpack.c.l.b16 %v1192
        %v2724 = vunpack.c.h.b16 %v1192
        %v2725 = vunpack.c.l.b16 %v1193
        %v2726 = vunpack.c.h.b16 %v1193
        %v2727 = vunpack.c.l.b16 %v1194
        %v2728 = vunpack.c.h.b16 %v1194
        %v2729 = vunpack.c.l.b16 %v1195
        %v2730 = vunpack.c.h.b16 %v1195
        %v2731 = vunpack.c.l.b16 %v1196
        %v2732 = vunpack.c.h.b16 %v1196
        %v2733 = vunpack.c.l.b16 %v1197
        %v2734 = vunpack.c.h.b16 %v1197
        %v2735 = vunpack.c.l.b16 %v1198
        %v2736 = vunpack.c.h.b16 %v1198
        %v2737 = vunpack.c.l.b16 %v1199
        %v2738 = vunpack.c.h.b16 %v1199
        %v2739 = vunpack.c.l.b16 %v1200
        %v2740 = vunpack.c.h.b16 %v1200
        %v2741 = vunpack.c.l.b16 %v1201
        %v2742 = vunpack.c.h.b16 %v1201
        %v2743 = vunpack.c.l.b16 %v1202
        %v2744 = vunpack.c.h.b16 %v1202
        %v2745 = vunpack.c.l.b16 %v1203
        %v2746 = vunpack.c.h.b16 %v1203
        %v2747 = vunpack.c.l.b16 %v1204
        %v2748 = vunpack.c.h.b16 %v1204
        %v2749 = vunpack.c.l.b16 %v1205
        %v2750 = vunpack.c.h.b16 %v1205
        %v2751 = vunpack.c.l.b16 %v1206
        %v2752 = vunpack.c.h.b16 %v1206
        %v2753 = vunpack.c.l.b16 %v1207
        %v2754 = vunpack.c.h.b16 %v1207
        %v2755 = vunpack.c.l.b16 %v1208
        %v2756 = vunpack.c.h.b16 %v1208
        %v2757 = vunpack.c.l.b16 %v1209
        %v2758 = vunpack.c.h.b16 %v1209
        %v2759 = vunpack.c.l.b16 %v1210
        %v2760 = vunpack.c.h.b16 %v1210
        %v2761 = vunpack.c.l.b16 %v1211
        %v2762 = vunpack.c.h.b16 %v1211
        %v2763 = vunpack.c.l.b16 %v1212
        %v2764 = vunpack.c.h.b16 %v1212
        %v2765 = vunpack.c.l.b16 %v1213
        %v2766 = vunpack.c.h.b16 %v1213
        %v2767 = vunpack.c.l.b16 %v1214
        %v2768 = vunpack.c.h.b16 %v1214
        %v2769 = vunpack.c.l.b16 %v1215
        %v2770 = vunpack.c.h.b16 %v1215
        %v2771 = vunpack.c.l.b16 %v1216
        %v2772 = vunpack.c.h.b16 %v1216
        %v2773 = vunpack.c.l.b16 %v1217
        %v2774 = vunpack.c.h.b16 %v1217
        %v2775 = vunpack.c.l.b16 %v1218
        %v2776 = vunpack.c.h.b16 %v1218
        %v2777 = vunpack.c.l.b16 %v1219
        %v2778 = vunpack.c.h.b16 %v1219
        %v2779 = vunpack.c.l.b16 %v1220
        %v2780 = vunpack.c.h.b16 %v1220
        %v2781 = vunpack.c.l.b16 %v1221
        %v2782 = vunpack.c.h.b16 %v1221
        %v2783 = vunpack.c.l.b16 %v1222
        %v2784 = vunpack.c.h.b16 %v1222
        %v2785 = vunpack.c.l.b16 %v1223
        %v2786 = vunpack.c.h.b16 %v1223
        %v2787 = vunpack.c.l.b16 %v1224
        %v2788 = vunpack.c.h.b16 %v1224
        %v2789 = vpack.c.b16 %v1773, %v1765
        %v2790 = vpack.c.b16 %v1774, %v1766
        %v2791 = vpack.c.b16 %v1775, %v1767
        %v2792 = vpack.c.b16 %v1776, %v1768
        %v2793 = vpack.c.b16 %v1777, %v1769
        %v2794 = vpack.c.b16 %v1778, %v1770
        %v2795 = vpack.c.b16 %v1779, %v1771
        %v2796 = vpack.c.b16 %v1780, %v1772
        %v2797 = vpack.c.b16 %v1789, %v1781
        %v2798 = vpack.c.b16 %v1790, %v1782
        %v2799 = vpack.c.b16 %v1791, %v1783
        %v2800 = vpack.c.b16 %v1792, %v1784
        %v2801 = vpack.c.b16 %v1793, %v1785
        %v2802 = vpack.c.b16 %v1794, %v1786
        %v2803 = vpack.c.b16 %v1795, %v1787
        %v2804 = vpack.c.b16 %v1796, %v1788
        %v2805 = vpack.c.b16 %v1805, %v1797
        %v2806 = vpack.c.b16 %v1806, %v1798
        %v2807 = vpack.c.b16 %v1807, %v1799
        %v2808 = vpack.c.b16 %v1808, %v1800
        %v2809 = vpack.c.b16 %v1809, %v1801
        %v2810 = vpack.c.b16 %v1810, %v1802
        %v2811 = vpack.c.b16 %v1811, %v1803
        %v2812 = vpack.c.b16 %v1812, %v1804
        %v2813 = vpack.c.b16 %v1821, %v1813
        %v2814 = vpack.c.b16 %v1822, %v1814
        %v2815 = vpack.c.b16 %v1823, %v1815
        %v2816 = vpack.c.b16 %v1824, %v1816
        %v2817 = vpack.c.b16 %v1825, %v1817
        %v2818 = vpack.c.b16 %v1826, %v1818
        %v2819 = vpack.c.b16 %v1827, %v1819
        %v2820 = vpack.c.b16 %v1828, %v1820
        %v2821 = vpack.c.b16 %v1837, %v1829
        %v2822 = vpack.c.b16 %v1838, %v1830
        %v2823 = vpack.c.b16 %v1839, %v1831
        %v2824 = vpack.c.b16 %v1840, %v1832
        %v2825 = vpack.c.b16 %v1841, %v1833
        %v2826 = vpack.c.b16 %v1842, %v1834
        %v2827 = vpack.c.b16 %v1843, %v1835
        %v2828 = vpack.c.b16 %v1844, %v1836
        %v2829 = vpack.c.b16 %v1853, %v1845
        %v2830 = vpack.c.b16 %v1854, %v1846
        %v2831 = vpack.c.b16 %v1855, %v1847
        %v2832 = vpack.c.b16 %v1856, %v1848
        %v2833 = vpack.c.b16 %v1857, %v1849
        %v2834 = vpack.c.b16 %v1858, %v1850
        %v2835 = vpack.c.b16 %v1859, %v1851
        %v2836 = vpack.c.b16 %v1860, %v1852
        %v2837 = vpack.c.b16 %v1869, %v1861
        %v2838 = vpack.c.b16 %v1870, %v1862
        %v2839 = vpack.c.b16 %v1871, %v1863
        %v2840 = vpack.c.b16 %v1872, %v1864
        %v2841 = vpack.c.b16 %v1873, %v1865
        %v2842 = vpack.c.b16 %v1874, %v1866
        %v2843 = vpack.c.b16 %v1875, %v1867
        %v2844 = vpack.c.b16 %v1876, %v1868
        %v2845 = vpack.c.b16 %v1885, %v1877
        %v2846 = vpack.c.b16 %v1886, %v1878
        %v2847 = vpack.c.b16 %v1887, %v1879
        %v2848 = vpack.c.b16 %v1888, %v1880
        %v2849 = vpack.c.b16 %v1889, %v1881
        %v2850 = vpack.c.b16 %v1890, %v1882
        %v2851 = vpack.c.b16 %v1891, %v1883
        %v2852 = vpack.c.b16 %v1892, %v1884
        %v2853 = vpack.c.b16 %v1901, %v1893
        %v2854 = vpack.c.b16 %v1902, %v1894
        %v2855 = vpack.c.b16 %v1903, %v1895
        %v2856 = vpack.c.b16 %v1904, %v1896
        %v2857 = vpack.c.b16 %v1905, %v1897
        %v2858 = vpack.c.b16 %v1906, %v1898
        %v2859 = vpack.c.b16 %v1907, %v1899
        %v2860 = vpack.c.b16 %v1908, %v1900
        %v2861 = vpack.c.b16 %v1917, %v1909
        %v2862 = vpack.c.b16 %v1918, %v1910
        %v2863 = vpack.c.b16 %v1919, %v1911
        %v2864 = vpack.c.b16 %v1920, %v1912
        %v2865 = vpack.c.b16 %v1921, %v1913
        %v2866 = vpack.c.b16 %v1922, %v1914
        %v2867 = vpack.c.b16 %v1923, %v1915
        %v2868 = vpack.c.b16 %v1924, %v1916
        %v2869 = vpack.c.b16 %v1933, %v1925
        %v2870 = vpack.c.b16 %v1934, %v1926
        %v2871 = vpack.c.b16 %v1935, %v1927
        %v2872 = vpack.c.b16 %v1936, %v1928
        %v2873 = vpack.c.b16 %v1937, %v1929
        %v2874 = vpack.c.b16 %v1938, %v1930
        %v2875 = vpack.c.b16 %v1939, %v1931
        %v2876 = vpack.c.b16 %v1940, %v1932
        %v2877 = vpack.c.b16 %v1949, %v1941
        %v2878 = vpack.c.b16 %v1950, %v1942
        %v2879 = vpack.c.b16 %v1951, %v1943
        %v2880 = vpack.c.b16 %v1952, %v1944
        %v2881 = vpack.c.b16 %v1953, %v1945
        %v2882 = vpack.c.b16 %v1954, %v1946
        %v2883 = vpack.c.b16 %v1955, %v1947
        %v2884 = vpack.c.b16 %v1956, %v1948
        %v2885 = vpack.c.b16 %v1965, %v1957
        %v2886 = vpack.c.b16 %v1966, %v1958
        %v2887 = vpack.c.b16 %v1967, %v1959
        %v2888 = vpack.c.b16 %v1968, %v1960
        %v2889 = vpack.c.b16 %v1969, %v1961
        %v2890 = vpack.c.b16 %v1970, %v1962
        %v2891 = vpack.c.b16 %v1971, %v1963
        %v2892 = vpack.c.b16 %v1972, %v1964
        %v2893 = vpack.c.b16 %v1981, %v1973
        %v2894 = vpack.c.b16 %v1982, %v1974
        %v2895 = vpack.c.b16 %v1983, %v1975
        %v2896 = vpack.c.b16 %v1984, %v1976
        %v2897 = vpack.c.b16 %v1985, %v1977
        %v2898 = vpack.c.b16 %v1986, %v1978
        %v2899 = vpack.c.b16 %v1987, %v1979
        %v2900 = vpack.c.b16 %v1988, %v1980
        %v2901 = vpack.c.b16 %v1997, %v1989
        %v2902 = vpack.c.b16 %v1998, %v1990
        %v2903 = vpack.c.b16 %v1999, %v1991
        %v2904 = vpack.c.b16 %v2000, %v1992
        %v2905 = vpack.c.b16 %v2001, %v1993
        %v2906 = vpack.c.b16 %v2002, %v1994
        %v2907 = vpack.c.b16 %v2003, %v1995
        %v2908 = vpack.c.b16 %v2004, %v1996
        %v2909 = vpack.c.b16 %v2013, %v2005
        %v2910 = vpack.c.b16 %v2014, %v2006
        %v2911 = vpack.c.b16 %v2015, %v2007
        %v2912 = vpack.c.b16 %v2016, %v2008
        %v2913 = vpack.c.b16 %v2017, %v2009
        %v2914 = vpack.c.b16 %v2018, %v2010
        %v2915 = vpack.c.b16 %v2019, %v2011
        %v2916 = vpack.c.b16 %v2020, %v2012
        %v2917 = vpack.c.b16 %v2029, %v2021
        %v2918 = vpack.c.b16 %v2030, %v2022
        %v2919 = vpack.c.b16 %v2031, %v2023
        %v2920 = vpack.c.b16 %v2032, %v2024
        %v2921 = vpack.c.b16 %v2033, %v2025
        %v2922 = vpack.c.b16 %v2034, %v2026
        %v2923 = vpack.c.b16 %v2035, %v2027
        %v2924 = vpack.c.b16 %v2036, %v2028
        %v2925 = vpack.c.b16 %v2045, %v2037
        %v2926 = vpack.c.b16 %v2046, %v2038
        %v2927 = vpack.c.b16 %v2047, %v2039
        %v2928 = vpack.c.b16 %v2048, %v2040
        %v2929 = vpack.c.b16 %v2049, %v2041
        %v2930 = vpack.c.b16 %v2050, %v2042
        %v2931 = vpack.c.b16 %v2051, %v2043
        %v2932 = vpack.c.b16 %v2052, %v2044
        %v2933 = vpack.c.b16 %v2061, %v2053
        %v2934 = vpack.c.b16 %v2062, %v2054
        %v2935 = vpack.c.b16 %v2063, %v2055
        %v2936 = vpack.c.b16 %v2064, %v2056
        %v2937 = vpack.c.b16 %v2065, %v2057
        %v2938 = vpack.c.b16 %v2066, %v2058
        %v2939 = vpack.c.b16 %v2067, %v2059
        %v2940 = vpack.c.b16 %v2068, %v2060
        %v2941 = vpack.c.b16 %v2077, %v2069
        %v2942 = vpack.c.b16 %v2078, %v2070
        %v2943 = vpack.c.b16 %v2079, %v2071
        %v2944 = vpack.c.b16 %v2080, %v2072
        %v2945 = vpack.c.b16 %v2081, %v2073
        %v2946 = vpack.c.b16 %v2082, %v2074
        %v2947 = vpack.c.b16 %v2083, %v2075
        %v2948 = vpack.c.b16 %v2084, %v2076
        %v2949 = vpack.c.b16 %v2093, %v2085
        %v2950 = vpack.c.b16 %v2094, %v2086
        %v2951 = vpack.c.b16 %v2095, %v2087
        %v2952 = vpack.c.b16 %v2096, %v2088
        %v2953 = vpack.c.b16 %v2097, %v2089
        %v2954 = vpack.c.b16 %v2098, %v2090
        %v2955 = vpack.c.b16 %v2099, %v2091
        %v2956 = vpack.c.b16 %v2100, %v2092
        %v2957 = vpack.c.b16 %v2109, %v2101
        %v2958 = vpack.c.b16 %v2110, %v2102
        %v2959 = vpack.c.b16 %v2111, %v2103
        %v2960 = vpack.c.b16 %v2112, %v2104
        %v2961 = vpack.c.b16 %v2113, %v2105
        %v2962 = vpack.c.b16 %v2114, %v2106
        %v2963 = vpack.c.b16 %v2115, %v2107
        %v2964 = vpack.c.b16 %v2116, %v2108
        %v2965 = vpack.c.b16 %v2125, %v2117
        %v2966 = vpack.c.b16 %v2126, %v2118
        %v2967 = vpack.c.b16 %v2127, %v2119
        %v2968 = vpack.c.b16 %v2128, %v2120
        %v2969 = vpack.c.b16 %v2129, %v2121
        %v2970 = vpack.c.b16 %v2130, %v2122
        %v2971 = vpack.c.b16 %v2131, %v2123
        %v2972 = vpack.c.b16 %v2132, %v2124
        %v2973 = vpack.c.b16 %v2141, %v2133
        %v2974 = vpack.c.b16 %v2142, %v2134
        %v2975 = vpack.c.b16 %v2143, %v2135
        %v2976 = vpack.c.b16 %v2144, %v2136
        %v2977 = vpack.c.b16 %v2145, %v2137
        %v2978 = vpack.c.b16 %v2146, %v2138
        %v2979 = vpack.c.b16 %v2147, %v2139
        %v2980 = vpack.c.b16 %v2148, %v2140
        %v2981 = vpack.c.b16 %v2157, %v2149
        %v2982 = vpack.c.b16 %v2158, %v2150
        %v2983 = vpack.c.b16 %v2159, %v2151
        %v2984 = vpack.c.b16 %v2160, %v2152
        %v2985 = vpack.c.b16 %v2161, %v2153
        %v2986 = vpack.c.b16 %v2162, %v2154
        %v2987 = vpack.c.b16 %v2163, %v2155
        %v2988 = vpack.c.b16 %v2164, %v2156
        %v2989 = vpack.c.b16 %v2173, %v2165
        %v2990 = vpack.c.b16 %v2174, %v2166
        %v2991 = vpack.c.b16 %v2175, %v2167
        %v2992 = vpack.c.b16 %v2176, %v2168
        %v2993 = vpack.c.b16 %v2177, %v2169
        %v2994 = vpack.c.b16 %v2178, %v2170
        %v2995 = vpack.c.b16 %v2179, %v2171
        %v2996 = vpack.c.b16 %v2180, %v2172
        %v2997 = vpack.c.b16 %v2189, %v2181
        %v2998 = vpack.c.b16 %v2190, %v2182
        %v2999 = vpack.c.b16 %v2191, %v2183
        %v3000 = vpack.c.b16 %v2192, %v2184
        %v3001 = vpack.c.b16 %v2193, %v2185
        %v3002 = vpack.c.b16 %v2194, %v2186
        %v3003 = vpack.c.b16 %v2195, %v2187
        %v3004 = vpack.c.b16 %v2196, %v2188
        %v3005 = vpack.c.b16 %v2205, %v2197
        %v3006 = vpack.c.b16 %v2206, %v2198
        %v3007 = vpack.c.b16 %v2207, %v2199
        %v3008 = vpack.c.b16 %v2208, %v2200
        %v3009 = vpack.c.b16 %v2209, %v2201
        %v3010 = vpack.c.b16 %v2210, %v2202
        %v3011 = vpack.c.b16 %v2211, %v2203
        %v3012 = vpack.c.b16 %v2212, %v2204
        %v3013 = vpack.c.b16 %v2221, %v2213
        %v3014 = vpack.c.b16 %v2222, %v2214
        %v3015 = vpack.c.b16 %v2223, %v2215
        %v3016 = vpack.c.b16 %v2224, %v2216
        %v3017 = vpack.c.b16 %v2225, %v2217
        %v3018 = vpack.c.b16 %v2226, %v2218
        %v3019 = vpack.c.b16 %v2227, %v2219
        %v3020 = vpack.c.b16 %v2228, %v2220
        %v3021 = vpack.c.b16 %v2237, %v2229
        %v3022 = vpack.c.b16 %v2238, %v2230
        %v3023 = vpack.c.b16 %v2239, %v2231
        %v3024 = vpack.c.b16 %v2240, %v2232
        %v3025 = vpack.c.b16 %v2241, %v2233
        %v3026 = vpack.c.b16 %v2242, %v2234
        %v3027 = vpack.c.b16 %v2243, %v2235
        %v3028 = vpack.c.b16 %v2244, %v2236
        %v3029 = vpack.c.b16 %v2253, %v2245
        %v3030 = vpack.c.b16 %v2254, %v2246
        %v3031 = vpack.c.b16 %v2255, %v2247
        %v3032 = vpack.c.b16 %v2256, %v2248
        %v3033 = vpack.c.b16 %v2257, %v2249
        %v3034 = vpack.c.b16 %v2258, %v2250
        %v3035 = vpack.c.b16 %v2259, %v2251
        %v3036 = vpack.c.b16 %v2260, %v2252
        %v3037 = vpack.c.b16 %v2269, %v2261
        %v3038 = vpack.c.b16 %v2270, %v2262
        %v3039 = vpack.c.b16 %v2271, %v2263
        %v3040 = vpack.c.b16 %v2272, %v2264
        %v3041 = vpack.c.b16 %v2273, %v2265
        %v3042 = vpack.c.b16 %v2274, %v2266
        %v3043 = vpack.c.b16 %v2275, %v2267
        %v3044 = vpack.c.b16 %v2276, %v2268
        %v3045 = vpack.c.b16 %v2285, %v2277
        %v3046 = vpack.c.b16 %v2286, %v2278
        %v3047 = vpack.c.b16 %v2287, %v2279
        %v3048 = vpack.c.b16 %v2288, %v2280
        %v3049 = vpack.c.b16 %v2289, %v2281
        %v3050 = vpack.c.b16 %v2290, %v2282
        %v3051 = vpack.c.b16 %v2291, %v2283
        %v3052 = vpack.c.b16 %v2292, %v2284
        %v3053 = vpack.c.b16 %v2301, %v2293
        %v3054 = vpack.c.b16 %v2302, %v2294
        %v3055 = vpack.c.b16 %v2303, %v2295
        %v3056 = vpack.c.b16 %v2304, %v2296
        %v3057 = vpack.c.b16 %v2305, %v2297
        %v3058 = vpack.c.b16 %v2306, %v2298
        %v3059 = vpack.c.b16 %v2307, %v2299
        %v3060 = vpack.c.b16 %v2308, %v2300
        %v3061 = vpack.c.b16 %v2317, %v2309
        %v3062 = vpack.c.b16 %v2318, %v2310
        %v3063 = vpack.c.b16 %v2319, %v2311
        %v3064 = vpack.c.b16 %v2320, %v2312
        %v3065 = vpack.c.b16 %v2321, %v2313
        %v3066 = vpack.c.b16 %v2322, %v2314
        %v3067 = vpack.c.b16 %v2323, %v2315
        %v3068 = vpack.c.b16 %v2324, %v2316
        %v3069 = vpack.c.b16 %v2333, %v2325
        %v3070 = vpack.c.b16 %v2334, %v2326
        %v3071 = vpack.c.b16 %v2335, %v2327
        %v3072 = vpack.c.b16 %v2336, %v2328
        %v3073 = vpack.c.b16 %v2337, %v2329
        %v3074 = vpack.c.b16 %v2338, %v2330
        %v3075 = vpack.c.b16 %v2339, %v2331
        %v3076 = vpack.c.b16 %v2340, %v2332
        %v3077 = vpack.c.b16 %v2349, %v2341
        %v3078 = vpack.c.b16 %v2350, %v2342
        %v3079 = vpack.c.b16 %v2351, %v2343
        %v3080 = vpack.c.b16 %v2352, %v2344
        %v3081 = vpack.c.b16 %v2353, %v2345
        %v3082 = vpack.c.b16 %v2354, %v2346
        %v3083 = vpack.c.b16 %v2355, %v2347
        %v3084 = vpack.c.b16 %v2356, %v2348
        %v3085 = vpack.c.b16 %v2365, %v2357
        %v3086 = vpack.c.b16 %v2366, %v2358
        %v3087 = vpack.c.b16 %v2367, %v2359
        %v3088 = vpack.c.b16 %v2368, %v2360
        %v3089 = vpack.c.b16 %v2369, %v2361
        %v3090 = vpack.c.b16 %v2370, %v2362
        %v3091 = vpack.c.b16 %v2371, %v2363
        %v3092 = vpack.c.b16 %v2372, %v2364
        %v3093 = vpack.c.b16 %v2381, %v2373
        %v3094 = vpack.c.b16 %v2382, %v2374
        %v3095 = vpack.c.b16 %v2383, %v2375
        %v3096 = vpack.c.b16 %v2384, %v2376
        %v3097 = vpack.c.b16 %v2385, %v2377
        %v3098 = vpack.c.b16 %v2386, %v2378
        %v3099 = vpack.c.b16 %v2387, %v2379
        %v3100 = vpack.c.b16 %v2388, %v2380
        %v3101 = vpack.c.b16 %v2397, %v2389
        %v3102 = vpack.c.b16 %v2398, %v2390
        %v3103 = vpack.c.b16 %v2399, %v2391
        %v3104 = vpack.c.b16 %v2400, %v2392
        %v3105 = vpack.c.b16 %v2401, %v2393
        %v3106 = vpack.c.b16 %v2402, %v2394
        %v3107 = vpack.c.b16 %v2403, %v2395
        %v3108 = vpack.c.b16 %v2404, %v2396
        %v3109 = vpack.c.b16 %v2413, %v2405
        %v3110 = vpack.c.b16 %v2414, %v2406
        %v3111 = vpack.c.b16 %v2415, %v2407
        %v3112 = vpack.c.b16 %v2416, %v2408
        %v3113 = vpack.c.b16 %v2417, %v2409
        %v3114 = vpack.c.b16 %v2418, %v2410
        %v3115 = vpack.c.b16 %v2419, %v2411
        %v3116 = vpack.c.b16 %v2420, %v2412
        %v3117 = vpack.c.b16 %v2429, %v2421
        %v3118 = vpack.c.b16 %v2430, %v2422
        %v3119 = vpack.c.b16 %v2431, %v2423
        %v3120 = vpack.c.b16 %v2432, %v2424
        %v3121 = vpack.c.b16 %v2433, %v2425
        %v3122 = vpack.c.b16 %v2434, %v2426
        %v3123 = vpack.c.b16 %v2435, %v2427
        %v3124 = vpack.c.b16 %v2436, %v2428
        %v3125 = vpack.c.b16 %v2445, %v2437
        %v3126 = vpack.c.b16 %v2446, %v2438
        %v3127 = vpack.c.b16 %v2447, %v2439
        %v3128 = vpack.c.b16 %v2448, %v2440
        %v3129 = vpack.c.b16 %v2449, %v2441
        %v3130 = vpack.c.b16 %v2450, %v2442
        %v3131 = vpack.c.b16 %v2451, %v2443
        %v3132 = vpack.c.b16 %v2452, %v2444
        %v3133 = vpack.c.b16 %v2461, %v2453
        %v3134 = vpack.c.b16 %v2462, %v2454
        %v3135 = vpack.c.b16 %v2463, %v2455
        %v3136 = vpack.c.b16 %v2464, %v2456
        %v3137 = vpack.c.b16 %v2465, %v2457
        %v3138 = vpack.c.b16 %v2466, %v2458
        %v3139 = vpack.c.b16 %v2467, %v2459
        %v3140 = vpack.c.b16 %v2468, %v2460
        %v3141 = vpack.c.b16 %v2477, %v2469
        %v3142 = vpack.c.b16 %v2478, %v2470
        %v3143 = vpack.c.b16 %v2479, %v2471
        %v3144 = vpack.c.b16 %v2480, %v2472
        %v3145 = vpack.c.b16 %v2481, %v2473
        %v3146 = vpack.c.b16 %v2482, %v2474
        %v3147 = vpack.c.b16 %v2483, %v2475
        %v3148 = vpack.c.b16 %v2484, %v2476
        %v3149 = vpack.c.b16 %v2493, %v2485
        %v3150 = vpack.c.b16 %v2494, %v2486
        %v3151 = vpack.c.b16 %v2495, %v2487
        %v3152 = vpack.c.b16 %v2496, %v2488
        %v3153 = vpack.c.b16 %v2497, %v2489
        %v3154 = vpack.c.b16 %v2498, %v2490
        %v3155 = vpack.c.b16 %v2499, %v2491
        %v3156 = vpack.c.b16 %v2500, %v2492
        %v3157 = vpack.c.b16 %v2509, %v2501
        %v3158 = vpack.c.b16 %v2510, %v2502
        %v3159 = vpack.c.b16 %v2511, %v2503
        %v3160 = vpack.c.b16 %v2512, %v2504
        %v3161 = vpack.c.b16 %v2513, %v2505
        %v3162 = vpack.c.b16 %v2514, %v2506
        %v3163 = vpack.c.b16 %v2515, %v2507
        %v3164 = vpack.c.b16 %v2516, %v2508
        %v3165 = vpack.c.b16 %v2525, %v2517
        %v3166 = vpack.c.b16 %v2526, %v2518
        %v3167 = vpack.c.b16 %v2527, %v2519
        %v3168 = vpack.c.b16 %v2528, %v2520
        %v3169 = vpack.c.b16 %v2529, %v2521
        %v3170 = vpack.c.b16 %v2530, %v2522
        %v3171 = vpack.c.b16 %v2531, %v2523
        %v3172 = vpack.c.b16 %v2532, %v2524
        %v3173 = vpack.c.b16 %v2541, %v2533
        %v3174 = vpack.c.b16 %v2542, %v2534
        %v3175 = vpack.c.b16 %v2543, %v2535
        %v3176 = vpack.c.b16 %v2544, %v2536
        %v3177 = vpack.c.b16 %v2545, %v2537
        %v3178 = vpack.c.b16 %v2546, %v2538
        %v3179 = vpack.c.b16 %v2547, %v2539
        %v3180 = vpack.c.b16 %v2548, %v2540
        %v3181 = vpack.c.b16 %v2557, %v2549
        %v3182 = vpack.c.b16 %v2558, %v2550
        %v3183 = vpack.c.b16 %v2559, %v2551
        %v3184 = vpack.c.b16 %v2560, %v2552
        %v3185 = vpack.c.b16 %v2561, %v2553
        %v3186 = vpack.c.b16 %v2562, %v2554
        %v3187 = vpack.c.b16 %v2563, %v2555
        %v3188 = vpack.c.b16 %v2564, %v2556
        %v3189 = vpack.c.b16 %v2573, %v2565
        %v3190 = vpack.c.b16 %v2574, %v2566
        %v3191 = vpack.c.b16 %v2575, %v2567
        %v3192 = vpack.c.b16 %v2576, %v2568
        %v3193 = vpack.c.b16 %v2577, %v2569
        %v3194 = vpack.c.b16 %v2578, %v2570
        %v3195 = vpack.c.b16 %v2579, %v2571
        %v3196 = vpack.c.b16 %v2580, %v2572
        %v3197 = vpack.c.b16 %v2589, %v2581
        %v3198 = vpack.c.b16 %v2590, %v2582
        %v3199 = vpack.c.b16 %v2591, %v2583
        %v3200 = vpack.c.b16 %v2592, %v2584
        %v3201 = vpack.c.b16 %v2593, %v2585
        %v3202 = vpack.c.b16 %v2594, %v2586
        %v3203 = vpack.c.b16 %v2595, %v2587
        %v3204 = vpack.c.b16 %v2596, %v2588
        %v3205 = vpack.c.b16 %v2605, %v2597
        %v3206 = vpack.c.b16 %v2606, %v2598
        %v3207 = vpack.c.b16 %v2607, %v2599
        %v3208 = vpack.c.b16 %v2608, %v2600
        %v3209 = vpack.c.b16 %v2609, %v2601
        %v3210 = vpack.c.b16 %v2610, %v2602
        %v3211 = vpack.c.b16 %v2611, %v2603
        %v3212 = vpack.c.b16 %v2612, %v2604
        %v3213 = vpack.c.b16 %v2621, %v2613
        %v3214 = vpack.c.b16 %v2622, %v2614
        %v3215 = vpack.c.b16 %v2623, %v2615
        %v3216 = vpack.c.b16 %v2624, %v2616
        %v3217 = vpack.c.b16 %v2625, %v2617
        %v3218 = vpack.c.b16 %v2626, %v2618
        %v3219 = vpack.c.b16 %v2627, %v2619
        %v3220 = vpack.c.b16 %v2628, %v2620
        %v3221 = vpack.c.b16 %v2637, %v2629
        %v3222 = vpack.c.b16 %v2638, %v2630
        %v3223 = vpack.c.b16 %v2639, %v2631
        %v3224 = vpack.c.b16 %v2640, %v2632
        %v3225 = vpack.c.b16 %v2641, %v2633
        %v3226 = vpack.c.b16 %v2642, %v2634
        %v3227 = vpack.c.b16 %v2643, %v2635
        %v3228 = vpack.c.b16 %v2644, %v2636
        %v3229 = vpack.c.b16 %v2653, %v2645
        %v3230 = vpack.c.b16 %v2654, %v2646
        %v3231 = vpack.c.b16 %v2655, %v2647
        %v3232 = vpack.c.b16 %v2656, %v2648
        %v3233 = vpack.c.b16 %v2657, %v2649
        %v3234 = vpack.c.b16 %v2658, %v2650
        %v3235 = vpack.c.b16 %v2659, %v2651
        %v3236 = vpack.c.b16 %v2660, %v2652
        %v3237 = vpack.c.b16 %v2669, %v2661
        %v3238 = vpack.c.b16 %v2670, %v2662
        %v3239 = vpack.c.b16 %v2671, %v2663
        %v3240 = vpack.c.b16 %v2672, %v2664
        %v3241 = vpack.c.b16 %v2673, %v2665
        %v3242 = vpack.c.b16 %v2674, %v2666
        %v3243 = vpack.c.b16 %v2675, %v2667
        %v3244 = vpack.c.b16 %v2676, %v2668
        %v3245 = vpack.c.b16 %v2685, %v2677
        %v3246 = vpack.c.b16 %v2686, %v2678
        %v3247 = vpack.c.b16 %v2687, %v2679
        %v3248 = vpack.c.b16 %v2688, %v2680
        %v3249 = vpack.c.b16 %v2689, %v2681
        %v3250 = vpack.c.b16 %v2690, %v2682
        %v3251 = vpack.c.b16 %v2691, %v2683
        %v3252 = vpack.c.b16 %v2692, %v2684
        %v3253 = vpack.c.b16 %v2701, %v2693
        %v3254 = vpack.c.b16 %v2702, %v2694
        %v3255 = vpack.c.b16 %v2703, %v2695
        %v3256 = vpack.c.b16 %v2704, %v2696
        %v3257 = vpack.c.b16 %v2705, %v2697
        %v3258 = vpack.c.b16 %v2706, %v2698
        %v3259 = vpack.c.b16 %v2707, %v2699
        %v3260 = vpack.c.b16 %v2708, %v2700
        %v3261 = vpack.c.b16 %v2717, %v2709
        %v3262 = vpack.c.b16 %v2718, %v2710
        %v3263 = vpack.c.b16 %v2719, %v2711
        %v3264 = vpack.c.b16 %v2720, %v2712
        %v3265 = vpack.c.b16 %v2721, %v2713
        %v3266 = vpack.c.b16 %v2722, %v2714
        %v3267 = vpack.c.b16 %v2723, %v2715
        %v3268 = vpack.c.b16 %v2724, %v2716
        %v3269 = vpack.c.b16 %v2733, %v2725
        %v3270 = vpack.c.b16 %v2734, %v2726
        %v3271 = vpack.c.b16 %v2735, %v2727
        %v3272 = vpack.c.b16 %v2736, %v2728
        %v3273 = vpack.c.b16 %v2737, %v2729
        %v3274 = vpack.c.b16 %v2738, %v2730
        %v3275 = vpack.c.b16 %v2739, %v2731
        %v3276 = vpack.c.b16 %v2740, %v2732
        %v3277 = vpack.c.b16 %v2749, %v2741
        %v3278 = vpack.c.b16 %v2750, %v2742
        %v3279 = vpack.c.b16 %v2751, %v2743
        %v3280 = vpack.c.b16 %v2752, %v2744
        %v3281 = vpack.c.b16 %v2753, %v2745
        %v3282 = vpack.c.b16 %v2754, %v2746
        %v3283 = vpack.c.b16 %v2755, %v2747
        %v3284 = vpack.c.b16 %v2756, %v2748
        %v3285 = vpack.c.b16 %v2765, %v2757
        %v3286 = vpack.c.b16 %v2766, %v2758
        %v3287 = vpack.c.b16 %v2767, %v2759
        %v3288 = vpack.c.b16 %v2768, %v2760
        %v3289 = vpack.c.b16 %v2769, %v2761
        %v3290 = vpack.c.b16 %v2770, %v2762
        %v3291 = vpack.c.b16 %v2771, %v2763
        %v3292 = vpack.c.b16 %v2772, %v2764
        %v3293 = vpack.c.b16 %v2781, %v2773
        %v3294 = vpack.c.b16 %v2782, %v2774
        %v3295 = vpack.c.b16 %v2783, %v2775
        %v3296 = vpack.c.b16 %v2784, %v2776
        %v3297 = vpack.c.b16 %v2785, %v2777
        %v3298 = vpack.c.b16 %v2786, %v2778
        %v3299 = vpack.c.b16 %v2787, %v2779
        %v3300 = vpack.c.b16 %v2788, %v2780
        %3813 = vmatpush.bf16.msra.mxu0 %v2845
        %3814 = vmatpush.bf16.msra.mxu0 %v2837
        %3815 = vmatpush.bf16.msra.mxu0 %v2829
        %3816 = vmatpush.bf16.msra.mxu0 %v2821
        %3817 = vmatpush.bf16.msra.mxu0 %v2813
        %3818 = vmatpush.bf16.msra.mxu0 %v2805
        %3819 = vmatpush.bf16.msra.mxu0 %v2797
        %3820 = vmatpush.bf16.msra.mxu0 %v2789
        %3821 = vmatmul.bf16.gmra.mxu0 %v1237
        %v3822 = vpop.f32.mrf.mxu0
        %v3823 = vadd.f32 0.0, %v3822
        %v3824 = vpop.f32.mrf.mxu0
        %3825 = vdwg.mxu0
        %3826 = vmatpush.bf16.msra.mxu0 %v2909
        %3827 = vmatpush.bf16.msra.mxu0 %v2901
        %3828 = vmatpush.bf16.msra.mxu0 %v2893
        %3829 = vmatpush.bf16.msra.mxu0 %v2885
        %3830 = vmatpush.bf16.msra.mxu0 %v2877
        %3831 = vmatpush.bf16.msra.mxu0 %v2869
        %3832 = vmatpush.bf16.msra.mxu0 %v2861
        %3833 = vmatpush.bf16.msra.mxu0 %v2853
        %3834 = vmatmul.bf16.gmra.mxu0 %v1238
        %v3835 = vpop.f32.mrf.mxu0
        %v3836 = vadd.f32 %v3823, %v3835
        %v3837 = vpop.f32.mrf.mxu0
        %3838 = vdwg.mxu0
        %3839 = vmatpush.bf16.msra.mxu0 %v2973
        %3840 = vmatpush.bf16.msra.mxu0 %v2965
        %3841 = vmatpush.bf16.msra.mxu0 %v2957
        %3842 = vmatpush.bf16.msra.mxu0 %v2949
        %3843 = vmatpush.bf16.msra.mxu0 %v2941
        %3844 = vmatpush.bf16.msra.mxu0 %v2933
        %3845 = vmatpush.bf16.msra.mxu0 %v2925
        %3846 = vmatpush.bf16.msra.mxu0 %v2917
        %3847 = vmatmul.bf16.gmra.mxu0 %v1239
        %v3848 = vpop.f32.mrf.mxu0
        %v3849 = vadd.f32 %v3836, %v3848
        %v3850 = vpop.f32.mrf.mxu0
        %3851 = vdwg.mxu0
        %3852 = vmatpush.bf16.msra.mxu0 %v3037
        %3853 = vmatpush.bf16.msra.mxu0 %v3029
        %3854 = vmatpush.bf16.msra.mxu0 %v3021
        %3855 = vmatpush.bf16.msra.mxu0 %v3013
        %3856 = vmatpush.bf16.msra.mxu0 %v3005
        %3857 = vmatpush.bf16.msra.mxu0 %v2997
        %3858 = vmatpush.bf16.msra.mxu0 %v2989
        %3859 = vmatpush.bf16.msra.mxu0 %v2981
        %3860 = vmatmul.bf16.gmra.mxu0 %v1240
        %v3861 = vpop.f32.mrf.mxu0
        %v3862 = vadd.f32 %v3849, %v3861
        %v3863 = vpop.f32.mrf.mxu0
        %3864 = vdwg.mxu0
        %3865 = vmatpush.bf16.msra.mxu0 %v3101
        %3866 = vmatpush.bf16.msra.mxu0 %v3093
        %3867 = vmatpush.bf16.msra.mxu0 %v3085
        %3868 = vmatpush.bf16.msra.mxu0 %v3077
        %3869 = vmatpush.bf16.msra.mxu0 %v3069
        %3870 = vmatpush.bf16.msra.mxu0 %v3061
        %3871 = vmatpush.bf16.msra.mxu0 %v3053
        %3872 = vmatpush.bf16.msra.mxu0 %v3045
        %3873 = vmatmul.bf16.gmra.mxu0 %v1241
        %v3874 = vpop.f32.mrf.mxu0
        %v3875 = vadd.f32 %v3862, %v3874
        %v3876 = vpop.f32.mrf.mxu0
        %3877 = vdwg.mxu0
        %3878 = vmatpush.bf16.msra.mxu0 %v3165
        %3879 = vmatpush.bf16.msra.mxu0 %v3157
        %3880 = vmatpush.bf16.msra.mxu0 %v3149
        %3881 = vmatpush.bf16.msra.mxu0 %v3141
        %3882 = vmatpush.bf16.msra.mxu0 %v3133
        %3883 = vmatpush.bf16.msra.mxu0 %v3125
        %3884 = vmatpush.bf16.msra.mxu0 %v3117
        %3885 = vmatpush.bf16.msra.mxu0 %v3109
        %3886 = vmatmul.bf16.gmra.mxu0 %v1242
        %v3887 = vpop.f32.mrf.mxu0
        %v3888 = vadd.f32 %v3875, %v3887
        %v3889 = vpop.f32.mrf.mxu0
        %3890 = vdwg.mxu0
        %3891 = vmatpush.bf16.msra.mxu0 %v3229
        %3892 = vmatpush.bf16.msra.mxu0 %v3221
        %3893 = vmatpush.bf16.msra.mxu0 %v3213
        %3894 = vmatpush.bf16.msra.mxu0 %v3205
        %3895 = vmatpush.bf16.msra.mxu0 %v3197
        %3896 = vmatpush.bf16.msra.mxu0 %v3189
        %3897 = vmatpush.bf16.msra.mxu0 %v3181
        %3898 = vmatpush.bf16.msra.mxu0 %v3173
        %3899 = vmatmul.bf16.gmra.mxu0 %v1243
        %v3900 = vpop.f32.mrf.mxu0
        %v3901 = vadd.f32 %v3888, %v3900
        %v3902 = vpop.f32.mrf.mxu0
        %3903 = vdwg.mxu0
        %3904 = vmatpush.bf16.msra.mxu0 %v3293
        %3905 = vmatpush.bf16.msra.mxu0 %v3285
        %3906 = vmatpush.bf16.msra.mxu0 %v3277
        %3907 = vmatpush.bf16.msra.mxu0 %v3269
        %3908 = vmatpush.bf16.msra.mxu0 %v3261
        %3909 = vmatpush.bf16.msra.mxu0 %v3253
        %3910 = vmatpush.bf16.msra.mxu0 %v3245
        %3911 = vmatpush.bf16.msra.mxu0 %v3237
        %3912 = vmatmul.bf16.gmra.mxu0 %v1244
        %v3913 = vpop.f32.mrf.mxu0
        %v3914 = vadd.f32 %v3901, %v3913
        %v3915 = vpop.f32.mrf.mxu0
        %3916 = vdwg.mxu0
        %3917 = vmatpush.bf16.msra.mxu0 %v2846
        %3918 = vmatpush.bf16.msra.mxu0 %v2838
        %3919 = vmatpush.bf16.msra.mxu0 %v2830
        %3920 = vmatpush.bf16.msra.mxu0 %v2822
        %3921 = vmatpush.bf16.msra.mxu0 %v2814
        %3922 = vmatpush.bf16.msra.mxu0 %v2806
        %3923 = vmatpush.bf16.msra.mxu0 %v2798
        %3924 = vmatpush.bf16.msra.mxu0 %v2790
        %3925 = vmatmul.bf16.gmra.mxu0 %v1237
        %v3926 = vpop.f32.mrf.mxu0
        %v3927 = vadd.f32 0.0, %v3926
        %v3928 = vpop.f32.mrf.mxu0
        %3929 = vdwg.mxu0
        %3930 = vmatpush.bf16.msra.mxu0 %v2910
        %3931 = vmatpush.bf16.msra.mxu0 %v2902
        %3932 = vmatpush.bf16.msra.mxu0 %v2894
        %3933 = vmatpush.bf16.msra.mxu0 %v2886
        %3934 = vmatpush.bf16.msra.mxu0 %v2878
        %3935 = vmatpush.bf16.msra.mxu0 %v2870
        %3936 = vmatpush.bf16.msra.mxu0 %v2862
        %3937 = vmatpush.bf16.msra.mxu0 %v2854
        %3938 = vmatmul.bf16.gmra.mxu0 %v1238
        %v3939 = vpop.f32.mrf.mxu0
        %v3940 = vadd.f32 %v3927, %v3939
        %v3941 = vpop.f32.mrf.mxu0
        %3942 = vdwg.mxu0
        %3943 = vmatpush.bf16.msra.mxu0 %v2974
        %3944 = vmatpush.bf16.msra.mxu0 %v2966
        %3945 = vmatpush.bf16.msra.mxu0 %v2958
        %3946 = vmatpush.bf16.msra.mxu0 %v2950
        %3947 = vmatpush.bf16.msra.mxu0 %v2942
        %3948 = vmatpush.bf16.msra.mxu0 %v2934
        %3949 = vmatpush.bf16.msra.mxu0 %v2926
        %3950 = vmatpush.bf16.msra.mxu0 %v2918
        %3951 = vmatmul.bf16.gmra.mxu0 %v1239
        %v3952 = vpop.f32.mrf.mxu0
        %v3953 = vadd.f32 %v3940, %v3952
        %v3954 = vpop.f32.mrf.mxu0
        %3955 = vdwg.mxu0
        %3956 = vmatpush.bf16.msra.mxu0 %v3038
        %3957 = vmatpush.bf16.msra.mxu0 %v3030
        %3958 = vmatpush.bf16.msra.mxu0 %v3022
        %3959 = vmatpush.bf16.msra.mxu0 %v3014
        %3960 = vmatpush.bf16.msra.mxu0 %v3006
        %3961 = vmatpush.bf16.msra.mxu0 %v2998
        %3962 = vmatpush.bf16.msra.mxu0 %v2990
        %3963 = vmatpush.bf16.msra.mxu0 %v2982
        %3964 = vmatmul.bf16.gmra.mxu0 %v1240
        %v3965 = vpop.f32.mrf.mxu0
        %v3966 = vadd.f32 %v3953, %v3965
        %v3967 = vpop.f32.mrf.mxu0
        %3968 = vdwg.mxu0
        %3969 = vmatpush.bf16.msra.mxu0 %v3102
        %3970 = vmatpush.bf16.msra.mxu0 %v3094
        %3971 = vmatpush.bf16.msra.mxu0 %v3086
        %3972 = vmatpush.bf16.msra.mxu0 %v3078
        %3973 = vmatpush.bf16.msra.mxu0 %v3070
        %3974 = vmatpush.bf16.msra.mxu0 %v3062
        %3975 = vmatpush.bf16.msra.mxu0 %v3054
        %3976 = vmatpush.bf16.msra.mxu0 %v3046
        %3977 = vmatmul.bf16.gmra.mxu0 %v1241
        %v3978 = vpop.f32.mrf.mxu0
        %v3979 = vadd.f32 %v3966, %v3978
        %v3980 = vpop.f32.mrf.mxu0
        %3981 = vdwg.mxu0
        %3982 = vmatpush.bf16.msra.mxu0 %v3166
        %3983 = vmatpush.bf16.msra.mxu0 %v3158
        %3984 = vmatpush.bf16.msra.mxu0 %v3150
        %3985 = vmatpush.bf16.msra.mxu0 %v3142
        %3986 = vmatpush.bf16.msra.mxu0 %v3134
        %3987 = vmatpush.bf16.msra.mxu0 %v3126
        %3988 = vmatpush.bf16.msra.mxu0 %v3118
        %3989 = vmatpush.bf16.msra.mxu0 %v3110
        %3990 = vmatmul.bf16.gmra.mxu0 %v1242
        %v3991 = vpop.f32.mrf.mxu0
        %v3992 = vadd.f32 %v3979, %v3991
        %v3993 = vpop.f32.mrf.mxu0
        %3994 = vdwg.mxu0
        %3995 = vmatpush.bf16.msra.mxu0 %v3230
        %3996 = vmatpush.bf16.msra.mxu0 %v3222
        %3997 = vmatpush.bf16.msra.mxu0 %v3214
        %3998 = vmatpush.bf16.msra.mxu0 %v3206
        %3999 = vmatpush.bf16.msra.mxu0 %v3198
        %4000 = vmatpush.bf16.msra.mxu0 %v3190
        %4001 = vmatpush.bf16.msra.mxu0 %v3182
        %4002 = vmatpush.bf16.msra.mxu0 %v3174
        %4003 = vmatmul.bf16.gmra.mxu0 %v1243
        %v4004 = vpop.f32.mrf.mxu0
        %v4005 = vadd.f32 %v3992, %v4004
        %v4006 = vpop.f32.mrf.mxu0
        %4007 = vdwg.mxu0
        %4008 = vmatpush.bf16.msra.mxu0 %v3294
        %4009 = vmatpush.bf16.msra.mxu0 %v3286
        %4010 = vmatpush.bf16.msra.mxu0 %v3278
        %4011 = vmatpush.bf16.msra.mxu0 %v3270
        %4012 = vmatpush.bf16.msra.mxu0 %v3262
        %4013 = vmatpush.bf16.msra.mxu0 %v3254
        %4014 = vmatpush.bf16.msra.mxu0 %v3246
        %4015 = vmatpush.bf16.msra.mxu0 %v3238
        %4016 = vmatmul.bf16.gmra.mxu0 %v1244
        %v4017 = vpop.f32.mrf.mxu0
        %v4018 = vadd.f32 %v4005, %v4017
        %v4019 = vpop.f32.mrf.mxu0
        %4020 = vdwg.mxu0
        %4021 = vmatpush.bf16.msra.mxu0 %v2847
        %4022 = vmatpush.bf16.msra.mxu0 %v2839
        %4023 = vmatpush.bf16.msra.mxu0 %v2831
        %4024 = vmatpush.bf16.msra.mxu0 %v2823
        %4025 = vmatpush.bf16.msra.mxu0 %v2815
        %4026 = vmatpush.bf16.msra.mxu0 %v2807
        %4027 = vmatpush.bf16.msra.mxu0 %v2799
        %4028 = vmatpush.bf16.msra.mxu0 %v2791
        %4029 = vmatmul.bf16.gmra.mxu0 %v1237
        %v4030 = vpop.f32.mrf.mxu0
        %v4031 = vadd.f32 0.0, %v4030
        %v4032 = vpop.f32.mrf.mxu0
        %4033 = vdwg.mxu0
        %4034 = vmatpush.bf16.msra.mxu0 %v2911
        %4035 = vmatpush.bf16.msra.mxu0 %v2903
        %4036 = vmatpush.bf16.msra.mxu0 %v2895
        %4037 = vmatpush.bf16.msra.mxu0 %v2887
        %4038 = vmatpush.bf16.msra.mxu0 %v2879
        %4039 = vmatpush.bf16.msra.mxu0 %v2871
        %4040 = vmatpush.bf16.msra.mxu0 %v2863
        %4041 = vmatpush.bf16.msra.mxu0 %v2855
        %4042 = vmatmul.bf16.gmra.mxu0 %v1238
        %v4043 = vpop.f32.mrf.mxu0
        %v4044 = vadd.f32 %v4031, %v4043
        %v4045 = vpop.f32.mrf.mxu0
        %4046 = vdwg.mxu0
        %4047 = vmatpush.bf16.msra.mxu0 %v2975
        %4048 = vmatpush.bf16.msra.mxu0 %v2967
        %4049 = vmatpush.bf16.msra.mxu0 %v2959
        %4050 = vmatpush.bf16.msra.mxu0 %v2951
        %4051 = vmatpush.bf16.msra.mxu0 %v2943
        %4052 = vmatpush.bf16.msra.mxu0 %v2935
        %4053 = vmatpush.bf16.msra.mxu0 %v2927
        %4054 = vmatpush.bf16.msra.mxu0 %v2919
        %4055 = vmatmul.bf16.gmra.mxu0 %v1239
        %v4056 = vpop.f32.mrf.mxu0
        %v4057 = vadd.f32 %v4044, %v4056
        %v4058 = vpop.f32.mrf.mxu0
        %4059 = vdwg.mxu0
        %4060 = vmatpush.bf16.msra.mxu0 %v3039
        %4061 = vmatpush.bf16.msra.mxu0 %v3031
        %4062 = vmatpush.bf16.msra.mxu0 %v3023
        %4063 = vmatpush.bf16.msra.mxu0 %v3015
        %4064 = vmatpush.bf16.msra.mxu0 %v3007
        %4065 = vmatpush.bf16.msra.mxu0 %v2999
        %4066 = vmatpush.bf16.msra.mxu0 %v2991
        %4067 = vmatpush.bf16.msra.mxu0 %v2983
        %4068 = vmatmul.bf16.gmra.mxu0 %v1240
        %v4069 = vpop.f32.mrf.mxu0
        %v4070 = vadd.f32 %v4057, %v4069
        %v4071 = vpop.f32.mrf.mxu0
        %4072 = vdwg.mxu0
        %4073 = vmatpush.bf16.msra.mxu0 %v3103
        %4074 = vmatpush.bf16.msra.mxu0 %v3095
        %4075 = vmatpush.bf16.msra.mxu0 %v3087
        %4076 = vmatpush.bf16.msra.mxu0 %v3079
        %4077 = vmatpush.bf16.msra.mxu0 %v3071
        %4078 = vmatpush.bf16.msra.mxu0 %v3063
        %4079 = vmatpush.bf16.msra.mxu0 %v3055
        %4080 = vmatpush.bf16.msra.mxu0 %v3047
        %4081 = vmatmul.bf16.gmra.mxu0 %v1241
        %v4082 = vpop.f32.mrf.mxu0
        %v4083 = vadd.f32 %v4070, %v4082
        %v4084 = vpop.f32.mrf.mxu0
        %4085 = vdwg.mxu0
        %4086 = vmatpush.bf16.msra.mxu0 %v3167
        %4087 = vmatpush.bf16.msra.mxu0 %v3159
        %4088 = vmatpush.bf16.msra.mxu0 %v3151
        %4089 = vmatpush.bf16.msra.mxu0 %v3143
        %4090 = vmatpush.bf16.msra.mxu0 %v3135
        %4091 = vmatpush.bf16.msra.mxu0 %v3127
        %4092 = vmatpush.bf16.msra.mxu0 %v3119
        %4093 = vmatpush.bf16.msra.mxu0 %v3111
        %4094 = vmatmul.bf16.gmra.mxu0 %v1242
        %v4095 = vpop.f32.mrf.mxu0
        %v4096 = vadd.f32 %v4083, %v4095
        %v4097 = vpop.f32.mrf.mxu0
        %4098 = vdwg.mxu0
        %4099 = vmatpush.bf16.msra.mxu0 %v3231
        %4100 = vmatpush.bf16.msra.mxu0 %v3223
        %4101 = vmatpush.bf16.msra.mxu0 %v3215
        %4102 = vmatpush.bf16.msra.mxu0 %v3207
        %4103 = vmatpush.bf16.msra.mxu0 %v3199
        %4104 = vmatpush.bf16.msra.mxu0 %v3191
        %4105 = vmatpush.bf16.msra.mxu0 %v3183
        %4106 = vmatpush.bf16.msra.mxu0 %v3175
        %4107 = vmatmul.bf16.gmra.mxu0 %v1243
        %v4108 = vpop.f32.mrf.mxu0
        %v4109 = vadd.f32 %v4096, %v4108
        %v4110 = vpop.f32.mrf.mxu0
        %4111 = vdwg.mxu0
        %4112 = vmatpush.bf16.msra.mxu0 %v3295
        %4113 = vmatpush.bf16.msra.mxu0 %v3287
        %4114 = vmatpush.bf16.msra.mxu0 %v3279
        %4115 = vmatpush.bf16.msra.mxu0 %v3271
        %4116 = vmatpush.bf16.msra.mxu0 %v3263
        %4117 = vmatpush.bf16.msra.mxu0 %v3255
        %4118 = vmatpush.bf16.msra.mxu0 %v3247
        %4119 = vmatpush.bf16.msra.mxu0 %v3239
        %4120 = vmatmul.bf16.gmra.mxu0 %v1244
        %v4121 = vpop.f32.mrf.mxu0
        %v4122 = vadd.f32 %v4109, %v4121
        %v4123 = vpop.f32.mrf.mxu0
        %4124 = vdwg.mxu0
        %4125 = vmatpush.bf16.msra.mxu0 %v2848
        %4126 = vmatpush.bf16.msra.mxu0 %v2840
        %4127 = vmatpush.bf16.msra.mxu0 %v2832
        %4128 = vmatpush.bf16.msra.mxu0 %v2824
        %4129 = vmatpush.bf16.msra.mxu0 %v2816
        %4130 = vmatpush.bf16.msra.mxu0 %v2808
        %4131 = vmatpush.bf16.msra.mxu0 %v2800
        %4132 = vmatpush.bf16.msra.mxu0 %v2792
        %4133 = vmatmul.bf16.gmra.mxu0 %v1237
        %v4134 = vpop.f32.mrf.mxu0
        %v4135 = vadd.f32 0.0, %v4134
        %v4136 = vpop.f32.mrf.mxu0
        %4137 = vdwg.mxu0
        %4138 = vmatpush.bf16.msra.mxu0 %v2912
        %4139 = vmatpush.bf16.msra.mxu0 %v2904
        %4140 = vmatpush.bf16.msra.mxu0 %v2896
        %4141 = vmatpush.bf16.msra.mxu0 %v2888
        %4142 = vmatpush.bf16.msra.mxu0 %v2880
        %4143 = vmatpush.bf16.msra.mxu0 %v2872
        %4144 = vmatpush.bf16.msra.mxu0 %v2864
        %4145 = vmatpush.bf16.msra.mxu0 %v2856
        %4146 = vmatmul.bf16.gmra.mxu0 %v1238
        %v4147 = vpop.f32.mrf.mxu0
        %v4148 = vadd.f32 %v4135, %v4147
        %v4149 = vpop.f32.mrf.mxu0
        %4150 = vdwg.mxu0
        %4151 = vmatpush.bf16.msra.mxu0 %v2976
        %4152 = vmatpush.bf16.msra.mxu0 %v2968
        %4153 = vmatpush.bf16.msra.mxu0 %v2960
        %4154 = vmatpush.bf16.msra.mxu0 %v2952
        %4155 = vmatpush.bf16.msra.mxu0 %v2944
        %4156 = vmatpush.bf16.msra.mxu0 %v2936
        %4157 = vmatpush.bf16.msra.mxu0 %v2928
        %4158 = vmatpush.bf16.msra.mxu0 %v2920
        %4159 = vmatmul.bf16.gmra.mxu0 %v1239
        %v4160 = vpop.f32.mrf.mxu0
        %v4161 = vadd.f32 %v4148, %v4160
        %v4162 = vpop.f32.mrf.mxu0
        %4163 = vdwg.mxu0
        %4164 = vmatpush.bf16.msra.mxu0 %v3040
        %4165 = vmatpush.bf16.msra.mxu0 %v3032
        %4166 = vmatpush.bf16.msra.mxu0 %v3024
        %4167 = vmatpush.bf16.msra.mxu0 %v3016
        %4168 = vmatpush.bf16.msra.mxu0 %v3008
        %4169 = vmatpush.bf16.msra.mxu0 %v3000
        %4170 = vmatpush.bf16.msra.mxu0 %v2992
        %4171 = vmatpush.bf16.msra.mxu0 %v2984
        %4172 = vmatmul.bf16.gmra.mxu0 %v1240
        %v4173 = vpop.f32.mrf.mxu0
        %v4174 = vadd.f32 %v4161, %v4173
        %v4175 = vpop.f32.mrf.mxu0
        %4176 = vdwg.mxu0
        %4177 = vmatpush.bf16.msra.mxu0 %v3104
        %4178 = vmatpush.bf16.msra.mxu0 %v3096
        %4179 = vmatpush.bf16.msra.mxu0 %v3088
        %4180 = vmatpush.bf16.msra.mxu0 %v3080
        %4181 = vmatpush.bf16.msra.mxu0 %v3072
        %4182 = vmatpush.bf16.msra.mxu0 %v3064
        %4183 = vmatpush.bf16.msra.mxu0 %v3056
        %4184 = vmatpush.bf16.msra.mxu0 %v3048
        %4185 = vmatmul.bf16.gmra.mxu0 %v1241
        %v4186 = vpop.f32.mrf.mxu0
        %v4187 = vadd.f32 %v4174, %v4186
        %v4188 = vpop.f32.mrf.mxu0
        %4189 = vdwg.mxu0
        %4190 = vmatpush.bf16.msra.mxu0 %v3168
        %4191 = vmatpush.bf16.msra.mxu0 %v3160
        %4192 = vmatpush.bf16.msra.mxu0 %v3152
        %4193 = vmatpush.bf16.msra.mxu0 %v3144
        %4194 = vmatpush.bf16.msra.mxu0 %v3136
        %4195 = vmatpush.bf16.msra.mxu0 %v3128
        %4196 = vmatpush.bf16.msra.mxu0 %v3120
        %4197 = vmatpush.bf16.msra.mxu0 %v3112
        %4198 = vmatmul.bf16.gmra.mxu0 %v1242
        %v4199 = vpop.f32.mrf.mxu0
        %v4200 = vadd.f32 %v4187, %v4199
        %v4201 = vpop.f32.mrf.mxu0
        %4202 = vdwg.mxu0
        %4203 = vmatpush.bf16.msra.mxu0 %v3232
        %4204 = vmatpush.bf16.msra.mxu0 %v3224
        %4205 = vmatpush.bf16.msra.mxu0 %v3216
        %4206 = vmatpush.bf16.msra.mxu0 %v3208
        %4207 = vmatpush.bf16.msra.mxu0 %v3200
        %4208 = vmatpush.bf16.msra.mxu0 %v3192
        %4209 = vmatpush.bf16.msra.mxu0 %v3184
        %4210 = vmatpush.bf16.msra.mxu0 %v3176
        %4211 = vmatmul.bf16.gmra.mxu0 %v1243
        %v4212 = vpop.f32.mrf.mxu0
        %v4213 = vadd.f32 %v4200, %v4212
        %v4214 = vpop.f32.mrf.mxu0
        %4215 = vdwg.mxu0
        %4216 = vmatpush.bf16.msra.mxu0 %v3296
        %4217 = vmatpush.bf16.msra.mxu0 %v3288
        %4218 = vmatpush.bf16.msra.mxu0 %v3280
        %4219 = vmatpush.bf16.msra.mxu0 %v3272
        %4220 = vmatpush.bf16.msra.mxu0 %v3264
        %4221 = vmatpush.bf16.msra.mxu0 %v3256
        %4222 = vmatpush.bf16.msra.mxu0 %v3248
        %4223 = vmatpush.bf16.msra.mxu0 %v3240
        %4224 = vmatmul.bf16.gmra.mxu0 %v1244
        %v4225 = vpop.f32.mrf.mxu0
        %v4226 = vadd.f32 %v4213, %v4225
        %v4227 = vpop.f32.mrf.mxu0
        %4228 = vdwg.mxu0
        %4229 = vmatpush.bf16.msra.mxu0 %v2849
        %4230 = vmatpush.bf16.msra.mxu0 %v2841
        %4231 = vmatpush.bf16.msra.mxu0 %v2833
        %4232 = vmatpush.bf16.msra.mxu0 %v2825
        %4233 = vmatpush.bf16.msra.mxu0 %v2817
        %4234 = vmatpush.bf16.msra.mxu0 %v2809
        %4235 = vmatpush.bf16.msra.mxu0 %v2801
        %4236 = vmatpush.bf16.msra.mxu0 %v2793
        %4237 = vmatmul.bf16.gmra.mxu0 %v1237
        %v4238 = vpop.f32.mrf.mxu0
        %v4239 = vadd.f32 0.0, %v4238
        %v4240 = vpop.f32.mrf.mxu0
        %4241 = vdwg.mxu0
        %4242 = vmatpush.bf16.msra.mxu0 %v2913
        %4243 = vmatpush.bf16.msra.mxu0 %v2905
        %4244 = vmatpush.bf16.msra.mxu0 %v2897
        %4245 = vmatpush.bf16.msra.mxu0 %v2889
        %4246 = vmatpush.bf16.msra.mxu0 %v2881
        %4247 = vmatpush.bf16.msra.mxu0 %v2873
        %4248 = vmatpush.bf16.msra.mxu0 %v2865
        %4249 = vmatpush.bf16.msra.mxu0 %v2857
        %4250 = vmatmul.bf16.gmra.mxu0 %v1238
        %v4251 = vpop.f32.mrf.mxu0
        %v4252 = vadd.f32 %v4239, %v4251
        %v4253 = vpop.f32.mrf.mxu0
        %4254 = vdwg.mxu0
        %4255 = vmatpush.bf16.msra.mxu0 %v2977
        %4256 = vmatpush.bf16.msra.mxu0 %v2969
        %4257 = vmatpush.bf16.msra.mxu0 %v2961
        %4258 = vmatpush.bf16.msra.mxu0 %v2953
        %4259 = vmatpush.bf16.msra.mxu0 %v2945
        %4260 = vmatpush.bf16.msra.mxu0 %v2937
        %4261 = vmatpush.bf16.msra.mxu0 %v2929
        %4262 = vmatpush.bf16.msra.mxu0 %v2921
        %4263 = vmatmul.bf16.gmra.mxu0 %v1239
        %v4264 = vpop.f32.mrf.mxu0
        %v4265 = vadd.f32 %v4252, %v4264
        %v4266 = vpop.f32.mrf.mxu0
        %4267 = vdwg.mxu0
        %4268 = vmatpush.bf16.msra.mxu0 %v3041
        %4269 = vmatpush.bf16.msra.mxu0 %v3033
        %4270 = vmatpush.bf16.msra.mxu0 %v3025
        %4271 = vmatpush.bf16.msra.mxu0 %v3017
        %4272 = vmatpush.bf16.msra.mxu0 %v3009
        %4273 = vmatpush.bf16.msra.mxu0 %v3001
        %4274 = vmatpush.bf16.msra.mxu0 %v2993
        %4275 = vmatpush.bf16.msra.mxu0 %v2985
        %4276 = vmatmul.bf16.gmra.mxu0 %v1240
        %v4277 = vpop.f32.mrf.mxu0
        %v4278 = vadd.f32 %v4265, %v4277
        %v4279 = vpop.f32.mrf.mxu0
        %4280 = vdwg.mxu0
        %4281 = vmatpush.bf16.msra.mxu0 %v3105
        %4282 = vmatpush.bf16.msra.mxu0 %v3097
        %4283 = vmatpush.bf16.msra.mxu0 %v3089
        %4284 = vmatpush.bf16.msra.mxu0 %v3081
        %4285 = vmatpush.bf16.msra.mxu0 %v3073
        %4286 = vmatpush.bf16.msra.mxu0 %v3065
        %4287 = vmatpush.bf16.msra.mxu0 %v3057
        %4288 = vmatpush.bf16.msra.mxu0 %v3049
        %4289 = vmatmul.bf16.gmra.mxu0 %v1241
        %v4290 = vpop.f32.mrf.mxu0
        %v4291 = vadd.f32 %v4278, %v4290
        %v4292 = vpop.f32.mrf.mxu0
        %4293 = vdwg.mxu0
        %4294 = vmatpush.bf16.msra.mxu0 %v3169
        %4295 = vmatpush.bf16.msra.mxu0 %v3161
        %4296 = vmatpush.bf16.msra.mxu0 %v3153
        %4297 = vmatpush.bf16.msra.mxu0 %v3145
        %4298 = vmatpush.bf16.msra.mxu0 %v3137
        %4299 = vmatpush.bf16.msra.mxu0 %v3129
        %4300 = vmatpush.bf16.msra.mxu0 %v3121
        %4301 = vmatpush.bf16.msra.mxu0 %v3113
        %4302 = vmatmul.bf16.gmra.mxu0 %v1242
        %v4303 = vpop.f32.mrf.mxu0
        %v4304 = vadd.f32 %v4291, %v4303
        %v4305 = vpop.f32.mrf.mxu0
        %4306 = vdwg.mxu0
        %4307 = vmatpush.bf16.msra.mxu0 %v3233
        %4308 = vmatpush.bf16.msra.mxu0 %v3225
        %4309 = vmatpush.bf16.msra.mxu0 %v3217
        %4310 = vmatpush.bf16.msra.mxu0 %v3209
        %4311 = vmatpush.bf16.msra.mxu0 %v3201
        %4312 = vmatpush.bf16.msra.mxu0 %v3193
        %4313 = vmatpush.bf16.msra.mxu0 %v3185
        %4314 = vmatpush.bf16.msra.mxu0 %v3177
        %4315 = vmatmul.bf16.gmra.mxu0 %v1243
        %v4316 = vpop.f32.mrf.mxu0
        %v4317 = vadd.f32 %v4304, %v4316
        %v4318 = vpop.f32.mrf.mxu0
        %4319 = vdwg.mxu0
        %4320 = vmatpush.bf16.msra.mxu0 %v3297
        %4321 = vmatpush.bf16.msra.mxu0 %v3289
        %4322 = vmatpush.bf16.msra.mxu0 %v3281
        %4323 = vmatpush.bf16.msra.mxu0 %v3273
        %4324 = vmatpush.bf16.msra.mxu0 %v3265
        %4325 = vmatpush.bf16.msra.mxu0 %v3257
        %4326 = vmatpush.bf16.msra.mxu0 %v3249
        %4327 = vmatpush.bf16.msra.mxu0 %v3241
        %4328 = vmatmul.bf16.gmra.mxu0 %v1244
        %v4329 = vpop.f32.mrf.mxu0
        %v4330 = vadd.f32 %v4317, %v4329
        %v4331 = vpop.f32.mrf.mxu0
        %4332 = vdwg.mxu0
        %4333 = vmatpush.bf16.msra.mxu0 %v2850
        %4334 = vmatpush.bf16.msra.mxu0 %v2842
        %4335 = vmatpush.bf16.msra.mxu0 %v2834
        %4336 = vmatpush.bf16.msra.mxu0 %v2826
        %4337 = vmatpush.bf16.msra.mxu0 %v2818
        %4338 = vmatpush.bf16.msra.mxu0 %v2810
        %4339 = vmatpush.bf16.msra.mxu0 %v2802
        %4340 = vmatpush.bf16.msra.mxu0 %v2794
        %4341 = vmatmul.bf16.gmra.mxu0 %v1237
        %v4342 = vpop.f32.mrf.mxu0
        %v4343 = vadd.f32 0.0, %v4342
        %v4344 = vpop.f32.mrf.mxu0
        %4345 = vdwg.mxu0
        %4346 = vmatpush.bf16.msra.mxu0 %v2914
        %4347 = vmatpush.bf16.msra.mxu0 %v2906
        %4348 = vmatpush.bf16.msra.mxu0 %v2898
        %4349 = vmatpush.bf16.msra.mxu0 %v2890
        %4350 = vmatpush.bf16.msra.mxu0 %v2882
        %4351 = vmatpush.bf16.msra.mxu0 %v2874
        %4352 = vmatpush.bf16.msra.mxu0 %v2866
        %4353 = vmatpush.bf16.msra.mxu0 %v2858
        %4354 = vmatmul.bf16.gmra.mxu0 %v1238
        %v4355 = vpop.f32.mrf.mxu0
        %v4356 = vadd.f32 %v4343, %v4355
        %v4357 = vpop.f32.mrf.mxu0
        %4358 = vdwg.mxu0
        %4359 = vmatpush.bf16.msra.mxu0 %v2978
        %4360 = vmatpush.bf16.msra.mxu0 %v2970
        %4361 = vmatpush.bf16.msra.mxu0 %v2962
        %4362 = vmatpush.bf16.msra.mxu0 %v2954
        %4363 = vmatpush.bf16.msra.mxu0 %v2946
        %4364 = vmatpush.bf16.msra.mxu0 %v2938
        %4365 = vmatpush.bf16.msra.mxu0 %v2930
        %4366 = vmatpush.bf16.msra.mxu0 %v2922
        %4367 = vmatmul.bf16.gmra.mxu0 %v1239
        %v4368 = vpop.f32.mrf.mxu0
        %v4369 = vadd.f32 %v4356, %v4368
        %v4370 = vpop.f32.mrf.mxu0
        %4371 = vdwg.mxu0
        %4372 = vmatpush.bf16.msra.mxu0 %v3042
        %4373 = vmatpush.bf16.msra.mxu0 %v3034
        %4374 = vmatpush.bf16.msra.mxu0 %v3026
        %4375 = vmatpush.bf16.msra.mxu0 %v3018
        %4376 = vmatpush.bf16.msra.mxu0 %v3010
        %4377 = vmatpush.bf16.msra.mxu0 %v3002
        %4378 = vmatpush.bf16.msra.mxu0 %v2994
        %4379 = vmatpush.bf16.msra.mxu0 %v2986
        %4380 = vmatmul.bf16.gmra.mxu0 %v1240
        %v4381 = vpop.f32.mrf.mxu0
        %v4382 = vadd.f32 %v4369, %v4381
        %v4383 = vpop.f32.mrf.mxu0
        %4384 = vdwg.mxu0
        %4385 = vmatpush.bf16.msra.mxu0 %v3106
        %4386 = vmatpush.bf16.msra.mxu0 %v3098
        %4387 = vmatpush.bf16.msra.mxu0 %v3090
        %4388 = vmatpush.bf16.msra.mxu0 %v3082
        %4389 = vmatpush.bf16.msra.mxu0 %v3074
        %4390 = vmatpush.bf16.msra.mxu0 %v3066
        %4391 = vmatpush.bf16.msra.mxu0 %v3058
        %4392 = vmatpush.bf16.msra.mxu0 %v3050
        %4393 = vmatmul.bf16.gmra.mxu0 %v1241
        %v4394 = vpop.f32.mrf.mxu0
        %v4395 = vadd.f32 %v4382, %v4394
        %v4396 = vpop.f32.mrf.mxu0
        %4397 = vdwg.mxu0
        %4398 = vmatpush.bf16.msra.mxu0 %v3170
        %4399 = vmatpush.bf16.msra.mxu0 %v3162
        %4400 = vmatpush.bf16.msra.mxu0 %v3154
        %4401 = vmatpush.bf16.msra.mxu0 %v3146
        %4402 = vmatpush.bf16.msra.mxu0 %v3138
        %4403 = vmatpush.bf16.msra.mxu0 %v3130
        %4404 = vmatpush.bf16.msra.mxu0 %v3122
        %4405 = vmatpush.bf16.msra.mxu0 %v3114
        %4406 = vmatmul.bf16.gmra.mxu0 %v1242
        %v4407 = vpop.f32.mrf.mxu0
        %v4408 = vadd.f32 %v4395, %v4407
        %v4409 = vpop.f32.mrf.mxu0
        %4410 = vdwg.mxu0
        %4411 = vmatpush.bf16.msra.mxu0 %v3234
        %4412 = vmatpush.bf16.msra.mxu0 %v3226
        %4413 = vmatpush.bf16.msra.mxu0 %v3218
        %4414 = vmatpush.bf16.msra.mxu0 %v3210
        %4415 = vmatpush.bf16.msra.mxu0 %v3202
        %4416 = vmatpush.bf16.msra.mxu0 %v3194
        %4417 = vmatpush.bf16.msra.mxu0 %v3186
        %4418 = vmatpush.bf16.msra.mxu0 %v3178
        %4419 = vmatmul.bf16.gmra.mxu0 %v1243
        %v4420 = vpop.f32.mrf.mxu0
        %v4421 = vadd.f32 %v4408, %v4420
        %v4422 = vpop.f32.mrf.mxu0
        %4423 = vdwg.mxu0
        %4424 = vmatpush.bf16.msra.mxu0 %v3298
        %4425 = vmatpush.bf16.msra.mxu0 %v3290
        %4426 = vmatpush.bf16.msra.mxu0 %v3282
        %4427 = vmatpush.bf16.msra.mxu0 %v3274
        %4428 = vmatpush.bf16.msra.mxu0 %v3266
        %4429 = vmatpush.bf16.msra.mxu0 %v3258
        %4430 = vmatpush.bf16.msra.mxu0 %v3250
        %4431 = vmatpush.bf16.msra.mxu0 %v3242
        %4432 = vmatmul.bf16.gmra.mxu0 %v1244
        %v4433 = vpop.f32.mrf.mxu0
        %v4434 = vadd.f32 %v4421, %v4433
        %v4435 = vpop.f32.mrf.mxu0
        %4436 = vdwg.mxu0
        %4437 = vmatpush.bf16.msra.mxu0 %v2851
        %4438 = vmatpush.bf16.msra.mxu0 %v2843
        %4439 = vmatpush.bf16.msra.mxu0 %v2835
        %4440 = vmatpush.bf16.msra.mxu0 %v2827
        %4441 = vmatpush.bf16.msra.mxu0 %v2819
        %4442 = vmatpush.bf16.msra.mxu0 %v2811
        %4443 = vmatpush.bf16.msra.mxu0 %v2803
        %4444 = vmatpush.bf16.msra.mxu0 %v2795
        %4445 = vmatmul.bf16.gmra.mxu0 %v1237
        %v4446 = vpop.f32.mrf.mxu0
        %v4447 = vadd.f32 0.0, %v4446
        %v4448 = vpop.f32.mrf.mxu0
        %4449 = vdwg.mxu0
        %4450 = vmatpush.bf16.msra.mxu0 %v2915
        %4451 = vmatpush.bf16.msra.mxu0 %v2907
        %4452 = vmatpush.bf16.msra.mxu0 %v2899
        %4453 = vmatpush.bf16.msra.mxu0 %v2891
        %4454 = vmatpush.bf16.msra.mxu0 %v2883
        %4455 = vmatpush.bf16.msra.mxu0 %v2875
        %4456 = vmatpush.bf16.msra.mxu0 %v2867
        %4457 = vmatpush.bf16.msra.mxu0 %v2859
        %4458 = vmatmul.bf16.gmra.mxu0 %v1238
        %v4459 = vpop.f32.mrf.mxu0
        %v4460 = vadd.f32 %v4447, %v4459
        %v4461 = vpop.f32.mrf.mxu0
        %4462 = vdwg.mxu0
        %4463 = vmatpush.bf16.msra.mxu0 %v2979
        %4464 = vmatpush.bf16.msra.mxu0 %v2971
        %4465 = vmatpush.bf16.msra.mxu0 %v2963
        %4466 = vmatpush.bf16.msra.mxu0 %v2955
        %4467 = vmatpush.bf16.msra.mxu0 %v2947
        %4468 = vmatpush.bf16.msra.mxu0 %v2939
        %4469 = vmatpush.bf16.msra.mxu0 %v2931
        %4470 = vmatpush.bf16.msra.mxu0 %v2923
        %4471 = vmatmul.bf16.gmra.mxu0 %v1239
        %v4472 = vpop.f32.mrf.mxu0
        %v4473 = vadd.f32 %v4460, %v4472
        %v4474 = vpop.f32.mrf.mxu0
        %4475 = vdwg.mxu0
        %4476 = vmatpush.bf16.msra.mxu0 %v3043
        %4477 = vmatpush.bf16.msra.mxu0 %v3035
        %4478 = vmatpush.bf16.msra.mxu0 %v3027
        %4479 = vmatpush.bf16.msra.mxu0 %v3019
        %4480 = vmatpush.bf16.msra.mxu0 %v3011
        %4481 = vmatpush.bf16.msra.mxu0 %v3003
        %4482 = vmatpush.bf16.msra.mxu0 %v2995
        %4483 = vmatpush.bf16.msra.mxu0 %v2987
        %4484 = vmatmul.bf16.gmra.mxu0 %v1240
        %v4485 = vpop.f32.mrf.mxu0
        %v4486 = vadd.f32 %v4473, %v4485
        %v4487 = vpop.f32.mrf.mxu0
        %4488 = vdwg.mxu0
        %4489 = vmatpush.bf16.msra.mxu0 %v3107
        %4490 = vmatpush.bf16.msra.mxu0 %v3099
        %4491 = vmatpush.bf16.msra.mxu0 %v3091
        %4492 = vmatpush.bf16.msra.mxu0 %v3083
        %4493 = vmatpush.bf16.msra.mxu0 %v3075
        %4494 = vmatpush.bf16.msra.mxu0 %v3067
        %4495 = vmatpush.bf16.msra.mxu0 %v3059
        %4496 = vmatpush.bf16.msra.mxu0 %v3051
        %4497 = vmatmul.bf16.gmra.mxu0 %v1241
        %v4498 = vpop.f32.mrf.mxu0
        %v4499 = vadd.f32 %v4486, %v4498
        %v4500 = vpop.f32.mrf.mxu0
        %4501 = vdwg.mxu0
        %4502 = vmatpush.bf16.msra.mxu0 %v3171
        %4503 = vmatpush.bf16.msra.mxu0 %v3163
        %4504 = vmatpush.bf16.msra.mxu0 %v3155
        %4505 = vmatpush.bf16.msra.mxu0 %v3147
        %4506 = vmatpush.bf16.msra.mxu0 %v3139
        %4507 = vmatpush.bf16.msra.mxu0 %v3131
        %4508 = vmatpush.bf16.msra.mxu0 %v3123
        %4509 = vmatpush.bf16.msra.mxu0 %v3115
        %4510 = vmatmul.bf16.gmra.mxu0 %v1242
        %v4511 = vpop.f32.mrf.mxu0
        %v4512 = vadd.f32 %v4499, %v4511
        %v4513 = vpop.f32.mrf.mxu0
        %4514 = vdwg.mxu0
        %4515 = vmatpush.bf16.msra.mxu0 %v3235
        %4516 = vmatpush.bf16.msra.mxu0 %v3227
        %4517 = vmatpush.bf16.msra.mxu0 %v3219
        %4518 = vmatpush.bf16.msra.mxu0 %v3211
        %4519 = vmatpush.bf16.msra.mxu0 %v3203
        %4520 = vmatpush.bf16.msra.mxu0 %v3195
        %4521 = vmatpush.bf16.msra.mxu0 %v3187
        %4522 = vmatpush.bf16.msra.mxu0 %v3179
        %4523 = vmatmul.bf16.gmra.mxu0 %v1243
        %v4524 = vpop.f32.mrf.mxu0
        %v4525 = vadd.f32 %v4512, %v4524
        %v4526 = vpop.f32.mrf.mxu0
        %4527 = vdwg.mxu0
        %4528 = vmatpush.bf16.msra.mxu0 %v3299
        %4529 = vmatpush.bf16.msra.mxu0 %v3291
        %4530 = vmatpush.bf16.msra.mxu0 %v3283
        %4531 = vmatpush.bf16.msra.mxu0 %v3275
        %4532 = vmatpush.bf16.msra.mxu0 %v3267
        %4533 = vmatpush.bf16.msra.mxu0 %v3259
        %4534 = vmatpush.bf16.msra.mxu0 %v3251
        %4535 = vmatpush.bf16.msra.mxu0 %v3243
        %4536 = vmatmul.bf16.gmra.mxu0 %v1244
        %v4537 = vpop.f32.mrf.mxu0
        %v4538 = vadd.f32 %v4525, %v4537
        %v4539 = vpop.f32.mrf.mxu0
        %4540 = vdwg.mxu0
        %4541 = vmatpush.bf16.msra.mxu0 %v2852
        %4542 = vmatpush.bf16.msra.mxu0 %v2844
        %4543 = vmatpush.bf16.msra.mxu0 %v2836
        %4544 = vmatpush.bf16.msra.mxu0 %v2828
        %4545 = vmatpush.bf16.msra.mxu0 %v2820
        %4546 = vmatpush.bf16.msra.mxu0 %v2812
        %4547 = vmatpush.bf16.msra.mxu0 %v2804
        %4548 = vmatpush.bf16.msra.mxu0 %v2796
        %4549 = vmatmul.bf16.gmra.mxu0 %v1237
        %v4550 = vpop.f32.mrf.mxu0
        %v4551 = vadd.f32 0.0, %v4550
        %v4552 = vpop.f32.mrf.mxu0
        %4553 = vdwg.mxu0
        %4554 = vmatpush.bf16.msra.mxu0 %v2916
        %4555 = vmatpush.bf16.msra.mxu0 %v2908
        %4556 = vmatpush.bf16.msra.mxu0 %v2900
        %4557 = vmatpush.bf16.msra.mxu0 %v2892
        %4558 = vmatpush.bf16.msra.mxu0 %v2884
        %4559 = vmatpush.bf16.msra.mxu0 %v2876
        %4560 = vmatpush.bf16.msra.mxu0 %v2868
        %4561 = vmatpush.bf16.msra.mxu0 %v2860
        %4562 = vmatmul.bf16.gmra.mxu0 %v1238
        %v4563 = vpop.f32.mrf.mxu0
        %v4564 = vadd.f32 %v4551, %v4563
        %v4565 = vpop.f32.mrf.mxu0
        %4566 = vdwg.mxu0
        %4567 = vmatpush.bf16.msra.mxu0 %v2980
        %4568 = vmatpush.bf16.msra.mxu0 %v2972
        %4569 = vmatpush.bf16.msra.mxu0 %v2964
        %4570 = vmatpush.bf16.msra.mxu0 %v2956
        %4571 = vmatpush.bf16.msra.mxu0 %v2948
        %4572 = vmatpush.bf16.msra.mxu0 %v2940
        %4573 = vmatpush.bf16.msra.mxu0 %v2932
        %4574 = vmatpush.bf16.msra.mxu0 %v2924
        %4575 = vmatmul.bf16.gmra.mxu0 %v1239
        %v4576 = vpop.f32.mrf.mxu0
        %v4577 = vadd.f32 %v4564, %v4576
        %v4578 = vpop.f32.mrf.mxu0
        %4579 = vdwg.mxu0
        %4580 = vmatpush.bf16.msra.mxu0 %v3044
        %4581 = vmatpush.bf16.msra.mxu0 %v3036
        %4582 = vmatpush.bf16.msra.mxu0 %v3028
        %4583 = vmatpush.bf16.msra.mxu0 %v3020
        %4584 = vmatpush.bf16.msra.mxu0 %v3012
        %4585 = vmatpush.bf16.msra.mxu0 %v3004
        %4586 = vmatpush.bf16.msra.mxu0 %v2996
        %4587 = vmatpush.bf16.msra.mxu0 %v2988
        %4588 = vmatmul.bf16.gmra.mxu0 %v1240
        %v4589 = vpop.f32.mrf.mxu0
        %v4590 = vadd.f32 %v4577, %v4589
        %v4591 = vpop.f32.mrf.mxu0
        %4592 = vdwg.mxu0
        %4593 = vmatpush.bf16.msra.mxu0 %v3108
        %4594 = vmatpush.bf16.msra.mxu0 %v3100
        %4595 = vmatpush.bf16.msra.mxu0 %v3092
        %4596 = vmatpush.bf16.msra.mxu0 %v3084
        %4597 = vmatpush.bf16.msra.mxu0 %v3076
        %4598 = vmatpush.bf16.msra.mxu0 %v3068
        %4599 = vmatpush.bf16.msra.mxu0 %v3060
        %4600 = vmatpush.bf16.msra.mxu0 %v3052
        %4601 = vmatmul.bf16.gmra.mxu0 %v1241
        %v4602 = vpop.f32.mrf.mxu0
        %v4603 = vadd.f32 %v4590, %v4602
        %v4604 = vpop.f32.mrf.mxu0
        %4605 = vdwg.mxu0
        %4606 = vmatpush.bf16.msra.mxu0 %v3172
        %4607 = vmatpush.bf16.msra.mxu0 %v3164
        %4608 = vmatpush.bf16.msra.mxu0 %v3156
        %4609 = vmatpush.bf16.msra.mxu0 %v3148
        %4610 = vmatpush.bf16.msra.mxu0 %v3140
        %4611 = vmatpush.bf16.msra.mxu0 %v3132
        %4612 = vmatpush.bf16.msra.mxu0 %v3124
        %4613 = vmatpush.bf16.msra.mxu0 %v3116
        %4614 = vmatmul.bf16.gmra.mxu0 %v1242
        %v4615 = vpop.f32.mrf.mxu0
        %v4616 = vadd.f32 %v4603, %v4615
        %v4617 = vpop.f32.mrf.mxu0
        %4618 = vdwg.mxu0
        %4619 = vmatpush.bf16.msra.mxu0 %v3236
        %4620 = vmatpush.bf16.msra.mxu0 %v3228
        %4621 = vmatpush.bf16.msra.mxu0 %v3220
        %4622 = vmatpush.bf16.msra.mxu0 %v3212
        %4623 = vmatpush.bf16.msra.mxu0 %v3204
        %4624 = vmatpush.bf16.msra.mxu0 %v3196
        %4625 = vmatpush.bf16.msra.mxu0 %v3188
        %4626 = vmatpush.bf16.msra.mxu0 %v3180
        %4627 = vmatmul.bf16.gmra.mxu0 %v1243
        %v4628 = vpop.f32.mrf.mxu0
        %v4629 = vadd.f32 %v4616, %v4628
        %v4630 = vpop.f32.mrf.mxu0
        %4631 = vdwg.mxu0
        %4632 = vmatpush.bf16.msra.mxu0 %v3300
        %4633 = vmatpush.bf16.msra.mxu0 %v3292
        %4634 = vmatpush.bf16.msra.mxu0 %v3284
        %4635 = vmatpush.bf16.msra.mxu0 %v3276
        %4636 = vmatpush.bf16.msra.mxu0 %v3268
        %4637 = vmatpush.bf16.msra.mxu0 %v3260
        %4638 = vmatpush.bf16.msra.mxu0 %v3252
        %4639 = vmatpush.bf16.msra.mxu0 %v3244
        %4640 = vmatmul.bf16.gmra.mxu0 %v1244
        %v4641 = vpop.f32.mrf.mxu0
        %v4642 = vadd.f32 %v4629, %v4641
        %v4643 = vpop.f32.mrf.mxu0
        %4644 = vdwg.mxu0
        %v4645 = vadd.f32 %v701, %v3914
        %v4646 = vadd.f32 %v702, %v4018
        %v4647 = vadd.f32 %v703, %v4122
        %v4648 = vadd.f32 %v704, %v4226
        %v4649 = vadd.f32 %v705, %v4330
        %v4650 = vadd.f32 %v706, %v4434
        %v4651 = vadd.f32 %v707, %v4538
        %v4652 = vadd.f32 %v708, %v4642
        %4653 = vst [vmem:[#allocation2] sm:$0xff] %v4645
        %4654 = vst [vmem:[#allocation2 + $0x8] sm:$0xff] %v4646
        %4655 = vst [vmem:[#allocation2 + $0x10] sm:$0xff] %v4647
        %4656 = vst [vmem:[#allocation2 + $0x18] sm:$0xff] %v4648
        %4657 = vst [vmem:[#allocation2 + $0x20] sm:$0xff] %v4649
        %4658 = vst [vmem:[#allocation2 + $0x28] sm:$0xff] %v4650
        %4659 = vst [vmem:[#allocation2 + $0x30] sm:$0xff] %v4651
        %4660 = vst [vmem:[#allocation2 + $0x38] sm:$0xff] %v4652
        %p4661 = scmp.eq.s32.totalorder %s29, 3
        // Predicated region
        $region77: #{instance_da_forward.1} parent=51 // pred_check
          %p4662 = pneg %p4661
        $region78: #{instance_da_forward.1} parent=51 // pred_check_branch
          %4664 = sbr.rel (%p4662) target = $region80
        $region79: #{instance_da_forward.1} parent=51 // pred_region
          %v4665 = vld [vmem:[#allocation2] sm:$0xff]
          %v4666 = vld [vmem:[#allocation2 + $0x8] sm:$0xff]
          %v4667 = vld [vmem:[#allocation2 + $0x10] sm:$0xff]
          %v4668 = vld [vmem:[#allocation2 + $0x18] sm:$0xff]
          %v4669 = vld [vmem:[#allocation2 + $0x20] sm:$0xff]
          %v4670 = vld [vmem:[#allocation2 + $0x28] sm:$0xff]
          %v4671 = vld [vmem:[#allocation2 + $0x30] sm:$0xff]
          %v4672 = vld [vmem:[#allocation2 + $0x38] sm:$0xff]
          %v4673 = vld [vmem:[#allocation11] sm:$0xff]
          %v4675 = vperm.slane %v4673, 0
          %v4676 = vperm.slane %v4673, 1
          %v4677 = vperm.slane %v4673, 2
          %v4678 = vperm.slane %v4673, 3
          %v4679 = vperm.slane %v4673, 4
          %v4680 = vperm.slane %v4673, 5
          %v4681 = vperm.slane %v4673, 6
          %v4682 = vperm.slane %v4673, 7
          %v4691 = vadd.f32 %v4665, %v4675
          %v4692 = vadd.f32 %v4666, %v4676
          %v4693 = vadd.f32 %v4667, %v4677
          %v4694 = vadd.f32 %v4668, %v4678
          %v4695 = vadd.f32 %v4669, %v4679
          %v4696 = vadd.f32 %v4670, %v4680
          %v4697 = vadd.f32 %v4671, %v4681
          %v4698 = vadd.f32 %v4672, %v4682
          %v4699 = vmax.f32 %v4691, 0.0
          %v4700 = vmax.f32 %v4692, 0.0
          %v4701 = vmax.f32 %v4693, 0.0
          %v4702 = vmax.f32 %v4694, 0.0
          %v4703 = vmax.f32 %v4695, 0.0
          %v4704 = vmax.f32 %v4696, 0.0
          %v4705 = vmax.f32 %v4697, 0.0
          %v4706 = vmax.f32 %v4698, 0.0
          %v4707 = vpack.c.bf16 %v4699, %v4699
          %v4708 = vpack.c.bf16 %v4700, %v4700
          %v4709 = vpack.c.bf16 %v4701, %v4701
          %v4710 = vpack.c.bf16 %v4702, %v4702
          %v4711 = vpack.c.bf16 %v4703, %v4703
          %v4712 = vpack.c.bf16 %v4704, %v4704
          %v4713 = vpack.c.bf16 %v4705, %v4705
          %v4714 = vpack.c.bf16 %v4706, %v4706
          %v4715 = vld [vmem:[#allocation3] sm:$0xff]
          %v4716 = vld [vmem:[#allocation3 + $0x8] sm:$0xff]
          %v4717 = vld [vmem:[#allocation3 + $0x10] sm:$0xff]
          %v4718 = vld [vmem:[#allocation3 + $0x18] sm:$0xff]
          %v4719 = vld [vmem:[#allocation3 + $0x20] sm:$0xff]
          %v4720 = vld [vmem:[#allocation3 + $0x28] sm:$0xff]
          %v4721 = vld [vmem:[#allocation3 + $0x30] sm:$0xff]
          %v4722 = vld [vmem:[#allocation3 + $0x38] sm:$0xff]
          %v4723 = vld [vmem:[#allocation3 + $0x40] sm:$0xff]
          %v4724 = vld [vmem:[#allocation3 + $0x48] sm:$0xff]
          %v4725 = vld [vmem:[#allocation3 + $0x50] sm:$0xff]
          %v4726 = vld [vmem:[#allocation3 + $0x58] sm:$0xff]
          %v4727 = vld [vmem:[#allocation3 + $0x60] sm:$0xff]
          %v4728 = vld [vmem:[#allocation3 + $0x68] sm:$0xff]
          %v4729 = vld [vmem:[#allocation3 + $0x70] sm:$0xff]
          %v4730 = vld [vmem:[#allocation3 + $0x78] sm:$0xff]
          %v4731 = vld [vmem:[#allocation3 + $0x80] sm:$0xff]
          %v4732 = vld [vmem:[#allocation3 + $0x88] sm:$0xff]
          %v4733 = vld [vmem:[#allocation3 + $0x90] sm:$0xff]
          %v4734 = vld [vmem:[#allocation3 + $0x98] sm:$0xff]
          %v4735 = vld [vmem:[#allocation3 + $0xa0] sm:$0xff]
          %v4736 = vld [vmem:[#allocation3 + $0xa8] sm:$0xff]
          %v4737 = vld [vmem:[#allocation3 + $0xb0] sm:$0xff]
          %v4738 = vld [vmem:[#allocation3 + $0xb8] sm:$0xff]
          %v4739 = vld [vmem:[#allocation3 + $0xc0] sm:$0xff]
          %v4740 = vld [vmem:[#allocation3 + $0xc8] sm:$0xff]
          %v4741 = vld [vmem:[#allocation3 + $0xd0] sm:$0xff]
          %v4742 = vld [vmem:[#allocation3 + $0xd8] sm:$0xff]
          %v4743 = vld [vmem:[#allocation3 + $0xe0] sm:$0xff]
          %v4744 = vld [vmem:[#allocation3 + $0xe8] sm:$0xff]
          %v4745 = vld [vmem:[#allocation3 + $0xf0] sm:$0xff]
          %v4746 = vld [vmem:[#allocation3 + $0xf8] sm:$0xff]
          %v4747 = vld [vmem:[#allocation3 + $0x100] sm:$0xff]
          %v4748 = vld [vmem:[#allocation3 + $0x108] sm:$0xff]
          %v4749 = vld [vmem:[#allocation3 + $0x110] sm:$0xff]
          %v4750 = vld [vmem:[#allocation3 + $0x118] sm:$0xff]
          %v4751 = vld [vmem:[#allocation3 + $0x120] sm:$0xff]
          %v4752 = vld [vmem:[#allocation3 + $0x128] sm:$0xff]
          %v4753 = vld [vmem:[#allocation3 + $0x130] sm:$0xff]
          %v4754 = vld [vmem:[#allocation3 + $0x138] sm:$0xff]
          %v4755 = vld [vmem:[#allocation3 + $0x140] sm:$0xff]
          %v4756 = vld [vmem:[#allocation3 + $0x148] sm:$0xff]
          %v4757 = vld [vmem:[#allocation3 + $0x150] sm:$0xff]
          %v4758 = vld [vmem:[#allocation3 + $0x158] sm:$0xff]
          %v4759 = vld [vmem:[#allocation3 + $0x160] sm:$0xff]
          %v4760 = vld [vmem:[#allocation3 + $0x168] sm:$0xff]
          %v4761 = vld [vmem:[#allocation3 + $0x170] sm:$0xff]
          %v4762 = vld [vmem:[#allocation3 + $0x178] sm:$0xff]
          %v4763 = vld [vmem:[#allocation3 + $0x180] sm:$0xff]
          %v4764 = vld [vmem:[#allocation3 + $0x188] sm:$0xff]
          %v4765 = vld [vmem:[#allocation3 + $0x190] sm:$0xff]
          %v4766 = vld [vmem:[#allocation3 + $0x198] sm:$0xff]
          %v4767 = vld [vmem:[#allocation3 + $0x1a0] sm:$0xff]
          %v4768 = vld [vmem:[#allocation3 + $0x1a8] sm:$0xff]
          %v4769 = vld [vmem:[#allocation3 + $0x1b0] sm:$0xff]
          %v4770 = vld [vmem:[#allocation3 + $0x1b8] sm:$0xff]
          %v4771 = vld [vmem:[#allocation3 + $0x1c0] sm:$0xff]
          %v4772 = vld [vmem:[#allocation3 + $0x1c8] sm:$0xff]
          %v4773 = vld [vmem:[#allocation3 + $0x1d0] sm:$0xff]
          %v4774 = vld [vmem:[#allocation3 + $0x1d8] sm:$0xff]
          %v4775 = vld [vmem:[#allocation3 + $0x1e0] sm:$0xff]
          %v4776 = vld [vmem:[#allocation3 + $0x1e8] sm:$0xff]
          %v4777 = vld [vmem:[#allocation3 + $0x1f0] sm:$0xff]
          %v4778 = vld [vmem:[#allocation3 + $0x1f8] sm:$0xff]
          %v4779 = vld [vmem:[#allocation3 + $0x200] sm:$0xff]
          %v4780 = vld [vmem:[#allocation3 + $0x208] sm:$0xff]
          %v4781 = vld [vmem:[#allocation3 + $0x210] sm:$0xff]
          %v4782 = vld [vmem:[#allocation3 + $0x218] sm:$0xff]
          %v4783 = vld [vmem:[#allocation3 + $0x220] sm:$0xff]
          %v4784 = vld [vmem:[#allocation3 + $0x228] sm:$0xff]
          %v4785 = vld [vmem:[#allocation3 + $0x230] sm:$0xff]
          %v4786 = vld [vmem:[#allocation3 + $0x238] sm:$0xff]
          %v4787 = vld [vmem:[#allocation3 + $0x240] sm:$0xff]
          %v4788 = vld [vmem:[#allocation3 + $0x248] sm:$0xff]
          %v4789 = vld [vmem:[#allocation3 + $0x250] sm:$0xff]
          %v4790 = vld [vmem:[#allocation3 + $0x258] sm:$0xff]
          %v4791 = vld [vmem:[#allocation3 + $0x260] sm:$0xff]
          %v4792 = vld [vmem:[#allocation3 + $0x268] sm:$0xff]
          %v4793 = vld [vmem:[#allocation3 + $0x270] sm:$0xff]
          %v4794 = vld [vmem:[#allocation3 + $0x278] sm:$0xff]
          %v4795 = vld [vmem:[#allocation3 + $0x280] sm:$0xff]
          %v4796 = vld [vmem:[#allocation3 + $0x288] sm:$0xff]
          %v4797 = vld [vmem:[#allocation3 + $0x290] sm:$0xff]
          %v4798 = vld [vmem:[#allocation3 + $0x298] sm:$0xff]
          %v4799 = vld [vmem:[#allocation3 + $0x2a0] sm:$0xff]
          %v4800 = vld [vmem:[#allocation3 + $0x2a8] sm:$0xff]
          %v4801 = vld [vmem:[#allocation3 + $0x2b0] sm:$0xff]
          %v4802 = vld [vmem:[#allocation3 + $0x2b8] sm:$0xff]
          %v4803 = vld [vmem:[#allocation3 + $0x2c0] sm:$0xff]
          %v4804 = vld [vmem:[#allocation3 + $0x2c8] sm:$0xff]
          %v4805 = vld [vmem:[#allocation3 + $0x2d0] sm:$0xff]
          %v4806 = vld [vmem:[#allocation3 + $0x2d8] sm:$0xff]
          %v4807 = vld [vmem:[#allocation3 + $0x2e0] sm:$0xff]
          %v4808 = vld [vmem:[#allocation3 + $0x2e8] sm:$0xff]
          %v4809 = vld [vmem:[#allocation3 + $0x2f0] sm:$0xff]
          %v4810 = vld [vmem:[#allocation3 + $0x2f8] sm:$0xff]
          %v4811 = vld [vmem:[#allocation3 + $0x300] sm:$0xff]
          %v4812 = vld [vmem:[#allocation3 + $0x308] sm:$0xff]
          %v4813 = vld [vmem:[#allocation3 + $0x310] sm:$0xff]
          %v4814 = vld [vmem:[#allocation3 + $0x318] sm:$0xff]
          %v4815 = vld [vmem:[#allocation3 + $0x320] sm:$0xff]
          %v4816 = vld [vmem:[#allocation3 + $0x328] sm:$0xff]
          %v4817 = vld [vmem:[#allocation3 + $0x330] sm:$0xff]
          %v4818 = vld [vmem:[#allocation3 + $0x338] sm:$0xff]
          %v4819 = vld [vmem:[#allocation3 + $0x340] sm:$0xff]
          %v4820 = vld [vmem:[#allocation3 + $0x348] sm:$0xff]
          %v4821 = vld [vmem:[#allocation3 + $0x350] sm:$0xff]
          %v4822 = vld [vmem:[#allocation3 + $0x358] sm:$0xff]
          %v4823 = vld [vmem:[#allocation3 + $0x360] sm:$0xff]
          %v4824 = vld [vmem:[#allocation3 + $0x368] sm:$0xff]
          %v4825 = vld [vmem:[#allocation3 + $0x370] sm:$0xff]
          %v4826 = vld [vmem:[#allocation3 + $0x378] sm:$0xff]
          %v4827 = vld [vmem:[#allocation3 + $0x380] sm:$0xff]
          %v4828 = vld [vmem:[#allocation3 + $0x388] sm:$0xff]
          %v4829 = vld [vmem:[#allocation3 + $0x390] sm:$0xff]
          %v4830 = vld [vmem:[#allocation3 + $0x398] sm:$0xff]
          %v4831 = vld [vmem:[#allocation3 + $0x3a0] sm:$0xff]
          %v4832 = vld [vmem:[#allocation3 + $0x3a8] sm:$0xff]
          %v4833 = vld [vmem:[#allocation3 + $0x3b0] sm:$0xff]
          %v4834 = vld [vmem:[#allocation3 + $0x3b8] sm:$0xff]
          %v4835 = vld [vmem:[#allocation3 + $0x3c0] sm:$0xff]
          %v4836 = vld [vmem:[#allocation3 + $0x3c8] sm:$0xff]
          %v4837 = vld [vmem:[#allocation3 + $0x3d0] sm:$0xff]
          %v4838 = vld [vmem:[#allocation3 + $0x3d8] sm:$0xff]
          %v4839 = vld [vmem:[#allocation3 + $0x3e0] sm:$0xff]
          %v4840 = vld [vmem:[#allocation3 + $0x3e8] sm:$0xff]
          %v4841 = vld [vmem:[#allocation3 + $0x3f0] sm:$0xff]
          %v4842 = vld [vmem:[#allocation3 + $0x3f8] sm:$0xff]
          %v4843 = vld [vmem:[#allocation3 + $0x400] sm:$0xff]
          %v4844 = vld [vmem:[#allocation3 + $0x408] sm:$0xff]
          %v4845 = vld [vmem:[#allocation3 + $0x410] sm:$0xff]
          %v4846 = vld [vmem:[#allocation3 + $0x418] sm:$0xff]
          %v4847 = vld [vmem:[#allocation3 + $0x420] sm:$0xff]
          %v4848 = vld [vmem:[#allocation3 + $0x428] sm:$0xff]
          %v4849 = vld [vmem:[#allocation3 + $0x430] sm:$0xff]
          %v4850 = vld [vmem:[#allocation3 + $0x438] sm:$0xff]
          %v4851 = vld [vmem:[#allocation3 + $0x440] sm:$0xff]
          %v4852 = vld [vmem:[#allocation3 + $0x448] sm:$0xff]
          %v4853 = vld [vmem:[#allocation3 + $0x450] sm:$0xff]
          %v4854 = vld [vmem:[#allocation3 + $0x458] sm:$0xff]
          %v4855 = vld [vmem:[#allocation3 + $0x460] sm:$0xff]
          %v4856 = vld [vmem:[#allocation3 + $0x468] sm:$0xff]
          %v4857 = vld [vmem:[#allocation3 + $0x470] sm:$0xff]
          %v4858 = vld [vmem:[#allocation3 + $0x478] sm:$0xff]
          %v4859 = vld [vmem:[#allocation3 + $0x480] sm:$0xff]
          %v4860 = vld [vmem:[#allocation3 + $0x488] sm:$0xff]
          %v4861 = vld [vmem:[#allocation3 + $0x490] sm:$0xff]
          %v4862 = vld [vmem:[#allocation3 + $0x498] sm:$0xff]
          %v4863 = vld [vmem:[#allocation3 + $0x4a0] sm:$0xff]
          %v4864 = vld [vmem:[#allocation3 + $0x4a8] sm:$0xff]
          %v4865 = vld [vmem:[#allocation3 + $0x4b0] sm:$0xff]
          %v4866 = vld [vmem:[#allocation3 + $0x4b8] sm:$0xff]
          %v4867 = vld [vmem:[#allocation3 + $0x4c0] sm:$0xff]
          %v4868 = vld [vmem:[#allocation3 + $0x4c8] sm:$0xff]
          %v4869 = vld [vmem:[#allocation3 + $0x4d0] sm:$0xff]
          %v4870 = vld [vmem:[#allocation3 + $0x4d8] sm:$0xff]
          %v4871 = vld [vmem:[#allocation3 + $0x4e0] sm:$0xff]
          %v4872 = vld [vmem:[#allocation3 + $0x4e8] sm:$0xff]
          %v4873 = vld [vmem:[#allocation3 + $0x4f0] sm:$0xff]
          %v4874 = vld [vmem:[#allocation3 + $0x4f8] sm:$0xff]
          %v4875 = vld [vmem:[#allocation3 + $0x500] sm:$0xff]
          %v4876 = vld [vmem:[#allocation3 + $0x508] sm:$0xff]
          %v4877 = vld [vmem:[#allocation3 + $0x510] sm:$0xff]
          %v4878 = vld [vmem:[#allocation3 + $0x518] sm:$0xff]
          %v4879 = vld [vmem:[#allocation3 + $0x520] sm:$0xff]
          %v4880 = vld [vmem:[#allocation3 + $0x528] sm:$0xff]
          %v4881 = vld [vmem:[#allocation3 + $0x530] sm:$0xff]
          %v4882 = vld [vmem:[#allocation3 + $0x538] sm:$0xff]
          %v4883 = vld [vmem:[#allocation3 + $0x540] sm:$0xff]
          %v4884 = vld [vmem:[#allocation3 + $0x548] sm:$0xff]
          %v4885 = vld [vmem:[#allocation3 + $0x550] sm:$0xff]
          %v4886 = vld [vmem:[#allocation3 + $0x558] sm:$0xff]
          %v4887 = vld [vmem:[#allocation3 + $0x560] sm:$0xff]
          %v4888 = vld [vmem:[#allocation3 + $0x568] sm:$0xff]
          %v4889 = vld [vmem:[#allocation3 + $0x570] sm:$0xff]
          %v4890 = vld [vmem:[#allocation3 + $0x578] sm:$0xff]
          %v4891 = vld [vmem:[#allocation3 + $0x580] sm:$0xff]
          %v4892 = vld [vmem:[#allocation3 + $0x588] sm:$0xff]
          %v4893 = vld [vmem:[#allocation3 + $0x590] sm:$0xff]
          %v4894 = vld [vmem:[#allocation3 + $0x598] sm:$0xff]
          %v4895 = vld [vmem:[#allocation3 + $0x5a0] sm:$0xff]
          %v4896 = vld [vmem:[#allocation3 + $0x5a8] sm:$0xff]
          %v4897 = vld [vmem:[#allocation3 + $0x5b0] sm:$0xff]
          %v4898 = vld [vmem:[#allocation3 + $0x5b8] sm:$0xff]
          %v4899 = vld [vmem:[#allocation3 + $0x5c0] sm:$0xff]
          %v4900 = vld [vmem:[#allocation3 + $0x5c8] sm:$0xff]
          %v4901 = vld [vmem:[#allocation3 + $0x5d0] sm:$0xff]
          %v4902 = vld [vmem:[#allocation3 + $0x5d8] sm:$0xff]
          %v4903 = vld [vmem:[#allocation3 + $0x5e0] sm:$0xff]
          %v4904 = vld [vmem:[#allocation3 + $0x5e8] sm:$0xff]
          %v4905 = vld [vmem:[#allocation3 + $0x5f0] sm:$0xff]
          %v4906 = vld [vmem:[#allocation3 + $0x5f8] sm:$0xff]
          %v4907 = vld [vmem:[#allocation3 + $0x600] sm:$0xff]
          %v4908 = vld [vmem:[#allocation3 + $0x608] sm:$0xff]
          %v4909 = vld [vmem:[#allocation3 + $0x610] sm:$0xff]
          %v4910 = vld [vmem:[#allocation3 + $0x618] sm:$0xff]
          %v4911 = vld [vmem:[#allocation3 + $0x620] sm:$0xff]
          %v4912 = vld [vmem:[#allocation3 + $0x628] sm:$0xff]
          %v4913 = vld [vmem:[#allocation3 + $0x630] sm:$0xff]
          %v4914 = vld [vmem:[#allocation3 + $0x638] sm:$0xff]
          %v4915 = vld [vmem:[#allocation3 + $0x640] sm:$0xff]
          %v4916 = vld [vmem:[#allocation3 + $0x648] sm:$0xff]
          %v4917 = vld [vmem:[#allocation3 + $0x650] sm:$0xff]
          %v4918 = vld [vmem:[#allocation3 + $0x658] sm:$0xff]
          %v4919 = vld [vmem:[#allocation3 + $0x660] sm:$0xff]
          %v4920 = vld [vmem:[#allocation3 + $0x668] sm:$0xff]
          %v4921 = vld [vmem:[#allocation3 + $0x670] sm:$0xff]
          %v4922 = vld [vmem:[#allocation3 + $0x678] sm:$0xff]
          %v4923 = vld [vmem:[#allocation3 + $0x680] sm:$0xff]
          %v4924 = vld [vmem:[#allocation3 + $0x688] sm:$0xff]
          %v4925 = vld [vmem:[#allocation3 + $0x690] sm:$0xff]
          %v4926 = vld [vmem:[#allocation3 + $0x698] sm:$0xff]
          %v4927 = vld [vmem:[#allocation3 + $0x6a0] sm:$0xff]
          %v4928 = vld [vmem:[#allocation3 + $0x6a8] sm:$0xff]
          %v4929 = vld [vmem:[#allocation3 + $0x6b0] sm:$0xff]
          %v4930 = vld [vmem:[#allocation3 + $0x6b8] sm:$0xff]
          %v4931 = vld [vmem:[#allocation3 + $0x6c0] sm:$0xff]
          %v4932 = vld [vmem:[#allocation3 + $0x6c8] sm:$0xff]
          %v4933 = vld [vmem:[#allocation3 + $0x6d0] sm:$0xff]
          %v4934 = vld [vmem:[#allocation3 + $0x6d8] sm:$0xff]
          %v4935 = vld [vmem:[#allocation3 + $0x6e0] sm:$0xff]
          %v4936 = vld [vmem:[#allocation3 + $0x6e8] sm:$0xff]
          %v4937 = vld [vmem:[#allocation3 + $0x6f0] sm:$0xff]
          %v4938 = vld [vmem:[#allocation3 + $0x6f8] sm:$0xff]
          %v4939 = vld [vmem:[#allocation3 + $0x700] sm:$0xff]
          %v4940 = vld [vmem:[#allocation3 + $0x708] sm:$0xff]
          %v4941 = vld [vmem:[#allocation3 + $0x710] sm:$0xff]
          %v4942 = vld [vmem:[#allocation3 + $0x718] sm:$0xff]
          %v4943 = vld [vmem:[#allocation3 + $0x720] sm:$0xff]
          %v4944 = vld [vmem:[#allocation3 + $0x728] sm:$0xff]
          %v4945 = vld [vmem:[#allocation3 + $0x730] sm:$0xff]
          %v4946 = vld [vmem:[#allocation3 + $0x738] sm:$0xff]
          %v4947 = vld [vmem:[#allocation3 + $0x740] sm:$0xff]
          %v4948 = vld [vmem:[#allocation3 + $0x748] sm:$0xff]
          %v4949 = vld [vmem:[#allocation3 + $0x750] sm:$0xff]
          %v4950 = vld [vmem:[#allocation3 + $0x758] sm:$0xff]
          %v4951 = vld [vmem:[#allocation3 + $0x760] sm:$0xff]
          %v4952 = vld [vmem:[#allocation3 + $0x768] sm:$0xff]
          %v4953 = vld [vmem:[#allocation3 + $0x770] sm:$0xff]
          %v4954 = vld [vmem:[#allocation3 + $0x778] sm:$0xff]
          %v4955 = vld [vmem:[#allocation3 + $0x780] sm:$0xff]
          %v4956 = vld [vmem:[#allocation3 + $0x788] sm:$0xff]
          %v4957 = vld [vmem:[#allocation3 + $0x790] sm:$0xff]
          %v4958 = vld [vmem:[#allocation3 + $0x798] sm:$0xff]
          %v4959 = vld [vmem:[#allocation3 + $0x7a0] sm:$0xff]
          %v4960 = vld [vmem:[#allocation3 + $0x7a8] sm:$0xff]
          %v4961 = vld [vmem:[#allocation3 + $0x7b0] sm:$0xff]
          %v4962 = vld [vmem:[#allocation3 + $0x7b8] sm:$0xff]
          %v4963 = vld [vmem:[#allocation3 + $0x7c0] sm:$0xff]
          %v4964 = vld [vmem:[#allocation3 + $0x7c8] sm:$0xff]
          %v4965 = vld [vmem:[#allocation3 + $0x7d0] sm:$0xff]
          %v4966 = vld [vmem:[#allocation3 + $0x7d8] sm:$0xff]
          %v4967 = vld [vmem:[#allocation3 + $0x7e0] sm:$0xff]
          %v4968 = vld [vmem:[#allocation3 + $0x7e8] sm:$0xff]
          %v4969 = vld [vmem:[#allocation3 + $0x7f0] sm:$0xff]
          %v4970 = vld [vmem:[#allocation3 + $0x7f8] sm:$0xff]
          %v4971 = vld [vmem:[#allocation3 + $0x800] sm:$0xff]
          %v4972 = vld [vmem:[#allocation3 + $0x808] sm:$0xff]
          %v4973 = vld [vmem:[#allocation3 + $0x810] sm:$0xff]
          %v4974 = vld [vmem:[#allocation3 + $0x818] sm:$0xff]
          %v4975 = vld [vmem:[#allocation3 + $0x820] sm:$0xff]
          %v4976 = vld [vmem:[#allocation3 + $0x828] sm:$0xff]
          %v4977 = vld [vmem:[#allocation3 + $0x830] sm:$0xff]
          %v4978 = vld [vmem:[#allocation3 + $0x838] sm:$0xff]
          %v4979 = vld [vmem:[#allocation3 + $0x840] sm:$0xff]
          %v4980 = vld [vmem:[#allocation3 + $0x848] sm:$0xff]
          %v4981 = vld [vmem:[#allocation3 + $0x850] sm:$0xff]
          %v4982 = vld [vmem:[#allocation3 + $0x858] sm:$0xff]
          %v4983 = vld [vmem:[#allocation3 + $0x860] sm:$0xff]
          %v4984 = vld [vmem:[#allocation3 + $0x868] sm:$0xff]
          %v4985 = vld [vmem:[#allocation3 + $0x870] sm:$0xff]
          %v4986 = vld [vmem:[#allocation3 + $0x878] sm:$0xff]
          %v4987 = vld [vmem:[#allocation3 + $0x880] sm:$0xff]
          %v4988 = vld [vmem:[#allocation3 + $0x888] sm:$0xff]
          %v4989 = vld [vmem:[#allocation3 + $0x890] sm:$0xff]
          %v4990 = vld [vmem:[#allocation3 + $0x898] sm:$0xff]
          %v4991 = vld [vmem:[#allocation3 + $0x8a0] sm:$0xff]
          %v4992 = vld [vmem:[#allocation3 + $0x8a8] sm:$0xff]
          %v4993 = vld [vmem:[#allocation3 + $0x8b0] sm:$0xff]
          %v4994 = vld [vmem:[#allocation3 + $0x8b8] sm:$0xff]
          %v4995 = vld [vmem:[#allocation3 + $0x8c0] sm:$0xff]
          %v4996 = vld [vmem:[#allocation3 + $0x8c8] sm:$0xff]
          %v4997 = vld [vmem:[#allocation3 + $0x8d0] sm:$0xff]
          %v4998 = vld [vmem:[#allocation3 + $0x8d8] sm:$0xff]
          %v4999 = vld [vmem:[#allocation3 + $0x8e0] sm:$0xff]
          %v5000 = vld [vmem:[#allocation3 + $0x8e8] sm:$0xff]
          %v5001 = vld [vmem:[#allocation3 + $0x8f0] sm:$0xff]
          %v5002 = vld [vmem:[#allocation3 + $0x8f8] sm:$0xff]
          %v5003 = vld [vmem:[#allocation3 + $0x900] sm:$0xff]
          %v5004 = vld [vmem:[#allocation3 + $0x908] sm:$0xff]
          %v5005 = vld [vmem:[#allocation3 + $0x910] sm:$0xff]
          %v5006 = vld [vmem:[#allocation3 + $0x918] sm:$0xff]
          %v5007 = vld [vmem:[#allocation3 + $0x920] sm:$0xff]
          %v5008 = vld [vmem:[#allocation3 + $0x928] sm:$0xff]
          %v5009 = vld [vmem:[#allocation3 + $0x930] sm:$0xff]
          %v5010 = vld [vmem:[#allocation3 + $0x938] sm:$0xff]
          %v5011 = vld [vmem:[#allocation3 + $0x940] sm:$0xff]
          %v5012 = vld [vmem:[#allocation3 + $0x948] sm:$0xff]
          %v5013 = vld [vmem:[#allocation3 + $0x950] sm:$0xff]
          %v5014 = vld [vmem:[#allocation3 + $0x958] sm:$0xff]
          %v5015 = vld [vmem:[#allocation3 + $0x960] sm:$0xff]
          %v5016 = vld [vmem:[#allocation3 + $0x968] sm:$0xff]
          %v5017 = vld [vmem:[#allocation3 + $0x970] sm:$0xff]
          %v5018 = vld [vmem:[#allocation3 + $0x978] sm:$0xff]
          %v5019 = vld [vmem:[#allocation3 + $0x980] sm:$0xff]
          %v5020 = vld [vmem:[#allocation3 + $0x988] sm:$0xff]
          %v5021 = vld [vmem:[#allocation3 + $0x990] sm:$0xff]
          %v5022 = vld [vmem:[#allocation3 + $0x998] sm:$0xff]
          %v5023 = vld [vmem:[#allocation3 + $0x9a0] sm:$0xff]
          %v5024 = vld [vmem:[#allocation3 + $0x9a8] sm:$0xff]
          %v5025 = vld [vmem:[#allocation3 + $0x9b0] sm:$0xff]
          %v5026 = vld [vmem:[#allocation3 + $0x9b8] sm:$0xff]
          %v5027 = vld [vmem:[#allocation3 + $0x9c0] sm:$0xff]
          %v5028 = vld [vmem:[#allocation3 + $0x9c8] sm:$0xff]
          %v5029 = vld [vmem:[#allocation3 + $0x9d0] sm:$0xff]
          %v5030 = vld [vmem:[#allocation3 + $0x9d8] sm:$0xff]
          %v5031 = vld [vmem:[#allocation3 + $0x9e0] sm:$0xff]
          %v5032 = vld [vmem:[#allocation3 + $0x9e8] sm:$0xff]
          %v5033 = vld [vmem:[#allocation3 + $0x9f0] sm:$0xff]
          %v5034 = vld [vmem:[#allocation3 + $0x9f8] sm:$0xff]
          %v5035 = vld [vmem:[#allocation3 + $0xa00] sm:$0xff]
          %v5036 = vld [vmem:[#allocation3 + $0xa08] sm:$0xff]
          %v5037 = vld [vmem:[#allocation3 + $0xa10] sm:$0xff]
          %v5038 = vld [vmem:[#allocation3 + $0xa18] sm:$0xff]
          %v5039 = vld [vmem:[#allocation3 + $0xa20] sm:$0xff]
          %v5040 = vld [vmem:[#allocation3 + $0xa28] sm:$0xff]
          %v5041 = vld [vmem:[#allocation3 + $0xa30] sm:$0xff]
          %v5042 = vld [vmem:[#allocation3 + $0xa38] sm:$0xff]
          %v5043 = vld [vmem:[#allocation3 + $0xa40] sm:$0xff]
          %v5044 = vld [vmem:[#allocation3 + $0xa48] sm:$0xff]
          %v5045 = vld [vmem:[#allocation3 + $0xa50] sm:$0xff]
          %v5046 = vld [vmem:[#allocation3 + $0xa58] sm:$0xff]
          %v5047 = vld [vmem:[#allocation3 + $0xa60] sm:$0xff]
          %v5048 = vld [vmem:[#allocation3 + $0xa68] sm:$0xff]
          %v5049 = vld [vmem:[#allocation3 + $0xa70] sm:$0xff]
          %v5050 = vld [vmem:[#allocation3 + $0xa78] sm:$0xff]
          %v5051 = vld [vmem:[#allocation3 + $0xa80] sm:$0xff]
          %v5052 = vld [vmem:[#allocation3 + $0xa88] sm:$0xff]
          %v5053 = vld [vmem:[#allocation3 + $0xa90] sm:$0xff]
          %v5054 = vld [vmem:[#allocation3 + $0xa98] sm:$0xff]
          %v5055 = vld [vmem:[#allocation3 + $0xaa0] sm:$0xff]
          %v5056 = vld [vmem:[#allocation3 + $0xaa8] sm:$0xff]
          %v5057 = vld [vmem:[#allocation3 + $0xab0] sm:$0xff]
          %v5058 = vld [vmem:[#allocation3 + $0xab8] sm:$0xff]
          %v5059 = vld [vmem:[#allocation3 + $0xac0] sm:$0xff]
          %v5060 = vld [vmem:[#allocation3 + $0xac8] sm:$0xff]
          %v5061 = vld [vmem:[#allocation3 + $0xad0] sm:$0xff]
          %v5062 = vld [vmem:[#allocation3 + $0xad8] sm:$0xff]
          %v5063 = vld [vmem:[#allocation3 + $0xae0] sm:$0xff]
          %v5064 = vld [vmem:[#allocation3 + $0xae8] sm:$0xff]
          %v5065 = vld [vmem:[#allocation3 + $0xaf0] sm:$0xff]
          %v5066 = vld [vmem:[#allocation3 + $0xaf8] sm:$0xff]
          %v5067 = vld [vmem:[#allocation3 + $0xb00] sm:$0xff]
          %v5068 = vld [vmem:[#allocation3 + $0xb08] sm:$0xff]
          %v5069 = vld [vmem:[#allocation3 + $0xb10] sm:$0xff]
          %v5070 = vld [vmem:[#allocation3 + $0xb18] sm:$0xff]
          %v5071 = vld [vmem:[#allocation3 + $0xb20] sm:$0xff]
          %v5072 = vld [vmem:[#allocation3 + $0xb28] sm:$0xff]
          %v5073 = vld [vmem:[#allocation3 + $0xb30] sm:$0xff]
          %v5074 = vld [vmem:[#allocation3 + $0xb38] sm:$0xff]
          %v5075 = vld [vmem:[#allocation3 + $0xb40] sm:$0xff]
          %v5076 = vld [vmem:[#allocation3 + $0xb48] sm:$0xff]
          %v5077 = vld [vmem:[#allocation3 + $0xb50] sm:$0xff]
          %v5078 = vld [vmem:[#allocation3 + $0xb58] sm:$0xff]
          %v5079 = vld [vmem:[#allocation3 + $0xb60] sm:$0xff]
          %v5080 = vld [vmem:[#allocation3 + $0xb68] sm:$0xff]
          %v5081 = vld [vmem:[#allocation3 + $0xb70] sm:$0xff]
          %v5082 = vld [vmem:[#allocation3 + $0xb78] sm:$0xff]
          %v5083 = vld [vmem:[#allocation3 + $0xb80] sm:$0xff]
          %v5084 = vld [vmem:[#allocation3 + $0xb88] sm:$0xff]
          %v5085 = vld [vmem:[#allocation3 + $0xb90] sm:$0xff]
          %v5086 = vld [vmem:[#allocation3 + $0xb98] sm:$0xff]
          %v5087 = vld [vmem:[#allocation3 + $0xba0] sm:$0xff]
          %v5088 = vld [vmem:[#allocation3 + $0xba8] sm:$0xff]
          %v5089 = vld [vmem:[#allocation3 + $0xbb0] sm:$0xff]
          %v5090 = vld [vmem:[#allocation3 + $0xbb8] sm:$0xff]
          %v5091 = vld [vmem:[#allocation3 + $0xbc0] sm:$0xff]
          %v5092 = vld [vmem:[#allocation3 + $0xbc8] sm:$0xff]
          %v5093 = vld [vmem:[#allocation3 + $0xbd0] sm:$0xff]
          %v5094 = vld [vmem:[#allocation3 + $0xbd8] sm:$0xff]
          %v5095 = vld [vmem:[#allocation3 + $0xbe0] sm:$0xff]
          %v5096 = vld [vmem:[#allocation3 + $0xbe8] sm:$0xff]
          %v5097 = vld [vmem:[#allocation3 + $0xbf0] sm:$0xff]
          %v5098 = vld [vmem:[#allocation3 + $0xbf8] sm:$0xff]
          %v5099 = vld [vmem:[#allocation3 + $0xc00] sm:$0xff]
          %v5100 = vld [vmem:[#allocation3 + $0xc08] sm:$0xff]
          %v5101 = vld [vmem:[#allocation3 + $0xc10] sm:$0xff]
          %v5102 = vld [vmem:[#allocation3 + $0xc18] sm:$0xff]
          %v5103 = vld [vmem:[#allocation3 + $0xc20] sm:$0xff]
          %v5104 = vld [vmem:[#allocation3 + $0xc28] sm:$0xff]
          %v5105 = vld [vmem:[#allocation3 + $0xc30] sm:$0xff]
          %v5106 = vld [vmem:[#allocation3 + $0xc38] sm:$0xff]
          %v5107 = vld [vmem:[#allocation3 + $0xc40] sm:$0xff]
          %v5108 = vld [vmem:[#allocation3 + $0xc48] sm:$0xff]
          %v5109 = vld [vmem:[#allocation3 + $0xc50] sm:$0xff]
          %v5110 = vld [vmem:[#allocation3 + $0xc58] sm:$0xff]
          %v5111 = vld [vmem:[#allocation3 + $0xc60] sm:$0xff]
          %v5112 = vld [vmem:[#allocation3 + $0xc68] sm:$0xff]
          %v5113 = vld [vmem:[#allocation3 + $0xc70] sm:$0xff]
          %v5114 = vld [vmem:[#allocation3 + $0xc78] sm:$0xff]
          %v5115 = vld [vmem:[#allocation3 + $0xc80] sm:$0xff]
          %v5116 = vld [vmem:[#allocation3 + $0xc88] sm:$0xff]
          %v5117 = vld [vmem:[#allocation3 + $0xc90] sm:$0xff]
          %v5118 = vld [vmem:[#allocation3 + $0xc98] sm:$0xff]
          %v5119 = vld [vmem:[#allocation3 + $0xca0] sm:$0xff]
          %v5120 = vld [vmem:[#allocation3 + $0xca8] sm:$0xff]
          %v5121 = vld [vmem:[#allocation3 + $0xcb0] sm:$0xff]
          %v5122 = vld [vmem:[#allocation3 + $0xcb8] sm:$0xff]
          %v5123 = vld [vmem:[#allocation3 + $0xcc0] sm:$0xff]
          %v5124 = vld [vmem:[#allocation3 + $0xcc8] sm:$0xff]
          %v5125 = vld [vmem:[#allocation3 + $0xcd0] sm:$0xff]
          %v5126 = vld [vmem:[#allocation3 + $0xcd8] sm:$0xff]
          %v5127 = vld [vmem:[#allocation3 + $0xce0] sm:$0xff]
          %v5128 = vld [vmem:[#allocation3 + $0xce8] sm:$0xff]
          %v5129 = vld [vmem:[#allocation3 + $0xcf0] sm:$0xff]
          %v5130 = vld [vmem:[#allocation3 + $0xcf8] sm:$0xff]
          %v5131 = vld [vmem:[#allocation3 + $0xd00] sm:$0xff]
          %v5132 = vld [vmem:[#allocation3 + $0xd08] sm:$0xff]
          %v5133 = vld [vmem:[#allocation3 + $0xd10] sm:$0xff]
          %v5134 = vld [vmem:[#allocation3 + $0xd18] sm:$0xff]
          %v5135 = vld [vmem:[#allocation3 + $0xd20] sm:$0xff]
          %v5136 = vld [vmem:[#allocation3 + $0xd28] sm:$0xff]
          %v5137 = vld [vmem:[#allocation3 + $0xd30] sm:$0xff]
          %v5138 = vld [vmem:[#allocation3 + $0xd38] sm:$0xff]
          %v5139 = vld [vmem:[#allocation3 + $0xd40] sm:$0xff]
          %v5140 = vld [vmem:[#allocation3 + $0xd48] sm:$0xff]
          %v5141 = vld [vmem:[#allocation3 + $0xd50] sm:$0xff]
          %v5142 = vld [vmem:[#allocation3 + $0xd58] sm:$0xff]
          %v5143 = vld [vmem:[#allocation3 + $0xd60] sm:$0xff]
          %v5144 = vld [vmem:[#allocation3 + $0xd68] sm:$0xff]
          %v5145 = vld [vmem:[#allocation3 + $0xd70] sm:$0xff]
          %v5146 = vld [vmem:[#allocation3 + $0xd78] sm:$0xff]
          %v5147 = vld [vmem:[#allocation3 + $0xd80] sm:$0xff]
          %v5148 = vld [vmem:[#allocation3 + $0xd88] sm:$0xff]
          %v5149 = vld [vmem:[#allocation3 + $0xd90] sm:$0xff]
          %v5150 = vld [vmem:[#allocation3 + $0xd98] sm:$0xff]
          %v5151 = vld [vmem:[#allocation3 + $0xda0] sm:$0xff]
          %v5152 = vld [vmem:[#allocation3 + $0xda8] sm:$0xff]
          %v5153 = vld [vmem:[#allocation3 + $0xdb0] sm:$0xff]
          %v5154 = vld [vmem:[#allocation3 + $0xdb8] sm:$0xff]
          %v5155 = vld [vmem:[#allocation3 + $0xdc0] sm:$0xff]
          %v5156 = vld [vmem:[#allocation3 + $0xdc8] sm:$0xff]
          %v5157 = vld [vmem:[#allocation3 + $0xdd0] sm:$0xff]
          %v5158 = vld [vmem:[#allocation3 + $0xdd8] sm:$0xff]
          %v5159 = vld [vmem:[#allocation3 + $0xde0] sm:$0xff]
          %v5160 = vld [vmem:[#allocation3 + $0xde8] sm:$0xff]
          %v5161 = vld [vmem:[#allocation3 + $0xdf0] sm:$0xff]
          %v5162 = vld [vmem:[#allocation3 + $0xdf8] sm:$0xff]
          %v5163 = vld [vmem:[#allocation3 + $0xe00] sm:$0xff]
          %v5164 = vld [vmem:[#allocation3 + $0xe08] sm:$0xff]
          %v5165 = vld [vmem:[#allocation3 + $0xe10] sm:$0xff]
          %v5166 = vld [vmem:[#allocation3 + $0xe18] sm:$0xff]
          %v5167 = vld [vmem:[#allocation3 + $0xe20] sm:$0xff]
          %v5168 = vld [vmem:[#allocation3 + $0xe28] sm:$0xff]
          %v5169 = vld [vmem:[#allocation3 + $0xe30] sm:$0xff]
          %v5170 = vld [vmem:[#allocation3 + $0xe38] sm:$0xff]
          %v5171 = vld [vmem:[#allocation3 + $0xe40] sm:$0xff]
          %v5172 = vld [vmem:[#allocation3 + $0xe48] sm:$0xff]
          %v5173 = vld [vmem:[#allocation3 + $0xe50] sm:$0xff]
          %v5174 = vld [vmem:[#allocation3 + $0xe58] sm:$0xff]
          %v5175 = vld [vmem:[#allocation3 + $0xe60] sm:$0xff]
          %v5176 = vld [vmem:[#allocation3 + $0xe68] sm:$0xff]
          %v5177 = vld [vmem:[#allocation3 + $0xe70] sm:$0xff]
          %v5178 = vld [vmem:[#allocation3 + $0xe78] sm:$0xff]
          %v5179 = vld [vmem:[#allocation3 + $0xe80] sm:$0xff]
          %v5180 = vld [vmem:[#allocation3 + $0xe88] sm:$0xff]
          %v5181 = vld [vmem:[#allocation3 + $0xe90] sm:$0xff]
          %v5182 = vld [vmem:[#allocation3 + $0xe98] sm:$0xff]
          %v5183 = vld [vmem:[#allocation3 + $0xea0] sm:$0xff]
          %v5184 = vld [vmem:[#allocation3 + $0xea8] sm:$0xff]
          %v5185 = vld [vmem:[#allocation3 + $0xeb0] sm:$0xff]
          %v5186 = vld [vmem:[#allocation3 + $0xeb8] sm:$0xff]
          %v5187 = vld [vmem:[#allocation3 + $0xec0] sm:$0xff]
          %v5188 = vld [vmem:[#allocation3 + $0xec8] sm:$0xff]
          %v5189 = vld [vmem:[#allocation3 + $0xed0] sm:$0xff]
          %v5190 = vld [vmem:[#allocation3 + $0xed8] sm:$0xff]
          %v5191 = vld [vmem:[#allocation3 + $0xee0] sm:$0xff]
          %v5192 = vld [vmem:[#allocation3 + $0xee8] sm:$0xff]
          %v5193 = vld [vmem:[#allocation3 + $0xef0] sm:$0xff]
          %v5194 = vld [vmem:[#allocation3 + $0xef8] sm:$0xff]
          %v5195 = vld [vmem:[#allocation3 + $0xf00] sm:$0xff]
          %v5196 = vld [vmem:[#allocation3 + $0xf08] sm:$0xff]
          %v5197 = vld [vmem:[#allocation3 + $0xf10] sm:$0xff]
          %v5198 = vld [vmem:[#allocation3 + $0xf18] sm:$0xff]
          %v5199 = vld [vmem:[#allocation3 + $0xf20] sm:$0xff]
          %v5200 = vld [vmem:[#allocation3 + $0xf28] sm:$0xff]
          %v5201 = vld [vmem:[#allocation3 + $0xf30] sm:$0xff]
          %v5202 = vld [vmem:[#allocation3 + $0xf38] sm:$0xff]
          %v5203 = vld [vmem:[#allocation3 + $0xf40] sm:$0xff]
          %v5204 = vld [vmem:[#allocation3 + $0xf48] sm:$0xff]
          %v5205 = vld [vmem:[#allocation3 + $0xf50] sm:$0xff]
          %v5206 = vld [vmem:[#allocation3 + $0xf58] sm:$0xff]
          %v5207 = vld [vmem:[#allocation3 + $0xf60] sm:$0xff]
          %v5208 = vld [vmem:[#allocation3 + $0xf68] sm:$0xff]
          %v5209 = vld [vmem:[#allocation3 + $0xf70] sm:$0xff]
          %v5210 = vld [vmem:[#allocation3 + $0xf78] sm:$0xff]
          %v5211 = vld [vmem:[#allocation3 + $0xf80] sm:$0xff]
          %v5212 = vld [vmem:[#allocation3 + $0xf88] sm:$0xff]
          %v5213 = vld [vmem:[#allocation3 + $0xf90] sm:$0xff]
          %v5214 = vld [vmem:[#allocation3 + $0xf98] sm:$0xff]
          %v5215 = vld [vmem:[#allocation3 + $0xfa0] sm:$0xff]
          %v5216 = vld [vmem:[#allocation3 + $0xfa8] sm:$0xff]
          %v5217 = vld [vmem:[#allocation3 + $0xfb0] sm:$0xff]
          %v5218 = vld [vmem:[#allocation3 + $0xfb8] sm:$0xff]
          %v5219 = vld [vmem:[#allocation3 + $0xfc0] sm:$0xff]
          %v5220 = vld [vmem:[#allocation3 + $0xfc8] sm:$0xff]
          %v5221 = vld [vmem:[#allocation3 + $0xfd0] sm:$0xff]
          %v5222 = vld [vmem:[#allocation3 + $0xfd8] sm:$0xff]
          %v5223 = vld [vmem:[#allocation3 + $0xfe0] sm:$0xff]
          %v5224 = vld [vmem:[#allocation3 + $0xfe8] sm:$0xff]
          %v5225 = vld [vmem:[#allocation3 + $0xff0] sm:$0xff]
          %v5226 = vld [vmem:[#allocation3 + $0xff8] sm:$0xff]
          %v5227 = vld [vmem:[#allocation13] sm:$0xff]
          %v5229 = vperm.slane %v5227, 0
          %v5230 = vperm.slane %v5227, 1
          %v5231 = vperm.slane %v5227, 2
          %v5232 = vperm.slane %v5227, 3
          %v5233 = vperm.slane %v5227, 4
          %v5234 = vperm.slane %v5227, 5
          %v5235 = vperm.slane %v5227, 6
          %v5236 = vperm.slane %v5227, 7
          %v5757 = vunpack.c.l.b16 %v4715
          %v5758 = vunpack.c.h.b16 %v4715
          %v5759 = vunpack.c.l.b16 %v4716
          %v5760 = vunpack.c.h.b16 %v4716
          %v5761 = vunpack.c.l.b16 %v4717
          %v5762 = vunpack.c.h.b16 %v4717
          %v5763 = vunpack.c.l.b16 %v4718
          %v5764 = vunpack.c.h.b16 %v4718
          %v5765 = vunpack.c.l.b16 %v4719
          %v5766 = vunpack.c.h.b16 %v4719
          %v5767 = vunpack.c.l.b16 %v4720
          %v5768 = vunpack.c.h.b16 %v4720
          %v5769 = vunpack.c.l.b16 %v4721
          %v5770 = vunpack.c.h.b16 %v4721
          %v5771 = vunpack.c.l.b16 %v4722
          %v5772 = vunpack.c.h.b16 %v4722
          %v5773 = vunpack.c.l.b16 %v4723
          %v5774 = vunpack.c.h.b16 %v4723
          %v5775 = vunpack.c.l.b16 %v4724
          %v5776 = vunpack.c.h.b16 %v4724
          %v5777 = vunpack.c.l.b16 %v4725
          %v5778 = vunpack.c.h.b16 %v4725
          %v5779 = vunpack.c.l.b16 %v4726
          %v5780 = vunpack.c.h.b16 %v4726
          %v5781 = vunpack.c.l.b16 %v4727
          %v5782 = vunpack.c.h.b16 %v4727
          %v5783 = vunpack.c.l.b16 %v4728
          %v5784 = vunpack.c.h.b16 %v4728
          %v5785 = vunpack.c.l.b16 %v4729
          %v5786 = vunpack.c.h.b16 %v4729
          %v5787 = vunpack.c.l.b16 %v4730
          %v5788 = vunpack.c.h.b16 %v4730
          %v5789 = vunpack.c.l.b16 %v4731
          %v5790 = vunpack.c.h.b16 %v4731
          %v5791 = vunpack.c.l.b16 %v4732
          %v5792 = vunpack.c.h.b16 %v4732
          %v5793 = vunpack.c.l.b16 %v4733
          %v5794 = vunpack.c.h.b16 %v4733
          %v5795 = vunpack.c.l.b16 %v4734
          %v5796 = vunpack.c.h.b16 %v4734
          %v5797 = vunpack.c.l.b16 %v4735
          %v5798 = vunpack.c.h.b16 %v4735
          %v5799 = vunpack.c.l.b16 %v4736
          %v5800 = vunpack.c.h.b16 %v4736
          %v5801 = vunpack.c.l.b16 %v4737
          %v5802 = vunpack.c.h.b16 %v4737
          %v5803 = vunpack.c.l.b16 %v4738
          %v5804 = vunpack.c.h.b16 %v4738
          %v5805 = vunpack.c.l.b16 %v4739
          %v5806 = vunpack.c.h.b16 %v4739
          %v5807 = vunpack.c.l.b16 %v4740
          %v5808 = vunpack.c.h.b16 %v4740
          %v5809 = vunpack.c.l.b16 %v4741
          %v5810 = vunpack.c.h.b16 %v4741
          %v5811 = vunpack.c.l.b16 %v4742
          %v5812 = vunpack.c.h.b16 %v4742
          %v5813 = vunpack.c.l.b16 %v4743
          %v5814 = vunpack.c.h.b16 %v4743
          %v5815 = vunpack.c.l.b16 %v4744
          %v5816 = vunpack.c.h.b16 %v4744
          %v5817 = vunpack.c.l.b16 %v4745
          %v5818 = vunpack.c.h.b16 %v4745
          %v5819 = vunpack.c.l.b16 %v4746
          %v5820 = vunpack.c.h.b16 %v4746
          %v5821 = vunpack.c.l.b16 %v4747
          %v5822 = vunpack.c.h.b16 %v4747
          %v5823 = vunpack.c.l.b16 %v4748
          %v5824 = vunpack.c.h.b16 %v4748
          %v5825 = vunpack.c.l.b16 %v4749
          %v5826 = vunpack.c.h.b16 %v4749
          %v5827 = vunpack.c.l.b16 %v4750
          %v5828 = vunpack.c.h.b16 %v4750
          %v5829 = vunpack.c.l.b16 %v4751
          %v5830 = vunpack.c.h.b16 %v4751
          %v5831 = vunpack.c.l.b16 %v4752
          %v5832 = vunpack.c.h.b16 %v4752
          %v5833 = vunpack.c.l.b16 %v4753
          %v5834 = vunpack.c.h.b16 %v4753
          %v5835 = vunpack.c.l.b16 %v4754
          %v5836 = vunpack.c.h.b16 %v4754
          %v5837 = vunpack.c.l.b16 %v4755
          %v5838 = vunpack.c.h.b16 %v4755
          %v5839 = vunpack.c.l.b16 %v4756
          %v5840 = vunpack.c.h.b16 %v4756
          %v5841 = vunpack.c.l.b16 %v4757
          %v5842 = vunpack.c.h.b16 %v4757
          %v5843 = vunpack.c.l.b16 %v4758
          %v5844 = vunpack.c.h.b16 %v4758
          %v5845 = vunpack.c.l.b16 %v4759
          %v5846 = vunpack.c.h.b16 %v4759
          %v5847 = vunpack.c.l.b16 %v4760
          %v5848 = vunpack.c.h.b16 %v4760
          %v5849 = vunpack.c.l.b16 %v4761
          %v5850 = vunpack.c.h.b16 %v4761
          %v5851 = vunpack.c.l.b16 %v4762
          %v5852 = vunpack.c.h.b16 %v4762
          %v5853 = vunpack.c.l.b16 %v4763
          %v5854 = vunpack.c.h.b16 %v4763
          %v5855 = vunpack.c.l.b16 %v4764
          %v5856 = vunpack.c.h.b16 %v4764
          %v5857 = vunpack.c.l.b16 %v4765
          %v5858 = vunpack.c.h.b16 %v4765
          %v5859 = vunpack.c.l.b16 %v4766
          %v5860 = vunpack.c.h.b16 %v4766
          %v5861 = vunpack.c.l.b16 %v4767
          %v5862 = vunpack.c.h.b16 %v4767
          %v5863 = vunpack.c.l.b16 %v4768
          %v5864 = vunpack.c.h.b16 %v4768
          %v5865 = vunpack.c.l.b16 %v4769
          %v5866 = vunpack.c.h.b16 %v4769
          %v5867 = vunpack.c.l.b16 %v4770
          %v5868 = vunpack.c.h.b16 %v4770
          %v5869 = vunpack.c.l.b16 %v4771
          %v5870 = vunpack.c.h.b16 %v4771
          %v5871 = vunpack.c.l.b16 %v4772
          %v5872 = vunpack.c.h.b16 %v4772
          %v5873 = vunpack.c.l.b16 %v4773
          %v5874 = vunpack.c.h.b16 %v4773
          %v5875 = vunpack.c.l.b16 %v4774
          %v5876 = vunpack.c.h.b16 %v4774
          %v5877 = vunpack.c.l.b16 %v4775
          %v5878 = vunpack.c.h.b16 %v4775
          %v5879 = vunpack.c.l.b16 %v4776
          %v5880 = vunpack.c.h.b16 %v4776
          %v5881 = vunpack.c.l.b16 %v4777
          %v5882 = vunpack.c.h.b16 %v4777
          %v5883 = vunpack.c.l.b16 %v4778
          %v5884 = vunpack.c.h.b16 %v4778
          %v5885 = vunpack.c.l.b16 %v4779
          %v5886 = vunpack.c.h.b16 %v4779
          %v5887 = vunpack.c.l.b16 %v4780
          %v5888 = vunpack.c.h.b16 %v4780
          %v5889 = vunpack.c.l.b16 %v4781
          %v5890 = vunpack.c.h.b16 %v4781
          %v5891 = vunpack.c.l.b16 %v4782
          %v5892 = vunpack.c.h.b16 %v4782
          %v5893 = vunpack.c.l.b16 %v4783
          %v5894 = vunpack.c.h.b16 %v4783
          %v5895 = vunpack.c.l.b16 %v4784
          %v5896 = vunpack.c.h.b16 %v4784
          %v5897 = vunpack.c.l.b16 %v4785
          %v5898 = vunpack.c.h.b16 %v4785
          %v5899 = vunpack.c.l.b16 %v4786
          %v5900 = vunpack.c.h.b16 %v4786
          %v5901 = vunpack.c.l.b16 %v4787
          %v5902 = vunpack.c.h.b16 %v4787
          %v5903 = vunpack.c.l.b16 %v4788
          %v5904 = vunpack.c.h.b16 %v4788
          %v5905 = vunpack.c.l.b16 %v4789
          %v5906 = vunpack.c.h.b16 %v4789
          %v5907 = vunpack.c.l.b16 %v4790
          %v5908 = vunpack.c.h.b16 %v4790
          %v5909 = vunpack.c.l.b16 %v4791
          %v5910 = vunpack.c.h.b16 %v4791
          %v5911 = vunpack.c.l.b16 %v4792
          %v5912 = vunpack.c.h.b16 %v4792
          %v5913 = vunpack.c.l.b16 %v4793
          %v5914 = vunpack.c.h.b16 %v4793
          %v5915 = vunpack.c.l.b16 %v4794
          %v5916 = vunpack.c.h.b16 %v4794
          %v5917 = vunpack.c.l.b16 %v4795
          %v5918 = vunpack.c.h.b16 %v4795
          %v5919 = vunpack.c.l.b16 %v4796
          %v5920 = vunpack.c.h.b16 %v4796
          %v5921 = vunpack.c.l.b16 %v4797
          %v5922 = vunpack.c.h.b16 %v4797
          %v5923 = vunpack.c.l.b16 %v4798
          %v5924 = vunpack.c.h.b16 %v4798
          %v5925 = vunpack.c.l.b16 %v4799
          %v5926 = vunpack.c.h.b16 %v4799
          %v5927 = vunpack.c.l.b16 %v4800
          %v5928 = vunpack.c.h.b16 %v4800
          %v5929 = vunpack.c.l.b16 %v4801
          %v5930 = vunpack.c.h.b16 %v4801
          %v5931 = vunpack.c.l.b16 %v4802
          %v5932 = vunpack.c.h.b16 %v4802
          %v5933 = vunpack.c.l.b16 %v4803
          %v5934 = vunpack.c.h.b16 %v4803
          %v5935 = vunpack.c.l.b16 %v4804
          %v5936 = vunpack.c.h.b16 %v4804
          %v5937 = vunpack.c.l.b16 %v4805
          %v5938 = vunpack.c.h.b16 %v4805
          %v5939 = vunpack.c.l.b16 %v4806
          %v5940 = vunpack.c.h.b16 %v4806
          %v5941 = vunpack.c.l.b16 %v4807
          %v5942 = vunpack.c.h.b16 %v4807
          %v5943 = vunpack.c.l.b16 %v4808
          %v5944 = vunpack.c.h.b16 %v4808
          %v5945 = vunpack.c.l.b16 %v4809
          %v5946 = vunpack.c.h.b16 %v4809
          %v5947 = vunpack.c.l.b16 %v4810
          %v5948 = vunpack.c.h.b16 %v4810
          %v5949 = vunpack.c.l.b16 %v4811
          %v5950 = vunpack.c.h.b16 %v4811
          %v5951 = vunpack.c.l.b16 %v4812
          %v5952 = vunpack.c.h.b16 %v4812
          %v5953 = vunpack.c.l.b16 %v4813
          %v5954 = vunpack.c.h.b16 %v4813
          %v5955 = vunpack.c.l.b16 %v4814
          %v5956 = vunpack.c.h.b16 %v4814
          %v5957 = vunpack.c.l.b16 %v4815
          %v5958 = vunpack.c.h.b16 %v4815
          %v5959 = vunpack.c.l.b16 %v4816
          %v5960 = vunpack.c.h.b16 %v4816
          %v5961 = vunpack.c.l.b16 %v4817
          %v5962 = vunpack.c.h.b16 %v4817
          %v5963 = vunpack.c.l.b16 %v4818
          %v5964 = vunpack.c.h.b16 %v4818
          %v5965 = vunpack.c.l.b16 %v4819
          %v5966 = vunpack.c.h.b16 %v4819
          %v5967 = vunpack.c.l.b16 %v4820
          %v5968 = vunpack.c.h.b16 %v4820
          %v5969 = vunpack.c.l.b16 %v4821
          %v5970 = vunpack.c.h.b16 %v4821
          %v5971 = vunpack.c.l.b16 %v4822
          %v5972 = vunpack.c.h.b16 %v4822
          %v5973 = vunpack.c.l.b16 %v4823
          %v5974 = vunpack.c.h.b16 %v4823
          %v5975 = vunpack.c.l.b16 %v4824
          %v5976 = vunpack.c.h.b16 %v4824
          %v5977 = vunpack.c.l.b16 %v4825
          %v5978 = vunpack.c.h.b16 %v4825
          %v5979 = vunpack.c.l.b16 %v4826
          %v5980 = vunpack.c.h.b16 %v4826
          %v5981 = vunpack.c.l.b16 %v4827
          %v5982 = vunpack.c.h.b16 %v4827
          %v5983 = vunpack.c.l.b16 %v4828
          %v5984 = vunpack.c.h.b16 %v4828
          %v5985 = vunpack.c.l.b16 %v4829
          %v5986 = vunpack.c.h.b16 %v4829
          %v5987 = vunpack.c.l.b16 %v4830
          %v5988 = vunpack.c.h.b16 %v4830
          %v5989 = vunpack.c.l.b16 %v4831
          %v5990 = vunpack.c.h.b16 %v4831
          %v5991 = vunpack.c.l.b16 %v4832
          %v5992 = vunpack.c.h.b16 %v4832
          %v5993 = vunpack.c.l.b16 %v4833
          %v5994 = vunpack.c.h.b16 %v4833
          %v5995 = vunpack.c.l.b16 %v4834
          %v5996 = vunpack.c.h.b16 %v4834
          %v5997 = vunpack.c.l.b16 %v4835
          %v5998 = vunpack.c.h.b16 %v4835
          %v5999 = vunpack.c.l.b16 %v4836
          %v6000 = vunpack.c.h.b16 %v4836
          %v6001 = vunpack.c.l.b16 %v4837
          %v6002 = vunpack.c.h.b16 %v4837
          %v6003 = vunpack.c.l.b16 %v4838
          %v6004 = vunpack.c.h.b16 %v4838
          %v6005 = vunpack.c.l.b16 %v4839
          %v6006 = vunpack.c.h.b16 %v4839
          %v6007 = vunpack.c.l.b16 %v4840
          %v6008 = vunpack.c.h.b16 %v4840
          %v6009 = vunpack.c.l.b16 %v4841
          %v6010 = vunpack.c.h.b16 %v4841
          %v6011 = vunpack.c.l.b16 %v4842
          %v6012 = vunpack.c.h.b16 %v4842
          %v6013 = vunpack.c.l.b16 %v4843
          %v6014 = vunpack.c.h.b16 %v4843
          %v6015 = vunpack.c.l.b16 %v4844
          %v6016 = vunpack.c.h.b16 %v4844
          %v6017 = vunpack.c.l.b16 %v4845
          %v6018 = vunpack.c.h.b16 %v4845
          %v6019 = vunpack.c.l.b16 %v4846
          %v6020 = vunpack.c.h.b16 %v4846
          %v6021 = vunpack.c.l.b16 %v4847
          %v6022 = vunpack.c.h.b16 %v4847
          %v6023 = vunpack.c.l.b16 %v4848
          %v6024 = vunpack.c.h.b16 %v4848
          %v6025 = vunpack.c.l.b16 %v4849
          %v6026 = vunpack.c.h.b16 %v4849
          %v6027 = vunpack.c.l.b16 %v4850
          %v6028 = vunpack.c.h.b16 %v4850
          %v6029 = vunpack.c.l.b16 %v4851
          %v6030 = vunpack.c.h.b16 %v4851
          %v6031 = vunpack.c.l.b16 %v4852
          %v6032 = vunpack.c.h.b16 %v4852
          %v6033 = vunpack.c.l.b16 %v4853
          %v6034 = vunpack.c.h.b16 %v4853
          %v6035 = vunpack.c.l.b16 %v4854
          %v6036 = vunpack.c.h.b16 %v4854
          %v6037 = vunpack.c.l.b16 %v4855
          %v6038 = vunpack.c.h.b16 %v4855
          %v6039 = vunpack.c.l.b16 %v4856
          %v6040 = vunpack.c.h.b16 %v4856
          %v6041 = vunpack.c.l.b16 %v4857
          %v6042 = vunpack.c.h.b16 %v4857
          %v6043 = vunpack.c.l.b16 %v4858
          %v6044 = vunpack.c.h.b16 %v4858
          %v6045 = vunpack.c.l.b16 %v4859
          %v6046 = vunpack.c.h.b16 %v4859
          %v6047 = vunpack.c.l.b16 %v4860
          %v6048 = vunpack.c.h.b16 %v4860
          %v6049 = vunpack.c.l.b16 %v4861
          %v6050 = vunpack.c.h.b16 %v4861
          %v6051 = vunpack.c.l.b16 %v4862
          %v6052 = vunpack.c.h.b16 %v4862
          %v6053 = vunpack.c.l.b16 %v4863
          %v6054 = vunpack.c.h.b16 %v4863
          %v6055 = vunpack.c.l.b16 %v4864
          %v6056 = vunpack.c.h.b16 %v4864
          %v6057 = vunpack.c.l.b16 %v4865
          %v6058 = vunpack.c.h.b16 %v4865
          %v6059 = vunpack.c.l.b16 %v4866
          %v6060 = vunpack.c.h.b16 %v4866
          %v6061 = vunpack.c.l.b16 %v4867
          %v6062 = vunpack.c.h.b16 %v4867
          %v6063 = vunpack.c.l.b16 %v4868
          %v6064 = vunpack.c.h.b16 %v4868
          %v6065 = vunpack.c.l.b16 %v4869
          %v6066 = vunpack.c.h.b16 %v4869
          %v6067 = vunpack.c.l.b16 %v4870
          %v6068 = vunpack.c.h.b16 %v4870
          %v6069 = vunpack.c.l.b16 %v4871
          %v6070 = vunpack.c.h.b16 %v4871
          %v6071 = vunpack.c.l.b16 %v4872
          %v6072 = vunpack.c.h.b16 %v4872
          %v6073 = vunpack.c.l.b16 %v4873
          %v6074 = vunpack.c.h.b16 %v4873
          %v6075 = vunpack.c.l.b16 %v4874
          %v6076 = vunpack.c.h.b16 %v4874
          %v6077 = vunpack.c.l.b16 %v4875
          %v6078 = vunpack.c.h.b16 %v4875
          %v6079 = vunpack.c.l.b16 %v4876
          %v6080 = vunpack.c.h.b16 %v4876
          %v6081 = vunpack.c.l.b16 %v4877
          %v6082 = vunpack.c.h.b16 %v4877
          %v6083 = vunpack.c.l.b16 %v4878
          %v6084 = vunpack.c.h.b16 %v4878
          %v6085 = vunpack.c.l.b16 %v4879
          %v6086 = vunpack.c.h.b16 %v4879
          %v6087 = vunpack.c.l.b16 %v4880
          %v6088 = vunpack.c.h.b16 %v4880
          %v6089 = vunpack.c.l.b16 %v4881
          %v6090 = vunpack.c.h.b16 %v4881
          %v6091 = vunpack.c.l.b16 %v4882
          %v6092 = vunpack.c.h.b16 %v4882
          %v6093 = vunpack.c.l.b16 %v4883
          %v6094 = vunpack.c.h.b16 %v4883
          %v6095 = vunpack.c.l.b16 %v4884
          %v6096 = vunpack.c.h.b16 %v4884
          %v6097 = vunpack.c.l.b16 %v4885
          %v6098 = vunpack.c.h.b16 %v4885
          %v6099 = vunpack.c.l.b16 %v4886
          %v6100 = vunpack.c.h.b16 %v4886
          %v6101 = vunpack.c.l.b16 %v4887
          %v6102 = vunpack.c.h.b16 %v4887
          %v6103 = vunpack.c.l.b16 %v4888
          %v6104 = vunpack.c.h.b16 %v4888
          %v6105 = vunpack.c.l.b16 %v4889
          %v6106 = vunpack.c.h.b16 %v4889
          %v6107 = vunpack.c.l.b16 %v4890
          %v6108 = vunpack.c.h.b16 %v4890
          %v6109 = vunpack.c.l.b16 %v4891
          %v6110 = vunpack.c.h.b16 %v4891
          %v6111 = vunpack.c.l.b16 %v4892
          %v6112 = vunpack.c.h.b16 %v4892
          %v6113 = vunpack.c.l.b16 %v4893
          %v6114 = vunpack.c.h.b16 %v4893
          %v6115 = vunpack.c.l.b16 %v4894
          %v6116 = vunpack.c.h.b16 %v4894
          %v6117 = vunpack.c.l.b16 %v4895
          %v6118 = vunpack.c.h.b16 %v4895
          %v6119 = vunpack.c.l.b16 %v4896
          %v6120 = vunpack.c.h.b16 %v4896
          %v6121 = vunpack.c.l.b16 %v4897
          %v6122 = vunpack.c.h.b16 %v4897
          %v6123 = vunpack.c.l.b16 %v4898
          %v6124 = vunpack.c.h.b16 %v4898
          %v6125 = vunpack.c.l.b16 %v4899
          %v6126 = vunpack.c.h.b16 %v4899
          %v6127 = vunpack.c.l.b16 %v4900
          %v6128 = vunpack.c.h.b16 %v4900
          %v6129 = vunpack.c.l.b16 %v4901
          %v6130 = vunpack.c.h.b16 %v4901
          %v6131 = vunpack.c.l.b16 %v4902
          %v6132 = vunpack.c.h.b16 %v4902
          %v6133 = vunpack.c.l.b16 %v4903
          %v6134 = vunpack.c.h.b16 %v4903
          %v6135 = vunpack.c.l.b16 %v4904
          %v6136 = vunpack.c.h.b16 %v4904
          %v6137 = vunpack.c.l.b16 %v4905
          %v6138 = vunpack.c.h.b16 %v4905
          %v6139 = vunpack.c.l.b16 %v4906
          %v6140 = vunpack.c.h.b16 %v4906
          %v6141 = vunpack.c.l.b16 %v4907
          %v6142 = vunpack.c.h.b16 %v4907
          %v6143 = vunpack.c.l.b16 %v4908
          %v6144 = vunpack.c.h.b16 %v4908
          %v6145 = vunpack.c.l.b16 %v4909
          %v6146 = vunpack.c.h.b16 %v4909
          %v6147 = vunpack.c.l.b16 %v4910
          %v6148 = vunpack.c.h.b16 %v4910
          %v6149 = vunpack.c.l.b16 %v4911
          %v6150 = vunpack.c.h.b16 %v4911
          %v6151 = vunpack.c.l.b16 %v4912
          %v6152 = vunpack.c.h.b16 %v4912
          %v6153 = vunpack.c.l.b16 %v4913
          %v6154 = vunpack.c.h.b16 %v4913
          %v6155 = vunpack.c.l.b16 %v4914
          %v6156 = vunpack.c.h.b16 %v4914
          %v6157 = vunpack.c.l.b16 %v4915
          %v6158 = vunpack.c.h.b16 %v4915
          %v6159 = vunpack.c.l.b16 %v4916
          %v6160 = vunpack.c.h.b16 %v4916
          %v6161 = vunpack.c.l.b16 %v4917
          %v6162 = vunpack.c.h.b16 %v4917
          %v6163 = vunpack.c.l.b16 %v4918
          %v6164 = vunpack.c.h.b16 %v4918
          %v6165 = vunpack.c.l.b16 %v4919
          %v6166 = vunpack.c.h.b16 %v4919
          %v6167 = vunpack.c.l.b16 %v4920
          %v6168 = vunpack.c.h.b16 %v4920
          %v6169 = vunpack.c.l.b16 %v4921
          %v6170 = vunpack.c.h.b16 %v4921
          %v6171 = vunpack.c.l.b16 %v4922
          %v6172 = vunpack.c.h.b16 %v4922
          %v6173 = vunpack.c.l.b16 %v4923
          %v6174 = vunpack.c.h.b16 %v4923
          %v6175 = vunpack.c.l.b16 %v4924
          %v6176 = vunpack.c.h.b16 %v4924
          %v6177 = vunpack.c.l.b16 %v4925
          %v6178 = vunpack.c.h.b16 %v4925
          %v6179 = vunpack.c.l.b16 %v4926
          %v6180 = vunpack.c.h.b16 %v4926
          %v6181 = vunpack.c.l.b16 %v4927
          %v6182 = vunpack.c.h.b16 %v4927
          %v6183 = vunpack.c.l.b16 %v4928
          %v6184 = vunpack.c.h.b16 %v4928
          %v6185 = vunpack.c.l.b16 %v4929
          %v6186 = vunpack.c.h.b16 %v4929
          %v6187 = vunpack.c.l.b16 %v4930
          %v6188 = vunpack.c.h.b16 %v4930
          %v6189 = vunpack.c.l.b16 %v4931
          %v6190 = vunpack.c.h.b16 %v4931
          %v6191 = vunpack.c.l.b16 %v4932
          %v6192 = vunpack.c.h.b16 %v4932
          %v6193 = vunpack.c.l.b16 %v4933
          %v6194 = vunpack.c.h.b16 %v4933
          %v6195 = vunpack.c.l.b16 %v4934
          %v6196 = vunpack.c.h.b16 %v4934
          %v6197 = vunpack.c.l.b16 %v4935
          %v6198 = vunpack.c.h.b16 %v4935
          %v6199 = vunpack.c.l.b16 %v4936
          %v6200 = vunpack.c.h.b16 %v4936
          %v6201 = vunpack.c.l.b16 %v4937
          %v6202 = vunpack.c.h.b16 %v4937
          %v6203 = vunpack.c.l.b16 %v4938
          %v6204 = vunpack.c.h.b16 %v4938
          %v6205 = vunpack.c.l.b16 %v4939
          %v6206 = vunpack.c.h.b16 %v4939
          %v6207 = vunpack.c.l.b16 %v4940
          %v6208 = vunpack.c.h.b16 %v4940
          %v6209 = vunpack.c.l.b16 %v4941
          %v6210 = vunpack.c.h.b16 %v4941
          %v6211 = vunpack.c.l.b16 %v4942
          %v6212 = vunpack.c.h.b16 %v4942
          %v6213 = vunpack.c.l.b16 %v4943
          %v6214 = vunpack.c.h.b16 %v4943
          %v6215 = vunpack.c.l.b16 %v4944
          %v6216 = vunpack.c.h.b16 %v4944
          %v6217 = vunpack.c.l.b16 %v4945
          %v6218 = vunpack.c.h.b16 %v4945
          %v6219 = vunpack.c.l.b16 %v4946
          %v6220 = vunpack.c.h.b16 %v4946
          %v6221 = vunpack.c.l.b16 %v4947
          %v6222 = vunpack.c.h.b16 %v4947
          %v6223 = vunpack.c.l.b16 %v4948
          %v6224 = vunpack.c.h.b16 %v4948
          %v6225 = vunpack.c.l.b16 %v4949
          %v6226 = vunpack.c.h.b16 %v4949
          %v6227 = vunpack.c.l.b16 %v4950
          %v6228 = vunpack.c.h.b16 %v4950
          %v6229 = vunpack.c.l.b16 %v4951
          %v6230 = vunpack.c.h.b16 %v4951
          %v6231 = vunpack.c.l.b16 %v4952
          %v6232 = vunpack.c.h.b16 %v4952
          %v6233 = vunpack.c.l.b16 %v4953
          %v6234 = vunpack.c.h.b16 %v4953
          %v6235 = vunpack.c.l.b16 %v4954
          %v6236 = vunpack.c.h.b16 %v4954
          %v6237 = vunpack.c.l.b16 %v4955
          %v6238 = vunpack.c.h.b16 %v4955
          %v6239 = vunpack.c.l.b16 %v4956
          %v6240 = vunpack.c.h.b16 %v4956
          %v6241 = vunpack.c.l.b16 %v4957
          %v6242 = vunpack.c.h.b16 %v4957
          %v6243 = vunpack.c.l.b16 %v4958
          %v6244 = vunpack.c.h.b16 %v4958
          %v6245 = vunpack.c.l.b16 %v4959
          %v6246 = vunpack.c.h.b16 %v4959
          %v6247 = vunpack.c.l.b16 %v4960
          %v6248 = vunpack.c.h.b16 %v4960
          %v6249 = vunpack.c.l.b16 %v4961
          %v6250 = vunpack.c.h.b16 %v4961
          %v6251 = vunpack.c.l.b16 %v4962
          %v6252 = vunpack.c.h.b16 %v4962
          %v6253 = vunpack.c.l.b16 %v4963
          %v6254 = vunpack.c.h.b16 %v4963
          %v6255 = vunpack.c.l.b16 %v4964
          %v6256 = vunpack.c.h.b16 %v4964
          %v6257 = vunpack.c.l.b16 %v4965
          %v6258 = vunpack.c.h.b16 %v4965
          %v6259 = vunpack.c.l.b16 %v4966
          %v6260 = vunpack.c.h.b16 %v4966
          %v6261 = vunpack.c.l.b16 %v4967
          %v6262 = vunpack.c.h.b16 %v4967
          %v6263 = vunpack.c.l.b16 %v4968
          %v6264 = vunpack.c.h.b16 %v4968
          %v6265 = vunpack.c.l.b16 %v4969
          %v6266 = vunpack.c.h.b16 %v4969
          %v6267 = vunpack.c.l.b16 %v4970
          %v6268 = vunpack.c.h.b16 %v4970
          %v6269 = vunpack.c.l.b16 %v4971
          %v6270 = vunpack.c.h.b16 %v4971
          %v6271 = vunpack.c.l.b16 %v4972
          %v6272 = vunpack.c.h.b16 %v4972
          %v6273 = vunpack.c.l.b16 %v4973
          %v6274 = vunpack.c.h.b16 %v4973
          %v6275 = vunpack.c.l.b16 %v4974
          %v6276 = vunpack.c.h.b16 %v4974
          %v6277 = vunpack.c.l.b16 %v4975
          %v6278 = vunpack.c.h.b16 %v4975
          %v6279 = vunpack.c.l.b16 %v4976
          %v6280 = vunpack.c.h.b16 %v4976
          %v6281 = vunpack.c.l.b16 %v4977
          %v6282 = vunpack.c.h.b16 %v4977
          %v6283 = vunpack.c.l.b16 %v4978
          %v6284 = vunpack.c.h.b16 %v4978
          %v6285 = vunpack.c.l.b16 %v4979
          %v6286 = vunpack.c.h.b16 %v4979
          %v6287 = vunpack.c.l.b16 %v4980
          %v6288 = vunpack.c.h.b16 %v4980
          %v6289 = vunpack.c.l.b16 %v4981
          %v6290 = vunpack.c.h.b16 %v4981
          %v6291 = vunpack.c.l.b16 %v4982
          %v6292 = vunpack.c.h.b16 %v4982
          %v6293 = vunpack.c.l.b16 %v4983
          %v6294 = vunpack.c.h.b16 %v4983
          %v6295 = vunpack.c.l.b16 %v4984
          %v6296 = vunpack.c.h.b16 %v4984
          %v6297 = vunpack.c.l.b16 %v4985
          %v6298 = vunpack.c.h.b16 %v4985
          %v6299 = vunpack.c.l.b16 %v4986
          %v6300 = vunpack.c.h.b16 %v4986
          %v6301 = vunpack.c.l.b16 %v4987
          %v6302 = vunpack.c.h.b16 %v4987
          %v6303 = vunpack.c.l.b16 %v4988
          %v6304 = vunpack.c.h.b16 %v4988
          %v6305 = vunpack.c.l.b16 %v4989
          %v6306 = vunpack.c.h.b16 %v4989
          %v6307 = vunpack.c.l.b16 %v4990
          %v6308 = vunpack.c.h.b16 %v4990
          %v6309 = vunpack.c.l.b16 %v4991
          %v6310 = vunpack.c.h.b16 %v4991
          %v6311 = vunpack.c.l.b16 %v4992
          %v6312 = vunpack.c.h.b16 %v4992
          %v6313 = vunpack.c.l.b16 %v4993
          %v6314 = vunpack.c.h.b16 %v4993
          %v6315 = vunpack.c.l.b16 %v4994
          %v6316 = vunpack.c.h.b16 %v4994
          %v6317 = vunpack.c.l.b16 %v4995
          %v6318 = vunpack.c.h.b16 %v4995
          %v6319 = vunpack.c.l.b16 %v4996
          %v6320 = vunpack.c.h.b16 %v4996
          %v6321 = vunpack.c.l.b16 %v4997
          %v6322 = vunpack.c.h.b16 %v4997
          %v6323 = vunpack.c.l.b16 %v4998
          %v6324 = vunpack.c.h.b16 %v4998
          %v6325 = vunpack.c.l.b16 %v4999
          %v6326 = vunpack.c.h.b16 %v4999
          %v6327 = vunpack.c.l.b16 %v5000
          %v6328 = vunpack.c.h.b16 %v5000
          %v6329 = vunpack.c.l.b16 %v5001
          %v6330 = vunpack.c.h.b16 %v5001
          %v6331 = vunpack.c.l.b16 %v5002
          %v6332 = vunpack.c.h.b16 %v5002
          %v6333 = vunpack.c.l.b16 %v5003
          %v6334 = vunpack.c.h.b16 %v5003
          %v6335 = vunpack.c.l.b16 %v5004
          %v6336 = vunpack.c.h.b16 %v5004
          %v6337 = vunpack.c.l.b16 %v5005
          %v6338 = vunpack.c.h.b16 %v5005
          %v6339 = vunpack.c.l.b16 %v5006
          %v6340 = vunpack.c.h.b16 %v5006
          %v6341 = vunpack.c.l.b16 %v5007
          %v6342 = vunpack.c.h.b16 %v5007
          %v6343 = vunpack.c.l.b16 %v5008
          %v6344 = vunpack.c.h.b16 %v5008
          %v6345 = vunpack.c.l.b16 %v5009
          %v6346 = vunpack.c.h.b16 %v5009
          %v6347 = vunpack.c.l.b16 %v5010
          %v6348 = vunpack.c.h.b16 %v5010
          %v6349 = vunpack.c.l.b16 %v5011
          %v6350 = vunpack.c.h.b16 %v5011
          %v6351 = vunpack.c.l.b16 %v5012
          %v6352 = vunpack.c.h.b16 %v5012
          %v6353 = vunpack.c.l.b16 %v5013
          %v6354 = vunpack.c.h.b16 %v5013
          %v6355 = vunpack.c.l.b16 %v5014
          %v6356 = vunpack.c.h.b16 %v5014
          %v6357 = vunpack.c.l.b16 %v5015
          %v6358 = vunpack.c.h.b16 %v5015
          %v6359 = vunpack.c.l.b16 %v5016
          %v6360 = vunpack.c.h.b16 %v5016
          %v6361 = vunpack.c.l.b16 %v5017
          %v6362 = vunpack.c.h.b16 %v5017
          %v6363 = vunpack.c.l.b16 %v5018
          %v6364 = vunpack.c.h.b16 %v5018
          %v6365 = vunpack.c.l.b16 %v5019
          %v6366 = vunpack.c.h.b16 %v5019
          %v6367 = vunpack.c.l.b16 %v5020
          %v6368 = vunpack.c.h.b16 %v5020
          %v6369 = vunpack.c.l.b16 %v5021
          %v6370 = vunpack.c.h.b16 %v5021
          %v6371 = vunpack.c.l.b16 %v5022
          %v6372 = vunpack.c.h.b16 %v5022
          %v6373 = vunpack.c.l.b16 %v5023
          %v6374 = vunpack.c.h.b16 %v5023
          %v6375 = vunpack.c.l.b16 %v5024
          %v6376 = vunpack.c.h.b16 %v5024
          %v6377 = vunpack.c.l.b16 %v5025
          %v6378 = vunpack.c.h.b16 %v5025
          %v6379 = vunpack.c.l.b16 %v5026
          %v6380 = vunpack.c.h.b16 %v5026
          %v6381 = vunpack.c.l.b16 %v5027
          %v6382 = vunpack.c.h.b16 %v5027
          %v6383 = vunpack.c.l.b16 %v5028
          %v6384 = vunpack.c.h.b16 %v5028
          %v6385 = vunpack.c.l.b16 %v5029
          %v6386 = vunpack.c.h.b16 %v5029
          %v6387 = vunpack.c.l.b16 %v5030
          %v6388 = vunpack.c.h.b16 %v5030
          %v6389 = vunpack.c.l.b16 %v5031
          %v6390 = vunpack.c.h.b16 %v5031
          %v6391 = vunpack.c.l.b16 %v5032
          %v6392 = vunpack.c.h.b16 %v5032
          %v6393 = vunpack.c.l.b16 %v5033
          %v6394 = vunpack.c.h.b16 %v5033
          %v6395 = vunpack.c.l.b16 %v5034
          %v6396 = vunpack.c.h.b16 %v5034
          %v6397 = vunpack.c.l.b16 %v5035
          %v6398 = vunpack.c.h.b16 %v5035
          %v6399 = vunpack.c.l.b16 %v5036
          %v6400 = vunpack.c.h.b16 %v5036
          %v6401 = vunpack.c.l.b16 %v5037
          %v6402 = vunpack.c.h.b16 %v5037
          %v6403 = vunpack.c.l.b16 %v5038
          %v6404 = vunpack.c.h.b16 %v5038
          %v6405 = vunpack.c.l.b16 %v5039
          %v6406 = vunpack.c.h.b16 %v5039
          %v6407 = vunpack.c.l.b16 %v5040
          %v6408 = vunpack.c.h.b16 %v5040
          %v6409 = vunpack.c.l.b16 %v5041
          %v6410 = vunpack.c.h.b16 %v5041
          %v6411 = vunpack.c.l.b16 %v5042
          %v6412 = vunpack.c.h.b16 %v5042
          %v6413 = vunpack.c.l.b16 %v5043
          %v6414 = vunpack.c.h.b16 %v5043
          %v6415 = vunpack.c.l.b16 %v5044
          %v6416 = vunpack.c.h.b16 %v5044
          %v6417 = vunpack.c.l.b16 %v5045
          %v6418 = vunpack.c.h.b16 %v5045
          %v6419 = vunpack.c.l.b16 %v5046
          %v6420 = vunpack.c.h.b16 %v5046
          %v6421 = vunpack.c.l.b16 %v5047
          %v6422 = vunpack.c.h.b16 %v5047
          %v6423 = vunpack.c.l.b16 %v5048
          %v6424 = vunpack.c.h.b16 %v5048
          %v6425 = vunpack.c.l.b16 %v5049
          %v6426 = vunpack.c.h.b16 %v5049
          %v6427 = vunpack.c.l.b16 %v5050
          %v6428 = vunpack.c.h.b16 %v5050
          %v6429 = vunpack.c.l.b16 %v5051
          %v6430 = vunpack.c.h.b16 %v5051
          %v6431 = vunpack.c.l.b16 %v5052
          %v6432 = vunpack.c.h.b16 %v5052
          %v6433 = vunpack.c.l.b16 %v5053
          %v6434 = vunpack.c.h.b16 %v5053
          %v6435 = vunpack.c.l.b16 %v5054
          %v6436 = vunpack.c.h.b16 %v5054
          %v6437 = vunpack.c.l.b16 %v5055
          %v6438 = vunpack.c.h.b16 %v5055
          %v6439 = vunpack.c.l.b16 %v5056
          %v6440 = vunpack.c.h.b16 %v5056
          %v6441 = vunpack.c.l.b16 %v5057
          %v6442 = vunpack.c.h.b16 %v5057
          %v6443 = vunpack.c.l.b16 %v5058
          %v6444 = vunpack.c.h.b16 %v5058
          %v6445 = vunpack.c.l.b16 %v5059
          %v6446 = vunpack.c.h.b16 %v5059
          %v6447 = vunpack.c.l.b16 %v5060
          %v6448 = vunpack.c.h.b16 %v5060
          %v6449 = vunpack.c.l.b16 %v5061
          %v6450 = vunpack.c.h.b16 %v5061
          %v6451 = vunpack.c.l.b16 %v5062
          %v6452 = vunpack.c.h.b16 %v5062
          %v6453 = vunpack.c.l.b16 %v5063
          %v6454 = vunpack.c.h.b16 %v5063
          %v6455 = vunpack.c.l.b16 %v5064
          %v6456 = vunpack.c.h.b16 %v5064
          %v6457 = vunpack.c.l.b16 %v5065
          %v6458 = vunpack.c.h.b16 %v5065
          %v6459 = vunpack.c.l.b16 %v5066
          %v6460 = vunpack.c.h.b16 %v5066
          %v6461 = vunpack.c.l.b16 %v5067
          %v6462 = vunpack.c.h.b16 %v5067
          %v6463 = vunpack.c.l.b16 %v5068
          %v6464 = vunpack.c.h.b16 %v5068
          %v6465 = vunpack.c.l.b16 %v5069
          %v6466 = vunpack.c.h.b16 %v5069
          %v6467 = vunpack.c.l.b16 %v5070
          %v6468 = vunpack.c.h.b16 %v5070
          %v6469 = vunpack.c.l.b16 %v5071
          %v6470 = vunpack.c.h.b16 %v5071
          %v6471 = vunpack.c.l.b16 %v5072
          %v6472 = vunpack.c.h.b16 %v5072
          %v6473 = vunpack.c.l.b16 %v5073
          %v6474 = vunpack.c.h.b16 %v5073
          %v6475 = vunpack.c.l.b16 %v5074
          %v6476 = vunpack.c.h.b16 %v5074
          %v6477 = vunpack.c.l.b16 %v5075
          %v6478 = vunpack.c.h.b16 %v5075
          %v6479 = vunpack.c.l.b16 %v5076
          %v6480 = vunpack.c.h.b16 %v5076
          %v6481 = vunpack.c.l.b16 %v5077
          %v6482 = vunpack.c.h.b16 %v5077
          %v6483 = vunpack.c.l.b16 %v5078
          %v6484 = vunpack.c.h.b16 %v5078
          %v6485 = vunpack.c.l.b16 %v5079
          %v6486 = vunpack.c.h.b16 %v5079
          %v6487 = vunpack.c.l.b16 %v5080
          %v6488 = vunpack.c.h.b16 %v5080
          %v6489 = vunpack.c.l.b16 %v5081
          %v6490 = vunpack.c.h.b16 %v5081
          %v6491 = vunpack.c.l.b16 %v5082
          %v6492 = vunpack.c.h.b16 %v5082
          %v6493 = vunpack.c.l.b16 %v5083
          %v6494 = vunpack.c.h.b16 %v5083
          %v6495 = vunpack.c.l.b16 %v5084
          %v6496 = vunpack.c.h.b16 %v5084
          %v6497 = vunpack.c.l.b16 %v5085
          %v6498 = vunpack.c.h.b16 %v5085
          %v6499 = vunpack.c.l.b16 %v5086
          %v6500 = vunpack.c.h.b16 %v5086
          %v6501 = vunpack.c.l.b16 %v5087
          %v6502 = vunpack.c.h.b16 %v5087
          %v6503 = vunpack.c.l.b16 %v5088
          %v6504 = vunpack.c.h.b16 %v5088
          %v6505 = vunpack.c.l.b16 %v5089
          %v6506 = vunpack.c.h.b16 %v5089
          %v6507 = vunpack.c.l.b16 %v5090
          %v6508 = vunpack.c.h.b16 %v5090
          %v6509 = vunpack.c.l.b16 %v5091
          %v6510 = vunpack.c.h.b16 %v5091
          %v6511 = vunpack.c.l.b16 %v5092
          %v6512 = vunpack.c.h.b16 %v5092
          %v6513 = vunpack.c.l.b16 %v5093
          %v6514 = vunpack.c.h.b16 %v5093
          %v6515 = vunpack.c.l.b16 %v5094
          %v6516 = vunpack.c.h.b16 %v5094
          %v6517 = vunpack.c.l.b16 %v5095
          %v6518 = vunpack.c.h.b16 %v5095
          %v6519 = vunpack.c.l.b16 %v5096
          %v6520 = vunpack.c.h.b16 %v5096
          %v6521 = vunpack.c.l.b16 %v5097
          %v6522 = vunpack.c.h.b16 %v5097
          %v6523 = vunpack.c.l.b16 %v5098
          %v6524 = vunpack.c.h.b16 %v5098
          %v6525 = vunpack.c.l.b16 %v5099
          %v6526 = vunpack.c.h.b16 %v5099
          %v6527 = vunpack.c.l.b16 %v5100
          %v6528 = vunpack.c.h.b16 %v5100
          %v6529 = vunpack.c.l.b16 %v5101
          %v6530 = vunpack.c.h.b16 %v5101
          %v6531 = vunpack.c.l.b16 %v5102
          %v6532 = vunpack.c.h.b16 %v5102
          %v6533 = vunpack.c.l.b16 %v5103
          %v6534 = vunpack.c.h.b16 %v5103
          %v6535 = vunpack.c.l.b16 %v5104
          %v6536 = vunpack.c.h.b16 %v5104
          %v6537 = vunpack.c.l.b16 %v5105
          %v6538 = vunpack.c.h.b16 %v5105
          %v6539 = vunpack.c.l.b16 %v5106
          %v6540 = vunpack.c.h.b16 %v5106
          %v6541 = vunpack.c.l.b16 %v5107
          %v6542 = vunpack.c.h.b16 %v5107
          %v6543 = vunpack.c.l.b16 %v5108
          %v6544 = vunpack.c.h.b16 %v5108
          %v6545 = vunpack.c.l.b16 %v5109
          %v6546 = vunpack.c.h.b16 %v5109
          %v6547 = vunpack.c.l.b16 %v5110
          %v6548 = vunpack.c.h.b16 %v5110
          %v6549 = vunpack.c.l.b16 %v5111
          %v6550 = vunpack.c.h.b16 %v5111
          %v6551 = vunpack.c.l.b16 %v5112
          %v6552 = vunpack.c.h.b16 %v5112
          %v6553 = vunpack.c.l.b16 %v5113
          %v6554 = vunpack.c.h.b16 %v5113
          %v6555 = vunpack.c.l.b16 %v5114
          %v6556 = vunpack.c.h.b16 %v5114
          %v6557 = vunpack.c.l.b16 %v5115
          %v6558 = vunpack.c.h.b16 %v5115
          %v6559 = vunpack.c.l.b16 %v5116
          %v6560 = vunpack.c.h.b16 %v5116
          %v6561 = vunpack.c.l.b16 %v5117
          %v6562 = vunpack.c.h.b16 %v5117
          %v6563 = vunpack.c.l.b16 %v5118
          %v6564 = vunpack.c.h.b16 %v5118
          %v6565 = vunpack.c.l.b16 %v5119
          %v6566 = vunpack.c.h.b16 %v5119
          %v6567 = vunpack.c.l.b16 %v5120
          %v6568 = vunpack.c.h.b16 %v5120
          %v6569 = vunpack.c.l.b16 %v5121
          %v6570 = vunpack.c.h.b16 %v5121
          %v6571 = vunpack.c.l.b16 %v5122
          %v6572 = vunpack.c.h.b16 %v5122
          %v6573 = vunpack.c.l.b16 %v5123
          %v6574 = vunpack.c.h.b16 %v5123
          %v6575 = vunpack.c.l.b16 %v5124
          %v6576 = vunpack.c.h.b16 %v5124
          %v6577 = vunpack.c.l.b16 %v5125
          %v6578 = vunpack.c.h.b16 %v5125
          %v6579 = vunpack.c.l.b16 %v5126
          %v6580 = vunpack.c.h.b16 %v5126
          %v6581 = vunpack.c.l.b16 %v5127
          %v6582 = vunpack.c.h.b16 %v5127
          %v6583 = vunpack.c.l.b16 %v5128
          %v6584 = vunpack.c.h.b16 %v5128
          %v6585 = vunpack.c.l.b16 %v5129
          %v6586 = vunpack.c.h.b16 %v5129
          %v6587 = vunpack.c.l.b16 %v5130
          %v6588 = vunpack.c.h.b16 %v5130
          %v6589 = vunpack.c.l.b16 %v5131
          %v6590 = vunpack.c.h.b16 %v5131
          %v6591 = vunpack.c.l.b16 %v5132
          %v6592 = vunpack.c.h.b16 %v5132
          %v6593 = vunpack.c.l.b16 %v5133
          %v6594 = vunpack.c.h.b16 %v5133
          %v6595 = vunpack.c.l.b16 %v5134
          %v6596 = vunpack.c.h.b16 %v5134
          %v6597 = vunpack.c.l.b16 %v5135
          %v6598 = vunpack.c.h.b16 %v5135
          %v6599 = vunpack.c.l.b16 %v5136
          %v6600 = vunpack.c.h.b16 %v5136
          %v6601 = vunpack.c.l.b16 %v5137
          %v6602 = vunpack.c.h.b16 %v5137
          %v6603 = vunpack.c.l.b16 %v5138
          %v6604 = vunpack.c.h.b16 %v5138
          %v6605 = vunpack.c.l.b16 %v5139
          %v6606 = vunpack.c.h.b16 %v5139
          %v6607 = vunpack.c.l.b16 %v5140
          %v6608 = vunpack.c.h.b16 %v5140
          %v6609 = vunpack.c.l.b16 %v5141
          %v6610 = vunpack.c.h.b16 %v5141
          %v6611 = vunpack.c.l.b16 %v5142
          %v6612 = vunpack.c.h.b16 %v5142
          %v6613 = vunpack.c.l.b16 %v5143
          %v6614 = vunpack.c.h.b16 %v5143
          %v6615 = vunpack.c.l.b16 %v5144
          %v6616 = vunpack.c.h.b16 %v5144
          %v6617 = vunpack.c.l.b16 %v5145
          %v6618 = vunpack.c.h.b16 %v5145
          %v6619 = vunpack.c.l.b16 %v5146
          %v6620 = vunpack.c.h.b16 %v5146
          %v6621 = vunpack.c.l.b16 %v5147
          %v6622 = vunpack.c.h.b16 %v5147
          %v6623 = vunpack.c.l.b16 %v5148
          %v6624 = vunpack.c.h.b16 %v5148
          %v6625 = vunpack.c.l.b16 %v5149
          %v6626 = vunpack.c.h.b16 %v5149
          %v6627 = vunpack.c.l.b16 %v5150
          %v6628 = vunpack.c.h.b16 %v5150
          %v6629 = vunpack.c.l.b16 %v5151
          %v6630 = vunpack.c.h.b16 %v5151
          %v6631 = vunpack.c.l.b16 %v5152
          %v6632 = vunpack.c.h.b16 %v5152
          %v6633 = vunpack.c.l.b16 %v5153
          %v6634 = vunpack.c.h.b16 %v5153
          %v6635 = vunpack.c.l.b16 %v5154
          %v6636 = vunpack.c.h.b16 %v5154
          %v6637 = vunpack.c.l.b16 %v5155
          %v6638 = vunpack.c.h.b16 %v5155
          %v6639 = vunpack.c.l.b16 %v5156
          %v6640 = vunpack.c.h.b16 %v5156
          %v6641 = vunpack.c.l.b16 %v5157
          %v6642 = vunpack.c.h.b16 %v5157
          %v6643 = vunpack.c.l.b16 %v5158
          %v6644 = vunpack.c.h.b16 %v5158
          %v6645 = vunpack.c.l.b16 %v5159
          %v6646 = vunpack.c.h.b16 %v5159
          %v6647 = vunpack.c.l.b16 %v5160
          %v6648 = vunpack.c.h.b16 %v5160
          %v6649 = vunpack.c.l.b16 %v5161
          %v6650 = vunpack.c.h.b16 %v5161
          %v6651 = vunpack.c.l.b16 %v5162
          %v6652 = vunpack.c.h.b16 %v5162
          %v6653 = vunpack.c.l.b16 %v5163
          %v6654 = vunpack.c.h.b16 %v5163
          %v6655 = vunpack.c.l.b16 %v5164
          %v6656 = vunpack.c.h.b16 %v5164
          %v6657 = vunpack.c.l.b16 %v5165
          %v6658 = vunpack.c.h.b16 %v5165
          %v6659 = vunpack.c.l.b16 %v5166
          %v6660 = vunpack.c.h.b16 %v5166
          %v6661 = vunpack.c.l.b16 %v5167
          %v6662 = vunpack.c.h.b16 %v5167
          %v6663 = vunpack.c.l.b16 %v5168
          %v6664 = vunpack.c.h.b16 %v5168
          %v6665 = vunpack.c.l.b16 %v5169
          %v6666 = vunpack.c.h.b16 %v5169
          %v6667 = vunpack.c.l.b16 %v5170
          %v6668 = vunpack.c.h.b16 %v5170
          %v6669 = vunpack.c.l.b16 %v5171
          %v6670 = vunpack.c.h.b16 %v5171
          %v6671 = vunpack.c.l.b16 %v5172
          %v6672 = vunpack.c.h.b16 %v5172
          %v6673 = vunpack.c.l.b16 %v5173
          %v6674 = vunpack.c.h.b16 %v5173
          %v6675 = vunpack.c.l.b16 %v5174
          %v6676 = vunpack.c.h.b16 %v5174
          %v6677 = vunpack.c.l.b16 %v5175
          %v6678 = vunpack.c.h.b16 %v5175
          %v6679 = vunpack.c.l.b16 %v5176
          %v6680 = vunpack.c.h.b16 %v5176
          %v6681 = vunpack.c.l.b16 %v5177
          %v6682 = vunpack.c.h.b16 %v5177
          %v6683 = vunpack.c.l.b16 %v5178
          %v6684 = vunpack.c.h.b16 %v5178
          %v6685 = vunpack.c.l.b16 %v5179
          %v6686 = vunpack.c.h.b16 %v5179
          %v6687 = vunpack.c.l.b16 %v5180
          %v6688 = vunpack.c.h.b16 %v5180
          %v6689 = vunpack.c.l.b16 %v5181
          %v6690 = vunpack.c.h.b16 %v5181
          %v6691 = vunpack.c.l.b16 %v5182
          %v6692 = vunpack.c.h.b16 %v5182
          %v6693 = vunpack.c.l.b16 %v5183
          %v6694 = vunpack.c.h.b16 %v5183
          %v6695 = vunpack.c.l.b16 %v5184
          %v6696 = vunpack.c.h.b16 %v5184
          %v6697 = vunpack.c.l.b16 %v5185
          %v6698 = vunpack.c.h.b16 %v5185
          %v6699 = vunpack.c.l.b16 %v5186
          %v6700 = vunpack.c.h.b16 %v5186
          %v6701 = vunpack.c.l.b16 %v5187
          %v6702 = vunpack.c.h.b16 %v5187
          %v6703 = vunpack.c.l.b16 %v5188
          %v6704 = vunpack.c.h.b16 %v5188
          %v6705 = vunpack.c.l.b16 %v5189
          %v6706 = vunpack.c.h.b16 %v5189
          %v6707 = vunpack.c.l.b16 %v5190
          %v6708 = vunpack.c.h.b16 %v5190
          %v6709 = vunpack.c.l.b16 %v5191
          %v6710 = vunpack.c.h.b16 %v5191
          %v6711 = vunpack.c.l.b16 %v5192
          %v6712 = vunpack.c.h.b16 %v5192
          %v6713 = vunpack.c.l.b16 %v5193
          %v6714 = vunpack.c.h.b16 %v5193
          %v6715 = vunpack.c.l.b16 %v5194
          %v6716 = vunpack.c.h.b16 %v5194
          %v6717 = vunpack.c.l.b16 %v5195
          %v6718 = vunpack.c.h.b16 %v5195
          %v6719 = vunpack.c.l.b16 %v5196
          %v6720 = vunpack.c.h.b16 %v5196
          %v6721 = vunpack.c.l.b16 %v5197
          %v6722 = vunpack.c.h.b16 %v5197
          %v6723 = vunpack.c.l.b16 %v5198
          %v6724 = vunpack.c.h.b16 %v5198
          %v6725 = vunpack.c.l.b16 %v5199
          %v6726 = vunpack.c.h.b16 %v5199
          %v6727 = vunpack.c.l.b16 %v5200
          %v6728 = vunpack.c.h.b16 %v5200
          %v6729 = vunpack.c.l.b16 %v5201
          %v6730 = vunpack.c.h.b16 %v5201
          %v6731 = vunpack.c.l.b16 %v5202
          %v6732 = vunpack.c.h.b16 %v5202
          %v6733 = vunpack.c.l.b16 %v5203
          %v6734 = vunpack.c.h.b16 %v5203
          %v6735 = vunpack.c.l.b16 %v5204
          %v6736 = vunpack.c.h.b16 %v5204
          %v6737 = vunpack.c.l.b16 %v5205
          %v6738 = vunpack.c.h.b16 %v5205
          %v6739 = vunpack.c.l.b16 %v5206
          %v6740 = vunpack.c.h.b16 %v5206
          %v6741 = vunpack.c.l.b16 %v5207
          %v6742 = vunpack.c.h.b16 %v5207
          %v6743 = vunpack.c.l.b16 %v5208
          %v6744 = vunpack.c.h.b16 %v5208
          %v6745 = vunpack.c.l.b16 %v5209
          %v6746 = vunpack.c.h.b16 %v5209
          %v6747 = vunpack.c.l.b16 %v5210
          %v6748 = vunpack.c.h.b16 %v5210
          %v6749 = vunpack.c.l.b16 %v5211
          %v6750 = vunpack.c.h.b16 %v5211
          %v6751 = vunpack.c.l.b16 %v5212
          %v6752 = vunpack.c.h.b16 %v5212
          %v6753 = vunpack.c.l.b16 %v5213
          %v6754 = vunpack.c.h.b16 %v5213
          %v6755 = vunpack.c.l.b16 %v5214
          %v6756 = vunpack.c.h.b16 %v5214
          %v6757 = vunpack.c.l.b16 %v5215
          %v6758 = vunpack.c.h.b16 %v5215
          %v6759 = vunpack.c.l.b16 %v5216
          %v6760 = vunpack.c.h.b16 %v5216
          %v6761 = vunpack.c.l.b16 %v5217
          %v6762 = vunpack.c.h.b16 %v5217
          %v6763 = vunpack.c.l.b16 %v5218
          %v6764 = vunpack.c.h.b16 %v5218
          %v6765 = vunpack.c.l.b16 %v5219
          %v6766 = vunpack.c.h.b16 %v5219
          %v6767 = vunpack.c.l.b16 %v5220
          %v6768 = vunpack.c.h.b16 %v5220
          %v6769 = vunpack.c.l.b16 %v5221
          %v6770 = vunpack.c.h.b16 %v5221
          %v6771 = vunpack.c.l.b16 %v5222
          %v6772 = vunpack.c.h.b16 %v5222
          %v6773 = vunpack.c.l.b16 %v5223
          %v6774 = vunpack.c.h.b16 %v5223
          %v6775 = vunpack.c.l.b16 %v5224
          %v6776 = vunpack.c.h.b16 %v5224
          %v6777 = vunpack.c.l.b16 %v5225
          %v6778 = vunpack.c.h.b16 %v5225
          %v6779 = vunpack.c.l.b16 %v5226
          %v6780 = vunpack.c.h.b16 %v5226
          %v6781 = vpack.c.b16 %v5765, %v5757
          %v6782 = vpack.c.b16 %v5766, %v5758
          %v6783 = vpack.c.b16 %v5767, %v5759
          %v6784 = vpack.c.b16 %v5768, %v5760
          %v6785 = vpack.c.b16 %v5769, %v5761
          %v6786 = vpack.c.b16 %v5770, %v5762
          %v6787 = vpack.c.b16 %v5771, %v5763
          %v6788 = vpack.c.b16 %v5772, %v5764
          %v6789 = vpack.c.b16 %v5781, %v5773
          %v6790 = vpack.c.b16 %v5782, %v5774
          %v6791 = vpack.c.b16 %v5783, %v5775
          %v6792 = vpack.c.b16 %v5784, %v5776
          %v6793 = vpack.c.b16 %v5785, %v5777
          %v6794 = vpack.c.b16 %v5786, %v5778
          %v6795 = vpack.c.b16 %v5787, %v5779
          %v6796 = vpack.c.b16 %v5788, %v5780
          %v6797 = vpack.c.b16 %v5797, %v5789
          %v6798 = vpack.c.b16 %v5798, %v5790
          %v6799 = vpack.c.b16 %v5799, %v5791
          %v6800 = vpack.c.b16 %v5800, %v5792
          %v6801 = vpack.c.b16 %v5801, %v5793
          %v6802 = vpack.c.b16 %v5802, %v5794
          %v6803 = vpack.c.b16 %v5803, %v5795
          %v6804 = vpack.c.b16 %v5804, %v5796
          %v6805 = vpack.c.b16 %v5813, %v5805
          %v6806 = vpack.c.b16 %v5814, %v5806
          %v6807 = vpack.c.b16 %v5815, %v5807
          %v6808 = vpack.c.b16 %v5816, %v5808
          %v6809 = vpack.c.b16 %v5817, %v5809
          %v6810 = vpack.c.b16 %v5818, %v5810
          %v6811 = vpack.c.b16 %v5819, %v5811
          %v6812 = vpack.c.b16 %v5820, %v5812
          %v6813 = vpack.c.b16 %v5829, %v5821
          %v6814 = vpack.c.b16 %v5830, %v5822
          %v6815 = vpack.c.b16 %v5831, %v5823
          %v6816 = vpack.c.b16 %v5832, %v5824
          %v6817 = vpack.c.b16 %v5833, %v5825
          %v6818 = vpack.c.b16 %v5834, %v5826
          %v6819 = vpack.c.b16 %v5835, %v5827
          %v6820 = vpack.c.b16 %v5836, %v5828
          %v6821 = vpack.c.b16 %v5845, %v5837
          %v6822 = vpack.c.b16 %v5846, %v5838
          %v6823 = vpack.c.b16 %v5847, %v5839
          %v6824 = vpack.c.b16 %v5848, %v5840
          %v6825 = vpack.c.b16 %v5849, %v5841
          %v6826 = vpack.c.b16 %v5850, %v5842
          %v6827 = vpack.c.b16 %v5851, %v5843
          %v6828 = vpack.c.b16 %v5852, %v5844
          %v6829 = vpack.c.b16 %v5861, %v5853
          %v6830 = vpack.c.b16 %v5862, %v5854
          %v6831 = vpack.c.b16 %v5863, %v5855
          %v6832 = vpack.c.b16 %v5864, %v5856
          %v6833 = vpack.c.b16 %v5865, %v5857
          %v6834 = vpack.c.b16 %v5866, %v5858
          %v6835 = vpack.c.b16 %v5867, %v5859
          %v6836 = vpack.c.b16 %v5868, %v5860
          %v6837 = vpack.c.b16 %v5877, %v5869
          %v6838 = vpack.c.b16 %v5878, %v5870
          %v6839 = vpack.c.b16 %v5879, %v5871
          %v6840 = vpack.c.b16 %v5880, %v5872
          %v6841 = vpack.c.b16 %v5881, %v5873
          %v6842 = vpack.c.b16 %v5882, %v5874
          %v6843 = vpack.c.b16 %v5883, %v5875
          %v6844 = vpack.c.b16 %v5884, %v5876
          %v6845 = vpack.c.b16 %v5893, %v5885
          %v6846 = vpack.c.b16 %v5894, %v5886
          %v6847 = vpack.c.b16 %v5895, %v5887
          %v6848 = vpack.c.b16 %v5896, %v5888
          %v6849 = vpack.c.b16 %v5897, %v5889
          %v6850 = vpack.c.b16 %v5898, %v5890
          %v6851 = vpack.c.b16 %v5899, %v5891
          %v6852 = vpack.c.b16 %v5900, %v5892
          %v6853 = vpack.c.b16 %v5909, %v5901
          %v6854 = vpack.c.b16 %v5910, %v5902
          %v6855 = vpack.c.b16 %v5911, %v5903
          %v6856 = vpack.c.b16 %v5912, %v5904
          %v6857 = vpack.c.b16 %v5913, %v5905
          %v6858 = vpack.c.b16 %v5914, %v5906
          %v6859 = vpack.c.b16 %v5915, %v5907
          %v6860 = vpack.c.b16 %v5916, %v5908
          %v6861 = vpack.c.b16 %v5925, %v5917
          %v6862 = vpack.c.b16 %v5926, %v5918
          %v6863 = vpack.c.b16 %v5927, %v5919
          %v6864 = vpack.c.b16 %v5928, %v5920
          %v6865 = vpack.c.b16 %v5929, %v5921
          %v6866 = vpack.c.b16 %v5930, %v5922
          %v6867 = vpack.c.b16 %v5931, %v5923
          %v6868 = vpack.c.b16 %v5932, %v5924
          %v6869 = vpack.c.b16 %v5941, %v5933
          %v6870 = vpack.c.b16 %v5942, %v5934
          %v6871 = vpack.c.b16 %v5943, %v5935
          %v6872 = vpack.c.b16 %v5944, %v5936
          %v6873 = vpack.c.b16 %v5945, %v5937
          %v6874 = vpack.c.b16 %v5946, %v5938
          %v6875 = vpack.c.b16 %v5947, %v5939
          %v6876 = vpack.c.b16 %v5948, %v5940
          %v6877 = vpack.c.b16 %v5957, %v5949
          %v6878 = vpack.c.b16 %v5958, %v5950
          %v6879 = vpack.c.b16 %v5959, %v5951
          %v6880 = vpack.c.b16 %v5960, %v5952
          %v6881 = vpack.c.b16 %v5961, %v5953
          %v6882 = vpack.c.b16 %v5962, %v5954
          %v6883 = vpack.c.b16 %v5963, %v5955
          %v6884 = vpack.c.b16 %v5964, %v5956
          %v6885 = vpack.c.b16 %v5973, %v5965
          %v6886 = vpack.c.b16 %v5974, %v5966
          %v6887 = vpack.c.b16 %v5975, %v5967
          %v6888 = vpack.c.b16 %v5976, %v5968
          %v6889 = vpack.c.b16 %v5977, %v5969
          %v6890 = vpack.c.b16 %v5978, %v5970
          %v6891 = vpack.c.b16 %v5979, %v5971
          %v6892 = vpack.c.b16 %v5980, %v5972
          %v6893 = vpack.c.b16 %v5989, %v5981
          %v6894 = vpack.c.b16 %v5990, %v5982
          %v6895 = vpack.c.b16 %v5991, %v5983
          %v6896 = vpack.c.b16 %v5992, %v5984
          %v6897 = vpack.c.b16 %v5993, %v5985
          %v6898 = vpack.c.b16 %v5994, %v5986
          %v6899 = vpack.c.b16 %v5995, %v5987
          %v6900 = vpack.c.b16 %v5996, %v5988
          %v6901 = vpack.c.b16 %v6005, %v5997
          %v6902 = vpack.c.b16 %v6006, %v5998
          %v6903 = vpack.c.b16 %v6007, %v5999
          %v6904 = vpack.c.b16 %v6008, %v6000
          %v6905 = vpack.c.b16 %v6009, %v6001
          %v6906 = vpack.c.b16 %v6010, %v6002
          %v6907 = vpack.c.b16 %v6011, %v6003
          %v6908 = vpack.c.b16 %v6012, %v6004
          %v6909 = vpack.c.b16 %v6021, %v6013
          %v6910 = vpack.c.b16 %v6022, %v6014
          %v6911 = vpack.c.b16 %v6023, %v6015
          %v6912 = vpack.c.b16 %v6024, %v6016
          %v6913 = vpack.c.b16 %v6025, %v6017
          %v6914 = vpack.c.b16 %v6026, %v6018
          %v6915 = vpack.c.b16 %v6027, %v6019
          %v6916 = vpack.c.b16 %v6028, %v6020
          %v6917 = vpack.c.b16 %v6037, %v6029
          %v6918 = vpack.c.b16 %v6038, %v6030
          %v6919 = vpack.c.b16 %v6039, %v6031
          %v6920 = vpack.c.b16 %v6040, %v6032
          %v6921 = vpack.c.b16 %v6041, %v6033
          %v6922 = vpack.c.b16 %v6042, %v6034
          %v6923 = vpack.c.b16 %v6043, %v6035
          %v6924 = vpack.c.b16 %v6044, %v6036
          %v6925 = vpack.c.b16 %v6053, %v6045
          %v6926 = vpack.c.b16 %v6054, %v6046
          %v6927 = vpack.c.b16 %v6055, %v6047
          %v6928 = vpack.c.b16 %v6056, %v6048
          %v6929 = vpack.c.b16 %v6057, %v6049
          %v6930 = vpack.c.b16 %v6058, %v6050
          %v6931 = vpack.c.b16 %v6059, %v6051
          %v6932 = vpack.c.b16 %v6060, %v6052
          %v6933 = vpack.c.b16 %v6069, %v6061
          %v6934 = vpack.c.b16 %v6070, %v6062
          %v6935 = vpack.c.b16 %v6071, %v6063
          %v6936 = vpack.c.b16 %v6072, %v6064
          %v6937 = vpack.c.b16 %v6073, %v6065
          %v6938 = vpack.c.b16 %v6074, %v6066
          %v6939 = vpack.c.b16 %v6075, %v6067
          %v6940 = vpack.c.b16 %v6076, %v6068
          %v6941 = vpack.c.b16 %v6085, %v6077
          %v6942 = vpack.c.b16 %v6086, %v6078
          %v6943 = vpack.c.b16 %v6087, %v6079
          %v6944 = vpack.c.b16 %v6088, %v6080
          %v6945 = vpack.c.b16 %v6089, %v6081
          %v6946 = vpack.c.b16 %v6090, %v6082
          %v6947 = vpack.c.b16 %v6091, %v6083
          %v6948 = vpack.c.b16 %v6092, %v6084
          %v6949 = vpack.c.b16 %v6101, %v6093
          %v6950 = vpack.c.b16 %v6102, %v6094
          %v6951 = vpack.c.b16 %v6103, %v6095
          %v6952 = vpack.c.b16 %v6104, %v6096
          %v6953 = vpack.c.b16 %v6105, %v6097
          %v6954 = vpack.c.b16 %v6106, %v6098
          %v6955 = vpack.c.b16 %v6107, %v6099
          %v6956 = vpack.c.b16 %v6108, %v6100
          %v6957 = vpack.c.b16 %v6117, %v6109
          %v6958 = vpack.c.b16 %v6118, %v6110
          %v6959 = vpack.c.b16 %v6119, %v6111
          %v6960 = vpack.c.b16 %v6120, %v6112
          %v6961 = vpack.c.b16 %v6121, %v6113
          %v6962 = vpack.c.b16 %v6122, %v6114
          %v6963 = vpack.c.b16 %v6123, %v6115
          %v6964 = vpack.c.b16 %v6124, %v6116
          %v6965 = vpack.c.b16 %v6133, %v6125
          %v6966 = vpack.c.b16 %v6134, %v6126
          %v6967 = vpack.c.b16 %v6135, %v6127
          %v6968 = vpack.c.b16 %v6136, %v6128
          %v6969 = vpack.c.b16 %v6137, %v6129
          %v6970 = vpack.c.b16 %v6138, %v6130
          %v6971 = vpack.c.b16 %v6139, %v6131
          %v6972 = vpack.c.b16 %v6140, %v6132
          %v6973 = vpack.c.b16 %v6149, %v6141
          %v6974 = vpack.c.b16 %v6150, %v6142
          %v6975 = vpack.c.b16 %v6151, %v6143
          %v6976 = vpack.c.b16 %v6152, %v6144
          %v6977 = vpack.c.b16 %v6153, %v6145
          %v6978 = vpack.c.b16 %v6154, %v6146
          %v6979 = vpack.c.b16 %v6155, %v6147
          %v6980 = vpack.c.b16 %v6156, %v6148
          %v6981 = vpack.c.b16 %v6165, %v6157
          %v6982 = vpack.c.b16 %v6166, %v6158
          %v6983 = vpack.c.b16 %v6167, %v6159
          %v6984 = vpack.c.b16 %v6168, %v6160
          %v6985 = vpack.c.b16 %v6169, %v6161
          %v6986 = vpack.c.b16 %v6170, %v6162
          %v6987 = vpack.c.b16 %v6171, %v6163
          %v6988 = vpack.c.b16 %v6172, %v6164
          %v6989 = vpack.c.b16 %v6181, %v6173
          %v6990 = vpack.c.b16 %v6182, %v6174
          %v6991 = vpack.c.b16 %v6183, %v6175
          %v6992 = vpack.c.b16 %v6184, %v6176
          %v6993 = vpack.c.b16 %v6185, %v6177
          %v6994 = vpack.c.b16 %v6186, %v6178
          %v6995 = vpack.c.b16 %v6187, %v6179
          %v6996 = vpack.c.b16 %v6188, %v6180
          %v6997 = vpack.c.b16 %v6197, %v6189
          %v6998 = vpack.c.b16 %v6198, %v6190
          %v6999 = vpack.c.b16 %v6199, %v6191
          %v7000 = vpack.c.b16 %v6200, %v6192
          %v7001 = vpack.c.b16 %v6201, %v6193
          %v7002 = vpack.c.b16 %v6202, %v6194
          %v7003 = vpack.c.b16 %v6203, %v6195
          %v7004 = vpack.c.b16 %v6204, %v6196
          %v7005 = vpack.c.b16 %v6213, %v6205
          %v7006 = vpack.c.b16 %v6214, %v6206
          %v7007 = vpack.c.b16 %v6215, %v6207
          %v7008 = vpack.c.b16 %v6216, %v6208
          %v7009 = vpack.c.b16 %v6217, %v6209
          %v7010 = vpack.c.b16 %v6218, %v6210
          %v7011 = vpack.c.b16 %v6219, %v6211
          %v7012 = vpack.c.b16 %v6220, %v6212
          %v7013 = vpack.c.b16 %v6229, %v6221
          %v7014 = vpack.c.b16 %v6230, %v6222
          %v7015 = vpack.c.b16 %v6231, %v6223
          %v7016 = vpack.c.b16 %v6232, %v6224
          %v7017 = vpack.c.b16 %v6233, %v6225
          %v7018 = vpack.c.b16 %v6234, %v6226
          %v7019 = vpack.c.b16 %v6235, %v6227
          %v7020 = vpack.c.b16 %v6236, %v6228
          %v7021 = vpack.c.b16 %v6245, %v6237
          %v7022 = vpack.c.b16 %v6246, %v6238
          %v7023 = vpack.c.b16 %v6247, %v6239
          %v7024 = vpack.c.b16 %v6248, %v6240
          %v7025 = vpack.c.b16 %v6249, %v6241
          %v7026 = vpack.c.b16 %v6250, %v6242
          %v7027 = vpack.c.b16 %v6251, %v6243
          %v7028 = vpack.c.b16 %v6252, %v6244
          %v7029 = vpack.c.b16 %v6261, %v6253
          %v7030 = vpack.c.b16 %v6262, %v6254
          %v7031 = vpack.c.b16 %v6263, %v6255
          %v7032 = vpack.c.b16 %v6264, %v6256
          %v7033 = vpack.c.b16 %v6265, %v6257
          %v7034 = vpack.c.b16 %v6266, %v6258
          %v7035 = vpack.c.b16 %v6267, %v6259
          %v7036 = vpack.c.b16 %v6268, %v6260
          %v7037 = vpack.c.b16 %v6277, %v6269
          %v7038 = vpack.c.b16 %v6278, %v6270
          %v7039 = vpack.c.b16 %v6279, %v6271
          %v7040 = vpack.c.b16 %v6280, %v6272
          %v7041 = vpack.c.b16 %v6281, %v6273
          %v7042 = vpack.c.b16 %v6282, %v6274
          %v7043 = vpack.c.b16 %v6283, %v6275
          %v7044 = vpack.c.b16 %v6284, %v6276
          %v7045 = vpack.c.b16 %v6293, %v6285
          %v7046 = vpack.c.b16 %v6294, %v6286
          %v7047 = vpack.c.b16 %v6295, %v6287
          %v7048 = vpack.c.b16 %v6296, %v6288
          %v7049 = vpack.c.b16 %v6297, %v6289
          %v7050 = vpack.c.b16 %v6298, %v6290
          %v7051 = vpack.c.b16 %v6299, %v6291
          %v7052 = vpack.c.b16 %v6300, %v6292
          %v7053 = vpack.c.b16 %v6309, %v6301
          %v7054 = vpack.c.b16 %v6310, %v6302
          %v7055 = vpack.c.b16 %v6311, %v6303
          %v7056 = vpack.c.b16 %v6312, %v6304
          %v7057 = vpack.c.b16 %v6313, %v6305
          %v7058 = vpack.c.b16 %v6314, %v6306
          %v7059 = vpack.c.b16 %v6315, %v6307
          %v7060 = vpack.c.b16 %v6316, %v6308
          %v7061 = vpack.c.b16 %v6325, %v6317
          %v7062 = vpack.c.b16 %v6326, %v6318
          %v7063 = vpack.c.b16 %v6327, %v6319
          %v7064 = vpack.c.b16 %v6328, %v6320
          %v7065 = vpack.c.b16 %v6329, %v6321
          %v7066 = vpack.c.b16 %v6330, %v6322
          %v7067 = vpack.c.b16 %v6331, %v6323
          %v7068 = vpack.c.b16 %v6332, %v6324
          %v7069 = vpack.c.b16 %v6341, %v6333
          %v7070 = vpack.c.b16 %v6342, %v6334
          %v7071 = vpack.c.b16 %v6343, %v6335
          %v7072 = vpack.c.b16 %v6344, %v6336
          %v7073 = vpack.c.b16 %v6345, %v6337
          %v7074 = vpack.c.b16 %v6346, %v6338
          %v7075 = vpack.c.b16 %v6347, %v6339
          %v7076 = vpack.c.b16 %v6348, %v6340
          %v7077 = vpack.c.b16 %v6357, %v6349
          %v7078 = vpack.c.b16 %v6358, %v6350
          %v7079 = vpack.c.b16 %v6359, %v6351
          %v7080 = vpack.c.b16 %v6360, %v6352
          %v7081 = vpack.c.b16 %v6361, %v6353
          %v7082 = vpack.c.b16 %v6362, %v6354
          %v7083 = vpack.c.b16 %v6363, %v6355
          %v7084 = vpack.c.b16 %v6364, %v6356
          %v7085 = vpack.c.b16 %v6373, %v6365
          %v7086 = vpack.c.b16 %v6374, %v6366
          %v7087 = vpack.c.b16 %v6375, %v6367
          %v7088 = vpack.c.b16 %v6376, %v6368
          %v7089 = vpack.c.b16 %v6377, %v6369
          %v7090 = vpack.c.b16 %v6378, %v6370
          %v7091 = vpack.c.b16 %v6379, %v6371
          %v7092 = vpack.c.b16 %v6380, %v6372
          %v7093 = vpack.c.b16 %v6389, %v6381
          %v7094 = vpack.c.b16 %v6390, %v6382
          %v7095 = vpack.c.b16 %v6391, %v6383
          %v7096 = vpack.c.b16 %v6392, %v6384
          %v7097 = vpack.c.b16 %v6393, %v6385
          %v7098 = vpack.c.b16 %v6394, %v6386
          %v7099 = vpack.c.b16 %v6395, %v6387
          %v7100 = vpack.c.b16 %v6396, %v6388
          %v7101 = vpack.c.b16 %v6405, %v6397
          %v7102 = vpack.c.b16 %v6406, %v6398
          %v7103 = vpack.c.b16 %v6407, %v6399
          %v7104 = vpack.c.b16 %v6408, %v6400
          %v7105 = vpack.c.b16 %v6409, %v6401
          %v7106 = vpack.c.b16 %v6410, %v6402
          %v7107 = vpack.c.b16 %v6411, %v6403
          %v7108 = vpack.c.b16 %v6412, %v6404
          %v7109 = vpack.c.b16 %v6421, %v6413
          %v7110 = vpack.c.b16 %v6422, %v6414
          %v7111 = vpack.c.b16 %v6423, %v6415
          %v7112 = vpack.c.b16 %v6424, %v6416
          %v7113 = vpack.c.b16 %v6425, %v6417
          %v7114 = vpack.c.b16 %v6426, %v6418
          %v7115 = vpack.c.b16 %v6427, %v6419
          %v7116 = vpack.c.b16 %v6428, %v6420
          %v7117 = vpack.c.b16 %v6437, %v6429
          %v7118 = vpack.c.b16 %v6438, %v6430
          %v7119 = vpack.c.b16 %v6439, %v6431
          %v7120 = vpack.c.b16 %v6440, %v6432
          %v7121 = vpack.c.b16 %v6441, %v6433
          %v7122 = vpack.c.b16 %v6442, %v6434
          %v7123 = vpack.c.b16 %v6443, %v6435
          %v7124 = vpack.c.b16 %v6444, %v6436
          %v7125 = vpack.c.b16 %v6453, %v6445
          %v7126 = vpack.c.b16 %v6454, %v6446
          %v7127 = vpack.c.b16 %v6455, %v6447
          %v7128 = vpack.c.b16 %v6456, %v6448
          %v7129 = vpack.c.b16 %v6457, %v6449
          %v7130 = vpack.c.b16 %v6458, %v6450
          %v7131 = vpack.c.b16 %v6459, %v6451
          %v7132 = vpack.c.b16 %v6460, %v6452
          %v7133 = vpack.c.b16 %v6469, %v6461
          %v7134 = vpack.c.b16 %v6470, %v6462
          %v7135 = vpack.c.b16 %v6471, %v6463
          %v7136 = vpack.c.b16 %v6472, %v6464
          %v7137 = vpack.c.b16 %v6473, %v6465
          %v7138 = vpack.c.b16 %v6474, %v6466
          %v7139 = vpack.c.b16 %v6475, %v6467
          %v7140 = vpack.c.b16 %v6476, %v6468
          %v7141 = vpack.c.b16 %v6485, %v6477
          %v7142 = vpack.c.b16 %v6486, %v6478
          %v7143 = vpack.c.b16 %v6487, %v6479
          %v7144 = vpack.c.b16 %v6488, %v6480
          %v7145 = vpack.c.b16 %v6489, %v6481
          %v7146 = vpack.c.b16 %v6490, %v6482
          %v7147 = vpack.c.b16 %v6491, %v6483
          %v7148 = vpack.c.b16 %v6492, %v6484
          %v7149 = vpack.c.b16 %v6501, %v6493
          %v7150 = vpack.c.b16 %v6502, %v6494
          %v7151 = vpack.c.b16 %v6503, %v6495
          %v7152 = vpack.c.b16 %v6504, %v6496
          %v7153 = vpack.c.b16 %v6505, %v6497
          %v7154 = vpack.c.b16 %v6506, %v6498
          %v7155 = vpack.c.b16 %v6507, %v6499
          %v7156 = vpack.c.b16 %v6508, %v6500
          %v7157 = vpack.c.b16 %v6517, %v6509
          %v7158 = vpack.c.b16 %v6518, %v6510
          %v7159 = vpack.c.b16 %v6519, %v6511
          %v7160 = vpack.c.b16 %v6520, %v6512
          %v7161 = vpack.c.b16 %v6521, %v6513
          %v7162 = vpack.c.b16 %v6522, %v6514
          %v7163 = vpack.c.b16 %v6523, %v6515
          %v7164 = vpack.c.b16 %v6524, %v6516
          %v7165 = vpack.c.b16 %v6533, %v6525
          %v7166 = vpack.c.b16 %v6534, %v6526
          %v7167 = vpack.c.b16 %v6535, %v6527
          %v7168 = vpack.c.b16 %v6536, %v6528
          %v7169 = vpack.c.b16 %v6537, %v6529
          %v7170 = vpack.c.b16 %v6538, %v6530
          %v7171 = vpack.c.b16 %v6539, %v6531
          %v7172 = vpack.c.b16 %v6540, %v6532
          %v7173 = vpack.c.b16 %v6549, %v6541
          %v7174 = vpack.c.b16 %v6550, %v6542
          %v7175 = vpack.c.b16 %v6551, %v6543
          %v7176 = vpack.c.b16 %v6552, %v6544
          %v7177 = vpack.c.b16 %v6553, %v6545
          %v7178 = vpack.c.b16 %v6554, %v6546
          %v7179 = vpack.c.b16 %v6555, %v6547
          %v7180 = vpack.c.b16 %v6556, %v6548
          %v7181 = vpack.c.b16 %v6565, %v6557
          %v7182 = vpack.c.b16 %v6566, %v6558
          %v7183 = vpack.c.b16 %v6567, %v6559
          %v7184 = vpack.c.b16 %v6568, %v6560
          %v7185 = vpack.c.b16 %v6569, %v6561
          %v7186 = vpack.c.b16 %v6570, %v6562
          %v7187 = vpack.c.b16 %v6571, %v6563
          %v7188 = vpack.c.b16 %v6572, %v6564
          %v7189 = vpack.c.b16 %v6581, %v6573
          %v7190 = vpack.c.b16 %v6582, %v6574
          %v7191 = vpack.c.b16 %v6583, %v6575
          %v7192 = vpack.c.b16 %v6584, %v6576
          %v7193 = vpack.c.b16 %v6585, %v6577
          %v7194 = vpack.c.b16 %v6586, %v6578
          %v7195 = vpack.c.b16 %v6587, %v6579
          %v7196 = vpack.c.b16 %v6588, %v6580
          %v7197 = vpack.c.b16 %v6597, %v6589
          %v7198 = vpack.c.b16 %v6598, %v6590
          %v7199 = vpack.c.b16 %v6599, %v6591
          %v7200 = vpack.c.b16 %v6600, %v6592
          %v7201 = vpack.c.b16 %v6601, %v6593
          %v7202 = vpack.c.b16 %v6602, %v6594
          %v7203 = vpack.c.b16 %v6603, %v6595
          %v7204 = vpack.c.b16 %v6604, %v6596
          %v7205 = vpack.c.b16 %v6613, %v6605
          %v7206 = vpack.c.b16 %v6614, %v6606
          %v7207 = vpack.c.b16 %v6615, %v6607
          %v7208 = vpack.c.b16 %v6616, %v6608
          %v7209 = vpack.c.b16 %v6617, %v6609
          %v7210 = vpack.c.b16 %v6618, %v6610
          %v7211 = vpack.c.b16 %v6619, %v6611
          %v7212 = vpack.c.b16 %v6620, %v6612
          %v7213 = vpack.c.b16 %v6629, %v6621
          %v7214 = vpack.c.b16 %v6630, %v6622
          %v7215 = vpack.c.b16 %v6631, %v6623
          %v7216 = vpack.c.b16 %v6632, %v6624
          %v7217 = vpack.c.b16 %v6633, %v6625
          %v7218 = vpack.c.b16 %v6634, %v6626
          %v7219 = vpack.c.b16 %v6635, %v6627
          %v7220 = vpack.c.b16 %v6636, %v6628
          %v7221 = vpack.c.b16 %v6645, %v6637
          %v7222 = vpack.c.b16 %v6646, %v6638
          %v7223 = vpack.c.b16 %v6647, %v6639
          %v7224 = vpack.c.b16 %v6648, %v6640
          %v7225 = vpack.c.b16 %v6649, %v6641
          %v7226 = vpack.c.b16 %v6650, %v6642
          %v7227 = vpack.c.b16 %v6651, %v6643
          %v7228 = vpack.c.b16 %v6652, %v6644
          %v7229 = vpack.c.b16 %v6661, %v6653
          %v7230 = vpack.c.b16 %v6662, %v6654
          %v7231 = vpack.c.b16 %v6663, %v6655
          %v7232 = vpack.c.b16 %v6664, %v6656
          %v7233 = vpack.c.b16 %v6665, %v6657
          %v7234 = vpack.c.b16 %v6666, %v6658
          %v7235 = vpack.c.b16 %v6667, %v6659
          %v7236 = vpack.c.b16 %v6668, %v6660
          %v7237 = vpack.c.b16 %v6677, %v6669
          %v7238 = vpack.c.b16 %v6678, %v6670
          %v7239 = vpack.c.b16 %v6679, %v6671
          %v7240 = vpack.c.b16 %v6680, %v6672
          %v7241 = vpack.c.b16 %v6681, %v6673
          %v7242 = vpack.c.b16 %v6682, %v6674
          %v7243 = vpack.c.b16 %v6683, %v6675
          %v7244 = vpack.c.b16 %v6684, %v6676
          %v7245 = vpack.c.b16 %v6693, %v6685
          %v7246 = vpack.c.b16 %v6694, %v6686
          %v7247 = vpack.c.b16 %v6695, %v6687
          %v7248 = vpack.c.b16 %v6696, %v6688
          %v7249 = vpack.c.b16 %v6697, %v6689
          %v7250 = vpack.c.b16 %v6698, %v6690
          %v7251 = vpack.c.b16 %v6699, %v6691
          %v7252 = vpack.c.b16 %v6700, %v6692
          %v7253 = vpack.c.b16 %v6709, %v6701
          %v7254 = vpack.c.b16 %v6710, %v6702
          %v7255 = vpack.c.b16 %v6711, %v6703
          %v7256 = vpack.c.b16 %v6712, %v6704
          %v7257 = vpack.c.b16 %v6713, %v6705
          %v7258 = vpack.c.b16 %v6714, %v6706
          %v7259 = vpack.c.b16 %v6715, %v6707
          %v7260 = vpack.c.b16 %v6716, %v6708
          %v7261 = vpack.c.b16 %v6725, %v6717
          %v7262 = vpack.c.b16 %v6726, %v6718
          %v7263 = vpack.c.b16 %v6727, %v6719
          %v7264 = vpack.c.b16 %v6728, %v6720
          %v7265 = vpack.c.b16 %v6729, %v6721
          %v7266 = vpack.c.b16 %v6730, %v6722
          %v7267 = vpack.c.b16 %v6731, %v6723
          %v7268 = vpack.c.b16 %v6732, %v6724
          %v7269 = vpack.c.b16 %v6741, %v6733
          %v7270 = vpack.c.b16 %v6742, %v6734
          %v7271 = vpack.c.b16 %v6743, %v6735
          %v7272 = vpack.c.b16 %v6744, %v6736
          %v7273 = vpack.c.b16 %v6745, %v6737
          %v7274 = vpack.c.b16 %v6746, %v6738
          %v7275 = vpack.c.b16 %v6747, %v6739
          %v7276 = vpack.c.b16 %v6748, %v6740
          %v7277 = vpack.c.b16 %v6757, %v6749
          %v7278 = vpack.c.b16 %v6758, %v6750
          %v7279 = vpack.c.b16 %v6759, %v6751
          %v7280 = vpack.c.b16 %v6760, %v6752
          %v7281 = vpack.c.b16 %v6761, %v6753
          %v7282 = vpack.c.b16 %v6762, %v6754
          %v7283 = vpack.c.b16 %v6763, %v6755
          %v7284 = vpack.c.b16 %v6764, %v6756
          %v7285 = vpack.c.b16 %v6773, %v6765
          %v7286 = vpack.c.b16 %v6774, %v6766
          %v7287 = vpack.c.b16 %v6775, %v6767
          %v7288 = vpack.c.b16 %v6776, %v6768
          %v7289 = vpack.c.b16 %v6777, %v6769
          %v7290 = vpack.c.b16 %v6778, %v6770
          %v7291 = vpack.c.b16 %v6779, %v6771
          %v7292 = vpack.c.b16 %v6780, %v6772
          %7805 = vmatpush.bf16.msra.mxu0 %v6837
          %7806 = vmatpush.bf16.msra.mxu0 %v6829
          %7807 = vmatpush.bf16.msra.mxu0 %v6821
          %7808 = vmatpush.bf16.msra.mxu0 %v6813
          %7809 = vmatpush.bf16.msra.mxu0 %v6805
          %7810 = vmatpush.bf16.msra.mxu0 %v6797
          %7811 = vmatpush.bf16.msra.mxu0 %v6789
          %7812 = vmatpush.bf16.msra.mxu0 %v6781
          %7813 = vmatmul.bf16.gmra.mxu0 %v4707
          %v7814 = vpop.f32.mrf.mxu0
          %v7815 = vadd.f32 %v5229, %v7814
          %v7816 = vpop.f32.mrf.mxu0
          %7817 = vdwg.mxu0
          %7818 = vmatpush.bf16.msra.mxu0 %v6901
          %7819 = vmatpush.bf16.msra.mxu0 %v6893
          %7820 = vmatpush.bf16.msra.mxu0 %v6885
          %7821 = vmatpush.bf16.msra.mxu0 %v6877
          %7822 = vmatpush.bf16.msra.mxu0 %v6869
          %7823 = vmatpush.bf16.msra.mxu0 %v6861
          %7824 = vmatpush.bf16.msra.mxu0 %v6853
          %7825 = vmatpush.bf16.msra.mxu0 %v6845
          %7826 = vmatmul.bf16.gmra.mxu0 %v4708
          %v7827 = vpop.f32.mrf.mxu0
          %v7828 = vadd.f32 %v7815, %v7827
          %v7829 = vpop.f32.mrf.mxu0
          %7830 = vdwg.mxu0
          %7831 = vmatpush.bf16.msra.mxu0 %v6965
          %7832 = vmatpush.bf16.msra.mxu0 %v6957
          %7833 = vmatpush.bf16.msra.mxu0 %v6949
          %7834 = vmatpush.bf16.msra.mxu0 %v6941
          %7835 = vmatpush.bf16.msra.mxu0 %v6933
          %7836 = vmatpush.bf16.msra.mxu0 %v6925
          %7837 = vmatpush.bf16.msra.mxu0 %v6917
          %7838 = vmatpush.bf16.msra.mxu0 %v6909
          %7839 = vmatmul.bf16.gmra.mxu0 %v4709
          %v7840 = vpop.f32.mrf.mxu0
          %v7841 = vadd.f32 %v7828, %v7840
          %v7842 = vpop.f32.mrf.mxu0
          %7843 = vdwg.mxu0
          %7844 = vmatpush.bf16.msra.mxu0 %v7029
          %7845 = vmatpush.bf16.msra.mxu0 %v7021
          %7846 = vmatpush.bf16.msra.mxu0 %v7013
          %7847 = vmatpush.bf16.msra.mxu0 %v7005
          %7848 = vmatpush.bf16.msra.mxu0 %v6997
          %7849 = vmatpush.bf16.msra.mxu0 %v6989
          %7850 = vmatpush.bf16.msra.mxu0 %v6981
          %7851 = vmatpush.bf16.msra.mxu0 %v6973
          %7852 = vmatmul.bf16.gmra.mxu0 %v4710
          %v7853 = vpop.f32.mrf.mxu0
          %v7854 = vadd.f32 %v7841, %v7853
          %v7855 = vpop.f32.mrf.mxu0
          %7856 = vdwg.mxu0
          %7857 = vmatpush.bf16.msra.mxu0 %v7093
          %7858 = vmatpush.bf16.msra.mxu0 %v7085
          %7859 = vmatpush.bf16.msra.mxu0 %v7077
          %7860 = vmatpush.bf16.msra.mxu0 %v7069
          %7861 = vmatpush.bf16.msra.mxu0 %v7061
          %7862 = vmatpush.bf16.msra.mxu0 %v7053
          %7863 = vmatpush.bf16.msra.mxu0 %v7045
          %7864 = vmatpush.bf16.msra.mxu0 %v7037
          %7865 = vmatmul.bf16.gmra.mxu0 %v4711
          %v7866 = vpop.f32.mrf.mxu0
          %v7867 = vadd.f32 %v7854, %v7866
          %v7868 = vpop.f32.mrf.mxu0
          %7869 = vdwg.mxu0
          %7870 = vmatpush.bf16.msra.mxu0 %v7157
          %7871 = vmatpush.bf16.msra.mxu0 %v7149
          %7872 = vmatpush.bf16.msra.mxu0 %v7141
          %7873 = vmatpush.bf16.msra.mxu0 %v7133
          %7874 = vmatpush.bf16.msra.mxu0 %v7125
          %7875 = vmatpush.bf16.msra.mxu0 %v7117
          %7876 = vmatpush.bf16.msra.mxu0 %v7109
          %7877 = vmatpush.bf16.msra.mxu0 %v7101
          %7878 = vmatmul.bf16.gmra.mxu0 %v4712
          %v7879 = vpop.f32.mrf.mxu0
          %v7880 = vadd.f32 %v7867, %v7879
          %v7881 = vpop.f32.mrf.mxu0
          %7882 = vdwg.mxu0
          %7883 = vmatpush.bf16.msra.mxu0 %v7221
          %7884 = vmatpush.bf16.msra.mxu0 %v7213
          %7885 = vmatpush.bf16.msra.mxu0 %v7205
          %7886 = vmatpush.bf16.msra.mxu0 %v7197
          %7887 = vmatpush.bf16.msra.mxu0 %v7189
          %7888 = vmatpush.bf16.msra.mxu0 %v7181
          %7889 = vmatpush.bf16.msra.mxu0 %v7173
          %7890 = vmatpush.bf16.msra.mxu0 %v7165
          %7891 = vmatmul.bf16.gmra.mxu0 %v4713
          %v7892 = vpop.f32.mrf.mxu0
          %v7893 = vadd.f32 %v7880, %v7892
          %v7894 = vpop.f32.mrf.mxu0
          %7895 = vdwg.mxu0
          %7896 = vmatpush.bf16.msra.mxu0 %v7285
          %7897 = vmatpush.bf16.msra.mxu0 %v7277
          %7898 = vmatpush.bf16.msra.mxu0 %v7269
          %7899 = vmatpush.bf16.msra.mxu0 %v7261
          %7900 = vmatpush.bf16.msra.mxu0 %v7253
          %7901 = vmatpush.bf16.msra.mxu0 %v7245
          %7902 = vmatpush.bf16.msra.mxu0 %v7237
          %7903 = vmatpush.bf16.msra.mxu0 %v7229
          %7904 = vmatmul.bf16.gmra.mxu0 %v4714
          %v7905 = vpop.f32.mrf.mxu0
          %v7906 = vadd.f32 %v7893, %v7905
          %v7907 = vpop.f32.mrf.mxu0
          %7908 = vdwg.mxu0
          %7909 = vmatpush.bf16.msra.mxu0 %v6838
          %7910 = vmatpush.bf16.msra.mxu0 %v6830
          %7911 = vmatpush.bf16.msra.mxu0 %v6822
          %7912 = vmatpush.bf16.msra.mxu0 %v6814
          %7913 = vmatpush.bf16.msra.mxu0 %v6806
          %7914 = vmatpush.bf16.msra.mxu0 %v6798
          %7915 = vmatpush.bf16.msra.mxu0 %v6790
          %7916 = vmatpush.bf16.msra.mxu0 %v6782
          %7917 = vmatmul.bf16.gmra.mxu0 %v4707
          %v7918 = vpop.f32.mrf.mxu0
          %v7919 = vadd.f32 %v5230, %v7918
          %v7920 = vpop.f32.mrf.mxu0
          %7921 = vdwg.mxu0
          %7922 = vmatpush.bf16.msra.mxu0 %v6902
          %7923 = vmatpush.bf16.msra.mxu0 %v6894
          %7924 = vmatpush.bf16.msra.mxu0 %v6886
          %7925 = vmatpush.bf16.msra.mxu0 %v6878
          %7926 = vmatpush.bf16.msra.mxu0 %v6870
          %7927 = vmatpush.bf16.msra.mxu0 %v6862
          %7928 = vmatpush.bf16.msra.mxu0 %v6854
          %7929 = vmatpush.bf16.msra.mxu0 %v6846
          %7930 = vmatmul.bf16.gmra.mxu0 %v4708
          %v7931 = vpop.f32.mrf.mxu0
          %v7932 = vadd.f32 %v7919, %v7931
          %v7933 = vpop.f32.mrf.mxu0
          %7934 = vdwg.mxu0
          %7935 = vmatpush.bf16.msra.mxu0 %v6966
          %7936 = vmatpush.bf16.msra.mxu0 %v6958
          %7937 = vmatpush.bf16.msra.mxu0 %v6950
          %7938 = vmatpush.bf16.msra.mxu0 %v6942
          %7939 = vmatpush.bf16.msra.mxu0 %v6934
          %7940 = vmatpush.bf16.msra.mxu0 %v6926
          %7941 = vmatpush.bf16.msra.mxu0 %v6918
          %7942 = vmatpush.bf16.msra.mxu0 %v6910
          %7943 = vmatmul.bf16.gmra.mxu0 %v4709
          %v7944 = vpop.f32.mrf.mxu0
          %v7945 = vadd.f32 %v7932, %v7944
          %v7946 = vpop.f32.mrf.mxu0
          %7947 = vdwg.mxu0
          %7948 = vmatpush.bf16.msra.mxu0 %v7030
          %7949 = vmatpush.bf16.msra.mxu0 %v7022
          %7950 = vmatpush.bf16.msra.mxu0 %v7014
          %7951 = vmatpush.bf16.msra.mxu0 %v7006
          %7952 = vmatpush.bf16.msra.mxu0 %v6998
          %7953 = vmatpush.bf16.msra.mxu0 %v6990
          %7954 = vmatpush.bf16.msra.mxu0 %v6982
          %7955 = vmatpush.bf16.msra.mxu0 %v6974
          %7956 = vmatmul.bf16.gmra.mxu0 %v4710
          %v7957 = vpop.f32.mrf.mxu0
          %v7958 = vadd.f32 %v7945, %v7957
          %v7959 = vpop.f32.mrf.mxu0
          %7960 = vdwg.mxu0
          %7961 = vmatpush.bf16.msra.mxu0 %v7094
          %7962 = vmatpush.bf16.msra.mxu0 %v7086
          %7963 = vmatpush.bf16.msra.mxu0 %v7078
          %7964 = vmatpush.bf16.msra.mxu0 %v7070
          %7965 = vmatpush.bf16.msra.mxu0 %v7062
          %7966 = vmatpush.bf16.msra.mxu0 %v7054
          %7967 = vmatpush.bf16.msra.mxu0 %v7046
          %7968 = vmatpush.bf16.msra.mxu0 %v7038
          %7969 = vmatmul.bf16.gmra.mxu0 %v4711
          %v7970 = vpop.f32.mrf.mxu0
          %v7971 = vadd.f32 %v7958, %v7970
          %v7972 = vpop.f32.mrf.mxu0
          %7973 = vdwg.mxu0
          %7974 = vmatpush.bf16.msra.mxu0 %v7158
          %7975 = vmatpush.bf16.msra.mxu0 %v7150
          %7976 = vmatpush.bf16.msra.mxu0 %v7142
          %7977 = vmatpush.bf16.msra.mxu0 %v7134
          %7978 = vmatpush.bf16.msra.mxu0 %v7126
          %7979 = vmatpush.bf16.msra.mxu0 %v7118
          %7980 = vmatpush.bf16.msra.mxu0 %v7110
          %7981 = vmatpush.bf16.msra.mxu0 %v7102
          %7982 = vmatmul.bf16.gmra.mxu0 %v4712
          %v7983 = vpop.f32.mrf.mxu0
          %v7984 = vadd.f32 %v7971, %v7983
          %v7985 = vpop.f32.mrf.mxu0
          %7986 = vdwg.mxu0
          %7987 = vmatpush.bf16.msra.mxu0 %v7222
          %7988 = vmatpush.bf16.msra.mxu0 %v7214
          %7989 = vmatpush.bf16.msra.mxu0 %v7206
          %7990 = vmatpush.bf16.msra.mxu0 %v7198
          %7991 = vmatpush.bf16.msra.mxu0 %v7190
          %7992 = vmatpush.bf16.msra.mxu0 %v7182
          %7993 = vmatpush.bf16.msra.mxu0 %v7174
          %7994 = vmatpush.bf16.msra.mxu0 %v7166
          %7995 = vmatmul.bf16.gmra.mxu0 %v4713
          %v7996 = vpop.f32.mrf.mxu0
          %v7997 = vadd.f32 %v7984, %v7996
          %v7998 = vpop.f32.mrf.mxu0
          %7999 = vdwg.mxu0
          %8000 = vmatpush.bf16.msra.mxu0 %v7286
          %8001 = vmatpush.bf16.msra.mxu0 %v7278
          %8002 = vmatpush.bf16.msra.mxu0 %v7270
          %8003 = vmatpush.bf16.msra.mxu0 %v7262
          %8004 = vmatpush.bf16.msra.mxu0 %v7254
          %8005 = vmatpush.bf16.msra.mxu0 %v7246
          %8006 = vmatpush.bf16.msra.mxu0 %v7238
          %8007 = vmatpush.bf16.msra.mxu0 %v7230
          %8008 = vmatmul.bf16.gmra.mxu0 %v4714
          %v8009 = vpop.f32.mrf.mxu0
          %v8010 = vadd.f32 %v7997, %v8009
          %v8011 = vpop.f32.mrf.mxu0
          %8012 = vdwg.mxu0
          %8013 = vmatpush.bf16.msra.mxu0 %v6839
          %8014 = vmatpush.bf16.msra.mxu0 %v6831
          %8015 = vmatpush.bf16.msra.mxu0 %v6823
          %8016 = vmatpush.bf16.msra.mxu0 %v6815
          %8017 = vmatpush.bf16.msra.mxu0 %v6807
          %8018 = vmatpush.bf16.msra.mxu0 %v6799
          %8019 = vmatpush.bf16.msra.mxu0 %v6791
          %8020 = vmatpush.bf16.msra.mxu0 %v6783
          %8021 = vmatmul.bf16.gmra.mxu0 %v4707
          %v8022 = vpop.f32.mrf.mxu0
          %v8023 = vadd.f32 %v5231, %v8022
          %v8024 = vpop.f32.mrf.mxu0
          %8025 = vdwg.mxu0
          %8026 = vmatpush.bf16.msra.mxu0 %v6903
          %8027 = vmatpush.bf16.msra.mxu0 %v6895
          %8028 = vmatpush.bf16.msra.mxu0 %v6887
          %8029 = vmatpush.bf16.msra.mxu0 %v6879
          %8030 = vmatpush.bf16.msra.mxu0 %v6871
          %8031 = vmatpush.bf16.msra.mxu0 %v6863
          %8032 = vmatpush.bf16.msra.mxu0 %v6855
          %8033 = vmatpush.bf16.msra.mxu0 %v6847
          %8034 = vmatmul.bf16.gmra.mxu0 %v4708
          %v8035 = vpop.f32.mrf.mxu0
          %v8036 = vadd.f32 %v8023, %v8035
          %v8037 = vpop.f32.mrf.mxu0
          %8038 = vdwg.mxu0
          %8039 = vmatpush.bf16.msra.mxu0 %v6967
          %8040 = vmatpush.bf16.msra.mxu0 %v6959
          %8041 = vmatpush.bf16.msra.mxu0 %v6951
          %8042 = vmatpush.bf16.msra.mxu0 %v6943
          %8043 = vmatpush.bf16.msra.mxu0 %v6935
          %8044 = vmatpush.bf16.msra.mxu0 %v6927
          %8045 = vmatpush.bf16.msra.mxu0 %v6919
          %8046 = vmatpush.bf16.msra.mxu0 %v6911
          %8047 = vmatmul.bf16.gmra.mxu0 %v4709
          %v8048 = vpop.f32.mrf.mxu0
          %v8049 = vadd.f32 %v8036, %v8048
          %v8050 = vpop.f32.mrf.mxu0
          %8051 = vdwg.mxu0
          %8052 = vmatpush.bf16.msra.mxu0 %v7031
          %8053 = vmatpush.bf16.msra.mxu0 %v7023
          %8054 = vmatpush.bf16.msra.mxu0 %v7015
          %8055 = vmatpush.bf16.msra.mxu0 %v7007
          %8056 = vmatpush.bf16.msra.mxu0 %v6999
          %8057 = vmatpush.bf16.msra.mxu0 %v6991
          %8058 = vmatpush.bf16.msra.mxu0 %v6983
          %8059 = vmatpush.bf16.msra.mxu0 %v6975
          %8060 = vmatmul.bf16.gmra.mxu0 %v4710
          %v8061 = vpop.f32.mrf.mxu0
          %v8062 = vadd.f32 %v8049, %v8061
          %v8063 = vpop.f32.mrf.mxu0
          %8064 = vdwg.mxu0
          %8065 = vmatpush.bf16.msra.mxu0 %v7095
          %8066 = vmatpush.bf16.msra.mxu0 %v7087
          %8067 = vmatpush.bf16.msra.mxu0 %v7079
          %8068 = vmatpush.bf16.msra.mxu0 %v7071
          %8069 = vmatpush.bf16.msra.mxu0 %v7063
          %8070 = vmatpush.bf16.msra.mxu0 %v7055
          %8071 = vmatpush.bf16.msra.mxu0 %v7047
          %8072 = vmatpush.bf16.msra.mxu0 %v7039
          %8073 = vmatmul.bf16.gmra.mxu0 %v4711
          %v8074 = vpop.f32.mrf.mxu0
          %v8075 = vadd.f32 %v8062, %v8074
          %v8076 = vpop.f32.mrf.mxu0
          %8077 = vdwg.mxu0
          %8078 = vmatpush.bf16.msra.mxu0 %v7159
          %8079 = vmatpush.bf16.msra.mxu0 %v7151
          %8080 = vmatpush.bf16.msra.mxu0 %v7143
          %8081 = vmatpush.bf16.msra.mxu0 %v7135
          %8082 = vmatpush.bf16.msra.mxu0 %v7127
          %8083 = vmatpush.bf16.msra.mxu0 %v7119
          %8084 = vmatpush.bf16.msra.mxu0 %v7111
          %8085 = vmatpush.bf16.msra.mxu0 %v7103
          %8086 = vmatmul.bf16.gmra.mxu0 %v4712
          %v8087 = vpop.f32.mrf.mxu0
          %v8088 = vadd.f32 %v8075, %v8087
          %v8089 = vpop.f32.mrf.mxu0
          %8090 = vdwg.mxu0
          %8091 = vmatpush.bf16.msra.mxu0 %v7223
          %8092 = vmatpush.bf16.msra.mxu0 %v7215
          %8093 = vmatpush.bf16.msra.mxu0 %v7207
          %8094 = vmatpush.bf16.msra.mxu0 %v7199
          %8095 = vmatpush.bf16.msra.mxu0 %v7191
          %8096 = vmatpush.bf16.msra.mxu0 %v7183
          %8097 = vmatpush.bf16.msra.mxu0 %v7175
          %8098 = vmatpush.bf16.msra.mxu0 %v7167
          %8099 = vmatmul.bf16.gmra.mxu0 %v4713
          %v8100 = vpop.f32.mrf.mxu0
          %v8101 = vadd.f32 %v8088, %v8100
          %v8102 = vpop.f32.mrf.mxu0
          %8103 = vdwg.mxu0
          %8104 = vmatpush.bf16.msra.mxu0 %v7287
          %8105 = vmatpush.bf16.msra.mxu0 %v7279
          %8106 = vmatpush.bf16.msra.mxu0 %v7271
          %8107 = vmatpush.bf16.msra.mxu0 %v7263
          %8108 = vmatpush.bf16.msra.mxu0 %v7255
          %8109 = vmatpush.bf16.msra.mxu0 %v7247
          %8110 = vmatpush.bf16.msra.mxu0 %v7239
          %8111 = vmatpush.bf16.msra.mxu0 %v7231
          %8112 = vmatmul.bf16.gmra.mxu0 %v4714
          %v8113 = vpop.f32.mrf.mxu0
          %v8114 = vadd.f32 %v8101, %v8113
          %v8115 = vpop.f32.mrf.mxu0
          %8116 = vdwg.mxu0
          %8117 = vmatpush.bf16.msra.mxu0 %v6840
          %8118 = vmatpush.bf16.msra.mxu0 %v6832
          %8119 = vmatpush.bf16.msra.mxu0 %v6824
          %8120 = vmatpush.bf16.msra.mxu0 %v6816
          %8121 = vmatpush.bf16.msra.mxu0 %v6808
          %8122 = vmatpush.bf16.msra.mxu0 %v6800
          %8123 = vmatpush.bf16.msra.mxu0 %v6792
          %8124 = vmatpush.bf16.msra.mxu0 %v6784
          %8125 = vmatmul.bf16.gmra.mxu0 %v4707
          %v8126 = vpop.f32.mrf.mxu0
          %v8127 = vadd.f32 %v5232, %v8126
          %v8128 = vpop.f32.mrf.mxu0
          %8129 = vdwg.mxu0
          %8130 = vmatpush.bf16.msra.mxu0 %v6904
          %8131 = vmatpush.bf16.msra.mxu0 %v6896
          %8132 = vmatpush.bf16.msra.mxu0 %v6888
          %8133 = vmatpush.bf16.msra.mxu0 %v6880
          %8134 = vmatpush.bf16.msra.mxu0 %v6872
          %8135 = vmatpush.bf16.msra.mxu0 %v6864
          %8136 = vmatpush.bf16.msra.mxu0 %v6856
          %8137 = vmatpush.bf16.msra.mxu0 %v6848
          %8138 = vmatmul.bf16.gmra.mxu0 %v4708
          %v8139 = vpop.f32.mrf.mxu0
          %v8140 = vadd.f32 %v8127, %v8139
          %v8141 = vpop.f32.mrf.mxu0
          %8142 = vdwg.mxu0
          %8143 = vmatpush.bf16.msra.mxu0 %v6968
          %8144 = vmatpush.bf16.msra.mxu0 %v6960
          %8145 = vmatpush.bf16.msra.mxu0 %v6952
          %8146 = vmatpush.bf16.msra.mxu0 %v6944
          %8147 = vmatpush.bf16.msra.mxu0 %v6936
          %8148 = vmatpush.bf16.msra.mxu0 %v6928
          %8149 = vmatpush.bf16.msra.mxu0 %v6920
          %8150 = vmatpush.bf16.msra.mxu0 %v6912
          %8151 = vmatmul.bf16.gmra.mxu0 %v4709
          %v8152 = vpop.f32.mrf.mxu0
          %v8153 = vadd.f32 %v8140, %v8152
          %v8154 = vpop.f32.mrf.mxu0
          %8155 = vdwg.mxu0
          %8156 = vmatpush.bf16.msra.mxu0 %v7032
          %8157 = vmatpush.bf16.msra.mxu0 %v7024
          %8158 = vmatpush.bf16.msra.mxu0 %v7016
          %8159 = vmatpush.bf16.msra.mxu0 %v7008
          %8160 = vmatpush.bf16.msra.mxu0 %v7000
          %8161 = vmatpush.bf16.msra.mxu0 %v6992
          %8162 = vmatpush.bf16.msra.mxu0 %v6984
          %8163 = vmatpush.bf16.msra.mxu0 %v6976
          %8164 = vmatmul.bf16.gmra.mxu0 %v4710
          %v8165 = vpop.f32.mrf.mxu0
          %v8166 = vadd.f32 %v8153, %v8165
          %v8167 = vpop.f32.mrf.mxu0
          %8168 = vdwg.mxu0
          %8169 = vmatpush.bf16.msra.mxu0 %v7096
          %8170 = vmatpush.bf16.msra.mxu0 %v7088
          %8171 = vmatpush.bf16.msra.mxu0 %v7080
          %8172 = vmatpush.bf16.msra.mxu0 %v7072
          %8173 = vmatpush.bf16.msra.mxu0 %v7064
          %8174 = vmatpush.bf16.msra.mxu0 %v7056
          %8175 = vmatpush.bf16.msra.mxu0 %v7048
          %8176 = vmatpush.bf16.msra.mxu0 %v7040
          %8177 = vmatmul.bf16.gmra.mxu0 %v4711
          %v8178 = vpop.f32.mrf.mxu0
          %v8179 = vadd.f32 %v8166, %v8178
          %v8180 = vpop.f32.mrf.mxu0
          %8181 = vdwg.mxu0
          %8182 = vmatpush.bf16.msra.mxu0 %v7160
          %8183 = vmatpush.bf16.msra.mxu0 %v7152
          %8184 = vmatpush.bf16.msra.mxu0 %v7144
          %8185 = vmatpush.bf16.msra.mxu0 %v7136
          %8186 = vmatpush.bf16.msra.mxu0 %v7128
          %8187 = vmatpush.bf16.msra.mxu0 %v7120
          %8188 = vmatpush.bf16.msra.mxu0 %v7112
          %8189 = vmatpush.bf16.msra.mxu0 %v7104
          %8190 = vmatmul.bf16.gmra.mxu0 %v4712
          %v8191 = vpop.f32.mrf.mxu0
          %v8192 = vadd.f32 %v8179, %v8191
          %v8193 = vpop.f32.mrf.mxu0
          %8194 = vdwg.mxu0
          %8195 = vmatpush.bf16.msra.mxu0 %v7224
          %8196 = vmatpush.bf16.msra.mxu0 %v7216
          %8197 = vmatpush.bf16.msra.mxu0 %v7208
          %8198 = vmatpush.bf16.msra.mxu0 %v7200
          %8199 = vmatpush.bf16.msra.mxu0 %v7192
          %8200 = vmatpush.bf16.msra.mxu0 %v7184
          %8201 = vmatpush.bf16.msra.mxu0 %v7176
          %8202 = vmatpush.bf16.msra.mxu0 %v7168
          %8203 = vmatmul.bf16.gmra.mxu0 %v4713
          %v8204 = vpop.f32.mrf.mxu0
          %v8205 = vadd.f32 %v8192, %v8204
          %v8206 = vpop.f32.mrf.mxu0
          %8207 = vdwg.mxu0
          %8208 = vmatpush.bf16.msra.mxu0 %v7288
          %8209 = vmatpush.bf16.msra.mxu0 %v7280
          %8210 = vmatpush.bf16.msra.mxu0 %v7272
          %8211 = vmatpush.bf16.msra.mxu0 %v7264
          %8212 = vmatpush.bf16.msra.mxu0 %v7256
          %8213 = vmatpush.bf16.msra.mxu0 %v7248
          %8214 = vmatpush.bf16.msra.mxu0 %v7240
          %8215 = vmatpush.bf16.msra.mxu0 %v7232
          %8216 = vmatmul.bf16.gmra.mxu0 %v4714
          %v8217 = vpop.f32.mrf.mxu0
          %v8218 = vadd.f32 %v8205, %v8217
          %v8219 = vpop.f32.mrf.mxu0
          %8220 = vdwg.mxu0
          %8221 = vmatpush.bf16.msra.mxu0 %v6841
          %8222 = vmatpush.bf16.msra.mxu0 %v6833
          %8223 = vmatpush.bf16.msra.mxu0 %v6825
          %8224 = vmatpush.bf16.msra.mxu0 %v6817
          %8225 = vmatpush.bf16.msra.mxu0 %v6809
          %8226 = vmatpush.bf16.msra.mxu0 %v6801
          %8227 = vmatpush.bf16.msra.mxu0 %v6793
          %8228 = vmatpush.bf16.msra.mxu0 %v6785
          %8229 = vmatmul.bf16.gmra.mxu0 %v4707
          %v8230 = vpop.f32.mrf.mxu0
          %v8231 = vadd.f32 %v5233, %v8230
          %v8232 = vpop.f32.mrf.mxu0
          %8233 = vdwg.mxu0
          %8234 = vmatpush.bf16.msra.mxu0 %v6905
          %8235 = vmatpush.bf16.msra.mxu0 %v6897
          %8236 = vmatpush.bf16.msra.mxu0 %v6889
          %8237 = vmatpush.bf16.msra.mxu0 %v6881
          %8238 = vmatpush.bf16.msra.mxu0 %v6873
          %8239 = vmatpush.bf16.msra.mxu0 %v6865
          %8240 = vmatpush.bf16.msra.mxu0 %v6857
          %8241 = vmatpush.bf16.msra.mxu0 %v6849
          %8242 = vmatmul.bf16.gmra.mxu0 %v4708
          %v8243 = vpop.f32.mrf.mxu0
          %v8244 = vadd.f32 %v8231, %v8243
          %v8245 = vpop.f32.mrf.mxu0
          %8246 = vdwg.mxu0
          %8247 = vmatpush.bf16.msra.mxu0 %v6969
          %8248 = vmatpush.bf16.msra.mxu0 %v6961
          %8249 = vmatpush.bf16.msra.mxu0 %v6953
          %8250 = vmatpush.bf16.msra.mxu0 %v6945
          %8251 = vmatpush.bf16.msra.mxu0 %v6937
          %8252 = vmatpush.bf16.msra.mxu0 %v6929
          %8253 = vmatpush.bf16.msra.mxu0 %v6921
          %8254 = vmatpush.bf16.msra.mxu0 %v6913
          %8255 = vmatmul.bf16.gmra.mxu0 %v4709
          %v8256 = vpop.f32.mrf.mxu0
          %v8257 = vadd.f32 %v8244, %v8256
          %v8258 = vpop.f32.mrf.mxu0
          %8259 = vdwg.mxu0
          %8260 = vmatpush.bf16.msra.mxu0 %v7033
          %8261 = vmatpush.bf16.msra.mxu0 %v7025
          %8262 = vmatpush.bf16.msra.mxu0 %v7017
          %8263 = vmatpush.bf16.msra.mxu0 %v7009
          %8264 = vmatpush.bf16.msra.mxu0 %v7001
          %8265 = vmatpush.bf16.msra.mxu0 %v6993
          %8266 = vmatpush.bf16.msra.mxu0 %v6985
          %8267 = vmatpush.bf16.msra.mxu0 %v6977
          %8268 = vmatmul.bf16.gmra.mxu0 %v4710
          %v8269 = vpop.f32.mrf.mxu0
          %v8270 = vadd.f32 %v8257, %v8269
          %v8271 = vpop.f32.mrf.mxu0
          %8272 = vdwg.mxu0
          %8273 = vmatpush.bf16.msra.mxu0 %v7097
          %8274 = vmatpush.bf16.msra.mxu0 %v7089
          %8275 = vmatpush.bf16.msra.mxu0 %v7081
          %8276 = vmatpush.bf16.msra.mxu0 %v7073
          %8277 = vmatpush.bf16.msra.mxu0 %v7065
          %8278 = vmatpush.bf16.msra.mxu0 %v7057
          %8279 = vmatpush.bf16.msra.mxu0 %v7049
          %8280 = vmatpush.bf16.msra.mxu0 %v7041
          %8281 = vmatmul.bf16.gmra.mxu0 %v4711
          %v8282 = vpop.f32.mrf.mxu0
          %v8283 = vadd.f32 %v8270, %v8282
          %v8284 = vpop.f32.mrf.mxu0
          %8285 = vdwg.mxu0
          %8286 = vmatpush.bf16.msra.mxu0 %v7161
          %8287 = vmatpush.bf16.msra.mxu0 %v7153
          %8288 = vmatpush.bf16.msra.mxu0 %v7145
          %8289 = vmatpush.bf16.msra.mxu0 %v7137
          %8290 = vmatpush.bf16.msra.mxu0 %v7129
          %8291 = vmatpush.bf16.msra.mxu0 %v7121
          %8292 = vmatpush.bf16.msra.mxu0 %v7113
          %8293 = vmatpush.bf16.msra.mxu0 %v7105
          %8294 = vmatmul.bf16.gmra.mxu0 %v4712
          %v8295 = vpop.f32.mrf.mxu0
          %v8296 = vadd.f32 %v8283, %v8295
          %v8297 = vpop.f32.mrf.mxu0
          %8298 = vdwg.mxu0
          %8299 = vmatpush.bf16.msra.mxu0 %v7225
          %8300 = vmatpush.bf16.msra.mxu0 %v7217
          %8301 = vmatpush.bf16.msra.mxu0 %v7209
          %8302 = vmatpush.bf16.msra.mxu0 %v7201
          %8303 = vmatpush.bf16.msra.mxu0 %v7193
          %8304 = vmatpush.bf16.msra.mxu0 %v7185
          %8305 = vmatpush.bf16.msra.mxu0 %v7177
          %8306 = vmatpush.bf16.msra.mxu0 %v7169
          %8307 = vmatmul.bf16.gmra.mxu0 %v4713
          %v8308 = vpop.f32.mrf.mxu0
          %v8309 = vadd.f32 %v8296, %v8308
          %v8310 = vpop.f32.mrf.mxu0
          %8311 = vdwg.mxu0
          %8312 = vmatpush.bf16.msra.mxu0 %v7289
          %8313 = vmatpush.bf16.msra.mxu0 %v7281
          %8314 = vmatpush.bf16.msra.mxu0 %v7273
          %8315 = vmatpush.bf16.msra.mxu0 %v7265
          %8316 = vmatpush.bf16.msra.mxu0 %v7257
          %8317 = vmatpush.bf16.msra.mxu0 %v7249
          %8318 = vmatpush.bf16.msra.mxu0 %v7241
          %8319 = vmatpush.bf16.msra.mxu0 %v7233
          %8320 = vmatmul.bf16.gmra.mxu0 %v4714
          %v8321 = vpop.f32.mrf.mxu0
          %v8322 = vadd.f32 %v8309, %v8321
          %v8323 = vpop.f32.mrf.mxu0
          %8324 = vdwg.mxu0
          %8325 = vmatpush.bf16.msra.mxu0 %v6842
          %8326 = vmatpush.bf16.msra.mxu0 %v6834
          %8327 = vmatpush.bf16.msra.mxu0 %v6826
          %8328 = vmatpush.bf16.msra.mxu0 %v6818
          %8329 = vmatpush.bf16.msra.mxu0 %v6810
          %8330 = vmatpush.bf16.msra.mxu0 %v6802
          %8331 = vmatpush.bf16.msra.mxu0 %v6794
          %8332 = vmatpush.bf16.msra.mxu0 %v6786
          %8333 = vmatmul.bf16.gmra.mxu0 %v4707
          %v8334 = vpop.f32.mrf.mxu0
          %v8335 = vadd.f32 %v5234, %v8334
          %v8336 = vpop.f32.mrf.mxu0
          %8337 = vdwg.mxu0
          %8338 = vmatpush.bf16.msra.mxu0 %v6906
          %8339 = vmatpush.bf16.msra.mxu0 %v6898
          %8340 = vmatpush.bf16.msra.mxu0 %v6890
          %8341 = vmatpush.bf16.msra.mxu0 %v6882
          %8342 = vmatpush.bf16.msra.mxu0 %v6874
          %8343 = vmatpush.bf16.msra.mxu0 %v6866
          %8344 = vmatpush.bf16.msra.mxu0 %v6858
          %8345 = vmatpush.bf16.msra.mxu0 %v6850
          %8346 = vmatmul.bf16.gmra.mxu0 %v4708
          %v8347 = vpop.f32.mrf.mxu0
          %v8348 = vadd.f32 %v8335, %v8347
          %v8349 = vpop.f32.mrf.mxu0
          %8350 = vdwg.mxu0
          %8351 = vmatpush.bf16.msra.mxu0 %v6970
          %8352 = vmatpush.bf16.msra.mxu0 %v6962
          %8353 = vmatpush.bf16.msra.mxu0 %v6954
          %8354 = vmatpush.bf16.msra.mxu0 %v6946
          %8355 = vmatpush.bf16.msra.mxu0 %v6938
          %8356 = vmatpush.bf16.msra.mxu0 %v6930
          %8357 = vmatpush.bf16.msra.mxu0 %v6922
          %8358 = vmatpush.bf16.msra.mxu0 %v6914
          %8359 = vmatmul.bf16.gmra.mxu0 %v4709
          %v8360 = vpop.f32.mrf.mxu0
          %v8361 = vadd.f32 %v8348, %v8360
          %v8362 = vpop.f32.mrf.mxu0
          %8363 = vdwg.mxu0
          %8364 = vmatpush.bf16.msra.mxu0 %v7034
          %8365 = vmatpush.bf16.msra.mxu0 %v7026
          %8366 = vmatpush.bf16.msra.mxu0 %v7018
          %8367 = vmatpush.bf16.msra.mxu0 %v7010
          %8368 = vmatpush.bf16.msra.mxu0 %v7002
          %8369 = vmatpush.bf16.msra.mxu0 %v6994
          %8370 = vmatpush.bf16.msra.mxu0 %v6986
          %8371 = vmatpush.bf16.msra.mxu0 %v6978
          %8372 = vmatmul.bf16.gmra.mxu0 %v4710
          %v8373 = vpop.f32.mrf.mxu0
          %v8374 = vadd.f32 %v8361, %v8373
          %v8375 = vpop.f32.mrf.mxu0
          %8376 = vdwg.mxu0
          %8377 = vmatpush.bf16.msra.mxu0 %v7098
          %8378 = vmatpush.bf16.msra.mxu0 %v7090
          %8379 = vmatpush.bf16.msra.mxu0 %v7082
          %8380 = vmatpush.bf16.msra.mxu0 %v7074
          %8381 = vmatpush.bf16.msra.mxu0 %v7066
          %8382 = vmatpush.bf16.msra.mxu0 %v7058
          %8383 = vmatpush.bf16.msra.mxu0 %v7050
          %8384 = vmatpush.bf16.msra.mxu0 %v7042
          %8385 = vmatmul.bf16.gmra.mxu0 %v4711
          %v8386 = vpop.f32.mrf.mxu0
          %v8387 = vadd.f32 %v8374, %v8386
          %v8388 = vpop.f32.mrf.mxu0
          %8389 = vdwg.mxu0
          %8390 = vmatpush.bf16.msra.mxu0 %v7162
          %8391 = vmatpush.bf16.msra.mxu0 %v7154
          %8392 = vmatpush.bf16.msra.mxu0 %v7146
          %8393 = vmatpush.bf16.msra.mxu0 %v7138
          %8394 = vmatpush.bf16.msra.mxu0 %v7130
          %8395 = vmatpush.bf16.msra.mxu0 %v7122
          %8396 = vmatpush.bf16.msra.mxu0 %v7114
          %8397 = vmatpush.bf16.msra.mxu0 %v7106
          %8398 = vmatmul.bf16.gmra.mxu0 %v4712
          %v8399 = vpop.f32.mrf.mxu0
          %v8400 = vadd.f32 %v8387, %v8399
          %v8401 = vpop.f32.mrf.mxu0
          %8402 = vdwg.mxu0
          %8403 = vmatpush.bf16.msra.mxu0 %v7226
          %8404 = vmatpush.bf16.msra.mxu0 %v7218
          %8405 = vmatpush.bf16.msra.mxu0 %v7210
          %8406 = vmatpush.bf16.msra.mxu0 %v7202
          %8407 = vmatpush.bf16.msra.mxu0 %v7194
          %8408 = vmatpush.bf16.msra.mxu0 %v7186
          %8409 = vmatpush.bf16.msra.mxu0 %v7178
          %8410 = vmatpush.bf16.msra.mxu0 %v7170
          %8411 = vmatmul.bf16.gmra.mxu0 %v4713
          %v8412 = vpop.f32.mrf.mxu0
          %v8413 = vadd.f32 %v8400, %v8412
          %v8414 = vpop.f32.mrf.mxu0
          %8415 = vdwg.mxu0
          %8416 = vmatpush.bf16.msra.mxu0 %v7290
          %8417 = vmatpush.bf16.msra.mxu0 %v7282
          %8418 = vmatpush.bf16.msra.mxu0 %v7274
          %8419 = vmatpush.bf16.msra.mxu0 %v7266
          %8420 = vmatpush.bf16.msra.mxu0 %v7258
          %8421 = vmatpush.bf16.msra.mxu0 %v7250
          %8422 = vmatpush.bf16.msra.mxu0 %v7242
          %8423 = vmatpush.bf16.msra.mxu0 %v7234
          %8424 = vmatmul.bf16.gmra.mxu0 %v4714
          %v8425 = vpop.f32.mrf.mxu0
          %v8426 = vadd.f32 %v8413, %v8425
          %v8427 = vpop.f32.mrf.mxu0
          %8428 = vdwg.mxu0
          %8429 = vmatpush.bf16.msra.mxu0 %v6843
          %8430 = vmatpush.bf16.msra.mxu0 %v6835
          %8431 = vmatpush.bf16.msra.mxu0 %v6827
          %8432 = vmatpush.bf16.msra.mxu0 %v6819
          %8433 = vmatpush.bf16.msra.mxu0 %v6811
          %8434 = vmatpush.bf16.msra.mxu0 %v6803
          %8435 = vmatpush.bf16.msra.mxu0 %v6795
          %8436 = vmatpush.bf16.msra.mxu0 %v6787
          %8437 = vmatmul.bf16.gmra.mxu0 %v4707
          %v8438 = vpop.f32.mrf.mxu0
          %v8439 = vadd.f32 %v5235, %v8438
          %v8440 = vpop.f32.mrf.mxu0
          %8441 = vdwg.mxu0
          %8442 = vmatpush.bf16.msra.mxu0 %v6907
          %8443 = vmatpush.bf16.msra.mxu0 %v6899
          %8444 = vmatpush.bf16.msra.mxu0 %v6891
          %8445 = vmatpush.bf16.msra.mxu0 %v6883
          %8446 = vmatpush.bf16.msra.mxu0 %v6875
          %8447 = vmatpush.bf16.msra.mxu0 %v6867
          %8448 = vmatpush.bf16.msra.mxu0 %v6859
          %8449 = vmatpush.bf16.msra.mxu0 %v6851
          %8450 = vmatmul.bf16.gmra.mxu0 %v4708
          %v8451 = vpop.f32.mrf.mxu0
          %v8452 = vadd.f32 %v8439, %v8451
          %v8453 = vpop.f32.mrf.mxu0
          %8454 = vdwg.mxu0
          %8455 = vmatpush.bf16.msra.mxu0 %v6971
          %8456 = vmatpush.bf16.msra.mxu0 %v6963
          %8457 = vmatpush.bf16.msra.mxu0 %v6955
          %8458 = vmatpush.bf16.msra.mxu0 %v6947
          %8459 = vmatpush.bf16.msra.mxu0 %v6939
          %8460 = vmatpush.bf16.msra.mxu0 %v6931
          %8461 = vmatpush.bf16.msra.mxu0 %v6923
          %8462 = vmatpush.bf16.msra.mxu0 %v6915
          %8463 = vmatmul.bf16.gmra.mxu0 %v4709
          %v8464 = vpop.f32.mrf.mxu0
          %v8465 = vadd.f32 %v8452, %v8464
          %v8466 = vpop.f32.mrf.mxu0
          %8467 = vdwg.mxu0
          %8468 = vmatpush.bf16.msra.mxu0 %v7035
          %8469 = vmatpush.bf16.msra.mxu0 %v7027
          %8470 = vmatpush.bf16.msra.mxu0 %v7019
          %8471 = vmatpush.bf16.msra.mxu0 %v7011
          %8472 = vmatpush.bf16.msra.mxu0 %v7003
          %8473 = vmatpush.bf16.msra.mxu0 %v6995
          %8474 = vmatpush.bf16.msra.mxu0 %v6987
          %8475 = vmatpush.bf16.msra.mxu0 %v6979
          %8476 = vmatmul.bf16.gmra.mxu0 %v4710
          %v8477 = vpop.f32.mrf.mxu0
          %v8478 = vadd.f32 %v8465, %v8477
          %v8479 = vpop.f32.mrf.mxu0
          %8480 = vdwg.mxu0
          %8481 = vmatpush.bf16.msra.mxu0 %v7099
          %8482 = vmatpush.bf16.msra.mxu0 %v7091
          %8483 = vmatpush.bf16.msra.mxu0 %v7083
          %8484 = vmatpush.bf16.msra.mxu0 %v7075
          %8485 = vmatpush.bf16.msra.mxu0 %v7067
          %8486 = vmatpush.bf16.msra.mxu0 %v7059
          %8487 = vmatpush.bf16.msra.mxu0 %v7051
          %8488 = vmatpush.bf16.msra.mxu0 %v7043
          %8489 = vmatmul.bf16.gmra.mxu0 %v4711
          %v8490 = vpop.f32.mrf.mxu0
          %v8491 = vadd.f32 %v8478, %v8490
          %v8492 = vpop.f32.mrf.mxu0
          %8493 = vdwg.mxu0
          %8494 = vmatpush.bf16.msra.mxu0 %v7163
          %8495 = vmatpush.bf16.msra.mxu0 %v7155
          %8496 = vmatpush.bf16.msra.mxu0 %v7147
          %8497 = vmatpush.bf16.msra.mxu0 %v7139
          %8498 = vmatpush.bf16.msra.mxu0 %v7131
          %8499 = vmatpush.bf16.msra.mxu0 %v7123
          %8500 = vmatpush.bf16.msra.mxu0 %v7115
          %8501 = vmatpush.bf16.msra.mxu0 %v7107
          %8502 = vmatmul.bf16.gmra.mxu0 %v4712
          %v8503 = vpop.f32.mrf.mxu0
          %v8504 = vadd.f32 %v8491, %v8503
          %v8505 = vpop.f32.mrf.mxu0
          %8506 = vdwg.mxu0
          %8507 = vmatpush.bf16.msra.mxu0 %v7227
          %8508 = vmatpush.bf16.msra.mxu0 %v7219
          %8509 = vmatpush.bf16.msra.mxu0 %v7211
          %8510 = vmatpush.bf16.msra.mxu0 %v7203
          %8511 = vmatpush.bf16.msra.mxu0 %v7195
          %8512 = vmatpush.bf16.msra.mxu0 %v7187
          %8513 = vmatpush.bf16.msra.mxu0 %v7179
          %8514 = vmatpush.bf16.msra.mxu0 %v7171
          %8515 = vmatmul.bf16.gmra.mxu0 %v4713
          %v8516 = vpop.f32.mrf.mxu0
          %v8517 = vadd.f32 %v8504, %v8516
          %v8518 = vpop.f32.mrf.mxu0
          %8519 = vdwg.mxu0
          %8520 = vmatpush.bf16.msra.mxu0 %v7291
          %8521 = vmatpush.bf16.msra.mxu0 %v7283
          %8522 = vmatpush.bf16.msra.mxu0 %v7275
          %8523 = vmatpush.bf16.msra.mxu0 %v7267
          %8524 = vmatpush.bf16.msra.mxu0 %v7259
          %8525 = vmatpush.bf16.msra.mxu0 %v7251
          %8526 = vmatpush.bf16.msra.mxu0 %v7243
          %8527 = vmatpush.bf16.msra.mxu0 %v7235
          %8528 = vmatmul.bf16.gmra.mxu0 %v4714
          %v8529 = vpop.f32.mrf.mxu0
          %v8530 = vadd.f32 %v8517, %v8529
          %v8531 = vpop.f32.mrf.mxu0
          %8532 = vdwg.mxu0
          %8533 = vmatpush.bf16.msra.mxu0 %v6844
          %8534 = vmatpush.bf16.msra.mxu0 %v6836
          %8535 = vmatpush.bf16.msra.mxu0 %v6828
          %8536 = vmatpush.bf16.msra.mxu0 %v6820
          %8537 = vmatpush.bf16.msra.mxu0 %v6812
          %8538 = vmatpush.bf16.msra.mxu0 %v6804
          %8539 = vmatpush.bf16.msra.mxu0 %v6796
          %8540 = vmatpush.bf16.msra.mxu0 %v6788
          %8541 = vmatmul.bf16.gmra.mxu0 %v4707
          %v8542 = vpop.f32.mrf.mxu0
          %v8543 = vadd.f32 %v5236, %v8542
          %v8544 = vpop.f32.mrf.mxu0
          %8545 = vdwg.mxu0
          %8546 = vmatpush.bf16.msra.mxu0 %v6908
          %8547 = vmatpush.bf16.msra.mxu0 %v6900
          %8548 = vmatpush.bf16.msra.mxu0 %v6892
          %8549 = vmatpush.bf16.msra.mxu0 %v6884
          %8550 = vmatpush.bf16.msra.mxu0 %v6876
          %8551 = vmatpush.bf16.msra.mxu0 %v6868
          %8552 = vmatpush.bf16.msra.mxu0 %v6860
          %8553 = vmatpush.bf16.msra.mxu0 %v6852
          %8554 = vmatmul.bf16.gmra.mxu0 %v4708
          %v8555 = vpop.f32.mrf.mxu0
          %v8556 = vadd.f32 %v8543, %v8555
          %v8557 = vpop.f32.mrf.mxu0
          %8558 = vdwg.mxu0
          %8559 = vmatpush.bf16.msra.mxu0 %v6972
          %8560 = vmatpush.bf16.msra.mxu0 %v6964
          %8561 = vmatpush.bf16.msra.mxu0 %v6956
          %8562 = vmatpush.bf16.msra.mxu0 %v6948
          %8563 = vmatpush.bf16.msra.mxu0 %v6940
          %8564 = vmatpush.bf16.msra.mxu0 %v6932
          %8565 = vmatpush.bf16.msra.mxu0 %v6924
          %8566 = vmatpush.bf16.msra.mxu0 %v6916
          %8567 = vmatmul.bf16.gmra.mxu0 %v4709
          %v8568 = vpop.f32.mrf.mxu0
          %v8569 = vadd.f32 %v8556, %v8568
          %v8570 = vpop.f32.mrf.mxu0
          %8571 = vdwg.mxu0
          %8572 = vmatpush.bf16.msra.mxu0 %v7036
          %8573 = vmatpush.bf16.msra.mxu0 %v7028
          %8574 = vmatpush.bf16.msra.mxu0 %v7020
          %8575 = vmatpush.bf16.msra.mxu0 %v7012
          %8576 = vmatpush.bf16.msra.mxu0 %v7004
          %8577 = vmatpush.bf16.msra.mxu0 %v6996
          %8578 = vmatpush.bf16.msra.mxu0 %v6988
          %8579 = vmatpush.bf16.msra.mxu0 %v6980
          %8580 = vmatmul.bf16.gmra.mxu0 %v4710
          %v8581 = vpop.f32.mrf.mxu0
          %v8582 = vadd.f32 %v8569, %v8581
          %v8583 = vpop.f32.mrf.mxu0
          %8584 = vdwg.mxu0
          %8585 = vmatpush.bf16.msra.mxu0 %v7100
          %8586 = vmatpush.bf16.msra.mxu0 %v7092
          %8587 = vmatpush.bf16.msra.mxu0 %v7084
          %8588 = vmatpush.bf16.msra.mxu0 %v7076
          %8589 = vmatpush.bf16.msra.mxu0 %v7068
          %8590 = vmatpush.bf16.msra.mxu0 %v7060
          %8591 = vmatpush.bf16.msra.mxu0 %v7052
          %8592 = vmatpush.bf16.msra.mxu0 %v7044
          %8593 = vmatmul.bf16.gmra.mxu0 %v4711
          %v8594 = vpop.f32.mrf.mxu0
          %v8595 = vadd.f32 %v8582, %v8594
          %v8596 = vpop.f32.mrf.mxu0
          %8597 = vdwg.mxu0
          %8598 = vmatpush.bf16.msra.mxu0 %v7164
          %8599 = vmatpush.bf16.msra.mxu0 %v7156
          %8600 = vmatpush.bf16.msra.mxu0 %v7148
          %8601 = vmatpush.bf16.msra.mxu0 %v7140
          %8602 = vmatpush.bf16.msra.mxu0 %v7132
          %8603 = vmatpush.bf16.msra.mxu0 %v7124
          %8604 = vmatpush.bf16.msra.mxu0 %v7116
          %8605 = vmatpush.bf16.msra.mxu0 %v7108
          %8606 = vmatmul.bf16.gmra.mxu0 %v4712
          %v8607 = vpop.f32.mrf.mxu0
          %v8608 = vadd.f32 %v8595, %v8607
          %v8609 = vpop.f32.mrf.mxu0
          %8610 = vdwg.mxu0
          %8611 = vmatpush.bf16.msra.mxu0 %v7228
          %8612 = vmatpush.bf16.msra.mxu0 %v7220
          %8613 = vmatpush.bf16.msra.mxu0 %v7212
          %8614 = vmatpush.bf16.msra.mxu0 %v7204
          %8615 = vmatpush.bf16.msra.mxu0 %v7196
          %8616 = vmatpush.bf16.msra.mxu0 %v7188
          %8617 = vmatpush.bf16.msra.mxu0 %v7180
          %8618 = vmatpush.bf16.msra.mxu0 %v7172
          %8619 = vmatmul.bf16.gmra.mxu0 %v4713
          %v8620 = vpop.f32.mrf.mxu0
          %v8621 = vadd.f32 %v8608, %v8620
          %v8622 = vpop.f32.mrf.mxu0
          %8623 = vdwg.mxu0
          %8624 = vmatpush.bf16.msra.mxu0 %v7292
          %8625 = vmatpush.bf16.msra.mxu0 %v7284
          %8626 = vmatpush.bf16.msra.mxu0 %v7276
          %8627 = vmatpush.bf16.msra.mxu0 %v7268
          %8628 = vmatpush.bf16.msra.mxu0 %v7260
          %8629 = vmatpush.bf16.msra.mxu0 %v7252
          %8630 = vmatpush.bf16.msra.mxu0 %v7244
          %8631 = vmatpush.bf16.msra.mxu0 %v7236
          %8632 = vmatmul.bf16.gmra.mxu0 %v4714
          %v8633 = vpop.f32.mrf.mxu0
          %v8634 = vadd.f32 %v8621, %v8633
          %v8635 = vpop.f32.mrf.mxu0
          %8636 = vdwg.mxu0
          %v8637 = vmax.f32 %v7906, 0.0
          %v8638 = vmax.f32 %v8010, 0.0
          %v8639 = vmax.f32 %v8114, 0.0
          %v8640 = vmax.f32 %v8218, 0.0
          %v8641 = vmax.f32 %v8322, 0.0
          %v8642 = vmax.f32 %v8426, 0.0
          %v8643 = vmax.f32 %v8530, 0.0
          %v8644 = vmax.f32 %v8634, 0.0
          %v8645 = vld [vmem:[#allocation10] sm:$0xff]
          %v8647 = vperm.slane %v8645, 0
          %v8648 = vperm.slane %v8645, 1
          %v8649 = vperm.slane %v8645, 2
          %v8650 = vperm.slane %v8645, 3
          %v8651 = vperm.slane %v8645, 4
          %v8652 = vperm.slane %v8645, 5
          %v8653 = vperm.slane %v8645, 6
          %v8654 = vperm.slane %v8645, 7
          %v8663 = vmul.f32 %v8637, %v8647
          %v8664 = vmul.f32 %v8638, %v8648
          %v8665 = vmul.f32 %v8639, %v8649
          %v8666 = vmul.f32 %v8640, %v8650
          %v8667 = vmul.f32 %v8641, %v8651
          %v8668 = vmul.f32 %v8642, %v8652
          %v8669 = vmul.f32 %v8643, %v8653
          %v8670 = vmul.f32 %v8644, %v8654
          %v8671 = vadd.f32 %v8663, %v8664
          %v8672 = vadd.f32 %v8671, %v8665
          %v8673 = vadd.f32 %v8672, %v8666
          %v8674 = vadd.f32 %v8673, %v8667
          %v8675 = vadd.f32 %v8674, %v8668
          %v8676 = vadd.f32 %v8675, %v8669
          %v8677 = vadd.f32 %v8676, %v8670
          %8678 = vadd.xlane.f32.xlu0 %v8677
          %v8679 = vpop.xlane.xlu0 %8678
          %v8680 = vld [vmem:[#allocation4] sm:$0x1]
          %v8682 = vperm.slane %v8680, 0
          %v8684 = vadd.f32 %v8679, %v8682
          %v8685 = vxor.u32 %v8684, 2147483648
          %v8686 = vmul.f32 %v8685, 1.442695
          %v8687 = vpow.pop %v8686
          %v8688 = vadd.f32 %v8687, 1.0
          %v8689 = vrcp.pop %v8688
          %v8690 = vmul.f32 %v8688, %v8689
          %v8691 = vsub.f32 1.0, %v8690
          %v8692 = vmul.f32 %v8689, %v8691
          %v8693 = vadd.f32 %v8689, %v8692
          %vm8694 = vweird.f32 %v8688
          %vm8695 = vweird.f32 %v8689
          %vm8696 = vmor %vm8694, %vm8695
          %v8697 = vsel %vm8696, %v8689, %v8693
          %v8698 = vand.u32 2147483647, %v8688
          %vm8699 = vcmp.eq.f32.partialorder %v8698, 8.507059e+37
          %v8700 = vand.u32 %v8688, 2147483648
          %v8701 = vor.u32 1.1754944e-38, %v8700
          %v8702 = vsel %vm8699, %v8701, %v8697
          %v8703 = vmul.f32 1.0, %v8702
          %v8704 = vld [vmem:[%s7] sm:$0xff]
          %v8705 = vsub.f32 %v8703, %v8704
          %v8706 = vand.u32 2147483647, %v8705
          %vm8707 = vcmask 7168
          %v8708 = vsel %vm8707, %v8706, 0.0
          %8709 = vadd.xlane.f32.xlu0 %v8708
          %v8710 = vpop.xlane.xlu0 %8709
          %v8711 = vrot.slane %v8710, 4
          %v8712 = vadd.f32 %v8710, %v8711
          %v8713 = vrot.slane %v8712, 2
          %v8714 = vadd.f32 %v8712, %v8713
          %v8715 = vrot.slane %v8714, 1
          %v8716 = vadd.f32 %v8714, %v8715
          %s8717 = vtos %v8716
          %v8718 = vstv %s8717
          %v8719 = vrcp.pop 8.0
          %v8720 = vmul.f32 8.0, %v8719
          %v8721 = vsub.f32 1.0, %v8720
          %v8722 = vmul.f32 %v8719, %v8721
          %v8723 = vadd.f32 %v8719, %v8722
          %vm8724 = vweird.f32 %v8719
          %v8725 = vsel %vm8724, %v8719, %v8723
          %v8726 = vmul.f32 %v8718, %v8725
          %vm8727 = vcmask 0
          %8728 = vst.msk [vmem:[#allocation14] sm:$0x1] %vm8727, %v8726
        $region80: #{instance_da_forward.1} parent=51 // pred_fallthru
          _
        // Predicated region
        $region81: #{instance_da_forward.1} parent=51 // pred_check
          %p8729 = pneg %p225
        $region82: #{instance_da_forward.1} parent=51 // pred_check_branch
          %8731 = sbr.rel (%p8729) target = $region84
        $region83: #{instance_da_forward.1} parent=51 // pred_region
          %8733 = vsyncadd [#allocation7], 0
          %s8735 = sshll.u32 [#allocation14], 4
          %s8736 = int_to_ptr.vmem [resolvable:$true] %s8735
          %s8737 = sshll.u32 %s8, 4
          %s8738 = int_to_ptr.hbm [resolvable:$true] %s8737
          %8740 = dma.vmem_to_hbm [thread:$0]  %s8736, 16, %s8738, [#allocation7]
        $region84: #{instance_da_forward.1} parent=51 // pred_fallthru
          _
        // Predicated region
        $region85: #{instance_da_forward.1} parent=51 // pred_check
          %p8741 = pneg %p225
        $region86: #{instance_da_forward.1} parent=51 // pred_check_branch
          %8743 = sbr.rel (%p8741) target = $region88
        $region87: #{instance_da_forward.1} parent=51 // pred_region
          %8745 = dma.done [#allocation7], 16
        $region88: #{instance_da_forward.1} parent=51 // pred_fallthru
          _
      $region52: #{instance_da_forward.1} parent=5 // pred_fallthru
        _
      %p8746 = scmp.le.s32.totalorder 2, %s24
      // Predicated region
      $region89: #{instance_da_forward.1} parent=5 // pred_check
        %p8747 = pneg %p8746
      $region90: #{instance_da_forward.1} parent=5 // pred_check_branch
        %8749 = sbr.rel (%p8747) target = $region92
      $region91: #{instance_da_forward.1} parent=5 // pred_region
        %s8750 = ssub.s32 %s24, 2
      $region92: #{instance_da_forward.1} parent=5 // pred_fallthru
        _
    $region6: #{instance_da_forward.1} parent=1 // loop_footer
      %s28 = sadd.s32 1, %s24
    $region7: #{instance_da_forward.1} parent=1 // loop_footer_branch
      %23 = sbr.rel target = $region3
    $region8: #{instance_da_forward.1} parent=1 // loop_exit
      _
    %8751 = vsyncpa [#allocation6], 1
    %s8752 = scalar_lea.sflag [#allocation6], 1
    %8753 = vsyncpa %s8752, 1
    %8754 = vsyncpa [#allocation9], 1
    %s8755 = scalar_lea.sflag [#allocation9], 1
    %8756 = vsyncpa %s8755, 1
    %8757 = vsyncpa [#allocation12], 1
    %8758 = vsyncpa [#allocation7], 1
    %s8759 = scalar_lea.sflag [#allocation7], 1
    %8760 = vsyncpa %s8759, 1

</llo_original>
